<compile_context>
chip_gen: v5e
topology: v5e:2x2
jax: 0.10.0
libtpu: 0.0.40
codegen_flags: <defaults>
</compile_context>

<pallas_src>
import functools

import jax
import jax.numpy as jnp
from jax import lax
from jax.experimental import pallas as pl
from jax.experimental.pallas import tpu as pltpu

FFN_DIM = 2048   # nn.TransformerEncoderLayer default dim_feedforward
LN_EPS = 1e-5
BN_EPS = 1e-5


# ----------------------------- kernel helpers -----------------------------

def _layer_norm(x, w, b):
    mean = jnp.mean(x, axis=-1, keepdims=True)
    var = jnp.mean((x - mean) ** 2, axis=-1, keepdims=True)
    return (x - mean) * lax.rsqrt(var + LN_EPS) * w + b


def make_previt_kernel(B, N, E, heads, C, num_layers):
    """Fully fused PreViT forward.

    Ref order:
      patches (B*N, C*P*P) bf16, pw_t (C*P*P, E) bf16, pos_b (B*N, E) f32,
      wqkv (L, E, 3E) bf16, wo (L, E, E) bf16, w1 (L, E, F) bf16, w2 (L, F, E) bf16,
      lbias (L, 8, max(F,3E)) f32  rows = [bqkv, bo, ln1w, ln1b, b1, b2, ln2w, ln2b],
      head (E+C+4, C) f32          rows = [proj_w_t(E), proj_b, bn_g, bn_b, conv_w_t(C), conv_b],
      kmat_t (N, H*W) f32, out (B*C, H*W) f32.
    """
    d = E // heads
    E3 = 3 * E
    bf16 = jnp.bfloat16
    f32 = jnp.float32

    def kernel(patches_ref, pw_ref, posb_ref, wqkv_ref, wo_ref, w1_ref, w2_ref,
               lbias_ref, head_ref, kmat_ref, o_ref):
        ffn = w1_ref.shape[2]

        # ---- patch embedding (Conv2d k=stride=patch as a linear) + pos embed ----
        # patch bias is folded into pos_b on the host.
        x = (jnp.dot(patches_ref[...], pw_ref[...], preferred_element_type=f32)
             + posb_ref[...])                                            # (B*N, E) f32

        # ---- transformer encoder layers (post-norm, eval-mode) ----
        for l in range(num_layers):
            wqkv = wqkv_ref[l]                                           # (E, 3E) bf16
            wo = wo_ref[l]                                               # (E, E)  bf16
            w1 = w1_ref[l]                                               # (E, F)  bf16
            w2 = w2_ref[l]                                               # (F, E)  bf16
            bias = lbias_ref[l]                                          # (8, >=F) f32
            bqkv = bias[0:1, :E3]
            bo = bias[1:2, :E]
            ln1w = bias[2:3, :E]
            ln1b = bias[3:4, :E]
            b1 = bias[4:5, :ffn]
            b2 = bias[5:6, :E]
            ln2w = bias[6:7, :E]
            ln2b = bias[7:8, :E]

            # fused Q/K/V projection (1/sqrt(d) pre-folded into the Q columns)
            qkv = (jnp.dot(x.astype(bf16), wqkv,
                           preferred_element_type=f32) + bqkv)           # (B*N, 3E)

            # TODO(synk): per-head unrolled loop kept (4-D two-batch-dim dot_general
            # is not a guaranteed Mosaic lowering); kernel is latency-bound here.
            ctx_heads = []
            for h in range(heads):
                qh = qkv[:, h * d:(h + 1) * d].reshape(B, N, d)
                kh = qkv[:, E + h * d: E + (h + 1) * d].reshape(B, N, d)
                vh = qkv[:, 2 * E + h * d: 2 * E + (h + 1) * d].reshape(B, N, d)
                s = jnp.einsum('bsd,btd->bst', qh, kh,
                               preferred_element_type=f32)               # (B, N, N)
                s = s - jnp.max(s, axis=-1, keepdims=True)
                p = jnp.exp(s)
                p = p * pl.reciprocal(jnp.sum(p, axis=-1, keepdims=True), approx=True)
                ctx_heads.append(jnp.einsum('bst,btd->bsd', p, vh,
                                            preferred_element_type=f32))
            ctx = jnp.concatenate(ctx_heads, axis=-1).reshape(B * N, E)

            # single fused output projection over all heads
            attn = (jnp.dot(ctx.astype(bf16), wo,
                            preferred_element_type=f32) + bo)
            # TODO(synk): dropout (p=0.1 default) omitted -> eval-mode (identity) semantics.
            h1 = _layer_norm(x + attn, ln1w, ln1b)

            # FFN: bf16 intermediate (next matmul consumes bf16 anyway)
            f = jnp.maximum(jnp.dot(h1.astype(bf16), w1,
                                    preferred_element_type=f32) + b1, 0.0).astype(bf16)
            f = jnp.dot(f, w2, preferred_element_type=f32) + b2
            x = _layer_norm(h1 + f, ln2w, ln2b)

        # ---- tail: proj Linear(E,C) + BatchNorm + ReLU + 1x1 conv + upsample ----
        head = head_ref[...]                                             # (E+C+4, C)
        projw = head[0:E]
        projb = head[E:E + 1]
        bng = head[E + 1:E + 2]
        bnb = head[E + 2:E + 3]
        convw = head[E + 3:E + 3 + C]
        convb = head[E + 3 + C:E + 4 + C]

        # TODO(synk): reference applies nn.BatchNorm2d to a 3-D (B, N, C) tensor, which
        # raises in PyTorch; implemented as the intended per-channel training-mode BN.
        y = jnp.dot(x, projw, preferred_element_type=f32) + projb        # (B*N, C)
        mean = jnp.mean(y, axis=0, keepdims=True)
        var = jnp.mean((y - mean) ** 2, axis=0, keepdims=True)
        y = jnp.maximum((y - mean) * lax.rsqrt(var + BN_EPS) * bng + bnb, 0.0)

        # 1x1 conv applied BEFORE the upsample (exactly commutes; bias too, since the
        # bilinear interpolation rows sum to 1).
        yc = jnp.dot(y, convw, preferred_element_type=f32) + convb       # (B*N, C)

        # token-major (B*N, C) -> channel-major (B*C, N), then bilinear upsample.
        y3 = yc.reshape(B, N, C)
        yt = jnp.concatenate([y3[b].T for b in range(B)], axis=0)        # (B*C, N)
        o_ref[...] = jnp.dot(yt, kmat_ref[...],
                             preferred_element_type=f32)                 # lane-dense (B*C, H*W)

    return kernel


# ----------------------------- host-side packing (one-time) -----------------------------

def bilinear_interp_matrix(out_size, in_size):
    """PyTorch F.interpolate(mode='bilinear', align_corners=False) as a matrix."""
    scale = in_size / out_size
    dst = jnp.arange(out_size, dtype=jnp.float32)
    src = jnp.maximum((dst + 0.5) * scale - 0.5, 0.0)
    i0 = jnp.clip(jnp.floor(src).astype(jnp.int32), 0, in_size - 1)
    i1 = jnp.minimum(i0 + 1, in_size - 1)
    w1 = src - i0.astype(jnp.float32)
    w0 = 1.0 - w1
    m = jnp.zeros((out_size, in_size), jnp.float32)
    m = m.at[jnp.arange(out_size), i0].add(w0)
    m = m.at[jnp.arange(out_size), i1].add(w1)
    return m


def pack_params(params, B, C, H, W, patch, num_heads):
    """One-time weight packing (run ONCE, outside the per-call jitted forward)."""
    E = params['patch_w'].shape[0]
    h, w = H // patch, W // patch
    N = h * w
    d = E // num_heads
    scale = 1.0 / float(d) ** 0.5
    bf16 = jnp.bfloat16
    F = max(FFN_DIM, 3 * E)

    pw_t = params['patch_w'].reshape(E, C * patch * patch).T.astype(bf16)
    pos_b = (jnp.broadcast_to(params['pos_embed'], (B, N, E)).reshape(B * N, E)
             + params['patch_b'][None, :]).astype(jnp.float32)

    def pad_row(v):
        return jnp.pad(v.astype(jnp.float32), (0, F - v.shape[0]))

    wqkv_all, wo_all, w1_all, w2_all, lbias = [], [], [], [], []
    for lp in params['layers']:
        # 1/sqrt(d) folded into the Q weight columns and Q bias.
        wqkv = jnp.concatenate([(lp['wq'] * scale).T, lp['wk'].T, lp['wv'].T], axis=1)
        wqkv_all.append(wqkv.astype(bf16))
        wo_all.append(lp['wo'].T.astype(bf16))
        w1_all.append(lp['w1'].T.astype(bf16))
        w2_all.append(lp['w2'].T.astype(bf16))
        lbias.append(jnp.stack([
            pad_row(jnp.concatenate([lp['bq'] * scale, lp['bk'], lp['bv']])),
            pad_row(lp['bo']),
            pad_row(lp['ln1w']), pad_row(lp['ln1b']),
            pad_row(lp['b1']),
            pad_row(lp['b2']),
            pad_row(lp['ln2w']), pad_row(lp['ln2b']),
        ]))

    head_pack = jnp.concatenate([
        params['proj_w'].T,                       # (E, C)
        params['proj_b'][None, :],
        params['bn_g'][None, :],
        params['bn_b'][None, :],
        params['conv_w'].reshape(C, C).T,         # (C, C)
        params['conv_b'][None, :],
    ], axis=0).astype(jnp.float32)                # (E+C+4, C)

    kmat_t = jnp.kron(bilinear_interp_matrix(H, h),
                      bilinear_interp_matrix(W, w)).T                    # (N, H*W)

    return {
        'pw_t': pw_t, 'pos_b': pos_b,
        'wqkv': jnp.stack(wqkv_all), 'wo': jnp.stack(wo_all),
        'w1': jnp.stack(w1_all), 'w2': jnp.stack(w2_all),
        'lbias': jnp.stack(lbias),
        'head': head_pack, 'kmat': kmat_t,
    }


# ----------------------------- jitted forward -----------------------------

@functools.partial(jax.jit, static_argnames=("patch", "num_heads"))
def previt_forward(x, packed, patch, num_heads):
    B, C, H, W = x.shape
    E = packed['pos_b'].shape[1]
    num_layers = packed['wqkv'].shape[0]
    h, w = H // patch, W // patch
    N = h * w

    # patch extraction (layout only) — the only per-call host-side prep.
    patches = (x.reshape(B, C, h, patch, w, patch)
                 .transpose(0, 2, 4, 1, 3, 5)
                 .reshape(B * N, C * patch * patch)).astype(jnp.bfloat16)

    ins = [patches, packed['pw_t'], packed['pos_b'],
           packed['wqkv'], packed['wo'], packed['w1'], packed['w2'],
           packed['lbias'], packed['head'], packed['kmat']]

    full = lambda s: pl.BlockSpec(s, lambda i: (0,) * len(s))
    kernel = make_previt_kernel(B, N, E, num_heads, C, num_layers)

    z = pl.pallas_call(
        kernel,
        out_shape=jax.ShapeDtypeStruct((B * C, H * W), jnp.float32),
        grid=(1,),
        in_specs=[full(a.shape) for a in ins],
        out_specs=full((B * C, H * W)),
        compiler_params=pltpu.CompilerParams(dimension_semantics=("arbitrary",)),
    )(*ins)

    return z.reshape(B, C, H, W)


# ----------------------------- parameter init -----------------------------

def init_params(key, C, img, patch, E, num_layers, num_heads):
    keys = iter(jax.random.split(key, 8 + 16 * num_layers))

    def nrm(shape, s=0.02):
        return s * jax.random.normal(next(keys), shape, jnp.float32)

    params = {
        'patch_w': nrm((E, C, patch, patch)),
        'patch_b': nrm((E,)),
        'pos_embed': nrm((1, (img // patch) ** 2, E)),
        'proj_w': nrm((C, E)),
        'proj_b': nrm((C,)),
        'bn_g': jnp.ones((C,), jnp.float32),
        'bn_b': jnp.zeros((C,), jnp.float32),
        'conv_w': nrm((C, C, 1, 1)),
        'conv_b': nrm((C,)),
        'layers': [],
    }
    for _ in range(num_layers):
        params['layers'].append({
            'wq': nrm((E, E)), 'wk': nrm((E, E)), 'wv': nrm((E, E)),
            'bq': nrm((E,)), 'bk': nrm((E,)), 'bv': nrm((E,)),
            'wo': nrm((E, E)), 'bo': nrm((E,)),
            'ln1w': jnp.ones((E,), jnp.float32), 'ln1b': jnp.zeros((E,), jnp.float32),
            'ln2w': jnp.ones((E,), jnp.float32), 'ln2b': jnp.zeros((E,), jnp.float32),
            'w1': nrm((FFN_DIM, E)), 'b1': nrm((FFN_DIM,)),
            'w2': nrm((E, FFN_DIM)), 'b2': nrm((E,)),
        })
    return params


if __name__ == "__main__":
    B, C, IMG, PATCH, EMBED, LAYERS, HEADS = 2, 4, 16, 4, 32, 2, 4
    key = jax.random.PRNGKey(0)
    kx, kp = jax.random.split(key)
    x = jax.random.normal(kx, (B, C, IMG, IMG), jnp.float32)
    params = init_params(kp, C, IMG, PATCH, EMBED, LAYERS, HEADS)

    # One-time packing (hoisted out of the per-call forward).
    packed = jax.tree_util.tree_map(jax.block_until_ready,
                                    pack_params(params, B, C, IMG, IMG, PATCH, HEADS))

    out = previt_forward(x, packed, patch=PATCH, num_heads=HEADS)
    out = jax.block_until_ready(out)
    assert out.shape == (B, C, IMG, IMG), out.shape
    assert jnp.all(jnp.isfinite(out))
    print("KERNEL_OK")
</pallas_src>

<mosaic_0001>
module attributes {stable_mosaic.version = 11 : i64} {
  func.func @kernel(%arg0: i32, %arg1: memref<32x64xbf16, #tpu.memory_space<vmem>>, %arg2: memref<64x32xbf16, #tpu.memory_space<vmem>>, %arg3: memref<32x32xf32, #tpu.memory_space<vmem>>, %arg4: memref<2x32x96xbf16, #tpu.memory_space<vmem>>, %arg5: memref<2x32x32xbf16, #tpu.memory_space<vmem>>, %arg6: memref<2x32x2048xbf16, #tpu.memory_space<vmem>>, %arg7: memref<2x2048x32xbf16, #tpu.memory_space<vmem>>, %arg8: memref<2x8x2048xf32, #tpu.memory_space<vmem>>, %arg9: memref<40x4xf32, #tpu.memory_space<vmem>>, %arg10: memref<16x256xf32, #tpu.memory_space<vmem>>, %arg11: memref<8x256xf32, #tpu.memory_space<vmem>>) attributes {dimension_semantics = [#tpu.dimension_semantics<arbitrary>], iteration_bounds = array<i64: 1>, scalar_prefetch = 0 : i64, scratch_operands = 0 : i64, tpu.core_type = #tpu.core_type<tc>, window_params = [{pipeline_mode = #tpu.pipeline_mode<synchronous>, transform_indices = @transform_0, window_bounds = array<i64: 32, 64>}, {pipeline_mode = #tpu.pipeline_mode<synchronous>, transform_indices = @transform_1, window_bounds = array<i64: 64, 32>}, {pipeline_mode = #tpu.pipeline_mode<synchronous>, transform_indices = @transform_2, window_bounds = array<i64: 32, 32>}, {pipeline_mode = #tpu.pipeline_mode<synchronous>, transform_indices = @transform_3, window_bounds = array<i64: 2, 32, 96>}, {pipeline_mode = #tpu.pipeline_mode<synchronous>, transform_indices = @transform_4, window_bounds = array<i64: 2, 32, 32>}, {pipeline_mode = #tpu.pipeline_mode<synchronous>, transform_indices = @transform_5, window_bounds = array<i64: 2, 32, 2048>}, {pipeline_mode = #tpu.pipeline_mode<synchronous>, transform_indices = @transform_6, window_bounds = array<i64: 2, 2048, 32>}, {pipeline_mode = #tpu.pipeline_mode<synchronous>, transform_indices = @transform_7, window_bounds = array<i64: 2, 8, 2048>}, {pipeline_mode = #tpu.pipeline_mode<synchronous>, transform_indices = @transform_8, window_bounds = array<i64: 40, 4>}, {pipeline_mode = #tpu.pipeline_mode<synchronous>, transform_indices = @transform_9, window_bounds = array<i64: 16, 256>}, {pipeline_mode = #tpu.pipeline_mode<synchronous>, transform_indices = @transform_10, window_bounds = array<i64: 8, 256>}]} {
    %c0 = arith.constant 0 : index
    %c0_0 = arith.constant 0 : index
    %0 = vector.load %arg1[%c0, %c0_0] : memref<32x64xbf16, #tpu.memory_space<vmem>>, vector<32x64xbf16>
    %c0_1 = arith.constant 0 : index
    %c0_2 = arith.constant 0 : index
    %1 = vector.load %arg2[%c0_1, %c0_2] : memref<64x32xbf16, #tpu.memory_space<vmem>>, vector<64x32xbf16>
    %cst = arith.constant dense<0.000000e+00> : vector<32x32xf32>
    %2 = tpu.matmul %0, %1, %cst {dimension_numbers = #tpu.dot_dimension_numbers<[1], [0], [0], [1], [0, 0, 1, 1], [], []>} : vector<32x64xbf16>, vector<64x32xbf16>, vector<32x32xf32> -> vector<32x32xf32>
    %c0_3 = arith.constant 0 : index
    %c0_4 = arith.constant 0 : index
    %3 = vector.load %arg3[%c0_3, %c0_4] : memref<32x32xf32, #tpu.memory_space<vmem>>, vector<32x32xf32>
    %4 = arith.addf %2, %3 : vector<32x32xf32>
    %c0_5 = arith.constant 0 : index
    %c0_6 = arith.constant 0 : index
    %c0_7 = arith.constant 0 : index
    %5 = vector.load %arg4[%c0_5, %c0_6, %c0_7] : memref<2x32x96xbf16, #tpu.memory_space<vmem>>, vector<1x32x96xbf16>
    %6 = vector.shape_cast %5 : vector<1x32x96xbf16> to vector<32x96xbf16>
    %c0_8 = arith.constant 0 : index
    %c0_9 = arith.constant 0 : index
    %c0_10 = arith.constant 0 : index
    %7 = vector.load %arg5[%c0_8, %c0_9, %c0_10] : memref<2x32x32xbf16, #tpu.memory_space<vmem>>, vector<1x32x32xbf16>
    %8 = vector.shape_cast %7 : vector<1x32x32xbf16> to vector<32x32xbf16>
    %c0_11 = arith.constant 0 : index
    %c0_12 = arith.constant 0 : index
    %c0_13 = arith.constant 0 : index
    %9 = vector.load %arg6[%c0_11, %c0_12, %c0_13] : memref<2x32x2048xbf16, #tpu.memory_space<vmem>>, vector<1x32x2048xbf16>
    %10 = vector.shape_cast %9 : vector<1x32x2048xbf16> to vector<32x2048xbf16>
    %c0_14 = arith.constant 0 : index
    %c0_15 = arith.constant 0 : index
    %c0_16 = arith.constant 0 : index
    %11 = vector.load %arg7[%c0_14, %c0_15, %c0_16] : memref<2x2048x32xbf16, #tpu.memory_space<vmem>>, vector<1x2048x32xbf16>
    %12 = vector.shape_cast %11 : vector<1x2048x32xbf16> to vector<2048x32xbf16>
    %c0_17 = arith.constant 0 : index
    %c0_18 = arith.constant 0 : index
    %c0_19 = arith.constant 0 : index
    %13 = vector.load %arg8[%c0_17, %c0_18, %c0_19] : memref<2x8x2048xf32, #tpu.memory_space<vmem>>, vector<1x8x2048xf32>
    %14 = vector.shape_cast %13 : vector<1x8x2048xf32> to vector<8x2048xf32>
    %15 = vector.extract_strided_slice %14 {offsets = [0, 0], sizes = [1, 96], strides = [1, 1]} : vector<8x2048xf32> to vector<1x96xf32>
    %16 = vector.extract_strided_slice %14 {offsets = [1, 0], sizes = [1, 32], strides = [1, 1]} : vector<8x2048xf32> to vector<1x32xf32>
    %17 = vector.extract_strided_slice %14 {offsets = [2, 0], sizes = [1, 32], strides = [1, 1]} : vector<8x2048xf32> to vector<1x32xf32>
    %18 = vector.extract_strided_slice %14 {offsets = [3, 0], sizes = [1, 32], strides = [1, 1]} : vector<8x2048xf32> to vector<1x32xf32>
    %19 = vector.extract_strided_slice %14 {offsets = [4, 0], sizes = [1, 2048], strides = [1, 1]} : vector<8x2048xf32> to vector<1x2048xf32>
    %20 = vector.extract_strided_slice %14 {offsets = [5, 0], sizes = [1, 32], strides = [1, 1]} : vector<8x2048xf32> to vector<1x32xf32>
    %21 = vector.extract_strided_slice %14 {offsets = [6, 0], sizes = [1, 32], strides = [1, 1]} : vector<8x2048xf32> to vector<1x32xf32>
    %22 = vector.extract_strided_slice %14 {offsets = [7, 0], sizes = [1, 32], strides = [1, 1]} : vector<8x2048xf32> to vector<1x32xf32>
    %23 = arith.truncf %4 : vector<32x32xf32> to vector<32x32xbf16>
    %cst_20 = arith.constant dense<0.000000e+00> : vector<32x96xf32>
    %24 = tpu.matmul %23, %6, %cst_20 {dimension_numbers = #tpu.dot_dimension_numbers<[1], [0], [0], [1], [0, 0, 1, 1], [], []>} : vector<32x32xbf16>, vector<32x96xbf16>, vector<32x96xf32> -> vector<32x96xf32>
    %25 = vector.broadcast %15 : vector<1x96xf32> to vector<32x96xf32>
    %26 = arith.addf %24, %25 : vector<32x96xf32>
    %27 = vector.extract_strided_slice %26 {offsets = [0, 0], sizes = [32, 8], strides = [1, 1]} : vector<32x96xf32> to vector<32x8xf32>
    %28 = vector.shape_cast %27 : vector<32x8xf32> to vector<2x16x8xf32>
    %29 = vector.extract_strided_slice %26 {offsets = [0, 32], sizes = [32, 8], strides = [1, 1]} : vector<32x96xf32> to vector<32x8xf32>
    %30 = vector.shape_cast %29 : vector<32x8xf32> to vector<2x16x8xf32>
    %31 = vector.extract_strided_slice %26 {offsets = [0, 64], sizes = [32, 8], strides = [1, 1]} : vector<32x96xf32> to vector<32x8xf32>
    %32 = vector.shape_cast %31 : vector<32x8xf32> to vector<2x16x8xf32>
    "tpu.trace_start"() <{level = 10 : i32, message = "bsd,btd->bst"}> : () -> ()
    %cst_21 = arith.constant dense<0.000000e+00> : vector<2x16x16xf32>
    %33 = tpu.matmul %28, %30, %cst_21 {dimension_numbers = #tpu.dot_dimension_numbers<[2], [2], [1], [1], [0, 0, 0, 1, 1, 1], [0], [0]>} : vector<2x16x8xf32>, vector<2x16x8xf32>, vector<2x16x16xf32> -> vector<2x16x16xf32>
    "tpu.trace_stop"() : () -> ()
    %cst_22 = arith.constant dense<0xFF800000> : vector<2x16xf32>
    %34 = vector.multi_reduction <maximumf>, %33, %cst_22 [2] : vector<2x16x16xf32> to vector<2x16xf32>
    %35 = vector.shape_cast %34 : vector<2x16xf32> to vector<2x16x1xf32>
    %36 = vector.broadcast %35 : vector<2x16x1xf32> to vector<2x16x16xf32>
    %37 = arith.subf %33, %36 : vector<2x16x16xf32>
    %38 = math.exp %37 : vector<2x16x16xf32>
    %cst_23 = arith.constant dense<0.000000e+00> : vector<2x16xf32>
    %39 = vector.multi_reduction <add>, %38, %cst_23 [2] : vector<2x16x16xf32> to vector<2x16xf32>
    %40 = vector.shape_cast %39 : vector<2x16xf32> to vector<2x16x1xf32>
    %41 = tpu.reciprocal %40 {approx = true} : vector<2x16x1xf32> -> vector<2x16x1xf32>
    %42 = vector.broadcast %41 : vector<2x16x1xf32> to vector<2x16x16xf32>
    %43 = arith.mulf %38, %42 : vector<2x16x16xf32>
    "tpu.trace_start"() <{level = 10 : i32, message = "bst,btd->bsd"}> : () -> ()
    %cst_24 = arith.constant dense<0.000000e+00> : vector<2x16x8xf32>
    %44 = tpu.matmul %43, %32, %cst_24 {dimension_numbers = #tpu.dot_dimension_numbers<[2], [1], [1], [2], [0, 0, 0, 1, 1, 2], [0], [0]>} : vector<2x16x16xf32>, vector<2x16x8xf32>, vector<2x16x8xf32> -> vector<2x16x8xf32>
    "tpu.trace_stop"() : () -> ()
    %45 = vector.extract_strided_slice %26 {offsets = [0, 8], sizes = [32, 8], strides = [1, 1]} : vector<32x96xf32> to vector<32x8xf32>
    %46 = vector.shape_cast %45 : vector<32x8xf32> to vector<2x16x8xf32>
    %47 = vector.extract_strided_slice %26 {offsets = [0, 40], sizes = [32, 8], strides = [1, 1]} : vector<32x96xf32> to vector<32x8xf32>
    %48 = vector.shape_cast %47 : vector<32x8xf32> to vector<2x16x8xf32>
    %49 = vector.extract_strided_slice %26 {offsets = [0, 72], sizes = [32, 8], strides = [1, 1]} : vector<32x96xf32> to vector<32x8xf32>
    %50 = vector.shape_cast %49 : vector<32x8xf32> to vector<2x16x8xf32>
    "tpu.trace_start"() <{level = 10 : i32, message = "bsd,btd->bst"}> : () -> ()
    %cst_25 = arith.constant dense<0.000000e+00> : vector<2x16x16xf32>
    %51 = tpu.matmul %46, %48, %cst_25 {dimension_numbers = #tpu.dot_dimension_numbers<[2], [2], [1], [1], [0, 0, 0, 1, 1, 1], [0], [0]>} : vector<2x16x8xf32>, vector<2x16x8xf32>, vector<2x16x16xf32> -> vector<2x16x16xf32>
    "tpu.trace_stop"() : () -> ()
    %cst_26 = arith.constant dense<0xFF800000> : vector<2x16xf32>
    %52 = vector.multi_reduction <maximumf>, %51, %cst_26 [2] : vector<2x16x16xf32> to vector<2x16xf32>
    %53 = vector.shape_cast %52 : vector<2x16xf32> to vector<2x16x1xf32>
    %54 = vector.broadcast %53 : vector<2x16x1xf32> to vector<2x16x16xf32>
    %55 = arith.subf %51, %54 : vector<2x16x16xf32>
    %56 = math.exp %55 : vector<2x16x16xf32>
    %cst_27 = arith.constant dense<0.000000e+00> : vector<2x16xf32>
    %57 = vector.multi_reduction <add>, %56, %cst_27 [2] : vector<2x16x16xf32> to vector<2x16xf32>
    %58 = vector.shape_cast %57 : vector<2x16xf32> to vector<2x16x1xf32>
    %59 = tpu.reciprocal %58 {approx = true} : vector<2x16x1xf32> -> vector<2x16x1xf32>
    %60 = vector.broadcast %59 : vector<2x16x1xf32> to vector<2x16x16xf32>
    %61 = arith.mulf %56, %60 : vector<2x16x16xf32>
    "tpu.trace_start"() <{level = 10 : i32, message = "bst,btd->bsd"}> : () -> ()
    %cst_28 = arith.constant dense<0.000000e+00> : vector<2x16x8xf32>
    %62 = tpu.matmul %61, %50, %cst_28 {dimension_numbers = #tpu.dot_dimension_numbers<[2], [1], [1], [2], [0, 0, 0, 1, 1, 2], [0], [0]>} : vector<2x16x16xf32>, vector<2x16x8xf32>, vector<2x16x8xf32> -> vector<2x16x8xf32>
    "tpu.trace_stop"() : () -> ()
    %63 = vector.extract_strided_slice %26 {offsets = [0, 16], sizes = [32, 8], strides = [1, 1]} : vector<32x96xf32> to vector<32x8xf32>
    %64 = vector.shape_cast %63 : vector<32x8xf32> to vector<2x16x8xf32>
    %65 = vector.extract_strided_slice %26 {offsets = [0, 48], sizes = [32, 8], strides = [1, 1]} : vector<32x96xf32> to vector<32x8xf32>
    %66 = vector.shape_cast %65 : vector<32x8xf32> to vector<2x16x8xf32>
    %67 = vector.extract_strided_slice %26 {offsets = [0, 80], sizes = [32, 8], strides = [1, 1]} : vector<32x96xf32> to vector<32x8xf32>
    %68 = vector.shape_cast %67 : vector<32x8xf32> to vector<2x16x8xf32>
    "tpu.trace_start"() <{level = 10 : i32, message = "bsd,btd->bst"}> : () -> ()
    %cst_29 = arith.constant dense<0.000000e+00> : vector<2x16x16xf32>
    %69 = tpu.matmul %64, %66, %cst_29 {dimension_numbers = #tpu.dot_dimension_numbers<[2], [2], [1], [1], [0, 0, 0, 1, 1, 1], [0], [0]>} : vector<2x16x8xf32>, vector<2x16x8xf32>, vector<2x16x16xf32> -> vector<2x16x16xf32>
    "tpu.trace_stop"() : () -> ()
    %cst_30 = arith.constant dense<0xFF800000> : vector<2x16xf32>
    %70 = vector.multi_reduction <maximumf>, %69, %cst_30 [2] : vector<2x16x16xf32> to vector<2x16xf32>
    %71 = vector.shape_cast %70 : vector<2x16xf32> to vector<2x16x1xf32>
    %72 = vector.broadcast %71 : vector<2x16x1xf32> to vector<2x16x16xf32>
    %73 = arith.subf %69, %72 : vector<2x16x16xf32>
    %74 = math.exp %73 : vector<2x16x16xf32>
    %cst_31 = arith.constant dense<0.000000e+00> : vector<2x16xf32>
    %75 = vector.multi_reduction <add>, %74, %cst_31 [2] : vector<2x16x16xf32> to vector<2x16xf32>
    %76 = vector.shape_cast %75 : vector<2x16xf32> to vector<2x16x1xf32>
    %77 = tpu.reciprocal %76 {approx = true} : vector<2x16x1xf32> -> vector<2x16x1xf32>
    %78 = vector.broadcast %77 : vector<2x16x1xf32> to vector<2x16x16xf32>
    %79 = arith.mulf %74, %78 : vector<2x16x16xf32>
    "tpu.trace_start"() <{level = 10 : i32, message = "bst,btd->bsd"}> : () -> ()
    %cst_32 = arith.constant dense<0.000000e+00> : vector<2x16x8xf32>
    %80 = tpu.matmul %79, %68, %cst_32 {dimension_numbers = #tpu.dot_dimension_numbers<[2], [1], [1], [2], [0, 0, 0, 1, 1, 2], [0], [0]>} : vector<2x16x16xf32>, vector<2x16x8xf32>, vector<2x16x8xf32> -> vector<2x16x8xf32>
    "tpu.trace_stop"() : () -> ()
    %81 = vector.extract_strided_slice %26 {offsets = [0, 24], sizes = [32, 8], strides = [1, 1]} : vector<32x96xf32> to vector<32x8xf32>
    %82 = vector.shape_cast %81 : vector<32x8xf32> to vector<2x16x8xf32>
    %83 = vector.extract_strided_slice %26 {offsets = [0, 56], sizes = [32, 8], strides = [1, 1]} : vector<32x96xf32> to vector<32x8xf32>
    %84 = vector.shape_cast %83 : vector<32x8xf32> to vector<2x16x8xf32>
    %85 = vector.extract_strided_slice %26 {offsets = [0, 88], sizes = [32, 8], strides = [1, 1]} : vector<32x96xf32> to vector<32x8xf32>
    %86 = vector.shape_cast %85 : vector<32x8xf32> to vector<2x16x8xf32>
    "tpu.trace_start"() <{level = 10 : i32, message = "bsd,btd->bst"}> : () -> ()
    %cst_33 = arith.constant dense<0.000000e+00> : vector<2x16x16xf32>
    %87 = tpu.matmul %82, %84, %cst_33 {dimension_numbers = #tpu.dot_dimension_numbers<[2], [2], [1], [1], [0, 0, 0, 1, 1, 1], [0], [0]>} : vector<2x16x8xf32>, vector<2x16x8xf32>, vector<2x16x16xf32> -> vector<2x16x16xf32>
    "tpu.trace_stop"() : () -> ()
    %cst_34 = arith.constant dense<0xFF800000> : vector<2x16xf32>
    %88 = vector.multi_reduction <maximumf>, %87, %cst_34 [2] : vector<2x16x16xf32> to vector<2x16xf32>
    %89 = vector.shape_cast %88 : vector<2x16xf32> to vector<2x16x1xf32>
    %90 = vector.broadcast %89 : vector<2x16x1xf32> to vector<2x16x16xf32>
    %91 = arith.subf %87, %90 : vector<2x16x16xf32>
    %92 = math.exp %91 : vector<2x16x16xf32>
    %cst_35 = arith.constant dense<0.000000e+00> : vector<2x16xf32>
    %93 = vector.multi_reduction <add>, %92, %cst_35 [2] : vector<2x16x16xf32> to vector<2x16xf32>
    %94 = vector.shape_cast %93 : vector<2x16xf32> to vector<2x16x1xf32>
    %95 = tpu.reciprocal %94 {approx = true} : vector<2x16x1xf32> -> vector<2x16x1xf32>
    %96 = vector.broadcast %95 : vector<2x16x1xf32> to vector<2x16x16xf32>
    %97 = arith.mulf %92, %96 : vector<2x16x16xf32>
    "tpu.trace_start"() <{level = 10 : i32, message = "bst,btd->bsd"}> : () -> ()
    %cst_36 = arith.constant dense<0.000000e+00> : vector<2x16x8xf32>
    %98 = tpu.matmul %97, %86, %cst_36 {dimension_numbers = #tpu.dot_dimension_numbers<[2], [1], [1], [2], [0, 0, 0, 1, 1, 2], [0], [0]>} : vector<2x16x16xf32>, vector<2x16x8xf32>, vector<2x16x8xf32> -> vector<2x16x8xf32>
    "tpu.trace_stop"() : () -> ()
    %99 = tpu.concatenate %44, %62, %80, %98 in 2 : vector<2x16x8xf32>, vector<2x16x8xf32>, vector<2x16x8xf32>, vector<2x16x8xf32> -> vector<2x16x32xf32>
    %100 = vector.shape_cast %99 : vector<2x16x32xf32> to vector<32x32xf32>
    %101 = arith.truncf %100 : vector<32x32xf32> to vector<32x32xbf16>
    %cst_37 = arith.constant dense<0.000000e+00> : vector<32x32xf32>
    %102 = tpu.matmul %101, %8, %cst_37 {dimension_numbers = #tpu.dot_dimension_numbers<[1], [0], [0], [1], [0, 0, 1, 1], [], []>} : vector<32x32xbf16>, vector<32x32xbf16>, vector<32x32xf32> -> vector<32x32xf32>
    %103 = vector.broadcast %16 : vector<1x32xf32> to vector<32x32xf32>
    %104 = arith.addf %102, %103 : vector<32x32xf32>
    %105 = arith.addf %4, %104 : vector<32x32xf32>
    %cst_38 = arith.constant dense<0.000000e+00> : vector<32xf32>
    %106 = vector.multi_reduction <add>, %105, %cst_38 [1] : vector<32x32xf32> to vector<32xf32>
    %107 = vector.shape_cast %106 : vector<32xf32> to vector<32x1xf32>
    %cst_39 = arith.constant 3.200000e+01 : f32
    %108 = vector.broadcast %cst_39 : f32 to vector<32x1xf32>
    %109 = arith.divf %107, %108 : vector<32x1xf32>
    %110 = vector.broadcast %109 : vector<32x1xf32> to vector<32x32xf32>
    %111 = arith.subf %105, %110 : vector<32x32xf32>
    %112 = arith.mulf %111, %111 : vector<32x32xf32>
    %cst_40 = arith.constant dense<0.000000e+00> : vector<32xf32>
    %113 = vector.multi_reduction <add>, %112, %cst_40 [1] : vector<32x32xf32> to vector<32xf32>
    %114 = vector.shape_cast %113 : vector<32xf32> to vector<32x1xf32>
    %cst_41 = arith.constant 3.200000e+01 : f32
    %115 = vector.broadcast %cst_41 : f32 to vector<32x1xf32>
    %116 = arith.divf %114, %115 : vector<32x1xf32>
    %117 = vector.broadcast %109 : vector<32x1xf32> to vector<32x32xf32>
    %118 = arith.subf %105, %117 : vector<32x32xf32>
    %cst_42 = arith.constant 9.99999974E-6 : f32
    %119 = vector.broadcast %cst_42 : f32 to vector<32x1xf32>
    %120 = arith.addf %116, %119 : vector<32x1xf32>
    %121 = math.rsqrt %120 : vector<32x1xf32>
    %122 = vector.broadcast %121 : vector<32x1xf32> to vector<32x32xf32>
    %123 = arith.mulf %118, %122 : vector<32x32xf32>
    %124 = vector.broadcast %17 : vector<1x32xf32> to vector<32x32xf32>
    %125 = arith.mulf %123, %124 : vector<32x32xf32>
    %126 = vector.broadcast %18 : vector<1x32xf32> to vector<32x32xf32>
    %127 = arith.addf %125, %126 : vector<32x32xf32>
    %128 = arith.truncf %127 : vector<32x32xf32> to vector<32x32xbf16>
    %cst_43 = arith.constant dense<0.000000e+00> : vector<32x2048xf32>
    %129 = tpu.matmul %128, %10, %cst_43 {dimension_numbers = #tpu.dot_dimension_numbers<[1], [0], [0], [1], [0, 0, 1, 1], [], []>} : vector<32x32xbf16>, vector<32x2048xbf16>, vector<32x2048xf32> -> vector<32x2048xf32>
    %130 = vector.broadcast %19 : vector<1x2048xf32> to vector<32x2048xf32>
    %131 = arith.addf %129, %130 : vector<32x2048xf32>
    %cst_44 = arith.constant 0.000000e+00 : f32
    %132 = vector.broadcast %cst_44 : f32 to vector<32x2048xf32>
    %133 = arith.maximumf %131, %132 : vector<32x2048xf32>
    %134 = arith.truncf %133 : vector<32x2048xf32> to vector<32x2048xbf16>
    %cst_45 = arith.constant dense<0.000000e+00> : vector<32x32xf32>
    %135 = tpu.matmul %134, %12, %cst_45 {dimension_numbers = #tpu.dot_dimension_numbers<[1], [0], [0], [1], [0, 0, 1, 1], [], []>} : vector<32x2048xbf16>, vector<2048x32xbf16>, vector<32x32xf32> -> vector<32x32xf32>
    %136 = vector.broadcast %20 : vector<1x32xf32> to vector<32x32xf32>
    %137 = arith.addf %135, %136 : vector<32x32xf32>
    %138 = arith.addf %127, %137 : vector<32x32xf32>
    %cst_46 = arith.constant dense<0.000000e+00> : vector<32xf32>
    %139 = vector.multi_reduction <add>, %138, %cst_46 [1] : vector<32x32xf32> to vector<32xf32>
    %140 = vector.shape_cast %139 : vector<32xf32> to vector<32x1xf32>
    %cst_47 = arith.constant 3.200000e+01 : f32
    %141 = vector.broadcast %cst_47 : f32 to vector<32x1xf32>
    %142 = arith.divf %140, %141 : vector<32x1xf32>
    %143 = vector.broadcast %142 : vector<32x1xf32> to vector<32x32xf32>
    %144 = arith.subf %138, %143 : vector<32x32xf32>
    %145 = arith.mulf %144, %144 : vector<32x32xf32>
    %cst_48 = arith.constant dense<0.000000e+00> : vector<32xf32>
    %146 = vector.multi_reduction <add>, %145, %cst_48 [1] : vector<32x32xf32> to vector<32xf32>
    %147 = vector.shape_cast %146 : vector<32xf32> to vector<32x1xf32>
    %cst_49 = arith.constant 3.200000e+01 : f32
    %148 = vector.broadcast %cst_49 : f32 to vector<32x1xf32>
    %149 = arith.divf %147, %148 : vector<32x1xf32>
    %150 = vector.broadcast %142 : vector<32x1xf32> to vector<32x32xf32>
    %151 = arith.subf %138, %150 : vector<32x32xf32>
    %cst_50 = arith.constant 9.99999974E-6 : f32
    %152 = vector.broadcast %cst_50 : f32 to vector<32x1xf32>
    %153 = arith.addf %149, %152 : vector<32x1xf32>
    %154 = math.rsqrt %153 : vector<32x1xf32>
    %155 = vector.broadcast %154 : vector<32x1xf32> to vector<32x32xf32>
    %156 = arith.mulf %151, %155 : vector<32x32xf32>
    %157 = vector.broadcast %21 : vector<1x32xf32> to vector<32x32xf32>
    %158 = arith.mulf %156, %157 : vector<32x32xf32>
    %159 = vector.broadcast %22 : vector<1x32xf32> to vector<32x32xf32>
    %160 = arith.addf %158, %159 : vector<32x32xf32>
    %c1 = arith.constant 1 : index
    %c0_51 = arith.constant 0 : index
    %c0_52 = arith.constant 0 : index
    %161 = vector.load %arg4[%c1, %c0_51, %c0_52] : memref<2x32x96xbf16, #tpu.memory_space<vmem>>, vector<1x32x96xbf16>
    %162 = vector.shape_cast %161 : vector<1x32x96xbf16> to vector<32x96xbf16>
    %c1_53 = arith.constant 1 : index
    %c0_54 = arith.constant 0 : index
    %c0_55 = arith.constant 0 : index
    %163 = vector.load %arg5[%c1_53, %c0_54, %c0_55] : memref<2x32x32xbf16, #tpu.memory_space<vmem>>, vector<1x32x32xbf16>
    %164 = vector.shape_cast %163 : vector<1x32x32xbf16> to vector<32x32xbf16>
    %c1_56 = arith.constant 1 : index
    %c0_57 = arith.constant 0 : index
    %c0_58 = arith.constant 0 : index
    %165 = vector.load %arg6[%c1_56, %c0_57, %c0_58] : memref<2x32x2048xbf16, #tpu.memory_space<vmem>>, vector<1x32x2048xbf16>
    %166 = vector.shape_cast %165 : vector<1x32x2048xbf16> to vector<32x2048xbf16>
    %c1_59 = arith.constant 1 : index
    %c0_60 = arith.constant 0 : index
    %c0_61 = arith.constant 0 : index
    %167 = vector.load %arg7[%c1_59, %c0_60, %c0_61] : memref<2x2048x32xbf16, #tpu.memory_space<vmem>>, vector<1x2048x32xbf16>
    %168 = vector.shape_cast %167 : vector<1x2048x32xbf16> to vector<2048x32xbf16>
    %c1_62 = arith.constant 1 : index
    %c0_63 = arith.constant 0 : index
    %c0_64 = arith.constant 0 : index
    %169 = vector.load %arg8[%c1_62, %c0_63, %c0_64] : memref<2x8x2048xf32, #tpu.memory_space<vmem>>, vector<1x8x2048xf32>
    %170 = vector.shape_cast %169 : vector<1x8x2048xf32> to vector<8x2048xf32>
    %171 = vector.extract_strided_slice %170 {offsets = [0, 0], sizes = [1, 96], strides = [1, 1]} : vector<8x2048xf32> to vector<1x96xf32>
    %172 = vector.extract_strided_slice %170 {offsets = [1, 0], sizes = [1, 32], strides = [1, 1]} : vector<8x2048xf32> to vector<1x32xf32>
    %173 = vector.extract_strided_slice %170 {offsets = [2, 0], sizes = [1, 32], strides = [1, 1]} : vector<8x2048xf32> to vector<1x32xf32>
    %174 = vector.extract_strided_slice %170 {offsets = [3, 0], sizes = [1, 32], strides = [1, 1]} : vector<8x2048xf32> to vector<1x32xf32>
    %175 = vector.extract_strided_slice %170 {offsets = [4, 0], sizes = [1, 2048], strides = [1, 1]} : vector<8x2048xf32> to vector<1x2048xf32>
    %176 = vector.extract_strided_slice %170 {offsets = [5, 0], sizes = [1, 32], strides = [1, 1]} : vector<8x2048xf32> to vector<1x32xf32>
    %177 = vector.extract_strided_slice %170 {offsets = [6, 0], sizes = [1, 32], strides = [1, 1]} : vector<8x2048xf32> to vector<1x32xf32>
    %178 = vector.extract_strided_slice %170 {offsets = [7, 0], sizes = [1, 32], strides = [1, 1]} : vector<8x2048xf32> to vector<1x32xf32>
    %179 = arith.truncf %160 : vector<32x32xf32> to vector<32x32xbf16>
    %cst_65 = arith.constant dense<0.000000e+00> : vector<32x96xf32>
    %180 = tpu.matmul %179, %162, %cst_65 {dimension_numbers = #tpu.dot_dimension_numbers<[1], [0], [0], [1], [0, 0, 1, 1], [], []>} : vector<32x32xbf16>, vector<32x96xbf16>, vector<32x96xf32> -> vector<32x96xf32>
    %181 = vector.broadcast %171 : vector<1x96xf32> to vector<32x96xf32>
    %182 = arith.addf %180, %181 : vector<32x96xf32>
    %183 = vector.extract_strided_slice %182 {offsets = [0, 0], sizes = [32, 8], strides = [1, 1]} : vector<32x96xf32> to vector<32x8xf32>
    %184 = vector.shape_cast %183 : vector<32x8xf32> to vector<2x16x8xf32>
    %185 = vector.extract_strided_slice %182 {offsets = [0, 32], sizes = [32, 8], strides = [1, 1]} : vector<32x96xf32> to vector<32x8xf32>
    %186 = vector.shape_cast %185 : vector<32x8xf32> to vector<2x16x8xf32>
    %187 = vector.extract_strided_slice %182 {offsets = [0, 64], sizes = [32, 8], strides = [1, 1]} : vector<32x96xf32> to vector<32x8xf32>
    %188 = vector.shape_cast %187 : vector<32x8xf32> to vector<2x16x8xf32>
    "tpu.trace_start"() <{level = 10 : i32, message = "bsd,btd->bst"}> : () -> ()
    %cst_66 = arith.constant dense<0.000000e+00> : vector<2x16x16xf32>
    %189 = tpu.matmul %184, %186, %cst_66 {dimension_numbers = #tpu.dot_dimension_numbers<[2], [2], [1], [1], [0, 0, 0, 1, 1, 1], [0], [0]>} : vector<2x16x8xf32>, vector<2x16x8xf32>, vector<2x16x16xf32> -> vector<2x16x16xf32>
    "tpu.trace_stop"() : () -> ()
    %cst_67 = arith.constant dense<0xFF800000> : vector<2x16xf32>
    %190 = vector.multi_reduction <maximumf>, %189, %cst_67 [2] : vector<2x16x16xf32> to vector<2x16xf32>
    %191 = vector.shape_cast %190 : vector<2x16xf32> to vector<2x16x1xf32>
    %192 = vector.broadcast %191 : vector<2x16x1xf32> to vector<2x16x16xf32>
    %193 = arith.subf %189, %192 : vector<2x16x16xf32>
    %194 = math.exp %193 : vector<2x16x16xf32>
    %cst_68 = arith.constant dense<0.000000e+00> : vector<2x16xf32>
    %195 = vector.multi_reduction <add>, %194, %cst_68 [2] : vector<2x16x16xf32> to vector<2x16xf32>
    %196 = vector.shape_cast %195 : vector<2x16xf32> to vector<2x16x1xf32>
    %197 = tpu.reciprocal %196 {approx = true} : vector<2x16x1xf32> -> vector<2x16x1xf32>
    %198 = vector.broadcast %197 : vector<2x16x1xf32> to vector<2x16x16xf32>
    %199 = arith.mulf %194, %198 : vector<2x16x16xf32>
    "tpu.trace_start"() <{level = 10 : i32, message = "bst,btd->bsd"}> : () -> ()
    %cst_69 = arith.constant dense<0.000000e+00> : vector<2x16x8xf32>
    %200 = tpu.matmul %199, %188, %cst_69 {dimension_numbers = #tpu.dot_dimension_numbers<[2], [1], [1], [2], [0, 0, 0, 1, 1, 2], [0], [0]>} : vector<2x16x16xf32>, vector<2x16x8xf32>, vector<2x16x8xf32> -> vector<2x16x8xf32>
    "tpu.trace_stop"() : () -> ()
    %201 = vector.extract_strided_slice %182 {offsets = [0, 8], sizes = [32, 8], strides = [1, 1]} : vector<32x96xf32> to vector<32x8xf32>
    %202 = vector.shape_cast %201 : vector<32x8xf32> to vector<2x16x8xf32>
    %203 = vector.extract_strided_slice %182 {offsets = [0, 40], sizes = [32, 8], strides = [1, 1]} : vector<32x96xf32> to vector<32x8xf32>
    %204 = vector.shape_cast %203 : vector<32x8xf32> to vector<2x16x8xf32>
    %205 = vector.extract_strided_slice %182 {offsets = [0, 72], sizes = [32, 8], strides = [1, 1]} : vector<32x96xf32> to vector<32x8xf32>
    %206 = vector.shape_cast %205 : vector<32x8xf32> to vector<2x16x8xf32>
    "tpu.trace_start"() <{level = 10 : i32, message = "bsd,btd->bst"}> : () -> ()
    %cst_70 = arith.constant dense<0.000000e+00> : vector<2x16x16xf32>
    %207 = tpu.matmul %202, %204, %cst_70 {dimension_numbers = #tpu.dot_dimension_numbers<[2], [2], [1], [1], [0, 0, 0, 1, 1, 1], [0], [0]>} : vector<2x16x8xf32>, vector<2x16x8xf32>, vector<2x16x16xf32> -> vector<2x16x16xf32>
    "tpu.trace_stop"() : () -> ()
    %cst_71 = arith.constant dense<0xFF800000> : vector<2x16xf32>
    %208 = vector.multi_reduction <maximumf>, %207, %cst_71 [2] : vector<2x16x16xf32> to vector<2x16xf32>
    %209 = vector.shape_cast %208 : vector<2x16xf32> to vector<2x16x1xf32>
    %210 = vector.broadcast %209 : vector<2x16x1xf32> to vector<2x16x16xf32>
    %211 = arith.subf %207, %210 : vector<2x16x16xf32>
    %212 = math.exp %211 : vector<2x16x16xf32>
    %cst_72 = arith.constant dense<0.000000e+00> : vector<2x16xf32>
    %213 = vector.multi_reduction <add>, %212, %cst_72 [2] : vector<2x16x16xf32> to vector<2x16xf32>
    %214 = vector.shape_cast %213 : vector<2x16xf32> to vector<2x16x1xf32>
    %215 = tpu.reciprocal %214 {approx = true} : vector<2x16x1xf32> -> vector<2x16x1xf32>
    %216 = vector.broadcast %215 : vector<2x16x1xf32> to vector<2x16x16xf32>
    %217 = arith.mulf %212, %216 : vector<2x16x16xf32>
    "tpu.trace_start"() <{level = 10 : i32, message = "bst,btd->bsd"}> : () -> ()
    %cst_73 = arith.constant dense<0.000000e+00> : vector<2x16x8xf32>
    %218 = tpu.matmul %217, %206, %cst_73 {dimension_numbers = #tpu.dot_dimension_numbers<[2], [1], [1], [2], [0, 0, 0, 1, 1, 2], [0], [0]>} : vector<2x16x16xf32>, vector<2x16x8xf32>, vector<2x16x8xf32> -> vector<2x16x8xf32>
    "tpu.trace_stop"() : () -> ()
    %219 = vector.extract_strided_slice %182 {offsets = [0, 16], sizes = [32, 8], strides = [1, 1]} : vector<32x96xf32> to vector<32x8xf32>
    %220 = vector.shape_cast %219 : vector<32x8xf32> to vector<2x16x8xf32>
    %221 = vector.extract_strided_slice %182 {offsets = [0, 48], sizes = [32, 8], strides = [1, 1]} : vector<32x96xf32> to vector<32x8xf32>
    %222 = vector.shape_cast %221 : vector<32x8xf32> to vector<2x16x8xf32>
    %223 = vector.extract_strided_slice %182 {offsets = [0, 80], sizes = [32, 8], strides = [1, 1]} : vector<32x96xf32> to vector<32x8xf32>
    %224 = vector.shape_cast %223 : vector<32x8xf32> to vector<2x16x8xf32>
    "tpu.trace_start"() <{level = 10 : i32, message = "bsd,btd->bst"}> : () -> ()
    %cst_74 = arith.constant dense<0.000000e+00> : vector<2x16x16xf32>
    %225 = tpu.matmul %220, %222, %cst_74 {dimension_numbers = #tpu.dot_dimension_numbers<[2], [2], [1], [1], [0, 0, 0, 1, 1, 1], [0], [0]>} : vector<2x16x8xf32>, vector<2x16x8xf32>, vector<2x16x16xf32> -> vector<2x16x16xf32>
    "tpu.trace_stop"() : () -> ()
    %cst_75 = arith.constant dense<0xFF800000> : vector<2x16xf32>
    %226 = vector.multi_reduction <maximumf>, %225, %cst_75 [2] : vector<2x16x16xf32> to vector<2x16xf32>
    %227 = vector.shape_cast %226 : vector<2x16xf32> to vector<2x16x1xf32>
    %228 = vector.broadcast %227 : vector<2x16x1xf32> to vector<2x16x16xf32>
    %229 = arith.subf %225, %228 : vector<2x16x16xf32>
    %230 = math.exp %229 : vector<2x16x16xf32>
    %cst_76 = arith.constant dense<0.000000e+00> : vector<2x16xf32>
    %231 = vector.multi_reduction <add>, %230, %cst_76 [2] : vector<2x16x16xf32> to vector<2x16xf32>
    %232 = vector.shape_cast %231 : vector<2x16xf32> to vector<2x16x1xf32>
    %233 = tpu.reciprocal %232 {approx = true} : vector<2x16x1xf32> -> vector<2x16x1xf32>
    %234 = vector.broadcast %233 : vector<2x16x1xf32> to vector<2x16x16xf32>
    %235 = arith.mulf %230, %234 : vector<2x16x16xf32>
    "tpu.trace_start"() <{level = 10 : i32, message = "bst,btd->bsd"}> : () -> ()
    %cst_77 = arith.constant dense<0.000000e+00> : vector<2x16x8xf32>
    %236 = tpu.matmul %235, %224, %cst_77 {dimension_numbers = #tpu.dot_dimension_numbers<[2], [1], [1], [2], [0, 0, 0, 1, 1, 2], [0], [0]>} : vector<2x16x16xf32>, vector<2x16x8xf32>, vector<2x16x8xf32> -> vector<2x16x8xf32>
    "tpu.trace_stop"() : () -> ()
    %237 = vector.extract_strided_slice %182 {offsets = [0, 24], sizes = [32, 8], strides = [1, 1]} : vector<32x96xf32> to vector<32x8xf32>
    %238 = vector.shape_cast %237 : vector<32x8xf32> to vector<2x16x8xf32>
    %239 = vector.extract_strided_slice %182 {offsets = [0, 56], sizes = [32, 8], strides = [1, 1]} : vector<32x96xf32> to vector<32x8xf32>
    %240 = vector.shape_cast %239 : vector<32x8xf32> to vector<2x16x8xf32>
    %241 = vector.extract_strided_slice %182 {offsets = [0, 88], sizes = [32, 8], strides = [1, 1]} : vector<32x96xf32> to vector<32x8xf32>
    %242 = vector.shape_cast %241 : vector<32x8xf32> to vector<2x16x8xf32>
    "tpu.trace_start"() <{level = 10 : i32, message = "bsd,btd->bst"}> : () -> ()
    %cst_78 = arith.constant dense<0.000000e+00> : vector<2x16x16xf32>
    %243 = tpu.matmul %238, %240, %cst_78 {dimension_numbers = #tpu.dot_dimension_numbers<[2], [2], [1], [1], [0, 0, 0, 1, 1, 1], [0], [0]>} : vector<2x16x8xf32>, vector<2x16x8xf32>, vector<2x16x16xf32> -> vector<2x16x16xf32>
    "tpu.trace_stop"() : () -> ()
    %cst_79 = arith.constant dense<0xFF800000> : vector<2x16xf32>
    %244 = vector.multi_reduction <maximumf>, %243, %cst_79 [2] : vector<2x16x16xf32> to vector<2x16xf32>
    %245 = vector.shape_cast %244 : vector<2x16xf32> to vector<2x16x1xf32>
    %246 = vector.broadcast %245 : vector<2x16x1xf32> to vector<2x16x16xf32>
    %247 = arith.subf %243, %246 : vector<2x16x16xf32>
    %248 = math.exp %247 : vector<2x16x16xf32>
    %cst_80 = arith.constant dense<0.000000e+00> : vector<2x16xf32>
    %249 = vector.multi_reduction <add>, %248, %cst_80 [2] : vector<2x16x16xf32> to vector<2x16xf32>
    %250 = vector.shape_cast %249 : vector<2x16xf32> to vector<2x16x1xf32>
    %251 = tpu.reciprocal %250 {approx = true} : vector<2x16x1xf32> -> vector<2x16x1xf32>
    %252 = vector.broadcast %251 : vector<2x16x1xf32> to vector<2x16x16xf32>
    %253 = arith.mulf %248, %252 : vector<2x16x16xf32>
    "tpu.trace_start"() <{level = 10 : i32, message = "bst,btd->bsd"}> : () -> ()
    %cst_81 = arith.constant dense<0.000000e+00> : vector<2x16x8xf32>
    %254 = tpu.matmul %253, %242, %cst_81 {dimension_numbers = #tpu.dot_dimension_numbers<[2], [1], [1], [2], [0, 0, 0, 1, 1, 2], [0], [0]>} : vector<2x16x16xf32>, vector<2x16x8xf32>, vector<2x16x8xf32> -> vector<2x16x8xf32>
    "tpu.trace_stop"() : () -> ()
    %255 = tpu.concatenate %200, %218, %236, %254 in 2 : vector<2x16x8xf32>, vector<2x16x8xf32>, vector<2x16x8xf32>, vector<2x16x8xf32> -> vector<2x16x32xf32>
    %256 = vector.shape_cast %255 : vector<2x16x32xf32> to vector<32x32xf32>
    %257 = arith.truncf %256 : vector<32x32xf32> to vector<32x32xbf16>
    %cst_82 = arith.constant dense<0.000000e+00> : vector<32x32xf32>
    %258 = tpu.matmul %257, %164, %cst_82 {dimension_numbers = #tpu.dot_dimension_numbers<[1], [0], [0], [1], [0, 0, 1, 1], [], []>} : vector<32x32xbf16>, vector<32x32xbf16>, vector<32x32xf32> -> vector<32x32xf32>
    %259 = vector.broadcast %172 : vector<1x32xf32> to vector<32x32xf32>
    %260 = arith.addf %258, %259 : vector<32x32xf32>
    %261 = arith.addf %160, %260 : vector<32x32xf32>
    %cst_83 = arith.constant dense<0.000000e+00> : vector<32xf32>
    %262 = vector.multi_reduction <add>, %261, %cst_83 [1] : vector<32x32xf32> to vector<32xf32>
    %263 = vector.shape_cast %262 : vector<32xf32> to vector<32x1xf32>
    %cst_84 = arith.constant 3.200000e+01 : f32
    %264 = vector.broadcast %cst_84 : f32 to vector<32x1xf32>
    %265 = arith.divf %263, %264 : vector<32x1xf32>
    %266 = vector.broadcast %265 : vector<32x1xf32> to vector<32x32xf32>
    %267 = arith.subf %261, %266 : vector<32x32xf32>
    %268 = arith.mulf %267, %267 : vector<32x32xf32>
    %cst_85 = arith.constant dense<0.000000e+00> : vector<32xf32>
    %269 = vector.multi_reduction <add>, %268, %cst_85 [1] : vector<32x32xf32> to vector<32xf32>
    %270 = vector.shape_cast %269 : vector<32xf32> to vector<32x1xf32>
    %cst_86 = arith.constant 3.200000e+01 : f32
    %271 = vector.broadcast %cst_86 : f32 to vector<32x1xf32>
    %272 = arith.divf %270, %271 : vector<32x1xf32>
    %273 = vector.broadcast %265 : vector<32x1xf32> to vector<32x32xf32>
    %274 = arith.subf %261, %273 : vector<32x32xf32>
    %cst_87 = arith.constant 9.99999974E-6 : f32
    %275 = vector.broadcast %cst_87 : f32 to vector<32x1xf32>
    %276 = arith.addf %272, %275 : vector<32x1xf32>
    %277 = math.rsqrt %276 : vector<32x1xf32>
    %278 = vector.broadcast %277 : vector<32x1xf32> to vector<32x32xf32>
    %279 = arith.mulf %274, %278 : vector<32x32xf32>
    %280 = vector.broadcast %173 : vector<1x32xf32> to vector<32x32xf32>
    %281 = arith.mulf %279, %280 : vector<32x32xf32>
    %282 = vector.broadcast %174 : vector<1x32xf32> to vector<32x32xf32>
    %283 = arith.addf %281, %282 : vector<32x32xf32>
    %284 = arith.truncf %283 : vector<32x32xf32> to vector<32x32xbf16>
    %cst_88 = arith.constant dense<0.000000e+00> : vector<32x2048xf32>
    %285 = tpu.matmul %284, %166, %cst_88 {dimension_numbers = #tpu.dot_dimension_numbers<[1], [0], [0], [1], [0, 0, 1, 1], [], []>} : vector<32x32xbf16>, vector<32x2048xbf16>, vector<32x2048xf32> -> vector<32x2048xf32>
    %286 = vector.broadcast %175 : vector<1x2048xf32> to vector<32x2048xf32>
    %287 = arith.addf %285, %286 : vector<32x2048xf32>
    %cst_89 = arith.constant 0.000000e+00 : f32
    %288 = vector.broadcast %cst_89 : f32 to vector<32x2048xf32>
    %289 = arith.maximumf %287, %288 : vector<32x2048xf32>
    %290 = arith.truncf %289 : vector<32x2048xf32> to vector<32x2048xbf16>
    %cst_90 = arith.constant dense<0.000000e+00> : vector<32x32xf32>
    %291 = tpu.matmul %290, %168, %cst_90 {dimension_numbers = #tpu.dot_dimension_numbers<[1], [0], [0], [1], [0, 0, 1, 1], [], []>} : vector<32x2048xbf16>, vector<2048x32xbf16>, vector<32x32xf32> -> vector<32x32xf32>
    %292 = vector.broadcast %176 : vector<1x32xf32> to vector<32x32xf32>
    %293 = arith.addf %291, %292 : vector<32x32xf32>
    %294 = arith.addf %283, %293 : vector<32x32xf32>
    %cst_91 = arith.constant dense<0.000000e+00> : vector<32xf32>
    %295 = vector.multi_reduction <add>, %294, %cst_91 [1] : vector<32x32xf32> to vector<32xf32>
    %296 = vector.shape_cast %295 : vector<32xf32> to vector<32x1xf32>
    %cst_92 = arith.constant 3.200000e+01 : f32
    %297 = vector.broadcast %cst_92 : f32 to vector<32x1xf32>
    %298 = arith.divf %296, %297 : vector<32x1xf32>
    %299 = vector.broadcast %298 : vector<32x1xf32> to vector<32x32xf32>
    %300 = arith.subf %294, %299 : vector<32x32xf32>
    %301 = arith.mulf %300, %300 : vector<32x32xf32>
    %cst_93 = arith.constant dense<0.000000e+00> : vector<32xf32>
    %302 = vector.multi_reduction <add>, %301, %cst_93 [1] : vector<32x32xf32> to vector<32xf32>
    %303 = vector.shape_cast %302 : vector<32xf32> to vector<32x1xf32>
    %cst_94 = arith.constant 3.200000e+01 : f32
    %304 = vector.broadcast %cst_94 : f32 to vector<32x1xf32>
    %305 = arith.divf %303, %304 : vector<32x1xf32>
    %306 = vector.broadcast %298 : vector<32x1xf32> to vector<32x32xf32>
    %307 = arith.subf %294, %306 : vector<32x32xf32>
    %cst_95 = arith.constant 9.99999974E-6 : f32
    %308 = vector.broadcast %cst_95 : f32 to vector<32x1xf32>
    %309 = arith.addf %305, %308 : vector<32x1xf32>
    %310 = math.rsqrt %309 : vector<32x1xf32>
    %311 = vector.broadcast %310 : vector<32x1xf32> to vector<32x32xf32>
    %312 = arith.mulf %307, %311 : vector<32x32xf32>
    %313 = vector.broadcast %177 : vector<1x32xf32> to vector<32x32xf32>
    %314 = arith.mulf %312, %313 : vector<32x32xf32>
    %315 = vector.broadcast %178 : vector<1x32xf32> to vector<32x32xf32>
    %316 = arith.addf %314, %315 : vector<32x32xf32>
    %c0_96 = arith.constant 0 : index
    %c0_97 = arith.constant 0 : index
    %317 = vector.load %arg9[%c0_96, %c0_97] : memref<40x4xf32, #tpu.memory_space<vmem>>, vector<40x4xf32>
    %318 = vector.extract_strided_slice %317 {offsets = [0, 0], sizes = [32, 4], strides = [1, 1]} : vector<40x4xf32> to vector<32x4xf32>
    %319 = vector.extract_strided_slice %317 {offsets = [32, 0], sizes = [1, 4], strides = [1, 1]} : vector<40x4xf32> to vector<1x4xf32>
    %320 = vector.extract_strided_slice %317 {offsets = [33, 0], sizes = [1, 4], strides = [1, 1]} : vector<40x4xf32> to vector<1x4xf32>
    %321 = vector.extract_strided_slice %317 {offsets = [34, 0], sizes = [1, 4], strides = [1, 1]} : vector<40x4xf32> to vector<1x4xf32>
    %322 = vector.extract_strided_slice %317 {offsets = [35, 0], sizes = [4, 4], strides = [1, 1]} : vector<40x4xf32> to vector<4x4xf32>
    %323 = vector.extract_strided_slice %317 {offsets = [39, 0], sizes = [1, 4], strides = [1, 1]} : vector<40x4xf32> to vector<1x4xf32>
    %cst_98 = arith.constant dense<0.000000e+00> : vector<32x4xf32>
    %324 = tpu.matmul %316, %318, %cst_98 {dimension_numbers = #tpu.dot_dimension_numbers<[1], [0], [0], [1], [0, 0, 1, 1], [], []>} : vector<32x32xf32>, vector<32x4xf32>, vector<32x4xf32> -> vector<32x4xf32>
    %325 = vector.broadcast %319 : vector<1x4xf32> to vector<32x4xf32>
    %326 = arith.addf %324, %325 : vector<32x4xf32>
    %cst_99 = arith.constant dense<0.000000e+00> : vector<4xf32>
    %327 = vector.multi_reduction <add>, %326, %cst_99 [0] : vector<32x4xf32> to vector<4xf32>
    %328 = vector.shape_cast %327 : vector<4xf32> to vector<1x4xf32>
    %cst_100 = arith.constant 3.200000e+01 : f32
    %329 = vector.broadcast %cst_100 : f32 to vector<1x4xf32>
    %330 = arith.divf %328, %329 : vector<1x4xf32>
    %331 = vector.broadcast %330 : vector<1x4xf32> to vector<32x4xf32>
    %332 = arith.subf %326, %331 : vector<32x4xf32>
    %333 = arith.mulf %332, %332 : vector<32x4xf32>
    %cst_101 = arith.constant dense<0.000000e+00> : vector<4xf32>
    %334 = vector.multi_reduction <add>, %333, %cst_101 [0] : vector<32x4xf32> to vector<4xf32>
    %335 = vector.shape_cast %334 : vector<4xf32> to vector<1x4xf32>
    %cst_102 = arith.constant 3.200000e+01 : f32
    %336 = vector.broadcast %cst_102 : f32 to vector<1x4xf32>
    %337 = arith.divf %335, %336 : vector<1x4xf32>
    %338 = vector.broadcast %330 : vector<1x4xf32> to vector<32x4xf32>
    %339 = arith.subf %326, %338 : vector<32x4xf32>
    %cst_103 = arith.constant 9.99999974E-6 : f32
    %340 = vector.broadcast %cst_103 : f32 to vector<1x4xf32>
    %341 = arith.addf %337, %340 : vector<1x4xf32>
    %342 = math.rsqrt %341 : vector<1x4xf32>
    %343 = vector.broadcast %342 : vector<1x4xf32> to vector<32x4xf32>
    %344 = arith.mulf %339, %343 : vector<32x4xf32>
    %345 = vector.broadcast %320 : vector<1x4xf32> to vector<32x4xf32>
    %346 = arith.mulf %344, %345 : vector<32x4xf32>
    %347 = vector.broadcast %321 : vector<1x4xf32> to vector<32x4xf32>
    %348 = arith.addf %346, %347 : vector<32x4xf32>
    %cst_104 = arith.constant 0.000000e+00 : f32
    %349 = vector.broadcast %cst_104 : f32 to vector<32x4xf32>
    %350 = arith.maximumf %348, %349 : vector<32x4xf32>
    %cst_105 = arith.constant dense<0.000000e+00> : vector<32x4xf32>
    %351 = tpu.matmul %350, %322, %cst_105 {dimension_numbers = #tpu.dot_dimension_numbers<[1], [0], [0], [1], [0, 0, 1, 1], [], []>} : vector<32x4xf32>, vector<4x4xf32>, vector<32x4xf32> -> vector<32x4xf32>
    %352 = vector.broadcast %323 : vector<1x4xf32> to vector<32x4xf32>
    %353 = arith.addf %351, %352 : vector<32x4xf32>
    %354 = vector.shape_cast %353 : vector<32x4xf32> to vector<2x16x4xf32>
    %355 = vector.extract_strided_slice %354 {offsets = [0, 0, 0], sizes = [1, 16, 4], strides = [1, 1, 1]} : vector<2x16x4xf32> to vector<1x16x4xf32>
    %356 = vector.shape_cast %355 : vector<1x16x4xf32> to vector<16x4xf32>
    %357 = tpu.transpose %356, [1, 0] : vector<16x4xf32> -> vector<4x16xf32>
    %358 = vector.extract_strided_slice %354 {offsets = [1, 0, 0], sizes = [1, 16, 4], strides = [1, 1, 1]} : vector<2x16x4xf32> to vector<1x16x4xf32>
    %359 = vector.shape_cast %358 : vector<1x16x4xf32> to vector<16x4xf32>
    %360 = tpu.transpose %359, [1, 0] : vector<16x4xf32> -> vector<4x16xf32>
    %361 = tpu.concatenate %357, %360 in 0 : vector<4x16xf32>, vector<4x16xf32> -> vector<8x16xf32>
    %c0_106 = arith.constant 0 : index
    %c0_107 = arith.constant 0 : index
    %362 = vector.load %arg10[%c0_106, %c0_107] : memref<16x256xf32, #tpu.memory_space<vmem>>, vector<16x256xf32>
    %cst_108 = arith.constant dense<0.000000e+00> : vector<8x256xf32>
    %363 = tpu.matmul %361, %362, %cst_108 {dimension_numbers = #tpu.dot_dimension_numbers<[1], [0], [0], [1], [0, 0, 1, 1], [], []>} : vector<8x16xf32>, vector<16x256xf32>, vector<8x256xf32> -> vector<8x256xf32>
    %c0_109 = arith.constant 0 : index
    %c0_110 = arith.constant 0 : index
    %364 = vector.load %arg11[%c0_109, %c0_110] : memref<8x256xf32, #tpu.memory_space<vmem>>, vector<8x256xf32>
    tpu.vector_store %arg11[%c0_109, %c0_110], %363 {strides = array<i32>} : memref<8x256xf32, #tpu.memory_space<vmem>>, vector<8x256xf32>,
    return
  }
  func.func @transform_0(%arg0: i32) -> (i32, i32) {
    %c0_i32 = arith.constant 0 : i32
    %c0_i32_0 = arith.constant 0 : i32
    %c0_i32_1 = arith.constant 0 : i32
    return %c0_i32, %c0_i32_0 : i32, i32
  }
  func.func @transform_1(%arg0: i32) -> (i32, i32) {
    %c0_i32 = arith.constant 0 : i32
    %c0_i32_0 = arith.constant 0 : i32
    %c0_i32_1 = arith.constant 0 : i32
    return %c0_i32, %c0_i32_0 : i32, i32
  }
  func.func @transform_2(%arg0: i32) -> (i32, i32) {
    %c0_i32 = arith.constant 0 : i32
    %c0_i32_0 = arith.constant 0 : i32
    %c0_i32_1 = arith.constant 0 : i32
    return %c0_i32, %c0_i32_0 : i32, i32
  }
  func.func @transform_3(%arg0: i32) -> (i32, i32, i32) {
    %c0_i32 = arith.constant 0 : i32
    %c0_i32_0 = arith.constant 0 : i32
    %c0_i32_1 = arith.constant 0 : i32
    %c0_i32_2 = arith.constant 0 : i32
    return %c0_i32, %c0_i32_0, %c0_i32_1 : i32, i32, i32
  }
  func.func @transform_4(%arg0: i32) -> (i32, i32, i32) {
    %c0_i32 = arith.constant 0 : i32
    %c0_i32_0 = arith.constant 0 : i32
    %c0_i32_1 = arith.constant 0 : i32
    %c0_i32_2 = arith.constant 0 : i32
    return %c0_i32, %c0_i32_0, %c0_i32_1 : i32, i32, i32
  }
  func.func @transform_5(%arg0: i32) -> (i32, i32, i32) {
    %c0_i32 = arith.constant 0 : i32
    %c0_i32_0 = arith.constant 0 : i32
    %c0_i32_1 = arith.constant 0 : i32
    %c0_i32_2 = arith.constant 0 : i32
    return %c0_i32, %c0_i32_0, %c0_i32_1 : i32, i32, i32
  }
  func.func @transform_6(%arg0: i32) -> (i32, i32, i32) {
    %c0_i32 = arith.constant 0 : i32
    %c0_i32_0 = arith.constant 0 : i32
    %c0_i32_1 = arith.constant 0 : i32
    %c0_i32_2 = arith.constant 0 : i32
    return %c0_i32, %c0_i32_0, %c0_i32_1 : i32, i32, i32
  }
  func.func @transform_7(%arg0: i32) -> (i32, i32, i32) {
    %c0_i32 = arith.constant 0 : i32
    %c0_i32_0 = arith.constant 0 : i32
    %c0_i32_1 = arith.constant 0 : i32
    %c0_i32_2 = arith.constant 0 : i32
    return %c0_i32, %c0_i32_0, %c0_i32_1 : i32, i32, i32
  }
  func.func @transform_8(%arg0: i32) -> (i32, i32) {
    %c0_i32 = arith.constant 0 : i32
    %c0_i32_0 = arith.constant 0 : i32
    %c0_i32_1 = arith.constant 0 : i32
    return %c0_i32, %c0_i32_0 : i32, i32
  }
  func.func @transform_9(%arg0: i32) -> (i32, i32) {
    %c0_i32 = arith.constant 0 : i32
    %c0_i32_0 = arith.constant 0 : i32
    %c0_i32_1 = arith.constant 0 : i32
    return %c0_i32, %c0_i32_0 : i32, i32
  }
  func.func @transform_10(%arg0: i32) -> (i32, i32) {
    %c0_i32 = arith.constant 0 : i32
    %c0_i32_0 = arith.constant 0 : i32
    %c0_i32_1 = arith.constant 0 : i32
    return %c0_i32, %c0_i32_0 : i32, i32
  }
}

</mosaic_0001>

<llo_original>
// kernel: previt_forward.1
$region0: #{previt_forward.1}
  #allocation0 [shape = 'u32[]', space=smem, size = 0x4, offset = 0x4, fixed_abs, tag = 'smem constant byte address 0x4 - core index']
  #allocation1 [shape = 'u32[72,128]{1,0:T(1,128)}', space=vmem, size = 0x9000, scoped, tag = 'internal scratch']
  %s0 = inlined_call_operand.vmem [shape: bf16[32,64], index: 0, kind: input, shape index: {}]
  %s1 = inlined_call_operand.vmem [shape: bf16[64,32], index: 1, kind: input, shape index: {}]
  %s2 = inlined_call_operand.vmem [shape: f32[32,32], index: 2, kind: input, shape index: {}]
  %s3 = inlined_call_operand.vmem [shape: bf16[2,32,96], index: 3, kind: input, shape index: {}]
  %s4 = inlined_call_operand.vmem [shape: bf16[2,32,32], index: 4, kind: input, shape index: {}]
  %s5 = inlined_call_operand.vmem [shape: bf16[2,32,2048], index: 5, kind: input, shape index: {}]
  %s6 = inlined_call_operand.vmem [shape: bf16[2,2048,32], index: 6, kind: input, shape index: {}]
  %s7 = inlined_call_operand.vmem [shape: f32[2,8,2048], index: 7, kind: input, shape index: {}]
  %s8 = inlined_call_operand.vmem [shape: f32[40,4], index: 8, kind: input, shape index: {}]
  %s9 = inlined_call_operand.vmem [shape: f32[16,256], index: 9, kind: input, shape index: {}]
  %s10 = inlined_call_operand.vmem [shape: f32[8,256], index: 10, kind: output, shape index: {}]
  %s11 = sld [smem:[#allocation0]]
  $region50: #{previt_forward.1} parent=0
    _
  %s13 = ssub.s32 1, %s11
  %s14 = scalar_select 0, %s13, %s11
  // Predicated region
  $region2: #{previt_forward.1} parent=0 // pred_check
    _
  $region3: #{previt_forward.1} parent=0 // pred_check_branch
    %16 = sbr.rel (0) target = $region5
  $region4: #{previt_forward.1} parent=0 // pred_region
    _
  $region5: #{previt_forward.1} parent=0 // pred_fallthru
    _
  // Predicated region
  $region6: #{previt_forward.1} parent=0 // pred_check
    _
  $region7: #{previt_forward.1} parent=0 // pred_check_branch
    %18 = sbr.rel (0) target = $region9
  $region8: #{previt_forward.1} parent=0 // pred_region
    _
  $region9: #{previt_forward.1} parent=0 // pred_fallthru
    _
  // Predicated region
  $region10: #{previt_forward.1} parent=0 // pred_check
    _
  $region11: #{previt_forward.1} parent=0 // pred_check_branch
    %20 = sbr.rel (0) target = $region13
  $region12: #{previt_forward.1} parent=0 // pred_region
    _
  $region13: #{previt_forward.1} parent=0 // pred_fallthru
    _
  // Predicated region
  $region14: #{previt_forward.1} parent=0 // pred_check
    _
  $region15: #{previt_forward.1} parent=0 // pred_check_branch
    %22 = sbr.rel (0) target = $region17
  $region16: #{previt_forward.1} parent=0 // pred_region
    _
  $region17: #{previt_forward.1} parent=0 // pred_fallthru
    _
  // Predicated region
  $region18: #{previt_forward.1} parent=0 // pred_check
    _
  $region19: #{previt_forward.1} parent=0 // pred_check_branch
    %24 = sbr.rel (0) target = $region21
  $region20: #{previt_forward.1} parent=0 // pred_region
    _
  $region21: #{previt_forward.1} parent=0 // pred_fallthru
    _
  // Predicated region
  $region22: #{previt_forward.1} parent=0 // pred_check
    _
  $region23: #{previt_forward.1} parent=0 // pred_check_branch
    %26 = sbr.rel (0) target = $region25
  $region24: #{previt_forward.1} parent=0 // pred_region
    _
  $region25: #{previt_forward.1} parent=0 // pred_fallthru
    _
  // Predicated region
  $region26: #{previt_forward.1} parent=0 // pred_check
    _
  $region27: #{previt_forward.1} parent=0 // pred_check_branch
    %28 = sbr.rel (0) target = $region29
  $region28: #{previt_forward.1} parent=0 // pred_region
    _
  $region29: #{previt_forward.1} parent=0 // pred_fallthru
    _
  // Predicated region
  $region30: #{previt_forward.1} parent=0 // pred_check
    _
  $region31: #{previt_forward.1} parent=0 // pred_check_branch
    %30 = sbr.rel (0) target = $region33
  $region32: #{previt_forward.1} parent=0 // pred_region
    _
  $region33: #{previt_forward.1} parent=0 // pred_fallthru
    _
  // Predicated region
  $region34: #{previt_forward.1} parent=0 // pred_check
    _
  $region35: #{previt_forward.1} parent=0 // pred_check_branch
    %32 = sbr.rel (0) target = $region37
  $region36: #{previt_forward.1} parent=0 // pred_region
    _
  $region37: #{previt_forward.1} parent=0 // pred_fallthru
    _
  // Predicated region
  $region38: #{previt_forward.1} parent=0 // pred_check
    _
  $region39: #{previt_forward.1} parent=0 // pred_check_branch
    %34 = sbr.rel (0) target = $region41
  $region40: #{previt_forward.1} parent=0 // pred_region
    _
  $region41: #{previt_forward.1} parent=0 // pred_fallthru
    _
  %v36 = vld [vmem:[%s0] sm:$0xf]
  %v37 = vld [vmem:[%s0 + $0x4] sm:$0xf]
  %v38 = vld [vmem:[%s0 + $0x8] sm:$0xf]
  %v39 = vld [vmem:[%s0 + $0xc] sm:$0xf]
  %v40 = vld [vmem:[%s1] sm:$0xf]
  %v41 = vld [vmem:[%s1 + $0x4] sm:$0xf]
  %v42 = vld [vmem:[%s1 + $0x8] sm:$0xf]
  %v43 = vld [vmem:[%s1 + $0xc] sm:$0xf]
  %v44 = vld [vmem:[%s1 + $0x10] sm:$0xf]
  %v45 = vld [vmem:[%s1 + $0x14] sm:$0xf]
  %v46 = vld [vmem:[%s1 + $0x18] sm:$0xf]
  %v47 = vld [vmem:[%s1 + $0x1c] sm:$0xf]
  %v48 = vld [vmem:[%s2] sm:$0xff]
  %v49 = vld [vmem:[%s2 + $0x8] sm:$0xff]
  %v50 = vld [vmem:[%s2 + $0x10] sm:$0xff]
  %v51 = vld [vmem:[%s2 + $0x18] sm:$0xff]
  %v56 = vunpack.c.l.b16 %v36
  %v57 = vunpack.c.l.b16 %v37
  %v58 = vunpack.c.l.b16 %v38
  %v59 = vunpack.c.l.b16 %v39
  %v60 = vpack.c.b16 %v57, %v56
  %v61 = vpack.c.b16 %v59, %v58
  %v70 = vunpack.c.l.b16 %v40
  %v71 = vunpack.c.l.b16 %v41
  %v72 = vunpack.c.l.b16 %v42
  %v73 = vunpack.c.l.b16 %v43
  %v74 = vunpack.c.l.b16 %v44
  %v75 = vunpack.c.l.b16 %v45
  %v76 = vunpack.c.l.b16 %v46
  %v77 = vunpack.c.l.b16 %v47
  %v78 = vpack.c.b16 %v71, %v70
  %v79 = vpack.c.b16 %v73, %v72
  %v80 = vpack.c.b16 %v75, %v74
  %v81 = vpack.c.b16 %v77, %v76
  %vm86 = vcmask 523264
  %v88 = vsel %vm86, %v60, 0
  %v91 = vsel %vm86, %v61, 0
  %93 = vmatpush.bf16.msra.mxu0 0
  %94 = vmatpush.bf16.msra.mxu0 0
  %95 = vmatpush.bf16.msra.mxu0 0
  %96 = vmatpush.bf16.msra.mxu0 0
  %97 = vmatpush.bf16.msra.mxu0 %v81
  %98 = vmatpush.bf16.msra.mxu0 %v80
  %99 = vmatpush.bf16.msra.mxu0 %v79
  %100 = vmatpush.bf16.msra.mxu0 %v78
  %101 = vmatmul.bf16.gmra.mxu0 %v88
  %v102 = vpop.f32.mrf.mxu0
  %v103 = vadd.f32 %v48, %v102
  %v104 = vpop.f32.mrf.mxu0
  %v105 = vadd.f32 %v49, %v104
  %106 = vmatmul.bf16.gmra.mxu0 %v91
  %v107 = vpop.f32.mrf.mxu0
  %v108 = vadd.f32 %v50, %v107
  %v109 = vpop.f32.mrf.mxu0
  %v110 = vadd.f32 %v51, %v109
  %111 = vdwg.mxu0
  %v112 = vld [vmem:[%s3] sm:$0xf]
  %v113 = vld [vmem:[%s3 + $0x4] sm:$0xf]
  %v114 = vld [vmem:[%s3 + $0x8] sm:$0xf]
  %v115 = vld [vmem:[%s3 + $0xc] sm:$0xf]
  %v116 = vld [vmem:[%s4] sm:$0xf]
  %v117 = vld [vmem:[%s4 + $0x4] sm:$0xf]
  %v118 = vld [vmem:[%s4 + $0x8] sm:$0xf]
  %v119 = vld [vmem:[%s4 + $0xc] sm:$0xf]
  %v120 = vld [vmem:[%s5] sm:$0xff]
  %v121 = vld [vmem:[%s5 + $0x8] sm:$0xff]
  %v122 = vld [vmem:[%s5 + $0x10] sm:$0xff]
  %v123 = vld [vmem:[%s5 + $0x18] sm:$0xff]
  %v124 = vld [vmem:[%s5 + $0x20] sm:$0xff]
  %v125 = vld [vmem:[%s5 + $0x28] sm:$0xff]
  %v126 = vld [vmem:[%s5 + $0x30] sm:$0xff]
  %v127 = vld [vmem:[%s5 + $0x38] sm:$0xff]
  %v128 = vld [vmem:[%s5 + $0x40] sm:$0xff]
  %v129 = vld [vmem:[%s5 + $0x48] sm:$0xff]
  %v130 = vld [vmem:[%s5 + $0x50] sm:$0xff]
  %v131 = vld [vmem:[%s5 + $0x58] sm:$0xff]
  %v132 = vld [vmem:[%s5 + $0x60] sm:$0xff]
  %v133 = vld [vmem:[%s5 + $0x68] sm:$0xff]
  %v134 = vld [vmem:[%s5 + $0x70] sm:$0xff]
  %v135 = vld [vmem:[%s5 + $0x78] sm:$0xff]
  %v136 = vld [vmem:[%s5 + $0x80] sm:$0xff]
  %v137 = vld [vmem:[%s5 + $0x88] sm:$0xff]
  %v138 = vld [vmem:[%s5 + $0x90] sm:$0xff]
  %v139 = vld [vmem:[%s5 + $0x98] sm:$0xff]
  %v140 = vld [vmem:[%s5 + $0xa0] sm:$0xff]
  %v141 = vld [vmem:[%s5 + $0xa8] sm:$0xff]
  %v142 = vld [vmem:[%s5 + $0xb0] sm:$0xff]
  %v143 = vld [vmem:[%s5 + $0xb8] sm:$0xff]
  %v144 = vld [vmem:[%s5 + $0xc0] sm:$0xff]
  %v145 = vld [vmem:[%s5 + $0xc8] sm:$0xff]
  %v146 = vld [vmem:[%s5 + $0xd0] sm:$0xff]
  %v147 = vld [vmem:[%s5 + $0xd8] sm:$0xff]
  %v148 = vld [vmem:[%s5 + $0xe0] sm:$0xff]
  %v149 = vld [vmem:[%s5 + $0xe8] sm:$0xff]
  %v150 = vld [vmem:[%s5 + $0xf0] sm:$0xff]
  %v151 = vld [vmem:[%s5 + $0xf8] sm:$0xff]
  %v152 = vld [vmem:[%s6] sm:$0xf]
  %v153 = vld [vmem:[%s6 + $0x4] sm:$0xf]
  %v154 = vld [vmem:[%s6 + $0x8] sm:$0xf]
  %v155 = vld [vmem:[%s6 + $0xc] sm:$0xf]
  %v156 = vld [vmem:[%s6 + $0x10] sm:$0xf]
  %v157 = vld [vmem:[%s6 + $0x14] sm:$0xf]
  %v158 = vld [vmem:[%s6 + $0x18] sm:$0xf]
  %v159 = vld [vmem:[%s6 + $0x1c] sm:$0xf]
  %v160 = vld [vmem:[%s6 + $0x20] sm:$0xf]
  %v161 = vld [vmem:[%s6 + $0x24] sm:$0xf]
  %v162 = vld [vmem:[%s6 + $0x28] sm:$0xf]
  %v163 = vld [vmem:[%s6 + $0x2c] sm:$0xf]
  %v164 = vld [vmem:[%s6 + $0x30] sm:$0xf]
  %v165 = vld [vmem:[%s6 + $0x34] sm:$0xf]
  %v166 = vld [vmem:[%s6 + $0x38] sm:$0xf]
  %v167 = vld [vmem:[%s6 + $0x3c] sm:$0xf]
  %v168 = vld [vmem:[%s6 + $0x40] sm:$0xf]
  %v169 = vld [vmem:[%s6 + $0x44] sm:$0xf]
  %v170 = vld [vmem:[%s6 + $0x48] sm:$0xf]
  %v171 = vld [vmem:[%s6 + $0x4c] sm:$0xf]
  %v172 = vld [vmem:[%s6 + $0x50] sm:$0xf]
  %v173 = vld [vmem:[%s6 + $0x54] sm:$0xf]
  %v174 = vld [vmem:[%s6 + $0x58] sm:$0xf]
  %v175 = vld [vmem:[%s6 + $0x5c] sm:$0xf]
  %v176 = vld [vmem:[%s6 + $0x60] sm:$0xf]
  %v177 = vld [vmem:[%s6 + $0x64] sm:$0xf]
  %v178 = vld [vmem:[%s6 + $0x68] sm:$0xf]
  %v179 = vld [vmem:[%s6 + $0x6c] sm:$0xf]
  %v180 = vld [vmem:[%s6 + $0x70] sm:$0xf]
  %v181 = vld [vmem:[%s6 + $0x74] sm:$0xf]
  %v182 = vld [vmem:[%s6 + $0x78] sm:$0xf]
  %v183 = vld [vmem:[%s6 + $0x7c] sm:$0xf]
  %v184 = vld [vmem:[%s6 + $0x80] sm:$0xf]
  %v185 = vld [vmem:[%s6 + $0x84] sm:$0xf]
  %v186 = vld [vmem:[%s6 + $0x88] sm:$0xf]
  %v187 = vld [vmem:[%s6 + $0x8c] sm:$0xf]
  %v188 = vld [vmem:[%s6 + $0x90] sm:$0xf]
  %v189 = vld [vmem:[%s6 + $0x94] sm:$0xf]
  %v190 = vld [vmem:[%s6 + $0x98] sm:$0xf]
  %v191 = vld [vmem:[%s6 + $0x9c] sm:$0xf]
  %v192 = vld [vmem:[%s6 + $0xa0] sm:$0xf]
  %v193 = vld [vmem:[%s6 + $0xa4] sm:$0xf]
  %v194 = vld [vmem:[%s6 + $0xa8] sm:$0xf]
  %v195 = vld [vmem:[%s6 + $0xac] sm:$0xf]
  %v196 = vld [vmem:[%s6 + $0xb0] sm:$0xf]
  %v197 = vld [vmem:[%s6 + $0xb4] sm:$0xf]
  %v198 = vld [vmem:[%s6 + $0xb8] sm:$0xf]
  %v199 = vld [vmem:[%s6 + $0xbc] sm:$0xf]
  %v200 = vld [vmem:[%s6 + $0xc0] sm:$0xf]
  %v201 = vld [vmem:[%s6 + $0xc4] sm:$0xf]
  %v202 = vld [vmem:[%s6 + $0xc8] sm:$0xf]
  %v203 = vld [vmem:[%s6 + $0xcc] sm:$0xf]
  %v204 = vld [vmem:[%s6 + $0xd0] sm:$0xf]
  %v205 = vld [vmem:[%s6 + $0xd4] sm:$0xf]
  %v206 = vld [vmem:[%s6 + $0xd8] sm:$0xf]
  %v207 = vld [vmem:[%s6 + $0xdc] sm:$0xf]
  %v208 = vld [vmem:[%s6 + $0xe0] sm:$0xf]
  %v209 = vld [vmem:[%s6 + $0xe4] sm:$0xf]
  %v210 = vld [vmem:[%s6 + $0xe8] sm:$0xf]
  %v211 = vld [vmem:[%s6 + $0xec] sm:$0xf]
  %v212 = vld [vmem:[%s6 + $0xf0] sm:$0xf]
  %v213 = vld [vmem:[%s6 + $0xf4] sm:$0xf]
  %v214 = vld [vmem:[%s6 + $0xf8] sm:$0xf]
  %v215 = vld [vmem:[%s6 + $0xfc] sm:$0xf]
  %v216 = vld [vmem:[%s6 + $0x100] sm:$0xf]
  %v217 = vld [vmem:[%s6 + $0x104] sm:$0xf]
  %v218 = vld [vmem:[%s6 + $0x108] sm:$0xf]
  %v219 = vld [vmem:[%s6 + $0x10c] sm:$0xf]
  %v220 = vld [vmem:[%s6 + $0x110] sm:$0xf]
  %v221 = vld [vmem:[%s6 + $0x114] sm:$0xf]
  %v222 = vld [vmem:[%s6 + $0x118] sm:$0xf]
  %v223 = vld [vmem:[%s6 + $0x11c] sm:$0xf]
  %v224 = vld [vmem:[%s6 + $0x120] sm:$0xf]
  %v225 = vld [vmem:[%s6 + $0x124] sm:$0xf]
  %v226 = vld [vmem:[%s6 + $0x128] sm:$0xf]
  %v227 = vld [vmem:[%s6 + $0x12c] sm:$0xf]
  %v228 = vld [vmem:[%s6 + $0x130] sm:$0xf]
  %v229 = vld [vmem:[%s6 + $0x134] sm:$0xf]
  %v230 = vld [vmem:[%s6 + $0x138] sm:$0xf]
  %v231 = vld [vmem:[%s6 + $0x13c] sm:$0xf]
  %v232 = vld [vmem:[%s6 + $0x140] sm:$0xf]
  %v233 = vld [vmem:[%s6 + $0x144] sm:$0xf]
  %v234 = vld [vmem:[%s6 + $0x148] sm:$0xf]
  %v235 = vld [vmem:[%s6 + $0x14c] sm:$0xf]
  %v236 = vld [vmem:[%s6 + $0x150] sm:$0xf]
  %v237 = vld [vmem:[%s6 + $0x154] sm:$0xf]
  %v238 = vld [vmem:[%s6 + $0x158] sm:$0xf]
  %v239 = vld [vmem:[%s6 + $0x15c] sm:$0xf]
  %v240 = vld [vmem:[%s6 + $0x160] sm:$0xf]
  %v241 = vld [vmem:[%s6 + $0x164] sm:$0xf]
  %v242 = vld [vmem:[%s6 + $0x168] sm:$0xf]
  %v243 = vld [vmem:[%s6 + $0x16c] sm:$0xf]
  %v244 = vld [vmem:[%s6 + $0x170] sm:$0xf]
  %v245 = vld [vmem:[%s6 + $0x174] sm:$0xf]
  %v246 = vld [vmem:[%s6 + $0x178] sm:$0xf]
  %v247 = vld [vmem:[%s6 + $0x17c] sm:$0xf]
  %v248 = vld [vmem:[%s6 + $0x180] sm:$0xf]
  %v249 = vld [vmem:[%s6 + $0x184] sm:$0xf]
  %v250 = vld [vmem:[%s6 + $0x188] sm:$0xf]
  %v251 = vld [vmem:[%s6 + $0x18c] sm:$0xf]
  %v252 = vld [vmem:[%s6 + $0x190] sm:$0xf]
  %v253 = vld [vmem:[%s6 + $0x194] sm:$0xf]
  %v254 = vld [vmem:[%s6 + $0x198] sm:$0xf]
  %v255 = vld [vmem:[%s6 + $0x19c] sm:$0xf]
  %v256 = vld [vmem:[%s6 + $0x1a0] sm:$0xf]
  %v257 = vld [vmem:[%s6 + $0x1a4] sm:$0xf]
  %v258 = vld [vmem:[%s6 + $0x1a8] sm:$0xf]
  %v259 = vld [vmem:[%s6 + $0x1ac] sm:$0xf]
  %v260 = vld [vmem:[%s6 + $0x1b0] sm:$0xf]
  %v261 = vld [vmem:[%s6 + $0x1b4] sm:$0xf]
  %v262 = vld [vmem:[%s6 + $0x1b8] sm:$0xf]
  %v263 = vld [vmem:[%s6 + $0x1bc] sm:$0xf]
  %v264 = vld [vmem:[%s6 + $0x1c0] sm:$0xf]
  %v265 = vld [vmem:[%s6 + $0x1c4] sm:$0xf]
  %v266 = vld [vmem:[%s6 + $0x1c8] sm:$0xf]
  %v267 = vld [vmem:[%s6 + $0x1cc] sm:$0xf]
  %v268 = vld [vmem:[%s6 + $0x1d0] sm:$0xf]
  %v269 = vld [vmem:[%s6 + $0x1d4] sm:$0xf]
  %v270 = vld [vmem:[%s6 + $0x1d8] sm:$0xf]
  %v271 = vld [vmem:[%s6 + $0x1dc] sm:$0xf]
  %v272 = vld [vmem:[%s6 + $0x1e0] sm:$0xf]
  %v273 = vld [vmem:[%s6 + $0x1e4] sm:$0xf]
  %v274 = vld [vmem:[%s6 + $0x1e8] sm:$0xf]
  %v275 = vld [vmem:[%s6 + $0x1ec] sm:$0xf]
  %v276 = vld [vmem:[%s6 + $0x1f0] sm:$0xf]
  %v277 = vld [vmem:[%s6 + $0x1f4] sm:$0xf]
  %v278 = vld [vmem:[%s6 + $0x1f8] sm:$0xf]
  %v279 = vld [vmem:[%s6 + $0x1fc] sm:$0xf]
  %v280 = vld [vmem:[%s6 + $0x200] sm:$0xf]
  %v281 = vld [vmem:[%s6 + $0x204] sm:$0xf]
  %v282 = vld [vmem:[%s6 + $0x208] sm:$0xf]
  %v283 = vld [vmem:[%s6 + $0x20c] sm:$0xf]
  %v284 = vld [vmem:[%s6 + $0x210] sm:$0xf]
  %v285 = vld [vmem:[%s6 + $0x214] sm:$0xf]
  %v286 = vld [vmem:[%s6 + $0x218] sm:$0xf]
  %v287 = vld [vmem:[%s6 + $0x21c] sm:$0xf]
  %v288 = vld [vmem:[%s6 + $0x220] sm:$0xf]
  %v289 = vld [vmem:[%s6 + $0x224] sm:$0xf]
  %v290 = vld [vmem:[%s6 + $0x228] sm:$0xf]
  %v291 = vld [vmem:[%s6 + $0x22c] sm:$0xf]
  %v292 = vld [vmem:[%s6 + $0x230] sm:$0xf]
  %v293 = vld [vmem:[%s6 + $0x234] sm:$0xf]
  %v294 = vld [vmem:[%s6 + $0x238] sm:$0xf]
  %v295 = vld [vmem:[%s6 + $0x23c] sm:$0xf]
  %v296 = vld [vmem:[%s6 + $0x240] sm:$0xf]
  %v297 = vld [vmem:[%s6 + $0x244] sm:$0xf]
  %v298 = vld [vmem:[%s6 + $0x248] sm:$0xf]
  %v299 = vld [vmem:[%s6 + $0x24c] sm:$0xf]
  %v300 = vld [vmem:[%s6 + $0x250] sm:$0xf]
  %v301 = vld [vmem:[%s6 + $0x254] sm:$0xf]
  %v302 = vld [vmem:[%s6 + $0x258] sm:$0xf]
  %v303 = vld [vmem:[%s6 + $0x25c] sm:$0xf]
  %v304 = vld [vmem:[%s6 + $0x260] sm:$0xf]
  %v305 = vld [vmem:[%s6 + $0x264] sm:$0xf]
  %v306 = vld [vmem:[%s6 + $0x268] sm:$0xf]
  %v307 = vld [vmem:[%s6 + $0x26c] sm:$0xf]
  %v308 = vld [vmem:[%s6 + $0x270] sm:$0xf]
  %v309 = vld [vmem:[%s6 + $0x274] sm:$0xf]
  %v310 = vld [vmem:[%s6 + $0x278] sm:$0xf]
  %v311 = vld [vmem:[%s6 + $0x27c] sm:$0xf]
  %v312 = vld [vmem:[%s6 + $0x280] sm:$0xf]
  %v313 = vld [vmem:[%s6 + $0x284] sm:$0xf]
  %v314 = vld [vmem:[%s6 + $0x288] sm:$0xf]
  %v315 = vld [vmem:[%s6 + $0x28c] sm:$0xf]
  %v316 = vld [vmem:[%s6 + $0x290] sm:$0xf]
  %v317 = vld [vmem:[%s6 + $0x294] sm:$0xf]
  %v318 = vld [vmem:[%s6 + $0x298] sm:$0xf]
  %v319 = vld [vmem:[%s6 + $0x29c] sm:$0xf]
  %v320 = vld [vmem:[%s6 + $0x2a0] sm:$0xf]
  %v321 = vld [vmem:[%s6 + $0x2a4] sm:$0xf]
  %v322 = vld [vmem:[%s6 + $0x2a8] sm:$0xf]
  %v323 = vld [vmem:[%s6 + $0x2ac] sm:$0xf]
  %v324 = vld [vmem:[%s6 + $0x2b0] sm:$0xf]
  %v325 = vld [vmem:[%s6 + $0x2b4] sm:$0xf]
  %v326 = vld [vmem:[%s6 + $0x2b8] sm:$0xf]
  %v327 = vld [vmem:[%s6 + $0x2bc] sm:$0xf]
  %v328 = vld [vmem:[%s6 + $0x2c0] sm:$0xf]
  %v329 = vld [vmem:[%s6 + $0x2c4] sm:$0xf]
  %v330 = vld [vmem:[%s6 + $0x2c8] sm:$0xf]
  %v331 = vld [vmem:[%s6 + $0x2cc] sm:$0xf]
  %v332 = vld [vmem:[%s6 + $0x2d0] sm:$0xf]
  %v333 = vld [vmem:[%s6 + $0x2d4] sm:$0xf]
  %v334 = vld [vmem:[%s6 + $0x2d8] sm:$0xf]
  %v335 = vld [vmem:[%s6 + $0x2dc] sm:$0xf]
  %v336 = vld [vmem:[%s6 + $0x2e0] sm:$0xf]
  %v337 = vld [vmem:[%s6 + $0x2e4] sm:$0xf]
  %v338 = vld [vmem:[%s6 + $0x2e8] sm:$0xf]
  %v339 = vld [vmem:[%s6 + $0x2ec] sm:$0xf]
  %v340 = vld [vmem:[%s6 + $0x2f0] sm:$0xf]
  %v341 = vld [vmem:[%s6 + $0x2f4] sm:$0xf]
  %v342 = vld [vmem:[%s6 + $0x2f8] sm:$0xf]
  %v343 = vld [vmem:[%s6 + $0x2fc] sm:$0xf]
  %v344 = vld [vmem:[%s6 + $0x300] sm:$0xf]
  %v345 = vld [vmem:[%s6 + $0x304] sm:$0xf]
  %v346 = vld [vmem:[%s6 + $0x308] sm:$0xf]
  %v347 = vld [vmem:[%s6 + $0x30c] sm:$0xf]
  %v348 = vld [vmem:[%s6 + $0x310] sm:$0xf]
  %v349 = vld [vmem:[%s6 + $0x314] sm:$0xf]
  %v350 = vld [vmem:[%s6 + $0x318] sm:$0xf]
  %v351 = vld [vmem:[%s6 + $0x31c] sm:$0xf]
  %v352 = vld [vmem:[%s6 + $0x320] sm:$0xf]
  %v353 = vld [vmem:[%s6 + $0x324] sm:$0xf]
  %v354 = vld [vmem:[%s6 + $0x328] sm:$0xf]
  %v355 = vld [vmem:[%s6 + $0x32c] sm:$0xf]
  %v356 = vld [vmem:[%s6 + $0x330] sm:$0xf]
  %v357 = vld [vmem:[%s6 + $0x334] sm:$0xf]
  %v358 = vld [vmem:[%s6 + $0x338] sm:$0xf]
  %v359 = vld [vmem:[%s6 + $0x33c] sm:$0xf]
  %v360 = vld [vmem:[%s6 + $0x340] sm:$0xf]
  %v361 = vld [vmem:[%s6 + $0x344] sm:$0xf]
  %v362 = vld [vmem:[%s6 + $0x348] sm:$0xf]
  %v363 = vld [vmem:[%s6 + $0x34c] sm:$0xf]
  %v364 = vld [vmem:[%s6 + $0x350] sm:$0xf]
  %v365 = vld [vmem:[%s6 + $0x354] sm:$0xf]
  %v366 = vld [vmem:[%s6 + $0x358] sm:$0xf]
  %v367 = vld [vmem:[%s6 + $0x35c] sm:$0xf]
  %v368 = vld [vmem:[%s6 + $0x360] sm:$0xf]
  %v369 = vld [vmem:[%s6 + $0x364] sm:$0xf]
  %v370 = vld [vmem:[%s6 + $0x368] sm:$0xf]
  %v371 = vld [vmem:[%s6 + $0x36c] sm:$0xf]
  %v372 = vld [vmem:[%s6 + $0x370] sm:$0xf]
  %v373 = vld [vmem:[%s6 + $0x374] sm:$0xf]
  %v374 = vld [vmem:[%s6 + $0x378] sm:$0xf]
  %v375 = vld [vmem:[%s6 + $0x37c] sm:$0xf]
  %v376 = vld [vmem:[%s6 + $0x380] sm:$0xf]
  %v377 = vld [vmem:[%s6 + $0x384] sm:$0xf]
  %v378 = vld [vmem:[%s6 + $0x388] sm:$0xf]
  %v379 = vld [vmem:[%s6 + $0x38c] sm:$0xf]
  %v380 = vld [vmem:[%s6 + $0x390] sm:$0xf]
  %v381 = vld [vmem:[%s6 + $0x394] sm:$0xf]
  %v382 = vld [vmem:[%s6 + $0x398] sm:$0xf]
  %v383 = vld [vmem:[%s6 + $0x39c] sm:$0xf]
  %v384 = vld [vmem:[%s6 + $0x3a0] sm:$0xf]
  %v385 = vld [vmem:[%s6 + $0x3a4] sm:$0xf]
  %v386 = vld [vmem:[%s6 + $0x3a8] sm:$0xf]
  %v387 = vld [vmem:[%s6 + $0x3ac] sm:$0xf]
  %v388 = vld [vmem:[%s6 + $0x3b0] sm:$0xf]
  %v389 = vld [vmem:[%s6 + $0x3b4] sm:$0xf]
  %v390 = vld [vmem:[%s6 + $0x3b8] sm:$0xf]
  %v391 = vld [vmem:[%s6 + $0x3bc] sm:$0xf]
  %v392 = vld [vmem:[%s6 + $0x3c0] sm:$0xf]
  %v393 = vld [vmem:[%s6 + $0x3c4] sm:$0xf]
  %v394 = vld [vmem:[%s6 + $0x3c8] sm:$0xf]
  %v395 = vld [vmem:[%s6 + $0x3cc] sm:$0xf]
  %v396 = vld [vmem:[%s6 + $0x3d0] sm:$0xf]
  %v397 = vld [vmem:[%s6 + $0x3d4] sm:$0xf]
  %v398 = vld [vmem:[%s6 + $0x3d8] sm:$0xf]
  %v399 = vld [vmem:[%s6 + $0x3dc] sm:$0xf]
  %v400 = vld [vmem:[%s6 + $0x3e0] sm:$0xf]
  %v401 = vld [vmem:[%s6 + $0x3e4] sm:$0xf]
  %v402 = vld [vmem:[%s6 + $0x3e8] sm:$0xf]
  %v403 = vld [vmem:[%s6 + $0x3ec] sm:$0xf]
  %v404 = vld [vmem:[%s6 + $0x3f0] sm:$0xf]
  %v405 = vld [vmem:[%s6 + $0x3f4] sm:$0xf]
  %v406 = vld [vmem:[%s6 + $0x3f8] sm:$0xf]
  %v407 = vld [vmem:[%s6 + $0x3fc] sm:$0xf]
  %v408 = vld [vmem:[%s7] sm:$0xff]
  %v409 = vld [vmem:[%s7 + $0x8] sm:$0xff]
  %v410 = vld [vmem:[%s7 + $0x10] sm:$0xff]
  %v411 = vld [vmem:[%s7 + $0x18] sm:$0xff]
  %v412 = vld [vmem:[%s7 + $0x20] sm:$0xff]
  %v413 = vld [vmem:[%s7 + $0x28] sm:$0xff]
  %v414 = vld [vmem:[%s7 + $0x30] sm:$0xff]
  %v415 = vld [vmem:[%s7 + $0x38] sm:$0xff]
  %v416 = vld [vmem:[%s7 + $0x40] sm:$0xff]
  %v417 = vld [vmem:[%s7 + $0x48] sm:$0xff]
  %v418 = vld [vmem:[%s7 + $0x50] sm:$0xff]
  %v419 = vld [vmem:[%s7 + $0x58] sm:$0xff]
  %v420 = vld [vmem:[%s7 + $0x60] sm:$0xff]
  %v421 = vld [vmem:[%s7 + $0x68] sm:$0xff]
  %v422 = vld [vmem:[%s7 + $0x70] sm:$0xff]
  %v423 = vld [vmem:[%s7 + $0x78] sm:$0xff]
  %v424 = vpack.c.bf16 %v105, %v103
  %v425 = vpack.c.bf16 %v110, %v108
  %v426 = vperm.slane %v408, 0
  %v431 = vunpack.c.l.b16 %v112
  %v432 = vunpack.c.l.b16 %v113
  %v433 = vunpack.c.l.b16 %v114
  %v434 = vunpack.c.l.b16 %v115
  %v435 = vpack.c.b16 %v432, %v431
  %v436 = vpack.c.b16 %v434, %v433
  %vm439 = vcmask 261120
  %v441 = vsel %vm439, %v424, 0
  %v444 = vsel %vm439, %v425, 0
  %446 = vmatpush.bf16.msra.mxu0 0
  %447 = vmatpush.bf16.msra.mxu0 0
  %448 = vmatpush.bf16.msra.mxu0 0
  %449 = vmatpush.bf16.msra.mxu0 0
  %450 = vmatpush.bf16.msra.mxu0 0
  %451 = vmatpush.bf16.msra.mxu0 0
  %452 = vmatpush.bf16.msra.mxu0 %v436
  %453 = vmatpush.bf16.msra.mxu0 %v435
  %454 = vmatmul.bf16.gmra.mxu0 %v441
  %v455 = vpop.f32.mrf.mxu0
  %v456 = vadd.f32 %v426, %v455
  %v457 = vpop.f32.mrf.mxu0
  %v458 = vadd.f32 %v426, %v457
  %459 = vmatmul.bf16.gmra.mxu0 %v444
  %v460 = vpop.f32.mrf.mxu0
  %v461 = vadd.f32 %v426, %v460
  %v462 = vpop.f32.mrf.mxu0
  %v463 = vadd.f32 %v426, %v462
  %464 = vdwg.mxu0
  %467 = vrot.lane.b32.xlu0 %v456, 96
  %v468 = vpop.permute.xlu0 %467
  %469 = vrot.lane.b32.xlu0 %v458, 96
  %v470 = vpop.permute.xlu0 %469
  %vm471 = vcmask 64512
  %v472 = vsel %vm471, %v456, 0
  %v474 = vsel %vm471, %v458, 0
  %v476 = vsel %vm471, %v468, 0
  %v478 = vsel %vm471, %v470, 0
  %480 = vmatpush.xpose.msra.mxu0 0.0
  %481 = vmatpush.xpose.msra.mxu0 0.0
  %482 = vmatpush.xpose.msra.mxu0 0.0
  %483 = vmatpush.xpose.msra.mxu0 0.0
  %484 = vmatpush.xpose.msra.mxu0 0.0
  %485 = vmatpush.xpose.msra.mxu0 0.0
  %486 = vmatpush.xpose.msra.mxu0 0.0
  %487 = vmatpush.xpose.msra.mxu0 0.0
  %488 = vmatpush.xpose.msra.mxu0 0.0
  %489 = vmatpush.xpose.msra.mxu0 0.0
  %490 = vmatpush.xpose.msra.mxu0 0.0
  %491 = vmatpush.xpose.msra.mxu0 0.0
  %492 = vmatpush.xpose.msra.mxu0 0.0
  %493 = vmatpush.xpose.msra.mxu0 0.0
  %494 = vmatpush.xpose.msra.mxu0 %v478
  %495 = vmatpush.xpose.msra.mxu0 %v476
  %496 = vmatmul.f32.gmra.mxu0 %v472
  %v497 = vpop.f32.mrf.mxu0
  %v498 = vadd.f32 0.0, %v497
  %499 = vmatmul.f32.gmra.mxu0 %v474
  %v500 = vpop.f32.mrf.mxu0
  %v501 = vadd.f32 0.0, %v500
  %502 = vdwg.mxu0
  %505 = vrot.lane.b32.xlu0 %v461, 96
  %v506 = vpop.permute.xlu0 %505
  %507 = vrot.lane.b32.xlu0 %v463, 96
  %v508 = vpop.permute.xlu0 %507
  %v509 = vsel %vm471, %v461, 0
  %v511 = vsel %vm471, %v463, 0
  %v513 = vsel %vm471, %v506, 0
  %v515 = vsel %vm471, %v508, 0
  %517 = vmatpush.xpose.msra.mxu0 0.0
  %518 = vmatpush.xpose.msra.mxu0 0.0
  %519 = vmatpush.xpose.msra.mxu0 0.0
  %520 = vmatpush.xpose.msra.mxu0 0.0
  %521 = vmatpush.xpose.msra.mxu0 0.0
  %522 = vmatpush.xpose.msra.mxu0 0.0
  %523 = vmatpush.xpose.msra.mxu0 0.0
  %524 = vmatpush.xpose.msra.mxu0 0.0
  %525 = vmatpush.xpose.msra.mxu0 0.0
  %526 = vmatpush.xpose.msra.mxu0 0.0
  %527 = vmatpush.xpose.msra.mxu0 0.0
  %528 = vmatpush.xpose.msra.mxu0 0.0
  %529 = vmatpush.xpose.msra.mxu0 0.0
  %530 = vmatpush.xpose.msra.mxu0 0.0
  %531 = vmatpush.xpose.msra.mxu0 %v515
  %532 = vmatpush.xpose.msra.mxu0 %v513
  %533 = vmatmul.f32.gmra.mxu0 %v509
  %v534 = vpop.f32.mrf.mxu0
  %v535 = vadd.f32 0.0, %v534
  %536 = vmatmul.f32.gmra.mxu0 %v511
  %v537 = vpop.f32.mrf.mxu0
  %v538 = vadd.f32 0.0, %v537
  %539 = vdwg.mxu0
  %vm540 = vcmask 130048
  %v541 = vsel %vm540, %v498, -inf
  %542 = vmax.xlane.f32.xlu0 %v541
  %v543 = vpop.xlane.xlu0 %542
  %v544 = vsel %vm540, %v501, -inf
  %545 = vmax.xlane.f32.xlu0 %v544
  %v546 = vpop.xlane.xlu0 %545
  %v547 = vsel %vm540, %v535, -inf
  %548 = vmax.xlane.f32.xlu0 %v547
  %v549 = vpop.xlane.xlu0 %548
  %v550 = vsel %vm540, %v538, -inf
  %551 = vmax.xlane.f32.xlu0 %v550
  %v552 = vpop.xlane.xlu0 %551
  %v553 = vsub.f32 %v498, %v543
  %v554 = vsub.f32 %v501, %v546
  %v555 = vsub.f32 %v535, %v549
  %v556 = vsub.f32 %v538, %v552
  %v557 = vmul.f32 %v553, 1.442695
  %v558 = vpow.pop %v557
  %v559 = vmul.f32 %v554, 1.442695
  %v560 = vpow.pop %v559
  %v561 = vmul.f32 %v555, 1.442695
  %v562 = vpow.pop %v561
  %v563 = vmul.f32 %v556, 1.442695
  %v564 = vpow.pop %v563
  %v565 = vsel %vm540, %v558, 0.0
  %566 = vadd.xlane.f32.xlu0 %v565
  %v567 = vpop.xlane.xlu0 %566
  %v568 = vsel %vm540, %v560, 0.0
  %569 = vadd.xlane.f32.xlu0 %v568
  %v570 = vpop.xlane.xlu0 %569
  %v571 = vsel %vm540, %v562, 0.0
  %572 = vadd.xlane.f32.xlu0 %v571
  %v573 = vpop.xlane.xlu0 %572
  %v574 = vsel %vm540, %v564, 0.0
  %575 = vadd.xlane.f32.xlu0 %v574
  %v576 = vpop.xlane.xlu0 %575
  %v577 = vrcp.pop %v567
  %v578 = vrcp.pop %v570
  %v579 = vrcp.pop %v573
  %v580 = vrcp.pop %v576
  %v581 = vmul.f32 %v558, %v577
  %v582 = vmul.f32 %v560, %v578
  %v583 = vmul.f32 %v562, %v579
  %v584 = vmul.f32 %v564, %v580
  %585 = vrot.lane.b32.xlu0 %v456, 64
  %v586 = vpop.permute.xlu0 %585
  %587 = vrot.lane.b32.xlu0 %v458, 64
  %v588 = vpop.permute.xlu0 %587
  %v592 = vsel %vm540, %v581, 0
  %v595 = vsel %vm540, %v582, 0
  %597 = vmatpush.msra.mxu0 0.0
  %598 = vmatpush.msra.mxu0 0.0
  %599 = vmatpush.msra.mxu0 0.0
  %600 = vmatpush.msra.mxu0 0.0
  %601 = vmatpush.msra.mxu0 0.0
  %602 = vmatpush.msra.mxu0 0.0
  %603 = vmatpush.msra.mxu0 0.0
  %604 = vmatpush.msra.mxu0 0.0
  %605 = vmatpush.msra.mxu0 0.0
  %606 = vmatpush.msra.mxu0 0.0
  %607 = vmatpush.msra.mxu0 0.0
  %608 = vmatpush.msra.mxu0 0.0
  %609 = vmatpush.msra.mxu0 0.0
  %610 = vmatpush.msra.mxu0 0.0
  %611 = vmatpush.msra.mxu0 %v588
  %612 = vmatpush.msra.mxu0 %v586
  %613 = vmatmul.f32.gmra.mxu0 %v592
  %v614 = vpop.f32.mrf.mxu0
  %v615 = vadd.f32 0.0, %v614
  %616 = vmatmul.f32.gmra.mxu0 %v595
  %v617 = vpop.f32.mrf.mxu0
  %v618 = vadd.f32 0.0, %v617
  %619 = vdwg.mxu0
  %620 = vrot.lane.b32.xlu0 %v461, 64
  %v621 = vpop.permute.xlu0 %620
  %622 = vrot.lane.b32.xlu0 %v463, 64
  %v623 = vpop.permute.xlu0 %622
  %v627 = vsel %vm540, %v583, 0
  %v630 = vsel %vm540, %v584, 0
  %632 = vmatpush.msra.mxu0 0.0
  %633 = vmatpush.msra.mxu0 0.0
  %634 = vmatpush.msra.mxu0 0.0
  %635 = vmatpush.msra.mxu0 0.0
  %636 = vmatpush.msra.mxu0 0.0
  %637 = vmatpush.msra.mxu0 0.0
  %638 = vmatpush.msra.mxu0 0.0
  %639 = vmatpush.msra.mxu0 0.0
  %640 = vmatpush.msra.mxu0 0.0
  %641 = vmatpush.msra.mxu0 0.0
  %642 = vmatpush.msra.mxu0 0.0
  %643 = vmatpush.msra.mxu0 0.0
  %644 = vmatpush.msra.mxu0 0.0
  %645 = vmatpush.msra.mxu0 0.0
  %646 = vmatpush.msra.mxu0 %v623
  %647 = vmatpush.msra.mxu0 %v621
  %648 = vmatmul.f32.gmra.mxu0 %v627
  %v649 = vpop.f32.mrf.mxu0
  %v650 = vadd.f32 0.0, %v649
  %651 = vmatmul.f32.gmra.mxu0 %v630
  %v652 = vpop.f32.mrf.mxu0
  %v653 = vadd.f32 0.0, %v652
  %654 = vdwg.mxu0
  %655 = vrot.lane.b32.xlu0 %v456, 120
  %v656 = vpop.permute.xlu0 %655
  %657 = vrot.lane.b32.xlu0 %v458, 120
  %v658 = vpop.permute.xlu0 %657
  %659 = vrot.lane.b32.xlu0 %v456, 88
  %v660 = vpop.permute.xlu0 %659
  %661 = vrot.lane.b32.xlu0 %v458, 88
  %v662 = vpop.permute.xlu0 %661
  %v663 = vsel %vm471, %v656, 0
  %v665 = vsel %vm471, %v658, 0
  %v667 = vsel %vm471, %v660, 0
  %v669 = vsel %vm471, %v662, 0
  %671 = vmatpush.xpose.msra.mxu0 0.0
  %672 = vmatpush.xpose.msra.mxu0 0.0
  %673 = vmatpush.xpose.msra.mxu0 0.0
  %674 = vmatpush.xpose.msra.mxu0 0.0
  %675 = vmatpush.xpose.msra.mxu0 0.0
  %676 = vmatpush.xpose.msra.mxu0 0.0
  %677 = vmatpush.xpose.msra.mxu0 0.0
  %678 = vmatpush.xpose.msra.mxu0 0.0
  %679 = vmatpush.xpose.msra.mxu0 0.0
  %680 = vmatpush.xpose.msra.mxu0 0.0
  %681 = vmatpush.xpose.msra.mxu0 0.0
  %682 = vmatpush.xpose.msra.mxu0 0.0
  %683 = vmatpush.xpose.msra.mxu0 0.0
  %684 = vmatpush.xpose.msra.mxu0 0.0
  %685 = vmatpush.xpose.msra.mxu0 %v669
  %686 = vmatpush.xpose.msra.mxu0 %v667
  %687 = vmatmul.f32.gmra.mxu0 %v663
  %v688 = vpop.f32.mrf.mxu0
  %v689 = vadd.f32 0.0, %v688
  %690 = vmatmul.f32.gmra.mxu0 %v665
  %v691 = vpop.f32.mrf.mxu0
  %v692 = vadd.f32 0.0, %v691
  %693 = vdwg.mxu0
  %694 = vrot.lane.b32.xlu0 %v461, 120
  %v695 = vpop.permute.xlu0 %694
  %696 = vrot.lane.b32.xlu0 %v463, 120
  %v697 = vpop.permute.xlu0 %696
  %698 = vrot.lane.b32.xlu0 %v461, 88
  %v699 = vpop.permute.xlu0 %698
  %700 = vrot.lane.b32.xlu0 %v463, 88
  %v701 = vpop.permute.xlu0 %700
  %v702 = vsel %vm471, %v695, 0
  %v704 = vsel %vm471, %v697, 0
  %v706 = vsel %vm471, %v699, 0
  %v708 = vsel %vm471, %v701, 0
  %710 = vmatpush.xpose.msra.mxu0 0.0
  %711 = vmatpush.xpose.msra.mxu0 0.0
  %712 = vmatpush.xpose.msra.mxu0 0.0
  %713 = vmatpush.xpose.msra.mxu0 0.0
  %714 = vmatpush.xpose.msra.mxu0 0.0
  %715 = vmatpush.xpose.msra.mxu0 0.0
  %716 = vmatpush.xpose.msra.mxu0 0.0
  %717 = vmatpush.xpose.msra.mxu0 0.0
  %718 = vmatpush.xpose.msra.mxu0 0.0
  %719 = vmatpush.xpose.msra.mxu0 0.0
  %720 = vmatpush.xpose.msra.mxu0 0.0
  %721 = vmatpush.xpose.msra.mxu0 0.0
  %722 = vmatpush.xpose.msra.mxu0 0.0
  %723 = vmatpush.xpose.msra.mxu0 0.0
  %724 = vmatpush.xpose.msra.mxu0 %v708
  %725 = vmatpush.xpose.msra.mxu0 %v706
  %726 = vmatmul.f32.gmra.mxu0 %v702
  %v727 = vpop.f32.mrf.mxu0
  %v728 = vadd.f32 0.0, %v727
  %729 = vmatmul.f32.gmra.mxu0 %v704
  %v730 = vpop.f32.mrf.mxu0
  %v731 = vadd.f32 0.0, %v730
  %732 = vdwg.mxu0
  %v733 = vsel %vm540, %v689, -inf
  %734 = vmax.xlane.f32.xlu0 %v733
  %v735 = vpop.xlane.xlu0 %734
  %v736 = vsel %vm540, %v692, -inf
  %737 = vmax.xlane.f32.xlu0 %v736
  %v738 = vpop.xlane.xlu0 %737
  %v739 = vsel %vm540, %v728, -inf
  %740 = vmax.xlane.f32.xlu0 %v739
  %v741 = vpop.xlane.xlu0 %740
  %v742 = vsel %vm540, %v731, -inf
  %743 = vmax.xlane.f32.xlu0 %v742
  %v744 = vpop.xlane.xlu0 %743
  %v745 = vsub.f32 %v689, %v735
  %v746 = vsub.f32 %v692, %v738
  %v747 = vsub.f32 %v728, %v741
  %v748 = vsub.f32 %v731, %v744
  %v749 = vmul.f32 %v745, 1.442695
  %v750 = vpow.pop %v749
  %v751 = vmul.f32 %v746, 1.442695
  %v752 = vpow.pop %v751
  %v753 = vmul.f32 %v747, 1.442695
  %v754 = vpow.pop %v753
  %v755 = vmul.f32 %v748, 1.442695
  %v756 = vpow.pop %v755
  %v757 = vsel %vm540, %v750, 0.0
  %758 = vadd.xlane.f32.xlu0 %v757
  %v759 = vpop.xlane.xlu0 %758
  %v760 = vsel %vm540, %v752, 0.0
  %761 = vadd.xlane.f32.xlu0 %v760
  %v762 = vpop.xlane.xlu0 %761
  %v763 = vsel %vm540, %v754, 0.0
  %764 = vadd.xlane.f32.xlu0 %v763
  %v765 = vpop.xlane.xlu0 %764
  %v766 = vsel %vm540, %v756, 0.0
  %767 = vadd.xlane.f32.xlu0 %v766
  %v768 = vpop.xlane.xlu0 %767
  %v769 = vrcp.pop %v759
  %v770 = vrcp.pop %v762
  %v771 = vrcp.pop %v765
  %v772 = vrcp.pop %v768
  %v773 = vmul.f32 %v750, %v769
  %v774 = vmul.f32 %v752, %v770
  %v775 = vmul.f32 %v754, %v771
  %v776 = vmul.f32 %v756, %v772
  %777 = vrot.lane.b32.xlu0 %v456, 56
  %v778 = vpop.permute.xlu0 %777
  %779 = vrot.lane.b32.xlu0 %v458, 56
  %v780 = vpop.permute.xlu0 %779
  %v784 = vsel %vm540, %v773, 0
  %v787 = vsel %vm540, %v774, 0
  %789 = vmatpush.msra.mxu0 0.0
  %790 = vmatpush.msra.mxu0 0.0
  %791 = vmatpush.msra.mxu0 0.0
  %792 = vmatpush.msra.mxu0 0.0
  %793 = vmatpush.msra.mxu0 0.0
  %794 = vmatpush.msra.mxu0 0.0
  %795 = vmatpush.msra.mxu0 0.0
  %796 = vmatpush.msra.mxu0 0.0
  %797 = vmatpush.msra.mxu0 0.0
  %798 = vmatpush.msra.mxu0 0.0
  %799 = vmatpush.msra.mxu0 0.0
  %800 = vmatpush.msra.mxu0 0.0
  %801 = vmatpush.msra.mxu0 0.0
  %802 = vmatpush.msra.mxu0 0.0
  %803 = vmatpush.msra.mxu0 %v780
  %804 = vmatpush.msra.mxu0 %v778
  %805 = vmatmul.f32.gmra.mxu0 %v784
  %v806 = vpop.f32.mrf.mxu0
  %v807 = vadd.f32 0.0, %v806
  %808 = vmatmul.f32.gmra.mxu0 %v787
  %v809 = vpop.f32.mrf.mxu0
  %v810 = vadd.f32 0.0, %v809
  %811 = vdwg.mxu0
  %812 = vrot.lane.b32.xlu0 %v461, 56
  %v813 = vpop.permute.xlu0 %812
  %814 = vrot.lane.b32.xlu0 %v463, 56
  %v815 = vpop.permute.xlu0 %814
  %v819 = vsel %vm540, %v775, 0
  %v822 = vsel %vm540, %v776, 0
  %824 = vmatpush.msra.mxu0 0.0
  %825 = vmatpush.msra.mxu0 0.0
  %826 = vmatpush.msra.mxu0 0.0
  %827 = vmatpush.msra.mxu0 0.0
  %828 = vmatpush.msra.mxu0 0.0
  %829 = vmatpush.msra.mxu0 0.0
  %830 = vmatpush.msra.mxu0 0.0
  %831 = vmatpush.msra.mxu0 0.0
  %832 = vmatpush.msra.mxu0 0.0
  %833 = vmatpush.msra.mxu0 0.0
  %834 = vmatpush.msra.mxu0 0.0
  %835 = vmatpush.msra.mxu0 0.0
  %836 = vmatpush.msra.mxu0 0.0
  %837 = vmatpush.msra.mxu0 0.0
  %838 = vmatpush.msra.mxu0 %v815
  %839 = vmatpush.msra.mxu0 %v813
  %840 = vmatmul.f32.gmra.mxu0 %v819
  %v841 = vpop.f32.mrf.mxu0
  %v842 = vadd.f32 0.0, %v841
  %843 = vmatmul.f32.gmra.mxu0 %v822
  %v844 = vpop.f32.mrf.mxu0
  %v845 = vadd.f32 0.0, %v844
  %846 = vdwg.mxu0
  %847 = vrot.lane.b32.xlu0 %v456, 112
  %v848 = vpop.permute.xlu0 %847
  %849 = vrot.lane.b32.xlu0 %v458, 112
  %v850 = vpop.permute.xlu0 %849
  %851 = vrot.lane.b32.xlu0 %v456, 80
  %v852 = vpop.permute.xlu0 %851
  %853 = vrot.lane.b32.xlu0 %v458, 80
  %v854 = vpop.permute.xlu0 %853
  %v855 = vsel %vm471, %v848, 0
  %v857 = vsel %vm471, %v850, 0
  %v859 = vsel %vm471, %v852, 0
  %v861 = vsel %vm471, %v854, 0
  %863 = vmatpush.xpose.msra.mxu0 0.0
  %864 = vmatpush.xpose.msra.mxu0 0.0
  %865 = vmatpush.xpose.msra.mxu0 0.0
  %866 = vmatpush.xpose.msra.mxu0 0.0
  %867 = vmatpush.xpose.msra.mxu0 0.0
  %868 = vmatpush.xpose.msra.mxu0 0.0
  %869 = vmatpush.xpose.msra.mxu0 0.0
  %870 = vmatpush.xpose.msra.mxu0 0.0
  %871 = vmatpush.xpose.msra.mxu0 0.0
  %872 = vmatpush.xpose.msra.mxu0 0.0
  %873 = vmatpush.xpose.msra.mxu0 0.0
  %874 = vmatpush.xpose.msra.mxu0 0.0
  %875 = vmatpush.xpose.msra.mxu0 0.0
  %876 = vmatpush.xpose.msra.mxu0 0.0
  %877 = vmatpush.xpose.msra.mxu0 %v861
  %878 = vmatpush.xpose.msra.mxu0 %v859
  %879 = vmatmul.f32.gmra.mxu0 %v855
  %v880 = vpop.f32.mrf.mxu0
  %v881 = vadd.f32 0.0, %v880
  %882 = vmatmul.f32.gmra.mxu0 %v857
  %v883 = vpop.f32.mrf.mxu0
  %v884 = vadd.f32 0.0, %v883
  %885 = vdwg.mxu0
  %886 = vrot.lane.b32.xlu0 %v461, 112
  %v887 = vpop.permute.xlu0 %886
  %888 = vrot.lane.b32.xlu0 %v463, 112
  %v889 = vpop.permute.xlu0 %888
  %890 = vrot.lane.b32.xlu0 %v461, 80
  %v891 = vpop.permute.xlu0 %890
  %892 = vrot.lane.b32.xlu0 %v463, 80
  %v893 = vpop.permute.xlu0 %892
  %v894 = vsel %vm471, %v887, 0
  %v896 = vsel %vm471, %v889, 0
  %v898 = vsel %vm471, %v891, 0
  %v900 = vsel %vm471, %v893, 0
  %902 = vmatpush.xpose.msra.mxu0 0.0
  %903 = vmatpush.xpose.msra.mxu0 0.0
  %904 = vmatpush.xpose.msra.mxu0 0.0
  %905 = vmatpush.xpose.msra.mxu0 0.0
  %906 = vmatpush.xpose.msra.mxu0 0.0
  %907 = vmatpush.xpose.msra.mxu0 0.0
  %908 = vmatpush.xpose.msra.mxu0 0.0
  %909 = vmatpush.xpose.msra.mxu0 0.0
  %910 = vmatpush.xpose.msra.mxu0 0.0
  %911 = vmatpush.xpose.msra.mxu0 0.0
  %912 = vmatpush.xpose.msra.mxu0 0.0
  %913 = vmatpush.xpose.msra.mxu0 0.0
  %914 = vmatpush.xpose.msra.mxu0 0.0
  %915 = vmatpush.xpose.msra.mxu0 0.0
  %916 = vmatpush.xpose.msra.mxu0 %v900
  %917 = vmatpush.xpose.msra.mxu0 %v898
  %918 = vmatmul.f32.gmra.mxu0 %v894
  %v919 = vpop.f32.mrf.mxu0
  %v920 = vadd.f32 0.0, %v919
  %921 = vmatmul.f32.gmra.mxu0 %v896
  %v922 = vpop.f32.mrf.mxu0
  %v923 = vadd.f32 0.0, %v922
  %924 = vdwg.mxu0
  %v925 = vsel %vm540, %v881, -inf
  %926 = vmax.xlane.f32.xlu0 %v925
  %v927 = vpop.xlane.xlu0 %926
  %v928 = vsel %vm540, %v884, -inf
  %929 = vmax.xlane.f32.xlu0 %v928
  %v930 = vpop.xlane.xlu0 %929
  %v931 = vsel %vm540, %v920, -inf
  %932 = vmax.xlane.f32.xlu0 %v931
  %v933 = vpop.xlane.xlu0 %932
  %v934 = vsel %vm540, %v923, -inf
  %935 = vmax.xlane.f32.xlu0 %v934
  %v936 = vpop.xlane.xlu0 %935
  %v937 = vsub.f32 %v881, %v927
  %v938 = vsub.f32 %v884, %v930
  %v939 = vsub.f32 %v920, %v933
  %v940 = vsub.f32 %v923, %v936
  %v941 = vmul.f32 %v937, 1.442695
  %v942 = vpow.pop %v941
  %v943 = vmul.f32 %v938, 1.442695
  %v944 = vpow.pop %v943
  %v945 = vmul.f32 %v939, 1.442695
  %v946 = vpow.pop %v945
  %v947 = vmul.f32 %v940, 1.442695
  %v948 = vpow.pop %v947
  %v949 = vsel %vm540, %v942, 0.0
  %950 = vadd.xlane.f32.xlu0 %v949
  %v951 = vpop.xlane.xlu0 %950
  %v952 = vsel %vm540, %v944, 0.0
  %953 = vadd.xlane.f32.xlu0 %v952
  %v954 = vpop.xlane.xlu0 %953
  %v955 = vsel %vm540, %v946, 0.0
  %956 = vadd.xlane.f32.xlu0 %v955
  %v957 = vpop.xlane.xlu0 %956
  %v958 = vsel %vm540, %v948, 0.0
  %959 = vadd.xlane.f32.xlu0 %v958
  %v960 = vpop.xlane.xlu0 %959
  %v961 = vrcp.pop %v951
  %v962 = vrcp.pop %v954
  %v963 = vrcp.pop %v957
  %v964 = vrcp.pop %v960
  %v965 = vmul.f32 %v942, %v961
  %v966 = vmul.f32 %v944, %v962
  %v967 = vmul.f32 %v946, %v963
  %v968 = vmul.f32 %v948, %v964
  %969 = vrot.lane.b32.xlu0 %v456, 48
  %v970 = vpop.permute.xlu0 %969
  %971 = vrot.lane.b32.xlu0 %v458, 48
  %v972 = vpop.permute.xlu0 %971
  %v976 = vsel %vm540, %v965, 0
  %v979 = vsel %vm540, %v966, 0
  %981 = vmatpush.msra.mxu0 0.0
  %982 = vmatpush.msra.mxu0 0.0
  %983 = vmatpush.msra.mxu0 0.0
  %984 = vmatpush.msra.mxu0 0.0
  %985 = vmatpush.msra.mxu0 0.0
  %986 = vmatpush.msra.mxu0 0.0
  %987 = vmatpush.msra.mxu0 0.0
  %988 = vmatpush.msra.mxu0 0.0
  %989 = vmatpush.msra.mxu0 0.0
  %990 = vmatpush.msra.mxu0 0.0
  %991 = vmatpush.msra.mxu0 0.0
  %992 = vmatpush.msra.mxu0 0.0
  %993 = vmatpush.msra.mxu0 0.0
  %994 = vmatpush.msra.mxu0 0.0
  %995 = vmatpush.msra.mxu0 %v972
  %996 = vmatpush.msra.mxu0 %v970
  %997 = vmatmul.f32.gmra.mxu0 %v976
  %v998 = vpop.f32.mrf.mxu0
  %v999 = vadd.f32 0.0, %v998
  %1000 = vmatmul.f32.gmra.mxu0 %v979
  %v1001 = vpop.f32.mrf.mxu0
  %v1002 = vadd.f32 0.0, %v1001
  %1003 = vdwg.mxu0
  %1004 = vrot.lane.b32.xlu0 %v461, 48
  %v1005 = vpop.permute.xlu0 %1004
  %1006 = vrot.lane.b32.xlu0 %v463, 48
  %v1007 = vpop.permute.xlu0 %1006
  %v1011 = vsel %vm540, %v967, 0
  %v1014 = vsel %vm540, %v968, 0
  %1016 = vmatpush.msra.mxu0 0.0
  %1017 = vmatpush.msra.mxu0 0.0
  %1018 = vmatpush.msra.mxu0 0.0
  %1019 = vmatpush.msra.mxu0 0.0
  %1020 = vmatpush.msra.mxu0 0.0
  %1021 = vmatpush.msra.mxu0 0.0
  %1022 = vmatpush.msra.mxu0 0.0
  %1023 = vmatpush.msra.mxu0 0.0
  %1024 = vmatpush.msra.mxu0 0.0
  %1025 = vmatpush.msra.mxu0 0.0
  %1026 = vmatpush.msra.mxu0 0.0
  %1027 = vmatpush.msra.mxu0 0.0
  %1028 = vmatpush.msra.mxu0 0.0
  %1029 = vmatpush.msra.mxu0 0.0
  %1030 = vmatpush.msra.mxu0 %v1007
  %1031 = vmatpush.msra.mxu0 %v1005
  %1032 = vmatmul.f32.gmra.mxu0 %v1011
  %v1033 = vpop.f32.mrf.mxu0
  %v1034 = vadd.f32 0.0, %v1033
  %1035 = vmatmul.f32.gmra.mxu0 %v1014
  %v1036 = vpop.f32.mrf.mxu0
  %v1037 = vadd.f32 0.0, %v1036
  %1038 = vdwg.mxu0
  %1039 = vrot.lane.b32.xlu0 %v456, 104
  %v1040 = vpop.permute.xlu0 %1039
  %1041 = vrot.lane.b32.xlu0 %v458, 104
  %v1042 = vpop.permute.xlu0 %1041
  %1043 = vrot.lane.b32.xlu0 %v456, 72
  %v1044 = vpop.permute.xlu0 %1043
  %1045 = vrot.lane.b32.xlu0 %v458, 72
  %v1046 = vpop.permute.xlu0 %1045
  %v1047 = vsel %vm471, %v1040, 0
  %v1049 = vsel %vm471, %v1042, 0
  %v1051 = vsel %vm471, %v1044, 0
  %v1053 = vsel %vm471, %v1046, 0
  %1055 = vmatpush.xpose.msra.mxu0 0.0
  %1056 = vmatpush.xpose.msra.mxu0 0.0
  %1057 = vmatpush.xpose.msra.mxu0 0.0
  %1058 = vmatpush.xpose.msra.mxu0 0.0
  %1059 = vmatpush.xpose.msra.mxu0 0.0
  %1060 = vmatpush.xpose.msra.mxu0 0.0
  %1061 = vmatpush.xpose.msra.mxu0 0.0
  %1062 = vmatpush.xpose.msra.mxu0 0.0
  %1063 = vmatpush.xpose.msra.mxu0 0.0
  %1064 = vmatpush.xpose.msra.mxu0 0.0
  %1065 = vmatpush.xpose.msra.mxu0 0.0
  %1066 = vmatpush.xpose.msra.mxu0 0.0
  %1067 = vmatpush.xpose.msra.mxu0 0.0
  %1068 = vmatpush.xpose.msra.mxu0 0.0
  %1069 = vmatpush.xpose.msra.mxu0 %v1053
  %1070 = vmatpush.xpose.msra.mxu0 %v1051
  %1071 = vmatmul.f32.gmra.mxu0 %v1047
  %v1072 = vpop.f32.mrf.mxu0
  %v1073 = vadd.f32 0.0, %v1072
  %1074 = vmatmul.f32.gmra.mxu0 %v1049
  %v1075 = vpop.f32.mrf.mxu0
  %v1076 = vadd.f32 0.0, %v1075
  %1077 = vdwg.mxu0
  %1078 = vrot.lane.b32.xlu0 %v461, 104
  %v1079 = vpop.permute.xlu0 %1078
  %1080 = vrot.lane.b32.xlu0 %v463, 104
  %v1081 = vpop.permute.xlu0 %1080
  %1082 = vrot.lane.b32.xlu0 %v461, 72
  %v1083 = vpop.permute.xlu0 %1082
  %1084 = vrot.lane.b32.xlu0 %v463, 72
  %v1085 = vpop.permute.xlu0 %1084
  %v1086 = vsel %vm471, %v1079, 0
  %v1088 = vsel %vm471, %v1081, 0
  %v1090 = vsel %vm471, %v1083, 0
  %v1092 = vsel %vm471, %v1085, 0
  %1094 = vmatpush.xpose.msra.mxu0 0.0
  %1095 = vmatpush.xpose.msra.mxu0 0.0
  %1096 = vmatpush.xpose.msra.mxu0 0.0
  %1097 = vmatpush.xpose.msra.mxu0 0.0
  %1098 = vmatpush.xpose.msra.mxu0 0.0
  %1099 = vmatpush.xpose.msra.mxu0 0.0
  %1100 = vmatpush.xpose.msra.mxu0 0.0
  %1101 = vmatpush.xpose.msra.mxu0 0.0
  %1102 = vmatpush.xpose.msra.mxu0 0.0
  %1103 = vmatpush.xpose.msra.mxu0 0.0
  %1104 = vmatpush.xpose.msra.mxu0 0.0
  %1105 = vmatpush.xpose.msra.mxu0 0.0
  %1106 = vmatpush.xpose.msra.mxu0 0.0
  %1107 = vmatpush.xpose.msra.mxu0 0.0
  %1108 = vmatpush.xpose.msra.mxu0 %v1092
  %1109 = vmatpush.xpose.msra.mxu0 %v1090
  %1110 = vmatmul.f32.gmra.mxu0 %v1086
  %v1111 = vpop.f32.mrf.mxu0
  %v1112 = vadd.f32 0.0, %v1111
  %1113 = vmatmul.f32.gmra.mxu0 %v1088
  %v1114 = vpop.f32.mrf.mxu0
  %v1115 = vadd.f32 0.0, %v1114
  %1116 = vdwg.mxu0
  %v1117 = vsel %vm540, %v1073, -inf
  %1118 = vmax.xlane.f32.xlu0 %v1117
  %v1119 = vpop.xlane.xlu0 %1118
  %v1120 = vsel %vm540, %v1076, -inf
  %1121 = vmax.xlane.f32.xlu0 %v1120
  %v1122 = vpop.xlane.xlu0 %1121
  %v1123 = vsel %vm540, %v1112, -inf
  %1124 = vmax.xlane.f32.xlu0 %v1123
  %v1125 = vpop.xlane.xlu0 %1124
  %v1126 = vsel %vm540, %v1115, -inf
  %1127 = vmax.xlane.f32.xlu0 %v1126
  %v1128 = vpop.xlane.xlu0 %1127
  %v1129 = vsub.f32 %v1073, %v1119
  %v1130 = vsub.f32 %v1076, %v1122
  %v1131 = vsub.f32 %v1112, %v1125
  %v1132 = vsub.f32 %v1115, %v1128
  %v1133 = vmul.f32 %v1129, 1.442695
  %v1134 = vpow.pop %v1133
  %v1135 = vmul.f32 %v1130, 1.442695
  %v1136 = vpow.pop %v1135
  %v1137 = vmul.f32 %v1131, 1.442695
  %v1138 = vpow.pop %v1137
  %v1139 = vmul.f32 %v1132, 1.442695
  %v1140 = vpow.pop %v1139
  %v1141 = vsel %vm540, %v1134, 0.0
  %1142 = vadd.xlane.f32.xlu0 %v1141
  %v1143 = vpop.xlane.xlu0 %1142
  %v1144 = vsel %vm540, %v1136, 0.0
  %1145 = vadd.xlane.f32.xlu0 %v1144
  %v1146 = vpop.xlane.xlu0 %1145
  %v1147 = vsel %vm540, %v1138, 0.0
  %1148 = vadd.xlane.f32.xlu0 %v1147
  %v1149 = vpop.xlane.xlu0 %1148
  %v1150 = vsel %vm540, %v1140, 0.0
  %1151 = vadd.xlane.f32.xlu0 %v1150
  %v1152 = vpop.xlane.xlu0 %1151
  %v1153 = vrcp.pop %v1143
  %v1154 = vrcp.pop %v1146
  %v1155 = vrcp.pop %v1149
  %v1156 = vrcp.pop %v1152
  %v1157 = vmul.f32 %v1134, %v1153
  %v1158 = vmul.f32 %v1136, %v1154
  %v1159 = vmul.f32 %v1138, %v1155
  %v1160 = vmul.f32 %v1140, %v1156
  %1161 = vrot.lane.b32.xlu0 %v456, 40
  %v1162 = vpop.permute.xlu0 %1161
  %1163 = vrot.lane.b32.xlu0 %v458, 40
  %v1164 = vpop.permute.xlu0 %1163
  %v1168 = vsel %vm540, %v1157, 0
  %v1171 = vsel %vm540, %v1158, 0
  %1173 = vmatpush.msra.mxu0 0.0
  %1174 = vmatpush.msra.mxu0 0.0
  %1175 = vmatpush.msra.mxu0 0.0
  %1176 = vmatpush.msra.mxu0 0.0
  %1177 = vmatpush.msra.mxu0 0.0
  %1178 = vmatpush.msra.mxu0 0.0
  %1179 = vmatpush.msra.mxu0 0.0
  %1180 = vmatpush.msra.mxu0 0.0
  %1181 = vmatpush.msra.mxu0 0.0
  %1182 = vmatpush.msra.mxu0 0.0
  %1183 = vmatpush.msra.mxu0 0.0
  %1184 = vmatpush.msra.mxu0 0.0
  %1185 = vmatpush.msra.mxu0 0.0
  %1186 = vmatpush.msra.mxu0 0.0
  %1187 = vmatpush.msra.mxu0 %v1164
  %1188 = vmatpush.msra.mxu0 %v1162
  %1189 = vmatmul.f32.gmra.mxu0 %v1168
  %v1190 = vpop.f32.mrf.mxu0
  %v1191 = vadd.f32 0.0, %v1190
  %1192 = vmatmul.f32.gmra.mxu0 %v1171
  %v1193 = vpop.f32.mrf.mxu0
  %v1194 = vadd.f32 0.0, %v1193
  %1195 = vdwg.mxu0
  %1196 = vrot.lane.b32.xlu0 %v461, 40
  %v1197 = vpop.permute.xlu0 %1196
  %1198 = vrot.lane.b32.xlu0 %v463, 40
  %v1199 = vpop.permute.xlu0 %1198
  %v1203 = vsel %vm540, %v1159, 0
  %v1206 = vsel %vm540, %v1160, 0
  %1208 = vmatpush.msra.mxu0 0.0
  %1209 = vmatpush.msra.mxu0 0.0
  %1210 = vmatpush.msra.mxu0 0.0
  %1211 = vmatpush.msra.mxu0 0.0
  %1212 = vmatpush.msra.mxu0 0.0
  %1213 = vmatpush.msra.mxu0 0.0
  %1214 = vmatpush.msra.mxu0 0.0
  %1215 = vmatpush.msra.mxu0 0.0
  %1216 = vmatpush.msra.mxu0 0.0
  %1217 = vmatpush.msra.mxu0 0.0
  %1218 = vmatpush.msra.mxu0 0.0
  %1219 = vmatpush.msra.mxu0 0.0
  %1220 = vmatpush.msra.mxu0 0.0
  %1221 = vmatpush.msra.mxu0 0.0
  %1222 = vmatpush.msra.mxu0 %v1199
  %1223 = vmatpush.msra.mxu0 %v1197
  %1224 = vmatmul.f32.gmra.mxu0 %v1203
  %v1225 = vpop.f32.mrf.mxu0
  %v1226 = vadd.f32 0.0, %v1225
  %1227 = vmatmul.f32.gmra.mxu0 %v1206
  %v1228 = vpop.f32.mrf.mxu0
  %v1229 = vadd.f32 0.0, %v1228
  %1230 = vdwg.mxu0
  %1235 = vrot.lane.b32.xlu0 %v807, 8
  %v1236 = vpop.permute.xlu0 %1235
  %1237 = vrot.lane.b32.xlu0 %v810, 8
  %v1238 = vpop.permute.xlu0 %1237
  %1239 = vrot.lane.b32.xlu0 %v842, 8
  %v1240 = vpop.permute.xlu0 %1239
  %1241 = vrot.lane.b32.xlu0 %v845, 8
  %v1242 = vpop.permute.xlu0 %1241
  %1251 = vrot.lane.b32.xlu0 %v999, 16
  %v1252 = vpop.permute.xlu0 %1251
  %1253 = vrot.lane.b32.xlu0 %v1002, 16
  %v1254 = vpop.permute.xlu0 %1253
  %1255 = vrot.lane.b32.xlu0 %v1034, 16
  %v1256 = vpop.permute.xlu0 %1255
  %1257 = vrot.lane.b32.xlu0 %v1037, 16
  %v1258 = vpop.permute.xlu0 %1257
  %1267 = vrot.lane.b32.xlu0 %v1191, 24
  %v1268 = vpop.permute.xlu0 %1267
  %1269 = vrot.lane.b32.xlu0 %v1194, 24
  %v1270 = vpop.permute.xlu0 %1269
  %1271 = vrot.lane.b32.xlu0 %v1226, 24
  %v1272 = vpop.permute.xlu0 %1271
  %1273 = vrot.lane.b32.xlu0 %v1229, 24
  %v1274 = vpop.permute.xlu0 %1273
  %v1279 = vsel %vm471, %v615, %v1236
  %v1280 = vsel %vm471, %v618, %v1238
  %v1281 = vsel %vm471, %v650, %v1240
  %v1282 = vsel %vm471, %v653, %v1242
  %v1283 = vsel %vm540, %v1279, %v1252
  %v1284 = vsel %vm540, %v1280, %v1254
  %v1285 = vsel %vm540, %v1281, %v1256
  %v1286 = vsel %vm540, %v1282, %v1258
  %vm1287 = vcmask 195584
  %v1288 = vsel %vm1287, %v1283, %v1268
  %v1289 = vsel %vm1287, %v1284, %v1270
  %v1290 = vsel %vm1287, %v1285, %v1272
  %v1291 = vsel %vm1287, %v1286, %v1274
  %v1292 = vpack.c.bf16 %v1289, %v1288
  %v1293 = vpack.c.bf16 %v1291, %v1290
  %v1294 = vperm.slane %v408, 1
  %v1299 = vunpack.c.l.b16 %v116
  %v1300 = vunpack.c.l.b16 %v117
  %v1301 = vunpack.c.l.b16 %v118
  %v1302 = vunpack.c.l.b16 %v119
  %v1303 = vpack.c.b16 %v1300, %v1299
  %v1304 = vpack.c.b16 %v1302, %v1301
  %v1308 = vsel %vm439, %v1292, 0
  %v1311 = vsel %vm439, %v1293, 0
  %1313 = vmatpush.bf16.msra.mxu0 0
  %1314 = vmatpush.bf16.msra.mxu0 0
  %1315 = vmatpush.bf16.msra.mxu0 0
  %1316 = vmatpush.bf16.msra.mxu0 0
  %1317 = vmatpush.bf16.msra.mxu0 0
  %1318 = vmatpush.bf16.msra.mxu0 0
  %1319 = vmatpush.bf16.msra.mxu0 %v1304
  %1320 = vmatpush.bf16.msra.mxu0 %v1303
  %1321 = vmatmul.bf16.gmra.mxu0 %v1308
  %v1322 = vpop.f32.mrf.mxu0
  %v1323 = vadd.f32 %v1294, %v1322
  %v1324 = vpop.f32.mrf.mxu0
  %v1325 = vadd.f32 %v1294, %v1324
  %1326 = vmatmul.bf16.gmra.mxu0 %v1311
  %v1327 = vpop.f32.mrf.mxu0
  %v1328 = vadd.f32 %v1294, %v1327
  %v1329 = vpop.f32.mrf.mxu0
  %v1330 = vadd.f32 %v1294, %v1329
  %1331 = vdwg.mxu0
  %v1332 = vadd.f32 %v103, %v1323
  %v1333 = vadd.f32 %v105, %v1325
  %v1334 = vadd.f32 %v108, %v1328
  %v1335 = vadd.f32 %v110, %v1330
  %v1336 = vsel %vm439, %v1332, 0.0
  %1337 = vadd.xlane.f32.xlu0 %v1336
  %v1338 = vpop.xlane.xlu0 %1337
  %v1339 = vsel %vm439, %v1333, 0.0
  %1340 = vadd.xlane.f32.xlu0 %v1339
  %v1341 = vpop.xlane.xlu0 %1340
  %v1342 = vsel %vm439, %v1334, 0.0
  %1343 = vadd.xlane.f32.xlu0 %v1342
  %v1344 = vpop.xlane.xlu0 %1343
  %v1345 = vsel %vm439, %v1335, 0.0
  %1346 = vadd.xlane.f32.xlu0 %v1345
  %v1347 = vpop.xlane.xlu0 %1346
  %v1348 = vrcp.pop 32.0
  %v1349 = vmul.f32 32.0, %v1348
  %v1350 = vsub.f32 1.0, %v1349
  %v1351 = vmul.f32 %v1348, %v1350
  %v1352 = vadd.f32 %v1348, %v1351
  %vm1353 = vweird.f32 %v1348
  %v1354 = vsel %vm1353, %v1348, %v1352
  %v1355 = vmul.f32 %v1338, %v1354
  %v1356 = vmul.f32 %v1341, %v1354
  %v1357 = vmul.f32 %v1344, %v1354
  %v1358 = vmul.f32 %v1347, %v1354
  %v1359 = vsub.f32 %v1332, %v1355
  %v1360 = vsub.f32 %v1333, %v1356
  %v1361 = vsub.f32 %v1334, %v1357
  %v1362 = vsub.f32 %v1335, %v1358
  %v1363 = vmul.f32 %v1359, %v1359
  %v1364 = vmul.f32 %v1360, %v1360
  %v1365 = vmul.f32 %v1361, %v1361
  %v1366 = vmul.f32 %v1362, %v1362
  %v1367 = vsel %vm439, %v1363, 0.0
  %1368 = vadd.xlane.f32.xlu0 %v1367
  %v1369 = vpop.xlane.xlu0 %1368
  %v1370 = vsel %vm439, %v1364, 0.0
  %1371 = vadd.xlane.f32.xlu0 %v1370
  %v1372 = vpop.xlane.xlu0 %1371
  %v1373 = vsel %vm439, %v1365, 0.0
  %1374 = vadd.xlane.f32.xlu0 %v1373
  %v1375 = vpop.xlane.xlu0 %1374
  %v1376 = vsel %vm439, %v1366, 0.0
  %1377 = vadd.xlane.f32.xlu0 %v1376
  %v1378 = vpop.xlane.xlu0 %1377
  %v1379 = vmul.f32 %v1369, %v1354
  %v1380 = vmul.f32 %v1372, %v1354
  %v1381 = vmul.f32 %v1375, %v1354
  %v1382 = vmul.f32 %v1378, %v1354
  %v1383 = vadd.f32 %v1379, 1e-05
  %v1384 = vadd.f32 %v1380, 1e-05
  %v1385 = vadd.f32 %v1381, 1e-05
  %v1386 = vadd.f32 %v1382, 1e-05
  %v1387 = vrsqrt.pop %v1383
  %v1388 = vmul.f32 %v1387, %v1383
  %v1389 = vmul.f32 %v1388, %v1387
  %v1390 = vmul.f32 0.5, %v1389
  %v1391 = vsub.f32 1.5, %v1390
  %v1392 = vmul.f32 %v1387, %v1391
  %vm1393 = vweird.f32 %v1383
  %vm1394 = vweird.f32 %v1387
  %vm1395 = vmor %vm1393, %vm1394
  %v1396 = vsel %vm1395, %v1387, %v1392
  %v1397 = vrsqrt.pop %v1384
  %v1398 = vmul.f32 %v1397, %v1384
  %v1399 = vmul.f32 %v1398, %v1397
  %v1400 = vmul.f32 0.5, %v1399
  %v1401 = vsub.f32 1.5, %v1400
  %v1402 = vmul.f32 %v1397, %v1401
  %vm1403 = vweird.f32 %v1384
  %vm1404 = vweird.f32 %v1397
  %vm1405 = vmor %vm1403, %vm1404
  %v1406 = vsel %vm1405, %v1397, %v1402
  %v1407 = vrsqrt.pop %v1385
  %v1408 = vmul.f32 %v1407, %v1385
  %v1409 = vmul.f32 %v1408, %v1407
  %v1410 = vmul.f32 0.5, %v1409
  %v1411 = vsub.f32 1.5, %v1410
  %v1412 = vmul.f32 %v1407, %v1411
  %vm1413 = vweird.f32 %v1385
  %vm1414 = vweird.f32 %v1407
  %vm1415 = vmor %vm1413, %vm1414
  %v1416 = vsel %vm1415, %v1407, %v1412
  %v1417 = vrsqrt.pop %v1386
  %v1418 = vmul.f32 %v1417, %v1386
  %v1419 = vmul.f32 %v1418, %v1417
  %v1420 = vmul.f32 0.5, %v1419
  %v1421 = vsub.f32 1.5, %v1420
  %v1422 = vmul.f32 %v1417, %v1421
  %vm1423 = vweird.f32 %v1386
  %vm1424 = vweird.f32 %v1417
  %vm1425 = vmor %vm1423, %vm1424
  %v1426 = vsel %vm1425, %v1417, %v1422
  %v1427 = vmul.f32 %v1359, %v1396
  %v1428 = vmul.f32 %v1360, %v1406
  %v1429 = vmul.f32 %v1361, %v1416
  %v1430 = vmul.f32 %v1362, %v1426
  %v1431 = vperm.slane %v408, 2
  %v1432 = vmul.f32 %v1427, %v1431
  %v1433 = vmul.f32 %v1428, %v1431
  %v1434 = vmul.f32 %v1429, %v1431
  %v1435 = vmul.f32 %v1430, %v1431
  %v1436 = vperm.slane %v408, 3
  %v1437 = vadd.f32 %v1432, %v1436
  %v1438 = vadd.f32 %v1433, %v1436
  %v1439 = vadd.f32 %v1434, %v1436
  %v1440 = vadd.f32 %v1435, %v1436
  %v1441 = vpack.c.bf16 %v1438, %v1437
  %v1442 = vpack.c.bf16 %v1440, %v1439
  %v1443 = vperm.slane %v408, 4
  %v1444 = vperm.slane %v409, 4
  %v1445 = vperm.slane %v410, 4
  %v1446 = vperm.slane %v411, 4
  %v1447 = vperm.slane %v412, 4
  %v1448 = vperm.slane %v413, 4
  %v1449 = vperm.slane %v414, 4
  %v1450 = vperm.slane %v415, 4
  %v1451 = vperm.slane %v416, 4
  %v1452 = vperm.slane %v417, 4
  %v1453 = vperm.slane %v418, 4
  %v1454 = vperm.slane %v419, 4
  %v1455 = vperm.slane %v420, 4
  %v1456 = vperm.slane %v421, 4
  %v1457 = vperm.slane %v422, 4
  %v1458 = vperm.slane %v423, 4
  %v1491 = vunpack.c.l.b16 %v120
  %v1492 = vunpack.c.h.b16 %v120
  %v1493 = vunpack.c.l.b16 %v121
  %v1494 = vunpack.c.h.b16 %v121
  %v1495 = vunpack.c.l.b16 %v122
  %v1496 = vunpack.c.h.b16 %v122
  %v1497 = vunpack.c.l.b16 %v123
  %v1498 = vunpack.c.h.b16 %v123
  %v1499 = vunpack.c.l.b16 %v124
  %v1500 = vunpack.c.h.b16 %v124
  %v1501 = vunpack.c.l.b16 %v125
  %v1502 = vunpack.c.h.b16 %v125
  %v1503 = vunpack.c.l.b16 %v126
  %v1504 = vunpack.c.h.b16 %v126
  %v1505 = vunpack.c.l.b16 %v127
  %v1506 = vunpack.c.h.b16 %v127
  %v1507 = vunpack.c.l.b16 %v128
  %v1508 = vunpack.c.h.b16 %v128
  %v1509 = vunpack.c.l.b16 %v129
  %v1510 = vunpack.c.h.b16 %v129
  %v1511 = vunpack.c.l.b16 %v130
  %v1512 = vunpack.c.h.b16 %v130
  %v1513 = vunpack.c.l.b16 %v131
  %v1514 = vunpack.c.h.b16 %v131
  %v1515 = vunpack.c.l.b16 %v132
  %v1516 = vunpack.c.h.b16 %v132
  %v1517 = vunpack.c.l.b16 %v133
  %v1518 = vunpack.c.h.b16 %v133
  %v1519 = vunpack.c.l.b16 %v134
  %v1520 = vunpack.c.h.b16 %v134
  %v1521 = vunpack.c.l.b16 %v135
  %v1522 = vunpack.c.h.b16 %v135
  %v1523 = vunpack.c.l.b16 %v136
  %v1524 = vunpack.c.h.b16 %v136
  %v1525 = vunpack.c.l.b16 %v137
  %v1526 = vunpack.c.h.b16 %v137
  %v1527 = vunpack.c.l.b16 %v138
  %v1528 = vunpack.c.h.b16 %v138
  %v1529 = vunpack.c.l.b16 %v139
  %v1530 = vunpack.c.h.b16 %v139
  %v1531 = vunpack.c.l.b16 %v140
  %v1532 = vunpack.c.h.b16 %v140
  %v1533 = vunpack.c.l.b16 %v141
  %v1534 = vunpack.c.h.b16 %v141
  %v1535 = vunpack.c.l.b16 %v142
  %v1536 = vunpack.c.h.b16 %v142
  %v1537 = vunpack.c.l.b16 %v143
  %v1538 = vunpack.c.h.b16 %v143
  %v1539 = vunpack.c.l.b16 %v144
  %v1540 = vunpack.c.h.b16 %v144
  %v1541 = vunpack.c.l.b16 %v145
  %v1542 = vunpack.c.h.b16 %v145
  %v1543 = vunpack.c.l.b16 %v146
  %v1544 = vunpack.c.h.b16 %v146
  %v1545 = vunpack.c.l.b16 %v147
  %v1546 = vunpack.c.h.b16 %v147
  %v1547 = vunpack.c.l.b16 %v148
  %v1548 = vunpack.c.h.b16 %v148
  %v1549 = vunpack.c.l.b16 %v149
  %v1550 = vunpack.c.h.b16 %v149
  %v1551 = vunpack.c.l.b16 %v150
  %v1552 = vunpack.c.h.b16 %v150
  %v1553 = vunpack.c.l.b16 %v151
  %v1554 = vunpack.c.h.b16 %v151
  %v1555 = vpack.c.b16 %v1507, %v1491
  %v1556 = vpack.c.b16 %v1508, %v1492
  %v1557 = vpack.c.b16 %v1509, %v1493
  %v1558 = vpack.c.b16 %v1510, %v1494
  %v1559 = vpack.c.b16 %v1511, %v1495
  %v1560 = vpack.c.b16 %v1512, %v1496
  %v1561 = vpack.c.b16 %v1513, %v1497
  %v1562 = vpack.c.b16 %v1514, %v1498
  %v1563 = vpack.c.b16 %v1515, %v1499
  %v1564 = vpack.c.b16 %v1516, %v1500
  %v1565 = vpack.c.b16 %v1517, %v1501
  %v1566 = vpack.c.b16 %v1518, %v1502
  %v1567 = vpack.c.b16 %v1519, %v1503
  %v1568 = vpack.c.b16 %v1520, %v1504
  %v1569 = vpack.c.b16 %v1521, %v1505
  %v1570 = vpack.c.b16 %v1522, %v1506
  %v1571 = vpack.c.b16 %v1539, %v1523
  %v1572 = vpack.c.b16 %v1540, %v1524
  %v1573 = vpack.c.b16 %v1541, %v1525
  %v1574 = vpack.c.b16 %v1542, %v1526
  %v1575 = vpack.c.b16 %v1543, %v1527
  %v1576 = vpack.c.b16 %v1544, %v1528
  %v1577 = vpack.c.b16 %v1545, %v1529
  %v1578 = vpack.c.b16 %v1546, %v1530
  %v1579 = vpack.c.b16 %v1547, %v1531
  %v1580 = vpack.c.b16 %v1548, %v1532
  %v1581 = vpack.c.b16 %v1549, %v1533
  %v1582 = vpack.c.b16 %v1550, %v1534
  %v1583 = vpack.c.b16 %v1551, %v1535
  %v1584 = vpack.c.b16 %v1552, %v1536
  %v1585 = vpack.c.b16 %v1553, %v1537
  %v1586 = vpack.c.b16 %v1554, %v1538
  %v1620 = vsel %vm439, %v1441, 0
  %v1623 = vsel %vm439, %v1442, 0
  %1625 = vmatpush.bf16.msra.mxu0 0
  %1626 = vmatpush.bf16.msra.mxu0 0
  %1627 = vmatpush.bf16.msra.mxu0 0
  %1628 = vmatpush.bf16.msra.mxu0 0
  %1629 = vmatpush.bf16.msra.mxu0 0
  %1630 = vmatpush.bf16.msra.mxu0 0
  %1631 = vmatpush.bf16.msra.mxu0 %v1571
  %1632 = vmatpush.bf16.msra.mxu0 %v1555
  %1633 = vmatmul.bf16.gmra.mxu0 %v1620
  %v1634 = vpop.f32.mrf.mxu0
  %v1635 = vadd.f32 %v1443, %v1634
  %v1636 = vpop.f32.mrf.mxu0
  %v1637 = vadd.f32 %v1443, %v1636
  %1638 = vmatmul.bf16.gmra.mxu0 %v1623
  %v1639 = vpop.f32.mrf.mxu0
  %v1640 = vadd.f32 %v1443, %v1639
  %v1641 = vpop.f32.mrf.mxu0
  %v1642 = vadd.f32 %v1443, %v1641
  %1643 = vdwg.mxu0
  %1644 = vmatpush.bf16.msra.mxu0 0
  %1645 = vmatpush.bf16.msra.mxu0 0
  %1646 = vmatpush.bf16.msra.mxu0 0
  %1647 = vmatpush.bf16.msra.mxu0 0
  %1648 = vmatpush.bf16.msra.mxu0 0
  %1649 = vmatpush.bf16.msra.mxu0 0
  %1650 = vmatpush.bf16.msra.mxu0 %v1572
  %1651 = vmatpush.bf16.msra.mxu0 %v1556
  %1652 = vmatmul.bf16.gmra.mxu0 %v1620
  %v1653 = vpop.f32.mrf.mxu0
  %v1654 = vadd.f32 %v1444, %v1653
  %v1655 = vpop.f32.mrf.mxu0
  %v1656 = vadd.f32 %v1444, %v1655
  %1657 = vmatmul.bf16.gmra.mxu0 %v1623
  %v1658 = vpop.f32.mrf.mxu0
  %v1659 = vadd.f32 %v1444, %v1658
  %v1660 = vpop.f32.mrf.mxu0
  %v1661 = vadd.f32 %v1444, %v1660
  %1662 = vdwg.mxu0
  %1663 = vmatpush.bf16.msra.mxu0 0
  %1664 = vmatpush.bf16.msra.mxu0 0
  %1665 = vmatpush.bf16.msra.mxu0 0
  %1666 = vmatpush.bf16.msra.mxu0 0
  %1667 = vmatpush.bf16.msra.mxu0 0
  %1668 = vmatpush.bf16.msra.mxu0 0
  %1669 = vmatpush.bf16.msra.mxu0 %v1573
  %1670 = vmatpush.bf16.msra.mxu0 %v1557
  %1671 = vmatmul.bf16.gmra.mxu0 %v1620
  %v1672 = vpop.f32.mrf.mxu0
  %v1673 = vadd.f32 %v1445, %v1672
  %v1674 = vpop.f32.mrf.mxu0
  %v1675 = vadd.f32 %v1445, %v1674
  %1676 = vmatmul.bf16.gmra.mxu0 %v1623
  %v1677 = vpop.f32.mrf.mxu0
  %v1678 = vadd.f32 %v1445, %v1677
  %v1679 = vpop.f32.mrf.mxu0
  %v1680 = vadd.f32 %v1445, %v1679
  %1681 = vdwg.mxu0
  %1682 = vmatpush.bf16.msra.mxu0 0
  %1683 = vmatpush.bf16.msra.mxu0 0
  %1684 = vmatpush.bf16.msra.mxu0 0
  %1685 = vmatpush.bf16.msra.mxu0 0
  %1686 = vmatpush.bf16.msra.mxu0 0
  %1687 = vmatpush.bf16.msra.mxu0 0
  %1688 = vmatpush.bf16.msra.mxu0 %v1574
  %1689 = vmatpush.bf16.msra.mxu0 %v1558
  %1690 = vmatmul.bf16.gmra.mxu0 %v1620
  %v1691 = vpop.f32.mrf.mxu0
  %v1692 = vadd.f32 %v1446, %v1691
  %v1693 = vpop.f32.mrf.mxu0
  %v1694 = vadd.f32 %v1446, %v1693
  %1695 = vmatmul.bf16.gmra.mxu0 %v1623
  %v1696 = vpop.f32.mrf.mxu0
  %v1697 = vadd.f32 %v1446, %v1696
  %v1698 = vpop.f32.mrf.mxu0
  %v1699 = vadd.f32 %v1446, %v1698
  %1700 = vdwg.mxu0
  %1701 = vmatpush.bf16.msra.mxu0 0
  %1702 = vmatpush.bf16.msra.mxu0 0
  %1703 = vmatpush.bf16.msra.mxu0 0
  %1704 = vmatpush.bf16.msra.mxu0 0
  %1705 = vmatpush.bf16.msra.mxu0 0
  %1706 = vmatpush.bf16.msra.mxu0 0
  %1707 = vmatpush.bf16.msra.mxu0 %v1575
  %1708 = vmatpush.bf16.msra.mxu0 %v1559
  %1709 = vmatmul.bf16.gmra.mxu0 %v1620
  %v1710 = vpop.f32.mrf.mxu0
  %v1711 = vadd.f32 %v1447, %v1710
  %v1712 = vpop.f32.mrf.mxu0
  %v1713 = vadd.f32 %v1447, %v1712
  %1714 = vmatmul.bf16.gmra.mxu0 %v1623
  %v1715 = vpop.f32.mrf.mxu0
  %v1716 = vadd.f32 %v1447, %v1715
  %v1717 = vpop.f32.mrf.mxu0
  %v1718 = vadd.f32 %v1447, %v1717
  %1719 = vdwg.mxu0
  %1720 = vmatpush.bf16.msra.mxu0 0
  %1721 = vmatpush.bf16.msra.mxu0 0
  %1722 = vmatpush.bf16.msra.mxu0 0
  %1723 = vmatpush.bf16.msra.mxu0 0
  %1724 = vmatpush.bf16.msra.mxu0 0
  %1725 = vmatpush.bf16.msra.mxu0 0
  %1726 = vmatpush.bf16.msra.mxu0 %v1576
  %1727 = vmatpush.bf16.msra.mxu0 %v1560
  %1728 = vmatmul.bf16.gmra.mxu0 %v1620
  %v1729 = vpop.f32.mrf.mxu0
  %v1730 = vadd.f32 %v1448, %v1729
  %v1731 = vpop.f32.mrf.mxu0
  %v1732 = vadd.f32 %v1448, %v1731
  %1733 = vmatmul.bf16.gmra.mxu0 %v1623
  %v1734 = vpop.f32.mrf.mxu0
  %v1735 = vadd.f32 %v1448, %v1734
  %v1736 = vpop.f32.mrf.mxu0
  %v1737 = vadd.f32 %v1448, %v1736
  %1738 = vdwg.mxu0
  %1739 = vmatpush.bf16.msra.mxu0 0
  %1740 = vmatpush.bf16.msra.mxu0 0
  %1741 = vmatpush.bf16.msra.mxu0 0
  %1742 = vmatpush.bf16.msra.mxu0 0
  %1743 = vmatpush.bf16.msra.mxu0 0
  %1744 = vmatpush.bf16.msra.mxu0 0
  %1745 = vmatpush.bf16.msra.mxu0 %v1577
  %1746 = vmatpush.bf16.msra.mxu0 %v1561
  %1747 = vmatmul.bf16.gmra.mxu0 %v1620
  %v1748 = vpop.f32.mrf.mxu0
  %v1749 = vadd.f32 %v1449, %v1748
  %v1750 = vpop.f32.mrf.mxu0
  %v1751 = vadd.f32 %v1449, %v1750
  %1752 = vmatmul.bf16.gmra.mxu0 %v1623
  %v1753 = vpop.f32.mrf.mxu0
  %v1754 = vadd.f32 %v1449, %v1753
  %v1755 = vpop.f32.mrf.mxu0
  %v1756 = vadd.f32 %v1449, %v1755
  %1757 = vdwg.mxu0
  %1758 = vmatpush.bf16.msra.mxu0 0
  %1759 = vmatpush.bf16.msra.mxu0 0
  %1760 = vmatpush.bf16.msra.mxu0 0
  %1761 = vmatpush.bf16.msra.mxu0 0
  %1762 = vmatpush.bf16.msra.mxu0 0
  %1763 = vmatpush.bf16.msra.mxu0 0
  %1764 = vmatpush.bf16.msra.mxu0 %v1578
  %1765 = vmatpush.bf16.msra.mxu0 %v1562
  %1766 = vmatmul.bf16.gmra.mxu0 %v1620
  %v1767 = vpop.f32.mrf.mxu0
  %v1768 = vadd.f32 %v1450, %v1767
  %v1769 = vpop.f32.mrf.mxu0
  %v1770 = vadd.f32 %v1450, %v1769
  %1771 = vmatmul.bf16.gmra.mxu0 %v1623
  %v1772 = vpop.f32.mrf.mxu0
  %v1773 = vadd.f32 %v1450, %v1772
  %v1774 = vpop.f32.mrf.mxu0
  %v1775 = vadd.f32 %v1450, %v1774
  %1776 = vdwg.mxu0
  %1777 = vmatpush.bf16.msra.mxu0 0
  %1778 = vmatpush.bf16.msra.mxu0 0
  %1779 = vmatpush.bf16.msra.mxu0 0
  %1780 = vmatpush.bf16.msra.mxu0 0
  %1781 = vmatpush.bf16.msra.mxu0 0
  %1782 = vmatpush.bf16.msra.mxu0 0
  %1783 = vmatpush.bf16.msra.mxu0 %v1579
  %1784 = vmatpush.bf16.msra.mxu0 %v1563
  %1785 = vmatmul.bf16.gmra.mxu0 %v1620
  %v1786 = vpop.f32.mrf.mxu0
  %v1787 = vadd.f32 %v1451, %v1786
  %v1788 = vpop.f32.mrf.mxu0
  %v1789 = vadd.f32 %v1451, %v1788
  %1790 = vmatmul.bf16.gmra.mxu0 %v1623
  %v1791 = vpop.f32.mrf.mxu0
  %v1792 = vadd.f32 %v1451, %v1791
  %v1793 = vpop.f32.mrf.mxu0
  %v1794 = vadd.f32 %v1451, %v1793
  %1795 = vdwg.mxu0
  %1796 = vmatpush.bf16.msra.mxu0 0
  %1797 = vmatpush.bf16.msra.mxu0 0
  %1798 = vmatpush.bf16.msra.mxu0 0
  %1799 = vmatpush.bf16.msra.mxu0 0
  %1800 = vmatpush.bf16.msra.mxu0 0
  %1801 = vmatpush.bf16.msra.mxu0 0
  %1802 = vmatpush.bf16.msra.mxu0 %v1580
  %1803 = vmatpush.bf16.msra.mxu0 %v1564
  %1804 = vmatmul.bf16.gmra.mxu0 %v1620
  %v1805 = vpop.f32.mrf.mxu0
  %v1806 = vadd.f32 %v1452, %v1805
  %v1807 = vpop.f32.mrf.mxu0
  %v1808 = vadd.f32 %v1452, %v1807
  %1809 = vmatmul.bf16.gmra.mxu0 %v1623
  %v1810 = vpop.f32.mrf.mxu0
  %v1811 = vadd.f32 %v1452, %v1810
  %v1812 = vpop.f32.mrf.mxu0
  %v1813 = vadd.f32 %v1452, %v1812
  %1814 = vdwg.mxu0
  %1815 = vmatpush.bf16.msra.mxu0 0
  %1816 = vmatpush.bf16.msra.mxu0 0
  %1817 = vmatpush.bf16.msra.mxu0 0
  %1818 = vmatpush.bf16.msra.mxu0 0
  %1819 = vmatpush.bf16.msra.mxu0 0
  %1820 = vmatpush.bf16.msra.mxu0 0
  %1821 = vmatpush.bf16.msra.mxu0 %v1581
  %1822 = vmatpush.bf16.msra.mxu0 %v1565
  %1823 = vmatmul.bf16.gmra.mxu0 %v1620
  %v1824 = vpop.f32.mrf.mxu0
  %v1825 = vadd.f32 %v1453, %v1824
  %v1826 = vpop.f32.mrf.mxu0
  %v1827 = vadd.f32 %v1453, %v1826
  %1828 = vmatmul.bf16.gmra.mxu0 %v1623
  %v1829 = vpop.f32.mrf.mxu0
  %v1830 = vadd.f32 %v1453, %v1829
  %v1831 = vpop.f32.mrf.mxu0
  %v1832 = vadd.f32 %v1453, %v1831
  %1833 = vdwg.mxu0
  %1834 = vmatpush.bf16.msra.mxu0 0
  %1835 = vmatpush.bf16.msra.mxu0 0
  %1836 = vmatpush.bf16.msra.mxu0 0
  %1837 = vmatpush.bf16.msra.mxu0 0
  %1838 = vmatpush.bf16.msra.mxu0 0
  %1839 = vmatpush.bf16.msra.mxu0 0
  %1840 = vmatpush.bf16.msra.mxu0 %v1582
  %1841 = vmatpush.bf16.msra.mxu0 %v1566
  %1842 = vmatmul.bf16.gmra.mxu0 %v1620
  %v1843 = vpop.f32.mrf.mxu0
  %v1844 = vadd.f32 %v1454, %v1843
  %v1845 = vpop.f32.mrf.mxu0
  %v1846 = vadd.f32 %v1454, %v1845
  %1847 = vmatmul.bf16.gmra.mxu0 %v1623
  %v1848 = vpop.f32.mrf.mxu0
  %v1849 = vadd.f32 %v1454, %v1848
  %v1850 = vpop.f32.mrf.mxu0
  %v1851 = vadd.f32 %v1454, %v1850
  %1852 = vdwg.mxu0
  %1853 = vmatpush.bf16.msra.mxu0 0
  %1854 = vmatpush.bf16.msra.mxu0 0
  %1855 = vmatpush.bf16.msra.mxu0 0
  %1856 = vmatpush.bf16.msra.mxu0 0
  %1857 = vmatpush.bf16.msra.mxu0 0
  %1858 = vmatpush.bf16.msra.mxu0 0
  %1859 = vmatpush.bf16.msra.mxu0 %v1583
  %1860 = vmatpush.bf16.msra.mxu0 %v1567
  %1861 = vmatmul.bf16.gmra.mxu0 %v1620
  %v1862 = vpop.f32.mrf.mxu0
  %v1863 = vadd.f32 %v1455, %v1862
  %v1864 = vpop.f32.mrf.mxu0
  %v1865 = vadd.f32 %v1455, %v1864
  %1866 = vmatmul.bf16.gmra.mxu0 %v1623
  %v1867 = vpop.f32.mrf.mxu0
  %v1868 = vadd.f32 %v1455, %v1867
  %v1869 = vpop.f32.mrf.mxu0
  %v1870 = vadd.f32 %v1455, %v1869
  %1871 = vdwg.mxu0
  %1872 = vmatpush.bf16.msra.mxu0 0
  %1873 = vmatpush.bf16.msra.mxu0 0
  %1874 = vmatpush.bf16.msra.mxu0 0
  %1875 = vmatpush.bf16.msra.mxu0 0
  %1876 = vmatpush.bf16.msra.mxu0 0
  %1877 = vmatpush.bf16.msra.mxu0 0
  %1878 = vmatpush.bf16.msra.mxu0 %v1584
  %1879 = vmatpush.bf16.msra.mxu0 %v1568
  %1880 = vmatmul.bf16.gmra.mxu0 %v1620
  %v1881 = vpop.f32.mrf.mxu0
  %v1882 = vadd.f32 %v1456, %v1881
  %v1883 = vpop.f32.mrf.mxu0
  %v1884 = vadd.f32 %v1456, %v1883
  %1885 = vmatmul.bf16.gmra.mxu0 %v1623
  %v1886 = vpop.f32.mrf.mxu0
  %v1887 = vadd.f32 %v1456, %v1886
  %v1888 = vpop.f32.mrf.mxu0
  %v1889 = vadd.f32 %v1456, %v1888
  %1890 = vdwg.mxu0
  %1891 = vmatpush.bf16.msra.mxu0 0
  %1892 = vmatpush.bf16.msra.mxu0 0
  %1893 = vmatpush.bf16.msra.mxu0 0
  %1894 = vmatpush.bf16.msra.mxu0 0
  %1895 = vmatpush.bf16.msra.mxu0 0
  %1896 = vmatpush.bf16.msra.mxu0 0
  %1897 = vmatpush.bf16.msra.mxu0 %v1585
  %1898 = vmatpush.bf16.msra.mxu0 %v1569
  %1899 = vmatmul.bf16.gmra.mxu0 %v1620
  %v1900 = vpop.f32.mrf.mxu0
  %v1901 = vadd.f32 %v1457, %v1900
  %v1902 = vpop.f32.mrf.mxu0
  %v1903 = vadd.f32 %v1457, %v1902
  %1904 = vmatmul.bf16.gmra.mxu0 %v1623
  %v1905 = vpop.f32.mrf.mxu0
  %v1906 = vadd.f32 %v1457, %v1905
  %v1907 = vpop.f32.mrf.mxu0
  %v1908 = vadd.f32 %v1457, %v1907
  %1909 = vdwg.mxu0
  %1910 = vmatpush.bf16.msra.mxu0 0
  %1911 = vmatpush.bf16.msra.mxu0 0
  %1912 = vmatpush.bf16.msra.mxu0 0
  %1913 = vmatpush.bf16.msra.mxu0 0
  %1914 = vmatpush.bf16.msra.mxu0 0
  %1915 = vmatpush.bf16.msra.mxu0 0
  %1916 = vmatpush.bf16.msra.mxu0 %v1586
  %1917 = vmatpush.bf16.msra.mxu0 %v1570
  %1918 = vmatmul.bf16.gmra.mxu0 %v1620
  %v1919 = vpop.f32.mrf.mxu0
  %v1920 = vadd.f32 %v1458, %v1919
  %v1921 = vpop.f32.mrf.mxu0
  %v1922 = vadd.f32 %v1458, %v1921
  %1923 = vmatmul.bf16.gmra.mxu0 %v1623
  %v1924 = vpop.f32.mrf.mxu0
  %v1925 = vadd.f32 %v1458, %v1924
  %v1926 = vpop.f32.mrf.mxu0
  %v1927 = vadd.f32 %v1458, %v1926
  %1928 = vdwg.mxu0
  %v1929 = vmax.f32 %v1635, 0.0
  %v1930 = vmax.f32 %v1654, 0.0
  %v1931 = vmax.f32 %v1673, 0.0
  %v1932 = vmax.f32 %v1692, 0.0
  %v1933 = vmax.f32 %v1711, 0.0
  %v1934 = vmax.f32 %v1730, 0.0
  %v1935 = vmax.f32 %v1749, 0.0
  %v1936 = vmax.f32 %v1768, 0.0
  %v1937 = vmax.f32 %v1787, 0.0
  %v1938 = vmax.f32 %v1806, 0.0
  %v1939 = vmax.f32 %v1825, 0.0
  %v1940 = vmax.f32 %v1844, 0.0
  %v1941 = vmax.f32 %v1863, 0.0
  %v1942 = vmax.f32 %v1882, 0.0
  %v1943 = vmax.f32 %v1901, 0.0
  %v1944 = vmax.f32 %v1920, 0.0
  %v1945 = vmax.f32 %v1637, 0.0
  %v1946 = vmax.f32 %v1656, 0.0
  %v1947 = vmax.f32 %v1675, 0.0
  %v1948 = vmax.f32 %v1694, 0.0
  %v1949 = vmax.f32 %v1713, 0.0
  %v1950 = vmax.f32 %v1732, 0.0
  %v1951 = vmax.f32 %v1751, 0.0
  %v1952 = vmax.f32 %v1770, 0.0
  %v1953 = vmax.f32 %v1789, 0.0
  %v1954 = vmax.f32 %v1808, 0.0
  %v1955 = vmax.f32 %v1827, 0.0
  %v1956 = vmax.f32 %v1846, 0.0
  %v1957 = vmax.f32 %v1865, 0.0
  %v1958 = vmax.f32 %v1884, 0.0
  %v1959 = vmax.f32 %v1903, 0.0
  %v1960 = vmax.f32 %v1922, 0.0
  %v1961 = vmax.f32 %v1640, 0.0
  %v1962 = vmax.f32 %v1659, 0.0
  %v1963 = vmax.f32 %v1678, 0.0
  %v1964 = vmax.f32 %v1697, 0.0
  %v1965 = vmax.f32 %v1716, 0.0
  %v1966 = vmax.f32 %v1735, 0.0
  %v1967 = vmax.f32 %v1754, 0.0
  %v1968 = vmax.f32 %v1773, 0.0
  %v1969 = vmax.f32 %v1792, 0.0
  %v1970 = vmax.f32 %v1811, 0.0
  %v1971 = vmax.f32 %v1830, 0.0
  %v1972 = vmax.f32 %v1849, 0.0
  %v1973 = vmax.f32 %v1868, 0.0
  %v1974 = vmax.f32 %v1887, 0.0
  %v1975 = vmax.f32 %v1906, 0.0
  %v1976 = vmax.f32 %v1925, 0.0
  %v1977 = vmax.f32 %v1642, 0.0
  %v1978 = vmax.f32 %v1661, 0.0
  %v1979 = vmax.f32 %v1680, 0.0
  %v1980 = vmax.f32 %v1699, 0.0
  %v1981 = vmax.f32 %v1718, 0.0
  %v1982 = vmax.f32 %v1737, 0.0
  %v1983 = vmax.f32 %v1756, 0.0
  %v1984 = vmax.f32 %v1775, 0.0
  %v1985 = vmax.f32 %v1794, 0.0
  %v1986 = vmax.f32 %v1813, 0.0
  %v1987 = vmax.f32 %v1832, 0.0
  %v1988 = vmax.f32 %v1851, 0.0
  %v1989 = vmax.f32 %v1870, 0.0
  %v1990 = vmax.f32 %v1889, 0.0
  %v1991 = vmax.f32 %v1908, 0.0
  %v1992 = vmax.f32 %v1927, 0.0
  %v1993 = vpack.c.bf16 %v1945, %v1929
  %v1994 = vpack.c.bf16 %v1946, %v1930
  %v1995 = vpack.c.bf16 %v1947, %v1931
  %v1996 = vpack.c.bf16 %v1948, %v1932
  %v1997 = vpack.c.bf16 %v1949, %v1933
  %v1998 = vpack.c.bf16 %v1950, %v1934
  %v1999 = vpack.c.bf16 %v1951, %v1935
  %v2000 = vpack.c.bf16 %v1952, %v1936
  %v2001 = vpack.c.bf16 %v1953, %v1937
  %v2002 = vpack.c.bf16 %v1954, %v1938
  %v2003 = vpack.c.bf16 %v1955, %v1939
  %v2004 = vpack.c.bf16 %v1956, %v1940
  %v2005 = vpack.c.bf16 %v1957, %v1941
  %v2006 = vpack.c.bf16 %v1958, %v1942
  %v2007 = vpack.c.bf16 %v1959, %v1943
  %v2008 = vpack.c.bf16 %v1960, %v1944
  %v2009 = vpack.c.bf16 %v1977, %v1961
  %v2010 = vpack.c.bf16 %v1978, %v1962
  %v2011 = vpack.c.bf16 %v1979, %v1963
  %v2012 = vpack.c.bf16 %v1980, %v1964
  %v2013 = vpack.c.bf16 %v1981, %v1965
  %v2014 = vpack.c.bf16 %v1982, %v1966
  %v2015 = vpack.c.bf16 %v1983, %v1967
  %v2016 = vpack.c.bf16 %v1984, %v1968
  %v2017 = vpack.c.bf16 %v1985, %v1969
  %v2018 = vpack.c.bf16 %v1986, %v1970
  %v2019 = vpack.c.bf16 %v1987, %v1971
  %v2020 = vpack.c.bf16 %v1988, %v1972
  %v2021 = vpack.c.bf16 %v1989, %v1973
  %v2022 = vpack.c.bf16 %v1990, %v1974
  %v2023 = vpack.c.bf16 %v1991, %v1975
  %v2024 = vpack.c.bf16 %v1992, %v1976
  %v2025 = vperm.slane %v408, 5
  %v2282 = vunpack.c.l.b16 %v152
  %v2283 = vunpack.c.l.b16 %v153
  %v2284 = vunpack.c.l.b16 %v154
  %v2285 = vunpack.c.l.b16 %v155
  %v2286 = vunpack.c.l.b16 %v156
  %v2287 = vunpack.c.l.b16 %v157
  %v2288 = vunpack.c.l.b16 %v158
  %v2289 = vunpack.c.l.b16 %v159
  %v2290 = vunpack.c.l.b16 %v160
  %v2291 = vunpack.c.l.b16 %v161
  %v2292 = vunpack.c.l.b16 %v162
  %v2293 = vunpack.c.l.b16 %v163
  %v2294 = vunpack.c.l.b16 %v164
  %v2295 = vunpack.c.l.b16 %v165
  %v2296 = vunpack.c.l.b16 %v166
  %v2297 = vunpack.c.l.b16 %v167
  %v2298 = vunpack.c.l.b16 %v168
  %v2299 = vunpack.c.l.b16 %v169
  %v2300 = vunpack.c.l.b16 %v170
  %v2301 = vunpack.c.l.b16 %v171
  %v2302 = vunpack.c.l.b16 %v172
  %v2303 = vunpack.c.l.b16 %v173
  %v2304 = vunpack.c.l.b16 %v174
  %v2305 = vunpack.c.l.b16 %v175
  %v2306 = vunpack.c.l.b16 %v176
  %v2307 = vunpack.c.l.b16 %v177
  %v2308 = vunpack.c.l.b16 %v178
  %v2309 = vunpack.c.l.b16 %v179
  %v2310 = vunpack.c.l.b16 %v180
  %v2311 = vunpack.c.l.b16 %v181
  %v2312 = vunpack.c.l.b16 %v182
  %v2313 = vunpack.c.l.b16 %v183
  %v2314 = vunpack.c.l.b16 %v184
  %v2315 = vunpack.c.l.b16 %v185
  %v2316 = vunpack.c.l.b16 %v186
  %v2317 = vunpack.c.l.b16 %v187
  %v2318 = vunpack.c.l.b16 %v188
  %v2319 = vunpack.c.l.b16 %v189
  %v2320 = vunpack.c.l.b16 %v190
  %v2321 = vunpack.c.l.b16 %v191
  %v2322 = vunpack.c.l.b16 %v192
  %v2323 = vunpack.c.l.b16 %v193
  %v2324 = vunpack.c.l.b16 %v194
  %v2325 = vunpack.c.l.b16 %v195
  %v2326 = vunpack.c.l.b16 %v196
  %v2327 = vunpack.c.l.b16 %v197
  %v2328 = vunpack.c.l.b16 %v198
  %v2329 = vunpack.c.l.b16 %v199
  %v2330 = vunpack.c.l.b16 %v200
  %v2331 = vunpack.c.l.b16 %v201
  %v2332 = vunpack.c.l.b16 %v202
  %v2333 = vunpack.c.l.b16 %v203
  %v2334 = vunpack.c.l.b16 %v204
  %v2335 = vunpack.c.l.b16 %v205
  %v2336 = vunpack.c.l.b16 %v206
  %v2337 = vunpack.c.l.b16 %v207
  %v2338 = vunpack.c.l.b16 %v208
  %v2339 = vunpack.c.l.b16 %v209
  %v2340 = vunpack.c.l.b16 %v210
  %v2341 = vunpack.c.l.b16 %v211
  %v2342 = vunpack.c.l.b16 %v212
  %v2343 = vunpack.c.l.b16 %v213
  %v2344 = vunpack.c.l.b16 %v214
  %v2345 = vunpack.c.l.b16 %v215
  %v2346 = vunpack.c.l.b16 %v216
  %v2347 = vunpack.c.l.b16 %v217
  %v2348 = vunpack.c.l.b16 %v218
  %v2349 = vunpack.c.l.b16 %v219
  %v2350 = vunpack.c.l.b16 %v220
  %v2351 = vunpack.c.l.b16 %v221
  %v2352 = vunpack.c.l.b16 %v222
  %v2353 = vunpack.c.l.b16 %v223
  %v2354 = vunpack.c.l.b16 %v224
  %v2355 = vunpack.c.l.b16 %v225
  %v2356 = vunpack.c.l.b16 %v226
  %v2357 = vunpack.c.l.b16 %v227
  %v2358 = vunpack.c.l.b16 %v228
  %v2359 = vunpack.c.l.b16 %v229
  %v2360 = vunpack.c.l.b16 %v230
  %v2361 = vunpack.c.l.b16 %v231
  %v2362 = vunpack.c.l.b16 %v232
  %v2363 = vunpack.c.l.b16 %v233
  %v2364 = vunpack.c.l.b16 %v234
  %v2365 = vunpack.c.l.b16 %v235
  %v2366 = vunpack.c.l.b16 %v236
  %v2367 = vunpack.c.l.b16 %v237
  %v2368 = vunpack.c.l.b16 %v238
  %v2369 = vunpack.c.l.b16 %v239
  %v2370 = vunpack.c.l.b16 %v240
  %v2371 = vunpack.c.l.b16 %v241
  %v2372 = vunpack.c.l.b16 %v242
  %v2373 = vunpack.c.l.b16 %v243
  %v2374 = vunpack.c.l.b16 %v244
  %v2375 = vunpack.c.l.b16 %v245
  %v2376 = vunpack.c.l.b16 %v246
  %v2377 = vunpack.c.l.b16 %v247
  %v2378 = vunpack.c.l.b16 %v248
  %v2379 = vunpack.c.l.b16 %v249
  %v2380 = vunpack.c.l.b16 %v250
  %v2381 = vunpack.c.l.b16 %v251
  %v2382 = vunpack.c.l.b16 %v252
  %v2383 = vunpack.c.l.b16 %v253
  %v2384 = vunpack.c.l.b16 %v254
  %v2385 = vunpack.c.l.b16 %v255
  %v2386 = vunpack.c.l.b16 %v256
  %v2387 = vunpack.c.l.b16 %v257
  %v2388 = vunpack.c.l.b16 %v258
  %v2389 = vunpack.c.l.b16 %v259
  %v2390 = vunpack.c.l.b16 %v260
  %v2391 = vunpack.c.l.b16 %v261
  %v2392 = vunpack.c.l.b16 %v262
  %v2393 = vunpack.c.l.b16 %v263
  %v2394 = vunpack.c.l.b16 %v264
  %v2395 = vunpack.c.l.b16 %v265
  %v2396 = vunpack.c.l.b16 %v266
  %v2397 = vunpack.c.l.b16 %v267
  %v2398 = vunpack.c.l.b16 %v268
  %v2399 = vunpack.c.l.b16 %v269
  %v2400 = vunpack.c.l.b16 %v270
  %v2401 = vunpack.c.l.b16 %v271
  %v2402 = vunpack.c.l.b16 %v272
  %v2403 = vunpack.c.l.b16 %v273
  %v2404 = vunpack.c.l.b16 %v274
  %v2405 = vunpack.c.l.b16 %v275
  %v2406 = vunpack.c.l.b16 %v276
  %v2407 = vunpack.c.l.b16 %v277
  %v2408 = vunpack.c.l.b16 %v278
  %v2409 = vunpack.c.l.b16 %v279
  %v2410 = vunpack.c.l.b16 %v280
  %v2411 = vunpack.c.l.b16 %v281
  %v2412 = vunpack.c.l.b16 %v282
  %v2413 = vunpack.c.l.b16 %v283
  %v2414 = vunpack.c.l.b16 %v284
  %v2415 = vunpack.c.l.b16 %v285
  %v2416 = vunpack.c.l.b16 %v286
  %v2417 = vunpack.c.l.b16 %v287
  %v2418 = vunpack.c.l.b16 %v288
  %v2419 = vunpack.c.l.b16 %v289
  %v2420 = vunpack.c.l.b16 %v290
  %v2421 = vunpack.c.l.b16 %v291
  %v2422 = vunpack.c.l.b16 %v292
  %v2423 = vunpack.c.l.b16 %v293
  %v2424 = vunpack.c.l.b16 %v294
  %v2425 = vunpack.c.l.b16 %v295
  %v2426 = vunpack.c.l.b16 %v296
  %v2427 = vunpack.c.l.b16 %v297
  %v2428 = vunpack.c.l.b16 %v298
  %v2429 = vunpack.c.l.b16 %v299
  %v2430 = vunpack.c.l.b16 %v300
  %v2431 = vunpack.c.l.b16 %v301
  %v2432 = vunpack.c.l.b16 %v302
  %v2433 = vunpack.c.l.b16 %v303
  %v2434 = vunpack.c.l.b16 %v304
  %v2435 = vunpack.c.l.b16 %v305
  %v2436 = vunpack.c.l.b16 %v306
  %v2437 = vunpack.c.l.b16 %v307
  %v2438 = vunpack.c.l.b16 %v308
  %v2439 = vunpack.c.l.b16 %v309
  %v2440 = vunpack.c.l.b16 %v310
  %v2441 = vunpack.c.l.b16 %v311
  %v2442 = vunpack.c.l.b16 %v312
  %v2443 = vunpack.c.l.b16 %v313
  %v2444 = vunpack.c.l.b16 %v314
  %v2445 = vunpack.c.l.b16 %v315
  %v2446 = vunpack.c.l.b16 %v316
  %v2447 = vunpack.c.l.b16 %v317
  %v2448 = vunpack.c.l.b16 %v318
  %v2449 = vunpack.c.l.b16 %v319
  %v2450 = vunpack.c.l.b16 %v320
  %v2451 = vunpack.c.l.b16 %v321
  %v2452 = vunpack.c.l.b16 %v322
  %v2453 = vunpack.c.l.b16 %v323
  %v2454 = vunpack.c.l.b16 %v324
  %v2455 = vunpack.c.l.b16 %v325
  %v2456 = vunpack.c.l.b16 %v326
  %v2457 = vunpack.c.l.b16 %v327
  %v2458 = vunpack.c.l.b16 %v328
  %v2459 = vunpack.c.l.b16 %v329
  %v2460 = vunpack.c.l.b16 %v330
  %v2461 = vunpack.c.l.b16 %v331
  %v2462 = vunpack.c.l.b16 %v332
  %v2463 = vunpack.c.l.b16 %v333
  %v2464 = vunpack.c.l.b16 %v334
  %v2465 = vunpack.c.l.b16 %v335
  %v2466 = vunpack.c.l.b16 %v336
  %v2467 = vunpack.c.l.b16 %v337
  %v2468 = vunpack.c.l.b16 %v338
  %v2469 = vunpack.c.l.b16 %v339
  %v2470 = vunpack.c.l.b16 %v340
  %v2471 = vunpack.c.l.b16 %v341
  %v2472 = vunpack.c.l.b16 %v342
  %v2473 = vunpack.c.l.b16 %v343
  %v2474 = vunpack.c.l.b16 %v344
  %v2475 = vunpack.c.l.b16 %v345
  %v2476 = vunpack.c.l.b16 %v346
  %v2477 = vunpack.c.l.b16 %v347
  %v2478 = vunpack.c.l.b16 %v348
  %v2479 = vunpack.c.l.b16 %v349
  %v2480 = vunpack.c.l.b16 %v350
  %v2481 = vunpack.c.l.b16 %v351
  %v2482 = vunpack.c.l.b16 %v352
  %v2483 = vunpack.c.l.b16 %v353
  %v2484 = vunpack.c.l.b16 %v354
  %v2485 = vunpack.c.l.b16 %v355
  %v2486 = vunpack.c.l.b16 %v356
  %v2487 = vunpack.c.l.b16 %v357
  %v2488 = vunpack.c.l.b16 %v358
  %v2489 = vunpack.c.l.b16 %v359
  %v2490 = vunpack.c.l.b16 %v360
  %v2491 = vunpack.c.l.b16 %v361
  %v2492 = vunpack.c.l.b16 %v362
  %v2493 = vunpack.c.l.b16 %v363
  %v2494 = vunpack.c.l.b16 %v364
  %v2495 = vunpack.c.l.b16 %v365
  %v2496 = vunpack.c.l.b16 %v366
  %v2497 = vunpack.c.l.b16 %v367
  %v2498 = vunpack.c.l.b16 %v368
  %v2499 = vunpack.c.l.b16 %v369
  %v2500 = vunpack.c.l.b16 %v370
  %v2501 = vunpack.c.l.b16 %v371
  %v2502 = vunpack.c.l.b16 %v372
  %v2503 = vunpack.c.l.b16 %v373
  %v2504 = vunpack.c.l.b16 %v374
  %v2505 = vunpack.c.l.b16 %v375
  %v2506 = vunpack.c.l.b16 %v376
  %v2507 = vunpack.c.l.b16 %v377
  %v2508 = vunpack.c.l.b16 %v378
  %v2509 = vunpack.c.l.b16 %v379
  %v2510 = vunpack.c.l.b16 %v380
  %v2511 = vunpack.c.l.b16 %v381
  %v2512 = vunpack.c.l.b16 %v382
  %v2513 = vunpack.c.l.b16 %v383
  %v2514 = vunpack.c.l.b16 %v384
  %v2515 = vunpack.c.l.b16 %v385
  %v2516 = vunpack.c.l.b16 %v386
  %v2517 = vunpack.c.l.b16 %v387
  %v2518 = vunpack.c.l.b16 %v388
  %v2519 = vunpack.c.l.b16 %v389
  %v2520 = vunpack.c.l.b16 %v390
  %v2521 = vunpack.c.l.b16 %v391
  %v2522 = vunpack.c.l.b16 %v392
  %v2523 = vunpack.c.l.b16 %v393
  %v2524 = vunpack.c.l.b16 %v394
  %v2525 = vunpack.c.l.b16 %v395
  %v2526 = vunpack.c.l.b16 %v396
  %v2527 = vunpack.c.l.b16 %v397
  %v2528 = vunpack.c.l.b16 %v398
  %v2529 = vunpack.c.l.b16 %v399
  %v2530 = vunpack.c.l.b16 %v400
  %v2531 = vunpack.c.l.b16 %v401
  %v2532 = vunpack.c.l.b16 %v402
  %v2533 = vunpack.c.l.b16 %v403
  %v2534 = vunpack.c.l.b16 %v404
  %v2535 = vunpack.c.l.b16 %v405
  %v2536 = vunpack.c.l.b16 %v406
  %v2537 = vunpack.c.l.b16 %v407
  %v2538 = vpack.c.b16 %v2283, %v2282
  %v2539 = vpack.c.b16 %v2285, %v2284
  %v2540 = vpack.c.b16 %v2287, %v2286
  %v2541 = vpack.c.b16 %v2289, %v2288
  %v2542 = vpack.c.b16 %v2291, %v2290
  %v2543 = vpack.c.b16 %v2293, %v2292
  %v2544 = vpack.c.b16 %v2295, %v2294
  %v2545 = vpack.c.b16 %v2297, %v2296
  %v2546 = vpack.c.b16 %v2299, %v2298
  %v2547 = vpack.c.b16 %v2301, %v2300
  %v2548 = vpack.c.b16 %v2303, %v2302
  %v2549 = vpack.c.b16 %v2305, %v2304
  %v2550 = vpack.c.b16 %v2307, %v2306
  %v2551 = vpack.c.b16 %v2309, %v2308
  %v2552 = vpack.c.b16 %v2311, %v2310
  %v2553 = vpack.c.b16 %v2313, %v2312
  %v2554 = vpack.c.b16 %v2315, %v2314
  %v2555 = vpack.c.b16 %v2317, %v2316
  %v2556 = vpack.c.b16 %v2319, %v2318
  %v2557 = vpack.c.b16 %v2321, %v2320
  %v2558 = vpack.c.b16 %v2323, %v2322
  %v2559 = vpack.c.b16 %v2325, %v2324
  %v2560 = vpack.c.b16 %v2327, %v2326
  %v2561 = vpack.c.b16 %v2329, %v2328
  %v2562 = vpack.c.b16 %v2331, %v2330
  %v2563 = vpack.c.b16 %v2333, %v2332
  %v2564 = vpack.c.b16 %v2335, %v2334
  %v2565 = vpack.c.b16 %v2337, %v2336
  %v2566 = vpack.c.b16 %v2339, %v2338
  %v2567 = vpack.c.b16 %v2341, %v2340
  %v2568 = vpack.c.b16 %v2343, %v2342
  %v2569 = vpack.c.b16 %v2345, %v2344
  %v2570 = vpack.c.b16 %v2347, %v2346
  %v2571 = vpack.c.b16 %v2349, %v2348
  %v2572 = vpack.c.b16 %v2351, %v2350
  %v2573 = vpack.c.b16 %v2353, %v2352
  %v2574 = vpack.c.b16 %v2355, %v2354
  %v2575 = vpack.c.b16 %v2357, %v2356
  %v2576 = vpack.c.b16 %v2359, %v2358
  %v2577 = vpack.c.b16 %v2361, %v2360
  %v2578 = vpack.c.b16 %v2363, %v2362
  %v2579 = vpack.c.b16 %v2365, %v2364
  %v2580 = vpack.c.b16 %v2367, %v2366
  %v2581 = vpack.c.b16 %v2369, %v2368
  %v2582 = vpack.c.b16 %v2371, %v2370
  %v2583 = vpack.c.b16 %v2373, %v2372
  %v2584 = vpack.c.b16 %v2375, %v2374
  %v2585 = vpack.c.b16 %v2377, %v2376
  %v2586 = vpack.c.b16 %v2379, %v2378
  %v2587 = vpack.c.b16 %v2381, %v2380
  %v2588 = vpack.c.b16 %v2383, %v2382
  %v2589 = vpack.c.b16 %v2385, %v2384
  %v2590 = vpack.c.b16 %v2387, %v2386
  %v2591 = vpack.c.b16 %v2389, %v2388
  %v2592 = vpack.c.b16 %v2391, %v2390
  %v2593 = vpack.c.b16 %v2393, %v2392
  %v2594 = vpack.c.b16 %v2395, %v2394
  %v2595 = vpack.c.b16 %v2397, %v2396
  %v2596 = vpack.c.b16 %v2399, %v2398
  %v2597 = vpack.c.b16 %v2401, %v2400
  %v2598 = vpack.c.b16 %v2403, %v2402
  %v2599 = vpack.c.b16 %v2405, %v2404
  %v2600 = vpack.c.b16 %v2407, %v2406
  %v2601 = vpack.c.b16 %v2409, %v2408
  %v2602 = vpack.c.b16 %v2411, %v2410
  %v2603 = vpack.c.b16 %v2413, %v2412
  %v2604 = vpack.c.b16 %v2415, %v2414
  %v2605 = vpack.c.b16 %v2417, %v2416
  %v2606 = vpack.c.b16 %v2419, %v2418
  %v2607 = vpack.c.b16 %v2421, %v2420
  %v2608 = vpack.c.b16 %v2423, %v2422
  %v2609 = vpack.c.b16 %v2425, %v2424
  %v2610 = vpack.c.b16 %v2427, %v2426
  %v2611 = vpack.c.b16 %v2429, %v2428
  %v2612 = vpack.c.b16 %v2431, %v2430
  %v2613 = vpack.c.b16 %v2433, %v2432
  %v2614 = vpack.c.b16 %v2435, %v2434
  %v2615 = vpack.c.b16 %v2437, %v2436
  %v2616 = vpack.c.b16 %v2439, %v2438
  %v2617 = vpack.c.b16 %v2441, %v2440
  %v2618 = vpack.c.b16 %v2443, %v2442
  %v2619 = vpack.c.b16 %v2445, %v2444
  %v2620 = vpack.c.b16 %v2447, %v2446
  %v2621 = vpack.c.b16 %v2449, %v2448
  %v2622 = vpack.c.b16 %v2451, %v2450
  %v2623 = vpack.c.b16 %v2453, %v2452
  %v2624 = vpack.c.b16 %v2455, %v2454
  %v2625 = vpack.c.b16 %v2457, %v2456
  %v2626 = vpack.c.b16 %v2459, %v2458
  %v2627 = vpack.c.b16 %v2461, %v2460
  %v2628 = vpack.c.b16 %v2463, %v2462
  %v2629 = vpack.c.b16 %v2465, %v2464
  %v2630 = vpack.c.b16 %v2467, %v2466
  %v2631 = vpack.c.b16 %v2469, %v2468
  %v2632 = vpack.c.b16 %v2471, %v2470
  %v2633 = vpack.c.b16 %v2473, %v2472
  %v2634 = vpack.c.b16 %v2475, %v2474
  %v2635 = vpack.c.b16 %v2477, %v2476
  %v2636 = vpack.c.b16 %v2479, %v2478
  %v2637 = vpack.c.b16 %v2481, %v2480
  %v2638 = vpack.c.b16 %v2483, %v2482
  %v2639 = vpack.c.b16 %v2485, %v2484
  %v2640 = vpack.c.b16 %v2487, %v2486
  %v2641 = vpack.c.b16 %v2489, %v2488
  %v2642 = vpack.c.b16 %v2491, %v2490
  %v2643 = vpack.c.b16 %v2493, %v2492
  %v2644 = vpack.c.b16 %v2495, %v2494
  %v2645 = vpack.c.b16 %v2497, %v2496
  %v2646 = vpack.c.b16 %v2499, %v2498
  %v2647 = vpack.c.b16 %v2501, %v2500
  %v2648 = vpack.c.b16 %v2503, %v2502
  %v2649 = vpack.c.b16 %v2505, %v2504
  %v2650 = vpack.c.b16 %v2507, %v2506
  %v2651 = vpack.c.b16 %v2509, %v2508
  %v2652 = vpack.c.b16 %v2511, %v2510
  %v2653 = vpack.c.b16 %v2513, %v2512
  %v2654 = vpack.c.b16 %v2515, %v2514
  %v2655 = vpack.c.b16 %v2517, %v2516
  %v2656 = vpack.c.b16 %v2519, %v2518
  %v2657 = vpack.c.b16 %v2521, %v2520
  %v2658 = vpack.c.b16 %v2523, %v2522
  %v2659 = vpack.c.b16 %v2525, %v2524
  %v2660 = vpack.c.b16 %v2527, %v2526
  %v2661 = vpack.c.b16 %v2529, %v2528
  %v2662 = vpack.c.b16 %v2531, %v2530
  %v2663 = vpack.c.b16 %v2533, %v2532
  %v2664 = vpack.c.b16 %v2535, %v2534
  %v2665 = vpack.c.b16 %v2537, %v2536
  %2794 = vmatpush.bf16.msra.mxu0 %v2545
  %2795 = vmatpush.bf16.msra.mxu0 %v2544
  %2796 = vmatpush.bf16.msra.mxu0 %v2543
  %2797 = vmatpush.bf16.msra.mxu0 %v2542
  %2798 = vmatpush.bf16.msra.mxu0 %v2541
  %2799 = vmatpush.bf16.msra.mxu0 %v2540
  %2800 = vmatpush.bf16.msra.mxu0 %v2539
  %2801 = vmatpush.bf16.msra.mxu0 %v2538
  %2802 = vmatmul.bf16.gmra.mxu0 %v1993
  %v2803 = vpop.f32.mrf.mxu0
  %v2804 = vadd.f32 %v2025, %v2803
  %v2805 = vpop.f32.mrf.mxu0
  %v2806 = vadd.f32 %v2025, %v2805
  %2807 = vmatmul.bf16.gmra.mxu0 %v2009
  %v2808 = vpop.f32.mrf.mxu0
  %v2809 = vadd.f32 %v2025, %v2808
  %v2810 = vpop.f32.mrf.mxu0
  %v2811 = vadd.f32 %v2025, %v2810
  %2812 = vdwg.mxu0
  %2813 = vmatpush.bf16.msra.mxu0 %v2553
  %2814 = vmatpush.bf16.msra.mxu0 %v2552
  %2815 = vmatpush.bf16.msra.mxu0 %v2551
  %2816 = vmatpush.bf16.msra.mxu0 %v2550
  %2817 = vmatpush.bf16.msra.mxu0 %v2549
  %2818 = vmatpush.bf16.msra.mxu0 %v2548
  %2819 = vmatpush.bf16.msra.mxu0 %v2547
  %2820 = vmatpush.bf16.msra.mxu0 %v2546
  %2821 = vmatmul.bf16.gmra.mxu0 %v1994
  %v2822 = vpop.f32.mrf.mxu0
  %v2823 = vadd.f32 %v2804, %v2822
  %v2824 = vpop.f32.mrf.mxu0
  %v2825 = vadd.f32 %v2806, %v2824
  %2826 = vmatmul.bf16.gmra.mxu0 %v2010
  %v2827 = vpop.f32.mrf.mxu0
  %v2828 = vadd.f32 %v2809, %v2827
  %v2829 = vpop.f32.mrf.mxu0
  %v2830 = vadd.f32 %v2811, %v2829
  %2831 = vdwg.mxu0
  %2832 = vmatpush.bf16.msra.mxu0 %v2561
  %2833 = vmatpush.bf16.msra.mxu0 %v2560
  %2834 = vmatpush.bf16.msra.mxu0 %v2559
  %2835 = vmatpush.bf16.msra.mxu0 %v2558
  %2836 = vmatpush.bf16.msra.mxu0 %v2557
  %2837 = vmatpush.bf16.msra.mxu0 %v2556
  %2838 = vmatpush.bf16.msra.mxu0 %v2555
  %2839 = vmatpush.bf16.msra.mxu0 %v2554
  %2840 = vmatmul.bf16.gmra.mxu0 %v1995
  %v2841 = vpop.f32.mrf.mxu0
  %v2842 = vadd.f32 %v2823, %v2841
  %v2843 = vpop.f32.mrf.mxu0
  %v2844 = vadd.f32 %v2825, %v2843
  %2845 = vmatmul.bf16.gmra.mxu0 %v2011
  %v2846 = vpop.f32.mrf.mxu0
  %v2847 = vadd.f32 %v2828, %v2846
  %v2848 = vpop.f32.mrf.mxu0
  %v2849 = vadd.f32 %v2830, %v2848
  %2850 = vdwg.mxu0
  %2851 = vmatpush.bf16.msra.mxu0 %v2569
  %2852 = vmatpush.bf16.msra.mxu0 %v2568
  %2853 = vmatpush.bf16.msra.mxu0 %v2567
  %2854 = vmatpush.bf16.msra.mxu0 %v2566
  %2855 = vmatpush.bf16.msra.mxu0 %v2565
  %2856 = vmatpush.bf16.msra.mxu0 %v2564
  %2857 = vmatpush.bf16.msra.mxu0 %v2563
  %2858 = vmatpush.bf16.msra.mxu0 %v2562
  %2859 = vmatmul.bf16.gmra.mxu0 %v1996
  %v2860 = vpop.f32.mrf.mxu0
  %v2861 = vadd.f32 %v2842, %v2860
  %v2862 = vpop.f32.mrf.mxu0
  %v2863 = vadd.f32 %v2844, %v2862
  %2864 = vmatmul.bf16.gmra.mxu0 %v2012
  %v2865 = vpop.f32.mrf.mxu0
  %v2866 = vadd.f32 %v2847, %v2865
  %v2867 = vpop.f32.mrf.mxu0
  %v2868 = vadd.f32 %v2849, %v2867
  %2869 = vdwg.mxu0
  %2870 = vmatpush.bf16.msra.mxu0 %v2577
  %2871 = vmatpush.bf16.msra.mxu0 %v2576
  %2872 = vmatpush.bf16.msra.mxu0 %v2575
  %2873 = vmatpush.bf16.msra.mxu0 %v2574
  %2874 = vmatpush.bf16.msra.mxu0 %v2573
  %2875 = vmatpush.bf16.msra.mxu0 %v2572
  %2876 = vmatpush.bf16.msra.mxu0 %v2571
  %2877 = vmatpush.bf16.msra.mxu0 %v2570
  %2878 = vmatmul.bf16.gmra.mxu0 %v1997
  %v2879 = vpop.f32.mrf.mxu0
  %v2880 = vadd.f32 %v2861, %v2879
  %v2881 = vpop.f32.mrf.mxu0
  %v2882 = vadd.f32 %v2863, %v2881
  %2883 = vmatmul.bf16.gmra.mxu0 %v2013
  %v2884 = vpop.f32.mrf.mxu0
  %v2885 = vadd.f32 %v2866, %v2884
  %v2886 = vpop.f32.mrf.mxu0
  %v2887 = vadd.f32 %v2868, %v2886
  %2888 = vdwg.mxu0
  %2889 = vmatpush.bf16.msra.mxu0 %v2585
  %2890 = vmatpush.bf16.msra.mxu0 %v2584
  %2891 = vmatpush.bf16.msra.mxu0 %v2583
  %2892 = vmatpush.bf16.msra.mxu0 %v2582
  %2893 = vmatpush.bf16.msra.mxu0 %v2581
  %2894 = vmatpush.bf16.msra.mxu0 %v2580
  %2895 = vmatpush.bf16.msra.mxu0 %v2579
  %2896 = vmatpush.bf16.msra.mxu0 %v2578
  %2897 = vmatmul.bf16.gmra.mxu0 %v1998
  %v2898 = vpop.f32.mrf.mxu0
  %v2899 = vadd.f32 %v2880, %v2898
  %v2900 = vpop.f32.mrf.mxu0
  %v2901 = vadd.f32 %v2882, %v2900
  %2902 = vmatmul.bf16.gmra.mxu0 %v2014
  %v2903 = vpop.f32.mrf.mxu0
  %v2904 = vadd.f32 %v2885, %v2903
  %v2905 = vpop.f32.mrf.mxu0
  %v2906 = vadd.f32 %v2887, %v2905
  %2907 = vdwg.mxu0
  %2908 = vmatpush.bf16.msra.mxu0 %v2593
  %2909 = vmatpush.bf16.msra.mxu0 %v2592
  %2910 = vmatpush.bf16.msra.mxu0 %v2591
  %2911 = vmatpush.bf16.msra.mxu0 %v2590
  %2912 = vmatpush.bf16.msra.mxu0 %v2589
  %2913 = vmatpush.bf16.msra.mxu0 %v2588
  %2914 = vmatpush.bf16.msra.mxu0 %v2587
  %2915 = vmatpush.bf16.msra.mxu0 %v2586
  %2916 = vmatmul.bf16.gmra.mxu0 %v1999
  %v2917 = vpop.f32.mrf.mxu0
  %v2918 = vadd.f32 %v2899, %v2917
  %v2919 = vpop.f32.mrf.mxu0
  %v2920 = vadd.f32 %v2901, %v2919
  %2921 = vmatmul.bf16.gmra.mxu0 %v2015
  %v2922 = vpop.f32.mrf.mxu0
  %v2923 = vadd.f32 %v2904, %v2922
  %v2924 = vpop.f32.mrf.mxu0
  %v2925 = vadd.f32 %v2906, %v2924
  %2926 = vdwg.mxu0
  %2927 = vmatpush.bf16.msra.mxu0 %v2601
  %2928 = vmatpush.bf16.msra.mxu0 %v2600
  %2929 = vmatpush.bf16.msra.mxu0 %v2599
  %2930 = vmatpush.bf16.msra.mxu0 %v2598
  %2931 = vmatpush.bf16.msra.mxu0 %v2597
  %2932 = vmatpush.bf16.msra.mxu0 %v2596
  %2933 = vmatpush.bf16.msra.mxu0 %v2595
  %2934 = vmatpush.bf16.msra.mxu0 %v2594
  %2935 = vmatmul.bf16.gmra.mxu0 %v2000
  %v2936 = vpop.f32.mrf.mxu0
  %v2937 = vadd.f32 %v2918, %v2936
  %v2938 = vpop.f32.mrf.mxu0
  %v2939 = vadd.f32 %v2920, %v2938
  %2940 = vmatmul.bf16.gmra.mxu0 %v2016
  %v2941 = vpop.f32.mrf.mxu0
  %v2942 = vadd.f32 %v2923, %v2941
  %v2943 = vpop.f32.mrf.mxu0
  %v2944 = vadd.f32 %v2925, %v2943
  %2945 = vdwg.mxu0
  %2946 = vmatpush.bf16.msra.mxu0 %v2609
  %2947 = vmatpush.bf16.msra.mxu0 %v2608
  %2948 = vmatpush.bf16.msra.mxu0 %v2607
  %2949 = vmatpush.bf16.msra.mxu0 %v2606
  %2950 = vmatpush.bf16.msra.mxu0 %v2605
  %2951 = vmatpush.bf16.msra.mxu0 %v2604
  %2952 = vmatpush.bf16.msra.mxu0 %v2603
  %2953 = vmatpush.bf16.msra.mxu0 %v2602
  %2954 = vmatmul.bf16.gmra.mxu0 %v2001
  %v2955 = vpop.f32.mrf.mxu0
  %v2956 = vadd.f32 %v2937, %v2955
  %v2957 = vpop.f32.mrf.mxu0
  %v2958 = vadd.f32 %v2939, %v2957
  %2959 = vmatmul.bf16.gmra.mxu0 %v2017
  %v2960 = vpop.f32.mrf.mxu0
  %v2961 = vadd.f32 %v2942, %v2960
  %v2962 = vpop.f32.mrf.mxu0
  %v2963 = vadd.f32 %v2944, %v2962
  %2964 = vdwg.mxu0
  %2965 = vmatpush.bf16.msra.mxu0 %v2617
  %2966 = vmatpush.bf16.msra.mxu0 %v2616
  %2967 = vmatpush.bf16.msra.mxu0 %v2615
  %2968 = vmatpush.bf16.msra.mxu0 %v2614
  %2969 = vmatpush.bf16.msra.mxu0 %v2613
  %2970 = vmatpush.bf16.msra.mxu0 %v2612
  %2971 = vmatpush.bf16.msra.mxu0 %v2611
  %2972 = vmatpush.bf16.msra.mxu0 %v2610
  %2973 = vmatmul.bf16.gmra.mxu0 %v2002
  %v2974 = vpop.f32.mrf.mxu0
  %v2975 = vadd.f32 %v2956, %v2974
  %v2976 = vpop.f32.mrf.mxu0
  %v2977 = vadd.f32 %v2958, %v2976
  %2978 = vmatmul.bf16.gmra.mxu0 %v2018
  %v2979 = vpop.f32.mrf.mxu0
  %v2980 = vadd.f32 %v2961, %v2979
  %v2981 = vpop.f32.mrf.mxu0
  %v2982 = vadd.f32 %v2963, %v2981
  %2983 = vdwg.mxu0
  %2984 = vmatpush.bf16.msra.mxu0 %v2625
  %2985 = vmatpush.bf16.msra.mxu0 %v2624
  %2986 = vmatpush.bf16.msra.mxu0 %v2623
  %2987 = vmatpush.bf16.msra.mxu0 %v2622
  %2988 = vmatpush.bf16.msra.mxu0 %v2621
  %2989 = vmatpush.bf16.msra.mxu0 %v2620
  %2990 = vmatpush.bf16.msra.mxu0 %v2619
  %2991 = vmatpush.bf16.msra.mxu0 %v2618
  %2992 = vmatmul.bf16.gmra.mxu0 %v2003
  %v2993 = vpop.f32.mrf.mxu0
  %v2994 = vadd.f32 %v2975, %v2993
  %v2995 = vpop.f32.mrf.mxu0
  %v2996 = vadd.f32 %v2977, %v2995
  %2997 = vmatmul.bf16.gmra.mxu0 %v2019
  %v2998 = vpop.f32.mrf.mxu0
  %v2999 = vadd.f32 %v2980, %v2998
  %v3000 = vpop.f32.mrf.mxu0
  %v3001 = vadd.f32 %v2982, %v3000
  %3002 = vdwg.mxu0
  %3003 = vmatpush.bf16.msra.mxu0 %v2633
  %3004 = vmatpush.bf16.msra.mxu0 %v2632
  %3005 = vmatpush.bf16.msra.mxu0 %v2631
  %3006 = vmatpush.bf16.msra.mxu0 %v2630
  %3007 = vmatpush.bf16.msra.mxu0 %v2629
  %3008 = vmatpush.bf16.msra.mxu0 %v2628
  %3009 = vmatpush.bf16.msra.mxu0 %v2627
  %3010 = vmatpush.bf16.msra.mxu0 %v2626
  %3011 = vmatmul.bf16.gmra.mxu0 %v2004
  %v3012 = vpop.f32.mrf.mxu0
  %v3013 = vadd.f32 %v2994, %v3012
  %v3014 = vpop.f32.mrf.mxu0
  %v3015 = vadd.f32 %v2996, %v3014
  %3016 = vmatmul.bf16.gmra.mxu0 %v2020
  %v3017 = vpop.f32.mrf.mxu0
  %v3018 = vadd.f32 %v2999, %v3017
  %v3019 = vpop.f32.mrf.mxu0
  %v3020 = vadd.f32 %v3001, %v3019
  %3021 = vdwg.mxu0
  %3022 = vmatpush.bf16.msra.mxu0 %v2641
  %3023 = vmatpush.bf16.msra.mxu0 %v2640
  %3024 = vmatpush.bf16.msra.mxu0 %v2639
  %3025 = vmatpush.bf16.msra.mxu0 %v2638
  %3026 = vmatpush.bf16.msra.mxu0 %v2637
  %3027 = vmatpush.bf16.msra.mxu0 %v2636
  %3028 = vmatpush.bf16.msra.mxu0 %v2635
  %3029 = vmatpush.bf16.msra.mxu0 %v2634
  %3030 = vmatmul.bf16.gmra.mxu0 %v2005
  %v3031 = vpop.f32.mrf.mxu0
  %v3032 = vadd.f32 %v3013, %v3031
  %v3033 = vpop.f32.mrf.mxu0
  %v3034 = vadd.f32 %v3015, %v3033
  %3035 = vmatmul.bf16.gmra.mxu0 %v2021
  %v3036 = vpop.f32.mrf.mxu0
  %v3037 = vadd.f32 %v3018, %v3036
  %v3038 = vpop.f32.mrf.mxu0
  %v3039 = vadd.f32 %v3020, %v3038
  %3040 = vdwg.mxu0
  %3041 = vmatpush.bf16.msra.mxu0 %v2649
  %3042 = vmatpush.bf16.msra.mxu0 %v2648
  %3043 = vmatpush.bf16.msra.mxu0 %v2647
  %3044 = vmatpush.bf16.msra.mxu0 %v2646
  %3045 = vmatpush.bf16.msra.mxu0 %v2645
  %3046 = vmatpush.bf16.msra.mxu0 %v2644
  %3047 = vmatpush.bf16.msra.mxu0 %v2643
  %3048 = vmatpush.bf16.msra.mxu0 %v2642
  %3049 = vmatmul.bf16.gmra.mxu0 %v2006
  %v3050 = vpop.f32.mrf.mxu0
  %v3051 = vadd.f32 %v3032, %v3050
  %v3052 = vpop.f32.mrf.mxu0
  %v3053 = vadd.f32 %v3034, %v3052
  %3054 = vmatmul.bf16.gmra.mxu0 %v2022
  %v3055 = vpop.f32.mrf.mxu0
  %v3056 = vadd.f32 %v3037, %v3055
  %v3057 = vpop.f32.mrf.mxu0
  %v3058 = vadd.f32 %v3039, %v3057
  %3059 = vdwg.mxu0
  %3060 = vmatpush.bf16.msra.mxu0 %v2657
  %3061 = vmatpush.bf16.msra.mxu0 %v2656
  %3062 = vmatpush.bf16.msra.mxu0 %v2655
  %3063 = vmatpush.bf16.msra.mxu0 %v2654
  %3064 = vmatpush.bf16.msra.mxu0 %v2653
  %3065 = vmatpush.bf16.msra.mxu0 %v2652
  %3066 = vmatpush.bf16.msra.mxu0 %v2651
  %3067 = vmatpush.bf16.msra.mxu0 %v2650
  %3068 = vmatmul.bf16.gmra.mxu0 %v2007
  %v3069 = vpop.f32.mrf.mxu0
  %v3070 = vadd.f32 %v3051, %v3069
  %v3071 = vpop.f32.mrf.mxu0
  %v3072 = vadd.f32 %v3053, %v3071
  %3073 = vmatmul.bf16.gmra.mxu0 %v2023
  %v3074 = vpop.f32.mrf.mxu0
  %v3075 = vadd.f32 %v3056, %v3074
  %v3076 = vpop.f32.mrf.mxu0
  %v3077 = vadd.f32 %v3058, %v3076
  %3078 = vdwg.mxu0
  %3079 = vmatpush.bf16.msra.mxu0 %v2665
  %3080 = vmatpush.bf16.msra.mxu0 %v2664
  %3081 = vmatpush.bf16.msra.mxu0 %v2663
  %3082 = vmatpush.bf16.msra.mxu0 %v2662
  %3083 = vmatpush.bf16.msra.mxu0 %v2661
  %3084 = vmatpush.bf16.msra.mxu0 %v2660
  %3085 = vmatpush.bf16.msra.mxu0 %v2659
  %3086 = vmatpush.bf16.msra.mxu0 %v2658
  %3087 = vmatmul.bf16.gmra.mxu0 %v2008
  %v3088 = vpop.f32.mrf.mxu0
  %v3089 = vadd.f32 %v3070, %v3088
  %v3090 = vpop.f32.mrf.mxu0
  %v3091 = vadd.f32 %v3072, %v3090
  %3092 = vmatmul.bf16.gmra.mxu0 %v2024
  %v3093 = vpop.f32.mrf.mxu0
  %v3094 = vadd.f32 %v3075, %v3093
  %v3095 = vpop.f32.mrf.mxu0
  %v3096 = vadd.f32 %v3077, %v3095
  %3097 = vdwg.mxu0
  %v3098 = vadd.f32 %v1437, %v3089
  %v3099 = vadd.f32 %v1438, %v3091
  %v3100 = vadd.f32 %v1439, %v3094
  %v3101 = vadd.f32 %v1440, %v3096
  %v3102 = vsel %vm439, %v3098, 0.0
  %3103 = vadd.xlane.f32.xlu0 %v3102
  %v3104 = vpop.xlane.xlu0 %3103
  %v3105 = vsel %vm439, %v3099, 0.0
  %3106 = vadd.xlane.f32.xlu0 %v3105
  %v3107 = vpop.xlane.xlu0 %3106
  %v3108 = vsel %vm439, %v3100, 0.0
  %3109 = vadd.xlane.f32.xlu0 %v3108
  %v3110 = vpop.xlane.xlu0 %3109
  %v3111 = vsel %vm439, %v3101, 0.0
  %3112 = vadd.xlane.f32.xlu0 %v3111
  %v3113 = vpop.xlane.xlu0 %3112
  %v3114 = vmul.f32 %v3104, %v1354
  %v3115 = vmul.f32 %v3107, %v1354
  %v3116 = vmul.f32 %v3110, %v1354
  %v3117 = vmul.f32 %v3113, %v1354
  %v3118 = vsub.f32 %v3098, %v3114
  %v3119 = vsub.f32 %v3099, %v3115
  %v3120 = vsub.f32 %v3100, %v3116
  %v3121 = vsub.f32 %v3101, %v3117
  %v3122 = vmul.f32 %v3118, %v3118
  %v3123 = vmul.f32 %v3119, %v3119
  %v3124 = vmul.f32 %v3120, %v3120
  %v3125 = vmul.f32 %v3121, %v3121
  %v3126 = vsel %vm439, %v3122, 0.0
  %3127 = vadd.xlane.f32.xlu0 %v3126
  %v3128 = vpop.xlane.xlu0 %3127
  %v3129 = vsel %vm439, %v3123, 0.0
  %3130 = vadd.xlane.f32.xlu0 %v3129
  %v3131 = vpop.xlane.xlu0 %3130
  %v3132 = vsel %vm439, %v3124, 0.0
  %3133 = vadd.xlane.f32.xlu0 %v3132
  %v3134 = vpop.xlane.xlu0 %3133
  %v3135 = vsel %vm439, %v3125, 0.0
  %3136 = vadd.xlane.f32.xlu0 %v3135
  %v3137 = vpop.xlane.xlu0 %3136
  %v3138 = vmul.f32 %v3128, %v1354
  %v3139 = vmul.f32 %v3131, %v1354
  %v3140 = vmul.f32 %v3134, %v1354
  %v3141 = vmul.f32 %v3137, %v1354
  %v3142 = vadd.f32 %v3138, 1e-05
  %v3143 = vadd.f32 %v3139, 1e-05
  %v3144 = vadd.f32 %v3140, 1e-05
  %v3145 = vadd.f32 %v3141, 1e-05
  %v3146 = vrsqrt.pop %v3142
  %v3147 = vmul.f32 %v3146, %v3142
  %v3148 = vmul.f32 %v3147, %v3146
  %v3149 = vmul.f32 0.5, %v3148
  %v3150 = vsub.f32 1.5, %v3149
  %v3151 = vmul.f32 %v3146, %v3150
  %vm3152 = vweird.f32 %v3142
  %vm3153 = vweird.f32 %v3146
  %vm3154 = vmor %vm3152, %vm3153
  %v3155 = vsel %vm3154, %v3146, %v3151
  %v3156 = vrsqrt.pop %v3143
  %v3157 = vmul.f32 %v3156, %v3143
  %v3158 = vmul.f32 %v3157, %v3156
  %v3159 = vmul.f32 0.5, %v3158
  %v3160 = vsub.f32 1.5, %v3159
  %v3161 = vmul.f32 %v3156, %v3160
  %vm3162 = vweird.f32 %v3143
  %vm3163 = vweird.f32 %v3156
  %vm3164 = vmor %vm3162, %vm3163
  %v3165 = vsel %vm3164, %v3156, %v3161
  %v3166 = vrsqrt.pop %v3144
  %v3167 = vmul.f32 %v3166, %v3144
  %v3168 = vmul.f32 %v3167, %v3166
  %v3169 = vmul.f32 0.5, %v3168
  %v3170 = vsub.f32 1.5, %v3169
  %v3171 = vmul.f32 %v3166, %v3170
  %vm3172 = vweird.f32 %v3144
  %vm3173 = vweird.f32 %v3166
  %vm3174 = vmor %vm3172, %vm3173
  %v3175 = vsel %vm3174, %v3166, %v3171
  %v3176 = vrsqrt.pop %v3145
  %v3177 = vmul.f32 %v3176, %v3145
  %v3178 = vmul.f32 %v3177, %v3176
  %v3179 = vmul.f32 0.5, %v3178
  %v3180 = vsub.f32 1.5, %v3179
  %v3181 = vmul.f32 %v3176, %v3180
  %vm3182 = vweird.f32 %v3145
  %vm3183 = vweird.f32 %v3176
  %vm3184 = vmor %vm3182, %vm3183
  %v3185 = vsel %vm3184, %v3176, %v3181
  %v3186 = vmul.f32 %v3118, %v3155
  %v3187 = vmul.f32 %v3119, %v3165
  %v3188 = vmul.f32 %v3120, %v3175
  %v3189 = vmul.f32 %v3121, %v3185
  %v3190 = vperm.slane %v408, 6
  %v3191 = vmul.f32 %v3186, %v3190
  %v3192 = vmul.f32 %v3187, %v3190
  %v3193 = vmul.f32 %v3188, %v3190
  %v3194 = vmul.f32 %v3189, %v3190
  %v3195 = vperm.slane %v408, 7
  %v3196 = vadd.f32 %v3191, %v3195
  %v3197 = vadd.f32 %v3192, %v3195
  %v3198 = vadd.f32 %v3193, %v3195
  %v3199 = vadd.f32 %v3194, %v3195
  %s3200 = scalar_lea.vmem %s3, 16
  %v3201 = vld [vmem:[%s3200] sm:$0xf]
  %v3202 = vld [vmem:[%s3200 + $0x4] sm:$0xf]
  %v3203 = vld [vmem:[%s3200 + $0x8] sm:$0xf]
  %v3204 = vld [vmem:[%s3200 + $0xc] sm:$0xf]
  %s3205 = scalar_lea.vmem %s4, 16
  %v3206 = vld [vmem:[%s3205] sm:$0xf]
  %v3207 = vld [vmem:[%s3205 + $0x4] sm:$0xf]
  %v3208 = vld [vmem:[%s3205 + $0x8] sm:$0xf]
  %v3209 = vld [vmem:[%s3205 + $0xc] sm:$0xf]
  %s3210 = scalar_lea.vmem %s5, 256
  %v3211 = vld [vmem:[%s3210] sm:$0xff]
  %v3212 = vld [vmem:[%s3210 + $0x8] sm:$0xff]
  %v3213 = vld [vmem:[%s3210 + $0x10] sm:$0xff]
  %v3214 = vld [vmem:[%s3210 + $0x18] sm:$0xff]
  %v3215 = vld [vmem:[%s3210 + $0x20] sm:$0xff]
  %v3216 = vld [vmem:[%s3210 + $0x28] sm:$0xff]
  %v3217 = vld [vmem:[%s3210 + $0x30] sm:$0xff]
  %v3218 = vld [vmem:[%s3210 + $0x38] sm:$0xff]
  %v3219 = vld [vmem:[%s3210 + $0x40] sm:$0xff]
  %v3220 = vld [vmem:[%s3210 + $0x48] sm:$0xff]
  %v3221 = vld [vmem:[%s3210 + $0x50] sm:$0xff]
  %v3222 = vld [vmem:[%s3210 + $0x58] sm:$0xff]
  %v3223 = vld [vmem:[%s3210 + $0x60] sm:$0xff]
  %v3224 = vld [vmem:[%s3210 + $0x68] sm:$0xff]
  %v3225 = vld [vmem:[%s3210 + $0x70] sm:$0xff]
  %v3226 = vld [vmem:[%s3210 + $0x78] sm:$0xff]
  %v3227 = vld [vmem:[%s3210 + $0x80] sm:$0xff]
  %v3228 = vld [vmem:[%s3210 + $0x88] sm:$0xff]
  %v3229 = vld [vmem:[%s3210 + $0x90] sm:$0xff]
  %v3230 = vld [vmem:[%s3210 + $0x98] sm:$0xff]
  %v3231 = vld [vmem:[%s3210 + $0xa0] sm:$0xff]
  %v3232 = vld [vmem:[%s3210 + $0xa8] sm:$0xff]
  %v3233 = vld [vmem:[%s3210 + $0xb0] sm:$0xff]
  %v3234 = vld [vmem:[%s3210 + $0xb8] sm:$0xff]
  %v3235 = vld [vmem:[%s3210 + $0xc0] sm:$0xff]
  %v3236 = vld [vmem:[%s3210 + $0xc8] sm:$0xff]
  %v3237 = vld [vmem:[%s3210 + $0xd0] sm:$0xff]
  %v3238 = vld [vmem:[%s3210 + $0xd8] sm:$0xff]
  %v3239 = vld [vmem:[%s3210 + $0xe0] sm:$0xff]
  %v3240 = vld [vmem:[%s3210 + $0xe8] sm:$0xff]
  %v3241 = vld [vmem:[%s3210 + $0xf0] sm:$0xff]
  %v3242 = vld [vmem:[%s3210 + $0xf8] sm:$0xff]
  %s3243 = scalar_lea.vmem %s6, 1024
  %v3244 = vld [vmem:[%s3243] sm:$0xf]
  %v3245 = vld [vmem:[%s3243 + $0x4] sm:$0xf]
  %v3246 = vld [vmem:[%s3243 + $0x8] sm:$0xf]
  %v3247 = vld [vmem:[%s3243 + $0xc] sm:$0xf]
  %v3248 = vld [vmem:[%s3243 + $0x10] sm:$0xf]
  %v3249 = vld [vmem:[%s3243 + $0x14] sm:$0xf]
  %v3250 = vld [vmem:[%s3243 + $0x18] sm:$0xf]
  %v3251 = vld [vmem:[%s3243 + $0x1c] sm:$0xf]
  %v3252 = vld [vmem:[%s3243 + $0x20] sm:$0xf]
  %v3253 = vld [vmem:[%s3243 + $0x24] sm:$0xf]
  %v3254 = vld [vmem:[%s3243 + $0x28] sm:$0xf]
  %v3255 = vld [vmem:[%s3243 + $0x2c] sm:$0xf]
  %v3256 = vld [vmem:[%s3243 + $0x30] sm:$0xf]
  %v3257 = vld [vmem:[%s3243 + $0x34] sm:$0xf]
  %v3258 = vld [vmem:[%s3243 + $0x38] sm:$0xf]
  %v3259 = vld [vmem:[%s3243 + $0x3c] sm:$0xf]
  %v3260 = vld [vmem:[%s3243 + $0x40] sm:$0xf]
  %v3261 = vld [vmem:[%s3243 + $0x44] sm:$0xf]
  %v3262 = vld [vmem:[%s3243 + $0x48] sm:$0xf]
  %v3263 = vld [vmem:[%s3243 + $0x4c] sm:$0xf]
  %v3264 = vld [vmem:[%s3243 + $0x50] sm:$0xf]
  %v3265 = vld [vmem:[%s3243 + $0x54] sm:$0xf]
  %v3266 = vld [vmem:[%s3243 + $0x58] sm:$0xf]
  %v3267 = vld [vmem:[%s3243 + $0x5c] sm:$0xf]
  %v3268 = vld [vmem:[%s3243 + $0x60] sm:$0xf]
  %v3269 = vld [vmem:[%s3243 + $0x64] sm:$0xf]
  %v3270 = vld [vmem:[%s3243 + $0x68] sm:$0xf]
  %v3271 = vld [vmem:[%s3243 + $0x6c] sm:$0xf]
  %v3272 = vld [vmem:[%s3243 + $0x70] sm:$0xf]
  %v3273 = vld [vmem:[%s3243 + $0x74] sm:$0xf]
  %v3274 = vld [vmem:[%s3243 + $0x78] sm:$0xf]
  %v3275 = vld [vmem:[%s3243 + $0x7c] sm:$0xf]
  %v3276 = vld [vmem:[%s3243 + $0x80] sm:$0xf]
  %v3277 = vld [vmem:[%s3243 + $0x84] sm:$0xf]
  %v3278 = vld [vmem:[%s3243 + $0x88] sm:$0xf]
  %v3279 = vld [vmem:[%s3243 + $0x8c] sm:$0xf]
  %v3280 = vld [vmem:[%s3243 + $0x90] sm:$0xf]
  %v3281 = vld [vmem:[%s3243 + $0x94] sm:$0xf]
  %v3282 = vld [vmem:[%s3243 + $0x98] sm:$0xf]
  %v3283 = vld [vmem:[%s3243 + $0x9c] sm:$0xf]
  %v3284 = vld [vmem:[%s3243 + $0xa0] sm:$0xf]
  %v3285 = vld [vmem:[%s3243 + $0xa4] sm:$0xf]
  %v3286 = vld [vmem:[%s3243 + $0xa8] sm:$0xf]
  %v3287 = vld [vmem:[%s3243 + $0xac] sm:$0xf]
  %v3288 = vld [vmem:[%s3243 + $0xb0] sm:$0xf]
  %v3289 = vld [vmem:[%s3243 + $0xb4] sm:$0xf]
  %v3290 = vld [vmem:[%s3243 + $0xb8] sm:$0xf]
  %v3291 = vld [vmem:[%s3243 + $0xbc] sm:$0xf]
  %v3292 = vld [vmem:[%s3243 + $0xc0] sm:$0xf]
  %v3293 = vld [vmem:[%s3243 + $0xc4] sm:$0xf]
  %v3294 = vld [vmem:[%s3243 + $0xc8] sm:$0xf]
  %v3295 = vld [vmem:[%s3243 + $0xcc] sm:$0xf]
  %v3296 = vld [vmem:[%s3243 + $0xd0] sm:$0xf]
  %v3297 = vld [vmem:[%s3243 + $0xd4] sm:$0xf]
  %v3298 = vld [vmem:[%s3243 + $0xd8] sm:$0xf]
  %v3299 = vld [vmem:[%s3243 + $0xdc] sm:$0xf]
  %v3300 = vld [vmem:[%s3243 + $0xe0] sm:$0xf]
  %v3301 = vld [vmem:[%s3243 + $0xe4] sm:$0xf]
  %v3302 = vld [vmem:[%s3243 + $0xe8] sm:$0xf]
  %v3303 = vld [vmem:[%s3243 + $0xec] sm:$0xf]
  %v3304 = vld [vmem:[%s3243 + $0xf0] sm:$0xf]
  %v3305 = vld [vmem:[%s3243 + $0xf4] sm:$0xf]
  %v3306 = vld [vmem:[%s3243 + $0xf8] sm:$0xf]
  %v3307 = vld [vmem:[%s3243 + $0xfc] sm:$0xf]
  %v3308 = vld [vmem:[%s3243 + $0x100] sm:$0xf]
  %v3309 = vld [vmem:[%s3243 + $0x104] sm:$0xf]
  %v3310 = vld [vmem:[%s3243 + $0x108] sm:$0xf]
  %v3311 = vld [vmem:[%s3243 + $0x10c] sm:$0xf]
  %v3312 = vld [vmem:[%s3243 + $0x110] sm:$0xf]
  %v3313 = vld [vmem:[%s3243 + $0x114] sm:$0xf]
  %v3314 = vld [vmem:[%s3243 + $0x118] sm:$0xf]
  %v3315 = vld [vmem:[%s3243 + $0x11c] sm:$0xf]
  %v3316 = vld [vmem:[%s3243 + $0x120] sm:$0xf]
  %v3317 = vld [vmem:[%s3243 + $0x124] sm:$0xf]
  %v3318 = vld [vmem:[%s3243 + $0x128] sm:$0xf]
  %v3319 = vld [vmem:[%s3243 + $0x12c] sm:$0xf]
  %v3320 = vld [vmem:[%s3243 + $0x130] sm:$0xf]
  %v3321 = vld [vmem:[%s3243 + $0x134] sm:$0xf]
  %v3322 = vld [vmem:[%s3243 + $0x138] sm:$0xf]
  %v3323 = vld [vmem:[%s3243 + $0x13c] sm:$0xf]
  %v3324 = vld [vmem:[%s3243 + $0x140] sm:$0xf]
  %v3325 = vld [vmem:[%s3243 + $0x144] sm:$0xf]
  %v3326 = vld [vmem:[%s3243 + $0x148] sm:$0xf]
  %v3327 = vld [vmem:[%s3243 + $0x14c] sm:$0xf]
  %v3328 = vld [vmem:[%s3243 + $0x150] sm:$0xf]
  %v3329 = vld [vmem:[%s3243 + $0x154] sm:$0xf]
  %v3330 = vld [vmem:[%s3243 + $0x158] sm:$0xf]
  %v3331 = vld [vmem:[%s3243 + $0x15c] sm:$0xf]
  %v3332 = vld [vmem:[%s3243 + $0x160] sm:$0xf]
  %v3333 = vld [vmem:[%s3243 + $0x164] sm:$0xf]
  %v3334 = vld [vmem:[%s3243 + $0x168] sm:$0xf]
  %v3335 = vld [vmem:[%s3243 + $0x16c] sm:$0xf]
  %v3336 = vld [vmem:[%s3243 + $0x170] sm:$0xf]
  %v3337 = vld [vmem:[%s3243 + $0x174] sm:$0xf]
  %v3338 = vld [vmem:[%s3243 + $0x178] sm:$0xf]
  %v3339 = vld [vmem:[%s3243 + $0x17c] sm:$0xf]
  %v3340 = vld [vmem:[%s3243 + $0x180] sm:$0xf]
  %v3341 = vld [vmem:[%s3243 + $0x184] sm:$0xf]
  %v3342 = vld [vmem:[%s3243 + $0x188] sm:$0xf]
  %v3343 = vld [vmem:[%s3243 + $0x18c] sm:$0xf]
  %v3344 = vld [vmem:[%s3243 + $0x190] sm:$0xf]
  %v3345 = vld [vmem:[%s3243 + $0x194] sm:$0xf]
  %v3346 = vld [vmem:[%s3243 + $0x198] sm:$0xf]
  %v3347 = vld [vmem:[%s3243 + $0x19c] sm:$0xf]
  %v3348 = vld [vmem:[%s3243 + $0x1a0] sm:$0xf]
  %v3349 = vld [vmem:[%s3243 + $0x1a4] sm:$0xf]
  %v3350 = vld [vmem:[%s3243 + $0x1a8] sm:$0xf]
  %v3351 = vld [vmem:[%s3243 + $0x1ac] sm:$0xf]
  %v3352 = vld [vmem:[%s3243 + $0x1b0] sm:$0xf]
  %v3353 = vld [vmem:[%s3243 + $0x1b4] sm:$0xf]
  %v3354 = vld [vmem:[%s3243 + $0x1b8] sm:$0xf]
  %v3355 = vld [vmem:[%s3243 + $0x1bc] sm:$0xf]
  %v3356 = vld [vmem:[%s3243 + $0x1c0] sm:$0xf]
  %v3357 = vld [vmem:[%s3243 + $0x1c4] sm:$0xf]
  %v3358 = vld [vmem:[%s3243 + $0x1c8] sm:$0xf]
  %v3359 = vld [vmem:[%s3243 + $0x1cc] sm:$0xf]
  %v3360 = vld [vmem:[%s3243 + $0x1d0] sm:$0xf]
  %v3361 = vld [vmem:[%s3243 + $0x1d4] sm:$0xf]
  %v3362 = vld [vmem:[%s3243 + $0x1d8] sm:$0xf]
  %v3363 = vld [vmem:[%s3243 + $0x1dc] sm:$0xf]
  %v3364 = vld [vmem:[%s3243 + $0x1e0] sm:$0xf]
  %v3365 = vld [vmem:[%s3243 + $0x1e4] sm:$0xf]
  %v3366 = vld [vmem:[%s3243 + $0x1e8] sm:$0xf]
  %v3367 = vld [vmem:[%s3243 + $0x1ec] sm:$0xf]
  %v3368 = vld [vmem:[%s3243 + $0x1f0] sm:$0xf]
  %v3369 = vld [vmem:[%s3243 + $0x1f4] sm:$0xf]
  %v3370 = vld [vmem:[%s3243 + $0x1f8] sm:$0xf]
  %v3371 = vld [vmem:[%s3243 + $0x1fc] sm:$0xf]
  %v3372 = vld [vmem:[%s3243 + $0x200] sm:$0xf]
  %v3373 = vld [vmem:[%s3243 + $0x204] sm:$0xf]
  %v3374 = vld [vmem:[%s3243 + $0x208] sm:$0xf]
  %v3375 = vld [vmem:[%s3243 + $0x20c] sm:$0xf]
  %v3376 = vld [vmem:[%s3243 + $0x210] sm:$0xf]
  %v3377 = vld [vmem:[%s3243 + $0x214] sm:$0xf]
  %v3378 = vld [vmem:[%s3243 + $0x218] sm:$0xf]
  %v3379 = vld [vmem:[%s3243 + $0x21c] sm:$0xf]
  %v3380 = vld [vmem:[%s3243 + $0x220] sm:$0xf]
  %v3381 = vld [vmem:[%s3243 + $0x224] sm:$0xf]
  %v3382 = vld [vmem:[%s3243 + $0x228] sm:$0xf]
  %v3383 = vld [vmem:[%s3243 + $0x22c] sm:$0xf]
  %v3384 = vld [vmem:[%s3243 + $0x230] sm:$0xf]
  %v3385 = vld [vmem:[%s3243 + $0x234] sm:$0xf]
  %v3386 = vld [vmem:[%s3243 + $0x238] sm:$0xf]
  %v3387 = vld [vmem:[%s3243 + $0x23c] sm:$0xf]
  %v3388 = vld [vmem:[%s3243 + $0x240] sm:$0xf]
  %v3389 = vld [vmem:[%s3243 + $0x244] sm:$0xf]
  %v3390 = vld [vmem:[%s3243 + $0x248] sm:$0xf]
  %v3391 = vld [vmem:[%s3243 + $0x24c] sm:$0xf]
  %v3392 = vld [vmem:[%s3243 + $0x250] sm:$0xf]
  %v3393 = vld [vmem:[%s3243 + $0x254] sm:$0xf]
  %v3394 = vld [vmem:[%s3243 + $0x258] sm:$0xf]
  %v3395 = vld [vmem:[%s3243 + $0x25c] sm:$0xf]
  %v3396 = vld [vmem:[%s3243 + $0x260] sm:$0xf]
  %v3397 = vld [vmem:[%s3243 + $0x264] sm:$0xf]
  %v3398 = vld [vmem:[%s3243 + $0x268] sm:$0xf]
  %v3399 = vld [vmem:[%s3243 + $0x26c] sm:$0xf]
  %v3400 = vld [vmem:[%s3243 + $0x270] sm:$0xf]
  %v3401 = vld [vmem:[%s3243 + $0x274] sm:$0xf]
  %v3402 = vld [vmem:[%s3243 + $0x278] sm:$0xf]
  %v3403 = vld [vmem:[%s3243 + $0x27c] sm:$0xf]
  %v3404 = vld [vmem:[%s3243 + $0x280] sm:$0xf]
  %v3405 = vld [vmem:[%s3243 + $0x284] sm:$0xf]
  %v3406 = vld [vmem:[%s3243 + $0x288] sm:$0xf]
  %v3407 = vld [vmem:[%s3243 + $0x28c] sm:$0xf]
  %v3408 = vld [vmem:[%s3243 + $0x290] sm:$0xf]
  %v3409 = vld [vmem:[%s3243 + $0x294] sm:$0xf]
  %v3410 = vld [vmem:[%s3243 + $0x298] sm:$0xf]
  %v3411 = vld [vmem:[%s3243 + $0x29c] sm:$0xf]
  %v3412 = vld [vmem:[%s3243 + $0x2a0] sm:$0xf]
  %v3413 = vld [vmem:[%s3243 + $0x2a4] sm:$0xf]
  %v3414 = vld [vmem:[%s3243 + $0x2a8] sm:$0xf]
  %v3415 = vld [vmem:[%s3243 + $0x2ac] sm:$0xf]
  %v3416 = vld [vmem:[%s3243 + $0x2b0] sm:$0xf]
  %v3417 = vld [vmem:[%s3243 + $0x2b4] sm:$0xf]
  %v3418 = vld [vmem:[%s3243 + $0x2b8] sm:$0xf]
  %v3419 = vld [vmem:[%s3243 + $0x2bc] sm:$0xf]
  %v3420 = vld [vmem:[%s3243 + $0x2c0] sm:$0xf]
  %v3421 = vld [vmem:[%s3243 + $0x2c4] sm:$0xf]
  %v3422 = vld [vmem:[%s3243 + $0x2c8] sm:$0xf]
  %v3423 = vld [vmem:[%s3243 + $0x2cc] sm:$0xf]
  %v3424 = vld [vmem:[%s3243 + $0x2d0] sm:$0xf]
  %v3425 = vld [vmem:[%s3243 + $0x2d4] sm:$0xf]
  %v3426 = vld [vmem:[%s3243 + $0x2d8] sm:$0xf]
  %v3427 = vld [vmem:[%s3243 + $0x2dc] sm:$0xf]
  %v3428 = vld [vmem:[%s3243 + $0x2e0] sm:$0xf]
  %v3429 = vld [vmem:[%s3243 + $0x2e4] sm:$0xf]
  %v3430 = vld [vmem:[%s3243 + $0x2e8] sm:$0xf]
  %v3431 = vld [vmem:[%s3243 + $0x2ec] sm:$0xf]
  %v3432 = vld [vmem:[%s3243 + $0x2f0] sm:$0xf]
  %v3433 = vld [vmem:[%s3243 + $0x2f4] sm:$0xf]
  %v3434 = vld [vmem:[%s3243 + $0x2f8] sm:$0xf]
  %v3435 = vld [vmem:[%s3243 + $0x2fc] sm:$0xf]
  %v3436 = vld [vmem:[%s3243 + $0x300] sm:$0xf]
  %v3437 = vld [vmem:[%s3243 + $0x304] sm:$0xf]
  %v3438 = vld [vmem:[%s3243 + $0x308] sm:$0xf]
  %v3439 = vld [vmem:[%s3243 + $0x30c] sm:$0xf]
  %v3440 = vld [vmem:[%s3243 + $0x310] sm:$0xf]
  %v3441 = vld [vmem:[%s3243 + $0x314] sm:$0xf]
  %v3442 = vld [vmem:[%s3243 + $0x318] sm:$0xf]
  %v3443 = vld [vmem:[%s3243 + $0x31c] sm:$0xf]
  %v3444 = vld [vmem:[%s3243 + $0x320] sm:$0xf]
  %v3445 = vld [vmem:[%s3243 + $0x324] sm:$0xf]
  %v3446 = vld [vmem:[%s3243 + $0x328] sm:$0xf]
  %v3447 = vld [vmem:[%s3243 + $0x32c] sm:$0xf]
  %v3448 = vld [vmem:[%s3243 + $0x330] sm:$0xf]
  %v3449 = vld [vmem:[%s3243 + $0x334] sm:$0xf]
  %v3450 = vld [vmem:[%s3243 + $0x338] sm:$0xf]
  %v3451 = vld [vmem:[%s3243 + $0x33c] sm:$0xf]
  %v3452 = vld [vmem:[%s3243 + $0x340] sm:$0xf]
  %v3453 = vld [vmem:[%s3243 + $0x344] sm:$0xf]
  %v3454 = vld [vmem:[%s3243 + $0x348] sm:$0xf]
  %v3455 = vld [vmem:[%s3243 + $0x34c] sm:$0xf]
  %v3456 = vld [vmem:[%s3243 + $0x350] sm:$0xf]
  %v3457 = vld [vmem:[%s3243 + $0x354] sm:$0xf]
  %v3458 = vld [vmem:[%s3243 + $0x358] sm:$0xf]
  %v3459 = vld [vmem:[%s3243 + $0x35c] sm:$0xf]
  %v3460 = vld [vmem:[%s3243 + $0x360] sm:$0xf]
  %v3461 = vld [vmem:[%s3243 + $0x364] sm:$0xf]
  %v3462 = vld [vmem:[%s3243 + $0x368] sm:$0xf]
  %v3463 = vld [vmem:[%s3243 + $0x36c] sm:$0xf]
  %v3464 = vld [vmem:[%s3243 + $0x370] sm:$0xf]
  %v3465 = vld [vmem:[%s3243 + $0x374] sm:$0xf]
  %v3466 = vld [vmem:[%s3243 + $0x378] sm:$0xf]
  %v3467 = vld [vmem:[%s3243 + $0x37c] sm:$0xf]
  %v3468 = vld [vmem:[%s3243 + $0x380] sm:$0xf]
  %v3469 = vld [vmem:[%s3243 + $0x384] sm:$0xf]
  %v3470 = vld [vmem:[%s3243 + $0x388] sm:$0xf]
  %v3471 = vld [vmem:[%s3243 + $0x38c] sm:$0xf]
  %v3472 = vld [vmem:[%s3243 + $0x390] sm:$0xf]
  %v3473 = vld [vmem:[%s3243 + $0x394] sm:$0xf]
  %v3474 = vld [vmem:[%s3243 + $0x398] sm:$0xf]
  %v3475 = vld [vmem:[%s3243 + $0x39c] sm:$0xf]
  %v3476 = vld [vmem:[%s3243 + $0x3a0] sm:$0xf]
  %v3477 = vld [vmem:[%s3243 + $0x3a4] sm:$0xf]
  %v3478 = vld [vmem:[%s3243 + $0x3a8] sm:$0xf]
  %v3479 = vld [vmem:[%s3243 + $0x3ac] sm:$0xf]
  %v3480 = vld [vmem:[%s3243 + $0x3b0] sm:$0xf]
  %v3481 = vld [vmem:[%s3243 + $0x3b4] sm:$0xf]
  %v3482 = vld [vmem:[%s3243 + $0x3b8] sm:$0xf]
  %v3483 = vld [vmem:[%s3243 + $0x3bc] sm:$0xf]
  %v3484 = vld [vmem:[%s3243 + $0x3c0] sm:$0xf]
  %v3485 = vld [vmem:[%s3243 + $0x3c4] sm:$0xf]
  %v3486 = vld [vmem:[%s3243 + $0x3c8] sm:$0xf]
  %v3487 = vld [vmem:[%s3243 + $0x3cc] sm:$0xf]
  %v3488 = vld [vmem:[%s3243 + $0x3d0] sm:$0xf]
  %v3489 = vld [vmem:[%s3243 + $0x3d4] sm:$0xf]
  %v3490 = vld [vmem:[%s3243 + $0x3d8] sm:$0xf]
  %v3491 = vld [vmem:[%s3243 + $0x3dc] sm:$0xf]
  %v3492 = vld [vmem:[%s3243 + $0x3e0] sm:$0xf]
  %v3493 = vld [vmem:[%s3243 + $0x3e4] sm:$0xf]
  %v3494 = vld [vmem:[%s3243 + $0x3e8] sm:$0xf]
  %v3495 = vld [vmem:[%s3243 + $0x3ec] sm:$0xf]
  %v3496 = vld [vmem:[%s3243 + $0x3f0] sm:$0xf]
  %v3497 = vld [vmem:[%s3243 + $0x3f4] sm:$0xf]
  %v3498 = vld [vmem:[%s3243 + $0x3f8] sm:$0xf]
  %v3499 = vld [vmem:[%s3243 + $0x3fc] sm:$0xf]
  %s3500 = scalar_lea.vmem %s7, 128
  %v3501 = vld [vmem:[%s3500] sm:$0xff]
  %v3502 = vld [vmem:[%s3500 + $0x8] sm:$0xff]
  %v3503 = vld [vmem:[%s3500 + $0x10] sm:$0xff]
  %v3504 = vld [vmem:[%s3500 + $0x18] sm:$0xff]
  %v3505 = vld [vmem:[%s3500 + $0x20] sm:$0xff]
  %v3506 = vld [vmem:[%s3500 + $0x28] sm:$0xff]
  %v3507 = vld [vmem:[%s3500 + $0x30] sm:$0xff]
  %v3508 = vld [vmem:[%s3500 + $0x38] sm:$0xff]
  %v3509 = vld [vmem:[%s3500 + $0x40] sm:$0xff]
  %v3510 = vld [vmem:[%s3500 + $0x48] sm:$0xff]
  %v3511 = vld [vmem:[%s3500 + $0x50] sm:$0xff]
  %v3512 = vld [vmem:[%s3500 + $0x58] sm:$0xff]
  %v3513 = vld [vmem:[%s3500 + $0x60] sm:$0xff]
  %v3514 = vld [vmem:[%s3500 + $0x68] sm:$0xff]
  %v3515 = vld [vmem:[%s3500 + $0x70] sm:$0xff]
  %v3516 = vld [vmem:[%s3500 + $0x78] sm:$0xff]
  %v3517 = vpack.c.bf16 %v3197, %v3196
  %v3518 = vpack.c.bf16 %v3199, %v3198
  %v3519 = vperm.slane %v3501, 0
  %v3524 = vunpack.c.l.b16 %v3201
  %v3525 = vunpack.c.l.b16 %v3202
  %v3526 = vunpack.c.l.b16 %v3203
  %v3527 = vunpack.c.l.b16 %v3204
  %v3528 = vpack.c.b16 %v3525, %v3524
  %v3529 = vpack.c.b16 %v3527, %v3526
  %v3533 = vsel %vm439, %v3517, 0
  %v3536 = vsel %vm439, %v3518, 0
  %3538 = vmatpush.bf16.msra.mxu0 0
  %3539 = vmatpush.bf16.msra.mxu0 0
  %3540 = vmatpush.bf16.msra.mxu0 0
  %3541 = vmatpush.bf16.msra.mxu0 0
  %3542 = vmatpush.bf16.msra.mxu0 0
  %3543 = vmatpush.bf16.msra.mxu0 0
  %3544 = vmatpush.bf16.msra.mxu0 %v3529
  %3545 = vmatpush.bf16.msra.mxu0 %v3528
  %3546 = vmatmul.bf16.gmra.mxu0 %v3533
  %v3547 = vpop.f32.mrf.mxu0
  %v3548 = vadd.f32 %v3519, %v3547
  %v3549 = vpop.f32.mrf.mxu0
  %v3550 = vadd.f32 %v3519, %v3549
  %3551 = vmatmul.bf16.gmra.mxu0 %v3536
  %v3552 = vpop.f32.mrf.mxu0
  %v3553 = vadd.f32 %v3519, %v3552
  %v3554 = vpop.f32.mrf.mxu0
  %v3555 = vadd.f32 %v3519, %v3554
  %3556 = vdwg.mxu0
  %3559 = vrot.lane.b32.xlu0 %v3548, 96
  %v3560 = vpop.permute.xlu0 %3559
  %3561 = vrot.lane.b32.xlu0 %v3550, 96
  %v3562 = vpop.permute.xlu0 %3561
  %v3563 = vsel %vm471, %v3548, 0
  %v3565 = vsel %vm471, %v3550, 0
  %v3567 = vsel %vm471, %v3560, 0
  %v3569 = vsel %vm471, %v3562, 0
  %3571 = vmatpush.xpose.msra.mxu0 0.0
  %3572 = vmatpush.xpose.msra.mxu0 0.0
  %3573 = vmatpush.xpose.msra.mxu0 0.0
  %3574 = vmatpush.xpose.msra.mxu0 0.0
  %3575 = vmatpush.xpose.msra.mxu0 0.0
  %3576 = vmatpush.xpose.msra.mxu0 0.0
  %3577 = vmatpush.xpose.msra.mxu0 0.0
  %3578 = vmatpush.xpose.msra.mxu0 0.0
  %3579 = vmatpush.xpose.msra.mxu0 0.0
  %3580 = vmatpush.xpose.msra.mxu0 0.0
  %3581 = vmatpush.xpose.msra.mxu0 0.0
  %3582 = vmatpush.xpose.msra.mxu0 0.0
  %3583 = vmatpush.xpose.msra.mxu0 0.0
  %3584 = vmatpush.xpose.msra.mxu0 0.0
  %3585 = vmatpush.xpose.msra.mxu0 %v3569
  %3586 = vmatpush.xpose.msra.mxu0 %v3567
  %3587 = vmatmul.f32.gmra.mxu0 %v3563
  %v3588 = vpop.f32.mrf.mxu0
  %v3589 = vadd.f32 0.0, %v3588
  %3590 = vmatmul.f32.gmra.mxu0 %v3565
  %v3591 = vpop.f32.mrf.mxu0
  %v3592 = vadd.f32 0.0, %v3591
  %3593 = vdwg.mxu0
  %3596 = vrot.lane.b32.xlu0 %v3553, 96
  %v3597 = vpop.permute.xlu0 %3596
  %3598 = vrot.lane.b32.xlu0 %v3555, 96
  %v3599 = vpop.permute.xlu0 %3598
  %v3600 = vsel %vm471, %v3553, 0
  %v3602 = vsel %vm471, %v3555, 0
  %v3604 = vsel %vm471, %v3597, 0
  %v3606 = vsel %vm471, %v3599, 0
  %3608 = vmatpush.xpose.msra.mxu0 0.0
  %3609 = vmatpush.xpose.msra.mxu0 0.0
  %3610 = vmatpush.xpose.msra.mxu0 0.0
  %3611 = vmatpush.xpose.msra.mxu0 0.0
  %3612 = vmatpush.xpose.msra.mxu0 0.0
  %3613 = vmatpush.xpose.msra.mxu0 0.0
  %3614 = vmatpush.xpose.msra.mxu0 0.0
  %3615 = vmatpush.xpose.msra.mxu0 0.0
  %3616 = vmatpush.xpose.msra.mxu0 0.0
  %3617 = vmatpush.xpose.msra.mxu0 0.0
  %3618 = vmatpush.xpose.msra.mxu0 0.0
  %3619 = vmatpush.xpose.msra.mxu0 0.0
  %3620 = vmatpush.xpose.msra.mxu0 0.0
  %3621 = vmatpush.xpose.msra.mxu0 0.0
  %3622 = vmatpush.xpose.msra.mxu0 %v3606
  %3623 = vmatpush.xpose.msra.mxu0 %v3604
  %3624 = vmatmul.f32.gmra.mxu0 %v3600
  %v3625 = vpop.f32.mrf.mxu0
  %v3626 = vadd.f32 0.0, %v3625
  %3627 = vmatmul.f32.gmra.mxu0 %v3602
  %v3628 = vpop.f32.mrf.mxu0
  %v3629 = vadd.f32 0.0, %v3628
  %3630 = vdwg.mxu0
  %v3631 = vsel %vm540, %v3589, -inf
  %3632 = vmax.xlane.f32.xlu0 %v3631
  %v3633 = vpop.xlane.xlu0 %3632
  %v3634 = vsel %vm540, %v3592, -inf
  %3635 = vmax.xlane.f32.xlu0 %v3634
  %v3636 = vpop.xlane.xlu0 %3635
  %v3637 = vsel %vm540, %v3626, -inf
  %3638 = vmax.xlane.f32.xlu0 %v3637
  %v3639 = vpop.xlane.xlu0 %3638
  %v3640 = vsel %vm540, %v3629, -inf
  %3641 = vmax.xlane.f32.xlu0 %v3640
  %v3642 = vpop.xlane.xlu0 %3641
  %v3643 = vsub.f32 %v3589, %v3633
  %v3644 = vsub.f32 %v3592, %v3636
  %v3645 = vsub.f32 %v3626, %v3639
  %v3646 = vsub.f32 %v3629, %v3642
  %v3647 = vmul.f32 %v3643, 1.442695
  %v3648 = vpow.pop %v3647
  %v3649 = vmul.f32 %v3644, 1.442695
  %v3650 = vpow.pop %v3649
  %v3651 = vmul.f32 %v3645, 1.442695
  %v3652 = vpow.pop %v3651
  %v3653 = vmul.f32 %v3646, 1.442695
  %v3654 = vpow.pop %v3653
  %v3655 = vsel %vm540, %v3648, 0.0
  %3656 = vadd.xlane.f32.xlu0 %v3655
  %v3657 = vpop.xlane.xlu0 %3656
  %v3658 = vsel %vm540, %v3650, 0.0
  %3659 = vadd.xlane.f32.xlu0 %v3658
  %v3660 = vpop.xlane.xlu0 %3659
  %v3661 = vsel %vm540, %v3652, 0.0
  %3662 = vadd.xlane.f32.xlu0 %v3661
  %v3663 = vpop.xlane.xlu0 %3662
  %v3664 = vsel %vm540, %v3654, 0.0
  %3665 = vadd.xlane.f32.xlu0 %v3664
  %v3666 = vpop.xlane.xlu0 %3665
  %v3667 = vrcp.pop %v3657
  %v3668 = vrcp.pop %v3660
  %v3669 = vrcp.pop %v3663
  %v3670 = vrcp.pop %v3666
  %v3671 = vmul.f32 %v3648, %v3667
  %v3672 = vmul.f32 %v3650, %v3668
  %v3673 = vmul.f32 %v3652, %v3669
  %v3674 = vmul.f32 %v3654, %v3670
  %3675 = vrot.lane.b32.xlu0 %v3548, 64
  %v3676 = vpop.permute.xlu0 %3675
  %3677 = vrot.lane.b32.xlu0 %v3550, 64
  %v3678 = vpop.permute.xlu0 %3677
  %v3682 = vsel %vm540, %v3671, 0
  %v3685 = vsel %vm540, %v3672, 0
  %3687 = vmatpush.msra.mxu0 0.0
  %3688 = vmatpush.msra.mxu0 0.0
  %3689 = vmatpush.msra.mxu0 0.0
  %3690 = vmatpush.msra.mxu0 0.0
  %3691 = vmatpush.msra.mxu0 0.0
  %3692 = vmatpush.msra.mxu0 0.0
  %3693 = vmatpush.msra.mxu0 0.0
  %3694 = vmatpush.msra.mxu0 0.0
  %3695 = vmatpush.msra.mxu0 0.0
  %3696 = vmatpush.msra.mxu0 0.0
  %3697 = vmatpush.msra.mxu0 0.0
  %3698 = vmatpush.msra.mxu0 0.0
  %3699 = vmatpush.msra.mxu0 0.0
  %3700 = vmatpush.msra.mxu0 0.0
  %3701 = vmatpush.msra.mxu0 %v3678
  %3702 = vmatpush.msra.mxu0 %v3676
  %3703 = vmatmul.f32.gmra.mxu0 %v3682
  %v3704 = vpop.f32.mrf.mxu0
  %v3705 = vadd.f32 0.0, %v3704
  %3706 = vmatmul.f32.gmra.mxu0 %v3685
  %v3707 = vpop.f32.mrf.mxu0
  %v3708 = vadd.f32 0.0, %v3707
  %3709 = vdwg.mxu0
  %3710 = vrot.lane.b32.xlu0 %v3553, 64
  %v3711 = vpop.permute.xlu0 %3710
  %3712 = vrot.lane.b32.xlu0 %v3555, 64
  %v3713 = vpop.permute.xlu0 %3712
  %v3717 = vsel %vm540, %v3673, 0
  %v3720 = vsel %vm540, %v3674, 0
  %3722 = vmatpush.msra.mxu0 0.0
  %3723 = vmatpush.msra.mxu0 0.0
  %3724 = vmatpush.msra.mxu0 0.0
  %3725 = vmatpush.msra.mxu0 0.0
  %3726 = vmatpush.msra.mxu0 0.0
  %3727 = vmatpush.msra.mxu0 0.0
  %3728 = vmatpush.msra.mxu0 0.0
  %3729 = vmatpush.msra.mxu0 0.0
  %3730 = vmatpush.msra.mxu0 0.0
  %3731 = vmatpush.msra.mxu0 0.0
  %3732 = vmatpush.msra.mxu0 0.0
  %3733 = vmatpush.msra.mxu0 0.0
  %3734 = vmatpush.msra.mxu0 0.0
  %3735 = vmatpush.msra.mxu0 0.0
  %3736 = vmatpush.msra.mxu0 %v3713
  %3737 = vmatpush.msra.mxu0 %v3711
  %3738 = vmatmul.f32.gmra.mxu0 %v3717
  %v3739 = vpop.f32.mrf.mxu0
  %v3740 = vadd.f32 0.0, %v3739
  %3741 = vmatmul.f32.gmra.mxu0 %v3720
  %v3742 = vpop.f32.mrf.mxu0
  %v3743 = vadd.f32 0.0, %v3742
  %3744 = vdwg.mxu0
  %3745 = vrot.lane.b32.xlu0 %v3548, 120
  %v3746 = vpop.permute.xlu0 %3745
  %3747 = vrot.lane.b32.xlu0 %v3550, 120
  %v3748 = vpop.permute.xlu0 %3747
  %3749 = vrot.lane.b32.xlu0 %v3548, 88
  %v3750 = vpop.permute.xlu0 %3749
  %3751 = vrot.lane.b32.xlu0 %v3550, 88
  %v3752 = vpop.permute.xlu0 %3751
  %v3753 = vsel %vm471, %v3746, 0
  %v3755 = vsel %vm471, %v3748, 0
  %v3757 = vsel %vm471, %v3750, 0
  %v3759 = vsel %vm471, %v3752, 0
  %3761 = vmatpush.xpose.msra.mxu0 0.0
  %3762 = vmatpush.xpose.msra.mxu0 0.0
  %3763 = vmatpush.xpose.msra.mxu0 0.0
  %3764 = vmatpush.xpose.msra.mxu0 0.0
  %3765 = vmatpush.xpose.msra.mxu0 0.0
  %3766 = vmatpush.xpose.msra.mxu0 0.0
  %3767 = vmatpush.xpose.msra.mxu0 0.0
  %3768 = vmatpush.xpose.msra.mxu0 0.0
  %3769 = vmatpush.xpose.msra.mxu0 0.0
  %3770 = vmatpush.xpose.msra.mxu0 0.0
  %3771 = vmatpush.xpose.msra.mxu0 0.0
  %3772 = vmatpush.xpose.msra.mxu0 0.0
  %3773 = vmatpush.xpose.msra.mxu0 0.0
  %3774 = vmatpush.xpose.msra.mxu0 0.0
  %3775 = vmatpush.xpose.msra.mxu0 %v3759
  %3776 = vmatpush.xpose.msra.mxu0 %v3757
  %3777 = vmatmul.f32.gmra.mxu0 %v3753
  %v3778 = vpop.f32.mrf.mxu0
  %v3779 = vadd.f32 0.0, %v3778
  %3780 = vmatmul.f32.gmra.mxu0 %v3755
  %v3781 = vpop.f32.mrf.mxu0
  %v3782 = vadd.f32 0.0, %v3781
  %3783 = vdwg.mxu0
  %3784 = vrot.lane.b32.xlu0 %v3553, 120
  %v3785 = vpop.permute.xlu0 %3784
  %3786 = vrot.lane.b32.xlu0 %v3555, 120
  %v3787 = vpop.permute.xlu0 %3786
  %3788 = vrot.lane.b32.xlu0 %v3553, 88
  %v3789 = vpop.permute.xlu0 %3788
  %3790 = vrot.lane.b32.xlu0 %v3555, 88
  %v3791 = vpop.permute.xlu0 %3790
  %v3792 = vsel %vm471, %v3785, 0
  %v3794 = vsel %vm471, %v3787, 0
  %v3796 = vsel %vm471, %v3789, 0
  %v3798 = vsel %vm471, %v3791, 0
  %3800 = vmatpush.xpose.msra.mxu0 0.0
  %3801 = vmatpush.xpose.msra.mxu0 0.0
  %3802 = vmatpush.xpose.msra.mxu0 0.0
  %3803 = vmatpush.xpose.msra.mxu0 0.0
  %3804 = vmatpush.xpose.msra.mxu0 0.0
  %3805 = vmatpush.xpose.msra.mxu0 0.0
  %3806 = vmatpush.xpose.msra.mxu0 0.0
  %3807 = vmatpush.xpose.msra.mxu0 0.0
  %3808 = vmatpush.xpose.msra.mxu0 0.0
  %3809 = vmatpush.xpose.msra.mxu0 0.0
  %3810 = vmatpush.xpose.msra.mxu0 0.0
  %3811 = vmatpush.xpose.msra.mxu0 0.0
  %3812 = vmatpush.xpose.msra.mxu0 0.0
  %3813 = vmatpush.xpose.msra.mxu0 0.0
  %3814 = vmatpush.xpose.msra.mxu0 %v3798
  %3815 = vmatpush.xpose.msra.mxu0 %v3796
  %3816 = vmatmul.f32.gmra.mxu0 %v3792
  %v3817 = vpop.f32.mrf.mxu0
  %v3818 = vadd.f32 0.0, %v3817
  %3819 = vmatmul.f32.gmra.mxu0 %v3794
  %v3820 = vpop.f32.mrf.mxu0
  %v3821 = vadd.f32 0.0, %v3820
  %3822 = vdwg.mxu0
  %v3823 = vsel %vm540, %v3779, -inf
  %3824 = vmax.xlane.f32.xlu0 %v3823
  %v3825 = vpop.xlane.xlu0 %3824
  %v3826 = vsel %vm540, %v3782, -inf
  %3827 = vmax.xlane.f32.xlu0 %v3826
  %v3828 = vpop.xlane.xlu0 %3827
  %v3829 = vsel %vm540, %v3818, -inf
  %3830 = vmax.xlane.f32.xlu0 %v3829
  %v3831 = vpop.xlane.xlu0 %3830
  %v3832 = vsel %vm540, %v3821, -inf
  %3833 = vmax.xlane.f32.xlu0 %v3832
  %v3834 = vpop.xlane.xlu0 %3833
  %v3835 = vsub.f32 %v3779, %v3825
  %v3836 = vsub.f32 %v3782, %v3828
  %v3837 = vsub.f32 %v3818, %v3831
  %v3838 = vsub.f32 %v3821, %v3834
  %v3839 = vmul.f32 %v3835, 1.442695
  %v3840 = vpow.pop %v3839
  %v3841 = vmul.f32 %v3836, 1.442695
  %v3842 = vpow.pop %v3841
  %v3843 = vmul.f32 %v3837, 1.442695
  %v3844 = vpow.pop %v3843
  %v3845 = vmul.f32 %v3838, 1.442695
  %v3846 = vpow.pop %v3845
  %v3847 = vsel %vm540, %v3840, 0.0
  %3848 = vadd.xlane.f32.xlu0 %v3847
  %v3849 = vpop.xlane.xlu0 %3848
  %v3850 = vsel %vm540, %v3842, 0.0
  %3851 = vadd.xlane.f32.xlu0 %v3850
  %v3852 = vpop.xlane.xlu0 %3851
  %v3853 = vsel %vm540, %v3844, 0.0
  %3854 = vadd.xlane.f32.xlu0 %v3853
  %v3855 = vpop.xlane.xlu0 %3854
  %v3856 = vsel %vm540, %v3846, 0.0
  %3857 = vadd.xlane.f32.xlu0 %v3856
  %v3858 = vpop.xlane.xlu0 %3857
  %v3859 = vrcp.pop %v3849
  %v3860 = vrcp.pop %v3852
  %v3861 = vrcp.pop %v3855
  %v3862 = vrcp.pop %v3858
  %v3863 = vmul.f32 %v3840, %v3859
  %v3864 = vmul.f32 %v3842, %v3860
  %v3865 = vmul.f32 %v3844, %v3861
  %v3866 = vmul.f32 %v3846, %v3862
  %3867 = vrot.lane.b32.xlu0 %v3548, 56
  %v3868 = vpop.permute.xlu0 %3867
  %3869 = vrot.lane.b32.xlu0 %v3550, 56
  %v3870 = vpop.permute.xlu0 %3869
  %v3874 = vsel %vm540, %v3863, 0
  %v3877 = vsel %vm540, %v3864, 0
  %3879 = vmatpush.msra.mxu0 0.0
  %3880 = vmatpush.msra.mxu0 0.0
  %3881 = vmatpush.msra.mxu0 0.0
  %3882 = vmatpush.msra.mxu0 0.0
  %3883 = vmatpush.msra.mxu0 0.0
  %3884 = vmatpush.msra.mxu0 0.0
  %3885 = vmatpush.msra.mxu0 0.0
  %3886 = vmatpush.msra.mxu0 0.0
  %3887 = vmatpush.msra.mxu0 0.0
  %3888 = vmatpush.msra.mxu0 0.0
  %3889 = vmatpush.msra.mxu0 0.0
  %3890 = vmatpush.msra.mxu0 0.0
  %3891 = vmatpush.msra.mxu0 0.0
  %3892 = vmatpush.msra.mxu0 0.0
  %3893 = vmatpush.msra.mxu0 %v3870
  %3894 = vmatpush.msra.mxu0 %v3868
  %3895 = vmatmul.f32.gmra.mxu0 %v3874
  %v3896 = vpop.f32.mrf.mxu0
  %v3897 = vadd.f32 0.0, %v3896
  %3898 = vmatmul.f32.gmra.mxu0 %v3877
  %v3899 = vpop.f32.mrf.mxu0
  %v3900 = vadd.f32 0.0, %v3899
  %3901 = vdwg.mxu0
  %3902 = vrot.lane.b32.xlu0 %v3553, 56
  %v3903 = vpop.permute.xlu0 %3902
  %3904 = vrot.lane.b32.xlu0 %v3555, 56
  %v3905 = vpop.permute.xlu0 %3904
  %v3909 = vsel %vm540, %v3865, 0
  %v3912 = vsel %vm540, %v3866, 0
  %3914 = vmatpush.msra.mxu0 0.0
  %3915 = vmatpush.msra.mxu0 0.0
  %3916 = vmatpush.msra.mxu0 0.0
  %3917 = vmatpush.msra.mxu0 0.0
  %3918 = vmatpush.msra.mxu0 0.0
  %3919 = vmatpush.msra.mxu0 0.0
  %3920 = vmatpush.msra.mxu0 0.0
  %3921 = vmatpush.msra.mxu0 0.0
  %3922 = vmatpush.msra.mxu0 0.0
  %3923 = vmatpush.msra.mxu0 0.0
  %3924 = vmatpush.msra.mxu0 0.0
  %3925 = vmatpush.msra.mxu0 0.0
  %3926 = vmatpush.msra.mxu0 0.0
  %3927 = vmatpush.msra.mxu0 0.0
  %3928 = vmatpush.msra.mxu0 %v3905
  %3929 = vmatpush.msra.mxu0 %v3903
  %3930 = vmatmul.f32.gmra.mxu0 %v3909
  %v3931 = vpop.f32.mrf.mxu0
  %v3932 = vadd.f32 0.0, %v3931
  %3933 = vmatmul.f32.gmra.mxu0 %v3912
  %v3934 = vpop.f32.mrf.mxu0
  %v3935 = vadd.f32 0.0, %v3934
  %3936 = vdwg.mxu0
  %3937 = vrot.lane.b32.xlu0 %v3548, 112
  %v3938 = vpop.permute.xlu0 %3937
  %3939 = vrot.lane.b32.xlu0 %v3550, 112
  %v3940 = vpop.permute.xlu0 %3939
  %3941 = vrot.lane.b32.xlu0 %v3548, 80
  %v3942 = vpop.permute.xlu0 %3941
  %3943 = vrot.lane.b32.xlu0 %v3550, 80
  %v3944 = vpop.permute.xlu0 %3943
  %v3945 = vsel %vm471, %v3938, 0
  %v3947 = vsel %vm471, %v3940, 0
  %v3949 = vsel %vm471, %v3942, 0
  %v3951 = vsel %vm471, %v3944, 0
  %3953 = vmatpush.xpose.msra.mxu0 0.0
  %3954 = vmatpush.xpose.msra.mxu0 0.0
  %3955 = vmatpush.xpose.msra.mxu0 0.0
  %3956 = vmatpush.xpose.msra.mxu0 0.0
  %3957 = vmatpush.xpose.msra.mxu0 0.0
  %3958 = vmatpush.xpose.msra.mxu0 0.0
  %3959 = vmatpush.xpose.msra.mxu0 0.0
  %3960 = vmatpush.xpose.msra.mxu0 0.0
  %3961 = vmatpush.xpose.msra.mxu0 0.0
  %3962 = vmatpush.xpose.msra.mxu0 0.0
  %3963 = vmatpush.xpose.msra.mxu0 0.0
  %3964 = vmatpush.xpose.msra.mxu0 0.0
  %3965 = vmatpush.xpose.msra.mxu0 0.0
  %3966 = vmatpush.xpose.msra.mxu0 0.0
  %3967 = vmatpush.xpose.msra.mxu0 %v3951
  %3968 = vmatpush.xpose.msra.mxu0 %v3949
  %3969 = vmatmul.f32.gmra.mxu0 %v3945
  %v3970 = vpop.f32.mrf.mxu0
  %v3971 = vadd.f32 0.0, %v3970
  %3972 = vmatmul.f32.gmra.mxu0 %v3947
  %v3973 = vpop.f32.mrf.mxu0
  %v3974 = vadd.f32 0.0, %v3973
  %3975 = vdwg.mxu0
  %3976 = vrot.lane.b32.xlu0 %v3553, 112
  %v3977 = vpop.permute.xlu0 %3976
  %3978 = vrot.lane.b32.xlu0 %v3555, 112
  %v3979 = vpop.permute.xlu0 %3978
  %3980 = vrot.lane.b32.xlu0 %v3553, 80
  %v3981 = vpop.permute.xlu0 %3980
  %3982 = vrot.lane.b32.xlu0 %v3555, 80
  %v3983 = vpop.permute.xlu0 %3982
  %v3984 = vsel %vm471, %v3977, 0
  %v3986 = vsel %vm471, %v3979, 0
  %v3988 = vsel %vm471, %v3981, 0
  %v3990 = vsel %vm471, %v3983, 0
  %3992 = vmatpush.xpose.msra.mxu0 0.0
  %3993 = vmatpush.xpose.msra.mxu0 0.0
  %3994 = vmatpush.xpose.msra.mxu0 0.0
  %3995 = vmatpush.xpose.msra.mxu0 0.0
  %3996 = vmatpush.xpose.msra.mxu0 0.0
  %3997 = vmatpush.xpose.msra.mxu0 0.0
  %3998 = vmatpush.xpose.msra.mxu0 0.0
  %3999 = vmatpush.xpose.msra.mxu0 0.0
  %4000 = vmatpush.xpose.msra.mxu0 0.0
  %4001 = vmatpush.xpose.msra.mxu0 0.0
  %4002 = vmatpush.xpose.msra.mxu0 0.0
  %4003 = vmatpush.xpose.msra.mxu0 0.0
  %4004 = vmatpush.xpose.msra.mxu0 0.0
  %4005 = vmatpush.xpose.msra.mxu0 0.0
  %4006 = vmatpush.xpose.msra.mxu0 %v3990
  %4007 = vmatpush.xpose.msra.mxu0 %v3988
  %4008 = vmatmul.f32.gmra.mxu0 %v3984
  %v4009 = vpop.f32.mrf.mxu0
  %v4010 = vadd.f32 0.0, %v4009
  %4011 = vmatmul.f32.gmra.mxu0 %v3986
  %v4012 = vpop.f32.mrf.mxu0
  %v4013 = vadd.f32 0.0, %v4012
  %4014 = vdwg.mxu0
  %v4015 = vsel %vm540, %v3971, -inf
  %4016 = vmax.xlane.f32.xlu0 %v4015
  %v4017 = vpop.xlane.xlu0 %4016
  %v4018 = vsel %vm540, %v3974, -inf
  %4019 = vmax.xlane.f32.xlu0 %v4018
  %v4020 = vpop.xlane.xlu0 %4019
  %v4021 = vsel %vm540, %v4010, -inf
  %4022 = vmax.xlane.f32.xlu0 %v4021
  %v4023 = vpop.xlane.xlu0 %4022
  %v4024 = vsel %vm540, %v4013, -inf
  %4025 = vmax.xlane.f32.xlu0 %v4024
  %v4026 = vpop.xlane.xlu0 %4025
  %v4027 = vsub.f32 %v3971, %v4017
  %v4028 = vsub.f32 %v3974, %v4020
  %v4029 = vsub.f32 %v4010, %v4023
  %v4030 = vsub.f32 %v4013, %v4026
  %v4031 = vmul.f32 %v4027, 1.442695
  %v4032 = vpow.pop %v4031
  %v4033 = vmul.f32 %v4028, 1.442695
  %v4034 = vpow.pop %v4033
  %v4035 = vmul.f32 %v4029, 1.442695
  %v4036 = vpow.pop %v4035
  %v4037 = vmul.f32 %v4030, 1.442695
  %v4038 = vpow.pop %v4037
  %v4039 = vsel %vm540, %v4032, 0.0
  %4040 = vadd.xlane.f32.xlu0 %v4039
  %v4041 = vpop.xlane.xlu0 %4040
  %v4042 = vsel %vm540, %v4034, 0.0
  %4043 = vadd.xlane.f32.xlu0 %v4042
  %v4044 = vpop.xlane.xlu0 %4043
  %v4045 = vsel %vm540, %v4036, 0.0
  %4046 = vadd.xlane.f32.xlu0 %v4045
  %v4047 = vpop.xlane.xlu0 %4046
  %v4048 = vsel %vm540, %v4038, 0.0
  %4049 = vadd.xlane.f32.xlu0 %v4048
  %v4050 = vpop.xlane.xlu0 %4049
  %v4051 = vrcp.pop %v4041
  %v4052 = vrcp.pop %v4044
  %v4053 = vrcp.pop %v4047
  %v4054 = vrcp.pop %v4050
  %v4055 = vmul.f32 %v4032, %v4051
  %v4056 = vmul.f32 %v4034, %v4052
  %v4057 = vmul.f32 %v4036, %v4053
  %v4058 = vmul.f32 %v4038, %v4054
  %4059 = vrot.lane.b32.xlu0 %v3548, 48
  %v4060 = vpop.permute.xlu0 %4059
  %4061 = vrot.lane.b32.xlu0 %v3550, 48
  %v4062 = vpop.permute.xlu0 %4061
  %v4066 = vsel %vm540, %v4055, 0
  %v4069 = vsel %vm540, %v4056, 0
  %4071 = vmatpush.msra.mxu0 0.0
  %4072 = vmatpush.msra.mxu0 0.0
  %4073 = vmatpush.msra.mxu0 0.0
  %4074 = vmatpush.msra.mxu0 0.0
  %4075 = vmatpush.msra.mxu0 0.0
  %4076 = vmatpush.msra.mxu0 0.0
  %4077 = vmatpush.msra.mxu0 0.0
  %4078 = vmatpush.msra.mxu0 0.0
  %4079 = vmatpush.msra.mxu0 0.0
  %4080 = vmatpush.msra.mxu0 0.0
  %4081 = vmatpush.msra.mxu0 0.0
  %4082 = vmatpush.msra.mxu0 0.0
  %4083 = vmatpush.msra.mxu0 0.0
  %4084 = vmatpush.msra.mxu0 0.0
  %4085 = vmatpush.msra.mxu0 %v4062
  %4086 = vmatpush.msra.mxu0 %v4060
  %4087 = vmatmul.f32.gmra.mxu0 %v4066
  %v4088 = vpop.f32.mrf.mxu0
  %v4089 = vadd.f32 0.0, %v4088
  %4090 = vmatmul.f32.gmra.mxu0 %v4069
  %v4091 = vpop.f32.mrf.mxu0
  %v4092 = vadd.f32 0.0, %v4091
  %4093 = vdwg.mxu0
  %4094 = vrot.lane.b32.xlu0 %v3553, 48
  %v4095 = vpop.permute.xlu0 %4094
  %4096 = vrot.lane.b32.xlu0 %v3555, 48
  %v4097 = vpop.permute.xlu0 %4096
  %v4101 = vsel %vm540, %v4057, 0
  %v4104 = vsel %vm540, %v4058, 0
  %4106 = vmatpush.msra.mxu0 0.0
  %4107 = vmatpush.msra.mxu0 0.0
  %4108 = vmatpush.msra.mxu0 0.0
  %4109 = vmatpush.msra.mxu0 0.0
  %4110 = vmatpush.msra.mxu0 0.0
  %4111 = vmatpush.msra.mxu0 0.0
  %4112 = vmatpush.msra.mxu0 0.0
  %4113 = vmatpush.msra.mxu0 0.0
  %4114 = vmatpush.msra.mxu0 0.0
  %4115 = vmatpush.msra.mxu0 0.0
  %4116 = vmatpush.msra.mxu0 0.0
  %4117 = vmatpush.msra.mxu0 0.0
  %4118 = vmatpush.msra.mxu0 0.0
  %4119 = vmatpush.msra.mxu0 0.0
  %4120 = vmatpush.msra.mxu0 %v4097
  %4121 = vmatpush.msra.mxu0 %v4095
  %4122 = vmatmul.f32.gmra.mxu0 %v4101
  %v4123 = vpop.f32.mrf.mxu0
  %v4124 = vadd.f32 0.0, %v4123
  %4125 = vmatmul.f32.gmra.mxu0 %v4104
  %v4126 = vpop.f32.mrf.mxu0
  %v4127 = vadd.f32 0.0, %v4126
  %4128 = vdwg.mxu0
  %4129 = vrot.lane.b32.xlu0 %v3548, 104
  %v4130 = vpop.permute.xlu0 %4129
  %4131 = vrot.lane.b32.xlu0 %v3550, 104
  %v4132 = vpop.permute.xlu0 %4131
  %4133 = vrot.lane.b32.xlu0 %v3548, 72
  %v4134 = vpop.permute.xlu0 %4133
  %4135 = vrot.lane.b32.xlu0 %v3550, 72
  %v4136 = vpop.permute.xlu0 %4135
  %v4137 = vsel %vm471, %v4130, 0
  %v4139 = vsel %vm471, %v4132, 0
  %v4141 = vsel %vm471, %v4134, 0
  %v4143 = vsel %vm471, %v4136, 0
  %4145 = vmatpush.xpose.msra.mxu0 0.0
  %4146 = vmatpush.xpose.msra.mxu0 0.0
  %4147 = vmatpush.xpose.msra.mxu0 0.0
  %4148 = vmatpush.xpose.msra.mxu0 0.0
  %4149 = vmatpush.xpose.msra.mxu0 0.0
  %4150 = vmatpush.xpose.msra.mxu0 0.0
  %4151 = vmatpush.xpose.msra.mxu0 0.0
  %4152 = vmatpush.xpose.msra.mxu0 0.0
  %4153 = vmatpush.xpose.msra.mxu0 0.0
  %4154 = vmatpush.xpose.msra.mxu0 0.0
  %4155 = vmatpush.xpose.msra.mxu0 0.0
  %4156 = vmatpush.xpose.msra.mxu0 0.0
  %4157 = vmatpush.xpose.msra.mxu0 0.0
  %4158 = vmatpush.xpose.msra.mxu0 0.0
  %4159 = vmatpush.xpose.msra.mxu0 %v4143
  %4160 = vmatpush.xpose.msra.mxu0 %v4141
  %4161 = vmatmul.f32.gmra.mxu0 %v4137
  %v4162 = vpop.f32.mrf.mxu0
  %v4163 = vadd.f32 0.0, %v4162
  %4164 = vmatmul.f32.gmra.mxu0 %v4139
  %v4165 = vpop.f32.mrf.mxu0
  %v4166 = vadd.f32 0.0, %v4165
  %4167 = vdwg.mxu0
  %4168 = vrot.lane.b32.xlu0 %v3553, 104
  %v4169 = vpop.permute.xlu0 %4168
  %4170 = vrot.lane.b32.xlu0 %v3555, 104
  %v4171 = vpop.permute.xlu0 %4170
  %4172 = vrot.lane.b32.xlu0 %v3553, 72
  %v4173 = vpop.permute.xlu0 %4172
  %4174 = vrot.lane.b32.xlu0 %v3555, 72
  %v4175 = vpop.permute.xlu0 %4174
  %v4176 = vsel %vm471, %v4169, 0
  %v4178 = vsel %vm471, %v4171, 0
  %v4180 = vsel %vm471, %v4173, 0
  %v4182 = vsel %vm471, %v4175, 0
  %4184 = vmatpush.xpose.msra.mxu0 0.0
  %4185 = vmatpush.xpose.msra.mxu0 0.0
  %4186 = vmatpush.xpose.msra.mxu0 0.0
  %4187 = vmatpush.xpose.msra.mxu0 0.0
  %4188 = vmatpush.xpose.msra.mxu0 0.0
  %4189 = vmatpush.xpose.msra.mxu0 0.0
  %4190 = vmatpush.xpose.msra.mxu0 0.0
  %4191 = vmatpush.xpose.msra.mxu0 0.0
  %4192 = vmatpush.xpose.msra.mxu0 0.0
  %4193 = vmatpush.xpose.msra.mxu0 0.0
  %4194 = vmatpush.xpose.msra.mxu0 0.0
  %4195 = vmatpush.xpose.msra.mxu0 0.0
  %4196 = vmatpush.xpose.msra.mxu0 0.0
  %4197 = vmatpush.xpose.msra.mxu0 0.0
  %4198 = vmatpush.xpose.msra.mxu0 %v4182
  %4199 = vmatpush.xpose.msra.mxu0 %v4180
  %4200 = vmatmul.f32.gmra.mxu0 %v4176
  %v4201 = vpop.f32.mrf.mxu0
  %v4202 = vadd.f32 0.0, %v4201
  %4203 = vmatmul.f32.gmra.mxu0 %v4178
  %v4204 = vpop.f32.mrf.mxu0
  %v4205 = vadd.f32 0.0, %v4204
  %4206 = vdwg.mxu0
  %v4207 = vsel %vm540, %v4163, -inf
  %4208 = vmax.xlane.f32.xlu0 %v4207
  %v4209 = vpop.xlane.xlu0 %4208
  %v4210 = vsel %vm540, %v4166, -inf
  %4211 = vmax.xlane.f32.xlu0 %v4210
  %v4212 = vpop.xlane.xlu0 %4211
  %v4213 = vsel %vm540, %v4202, -inf
  %4214 = vmax.xlane.f32.xlu0 %v4213
  %v4215 = vpop.xlane.xlu0 %4214
  %v4216 = vsel %vm540, %v4205, -inf
  %4217 = vmax.xlane.f32.xlu0 %v4216
  %v4218 = vpop.xlane.xlu0 %4217
  %v4219 = vsub.f32 %v4163, %v4209
  %v4220 = vsub.f32 %v4166, %v4212
  %v4221 = vsub.f32 %v4202, %v4215
  %v4222 = vsub.f32 %v4205, %v4218
  %v4223 = vmul.f32 %v4219, 1.442695
  %v4224 = vpow.pop %v4223
  %v4225 = vmul.f32 %v4220, 1.442695
  %v4226 = vpow.pop %v4225
  %v4227 = vmul.f32 %v4221, 1.442695
  %v4228 = vpow.pop %v4227
  %v4229 = vmul.f32 %v4222, 1.442695
  %v4230 = vpow.pop %v4229
  %v4231 = vsel %vm540, %v4224, 0.0
  %4232 = vadd.xlane.f32.xlu0 %v4231
  %v4233 = vpop.xlane.xlu0 %4232
  %v4234 = vsel %vm540, %v4226, 0.0
  %4235 = vadd.xlane.f32.xlu0 %v4234
  %v4236 = vpop.xlane.xlu0 %4235
  %v4237 = vsel %vm540, %v4228, 0.0
  %4238 = vadd.xlane.f32.xlu0 %v4237
  %v4239 = vpop.xlane.xlu0 %4238
  %v4240 = vsel %vm540, %v4230, 0.0
  %4241 = vadd.xlane.f32.xlu0 %v4240
  %v4242 = vpop.xlane.xlu0 %4241
  %v4243 = vrcp.pop %v4233
  %v4244 = vrcp.pop %v4236
  %v4245 = vrcp.pop %v4239
  %v4246 = vrcp.pop %v4242
  %v4247 = vmul.f32 %v4224, %v4243
  %v4248 = vmul.f32 %v4226, %v4244
  %v4249 = vmul.f32 %v4228, %v4245
  %v4250 = vmul.f32 %v4230, %v4246
  %4251 = vrot.lane.b32.xlu0 %v3548, 40
  %v4252 = vpop.permute.xlu0 %4251
  %4253 = vrot.lane.b32.xlu0 %v3550, 40
  %v4254 = vpop.permute.xlu0 %4253
  %v4258 = vsel %vm540, %v4247, 0
  %v4261 = vsel %vm540, %v4248, 0
  %4263 = vmatpush.msra.mxu0 0.0
  %4264 = vmatpush.msra.mxu0 0.0
  %4265 = vmatpush.msra.mxu0 0.0
  %4266 = vmatpush.msra.mxu0 0.0
  %4267 = vmatpush.msra.mxu0 0.0
  %4268 = vmatpush.msra.mxu0 0.0
  %4269 = vmatpush.msra.mxu0 0.0
  %4270 = vmatpush.msra.mxu0 0.0
  %4271 = vmatpush.msra.mxu0 0.0
  %4272 = vmatpush.msra.mxu0 0.0
  %4273 = vmatpush.msra.mxu0 0.0
  %4274 = vmatpush.msra.mxu0 0.0
  %4275 = vmatpush.msra.mxu0 0.0
  %4276 = vmatpush.msra.mxu0 0.0
  %4277 = vmatpush.msra.mxu0 %v4254
  %4278 = vmatpush.msra.mxu0 %v4252
  %4279 = vmatmul.f32.gmra.mxu0 %v4258
  %v4280 = vpop.f32.mrf.mxu0
  %v4281 = vadd.f32 0.0, %v4280
  %4282 = vmatmul.f32.gmra.mxu0 %v4261
  %v4283 = vpop.f32.mrf.mxu0
  %v4284 = vadd.f32 0.0, %v4283
  %4285 = vdwg.mxu0
  %4286 = vrot.lane.b32.xlu0 %v3553, 40
  %v4287 = vpop.permute.xlu0 %4286
  %4288 = vrot.lane.b32.xlu0 %v3555, 40
  %v4289 = vpop.permute.xlu0 %4288
  %v4293 = vsel %vm540, %v4249, 0
  %v4296 = vsel %vm540, %v4250, 0
  %4298 = vmatpush.msra.mxu0 0.0
  %4299 = vmatpush.msra.mxu0 0.0
  %4300 = vmatpush.msra.mxu0 0.0
  %4301 = vmatpush.msra.mxu0 0.0
  %4302 = vmatpush.msra.mxu0 0.0
  %4303 = vmatpush.msra.mxu0 0.0
  %4304 = vmatpush.msra.mxu0 0.0
  %4305 = vmatpush.msra.mxu0 0.0
  %4306 = vmatpush.msra.mxu0 0.0
  %4307 = vmatpush.msra.mxu0 0.0
  %4308 = vmatpush.msra.mxu0 0.0
  %4309 = vmatpush.msra.mxu0 0.0
  %4310 = vmatpush.msra.mxu0 0.0
  %4311 = vmatpush.msra.mxu0 0.0
  %4312 = vmatpush.msra.mxu0 %v4289
  %4313 = vmatpush.msra.mxu0 %v4287
  %4314 = vmatmul.f32.gmra.mxu0 %v4293
  %v4315 = vpop.f32.mrf.mxu0
  %v4316 = vadd.f32 0.0, %v4315
  %4317 = vmatmul.f32.gmra.mxu0 %v4296
  %v4318 = vpop.f32.mrf.mxu0
  %v4319 = vadd.f32 0.0, %v4318
  %4320 = vdwg.mxu0
  %4325 = vrot.lane.b32.xlu0 %v3897, 8
  %v4326 = vpop.permute.xlu0 %4325
  %4327 = vrot.lane.b32.xlu0 %v3900, 8
  %v4328 = vpop.permute.xlu0 %4327
  %4329 = vrot.lane.b32.xlu0 %v3932, 8
  %v4330 = vpop.permute.xlu0 %4329
  %4331 = vrot.lane.b32.xlu0 %v3935, 8
  %v4332 = vpop.permute.xlu0 %4331
  %4341 = vrot.lane.b32.xlu0 %v4089, 16
  %v4342 = vpop.permute.xlu0 %4341
  %4343 = vrot.lane.b32.xlu0 %v4092, 16
  %v4344 = vpop.permute.xlu0 %4343
  %4345 = vrot.lane.b32.xlu0 %v4124, 16
  %v4346 = vpop.permute.xlu0 %4345
  %4347 = vrot.lane.b32.xlu0 %v4127, 16
  %v4348 = vpop.permute.xlu0 %4347
  %4357 = vrot.lane.b32.xlu0 %v4281, 24
  %v4358 = vpop.permute.xlu0 %4357
  %4359 = vrot.lane.b32.xlu0 %v4284, 24
  %v4360 = vpop.permute.xlu0 %4359
  %4361 = vrot.lane.b32.xlu0 %v4316, 24
  %v4362 = vpop.permute.xlu0 %4361
  %4363 = vrot.lane.b32.xlu0 %v4319, 24
  %v4364 = vpop.permute.xlu0 %4363
  %v4369 = vsel %vm471, %v3705, %v4326
  %v4370 = vsel %vm471, %v3708, %v4328
  %v4371 = vsel %vm471, %v3740, %v4330
  %v4372 = vsel %vm471, %v3743, %v4332
  %v4373 = vsel %vm540, %v4369, %v4342
  %v4374 = vsel %vm540, %v4370, %v4344
  %v4375 = vsel %vm540, %v4371, %v4346
  %v4376 = vsel %vm540, %v4372, %v4348
  %v4377 = vsel %vm1287, %v4373, %v4358
  %v4378 = vsel %vm1287, %v4374, %v4360
  %v4379 = vsel %vm1287, %v4375, %v4362
  %v4380 = vsel %vm1287, %v4376, %v4364
  %v4381 = vpack.c.bf16 %v4378, %v4377
  %v4382 = vpack.c.bf16 %v4380, %v4379
  %v4383 = vperm.slane %v3501, 1
  %v4388 = vunpack.c.l.b16 %v3206
  %v4389 = vunpack.c.l.b16 %v3207
  %v4390 = vunpack.c.l.b16 %v3208
  %v4391 = vunpack.c.l.b16 %v3209
  %v4392 = vpack.c.b16 %v4389, %v4388
  %v4393 = vpack.c.b16 %v4391, %v4390
  %v4397 = vsel %vm439, %v4381, 0
  %v4400 = vsel %vm439, %v4382, 0
  %4402 = vmatpush.bf16.msra.mxu0 0
  %4403 = vmatpush.bf16.msra.mxu0 0
  %4404 = vmatpush.bf16.msra.mxu0 0
  %4405 = vmatpush.bf16.msra.mxu0 0
  %4406 = vmatpush.bf16.msra.mxu0 0
  %4407 = vmatpush.bf16.msra.mxu0 0
  %4408 = vmatpush.bf16.msra.mxu0 %v4393
  %4409 = vmatpush.bf16.msra.mxu0 %v4392
  %4410 = vmatmul.bf16.gmra.mxu0 %v4397
  %v4411 = vpop.f32.mrf.mxu0
  %v4412 = vadd.f32 %v4383, %v4411
  %v4413 = vpop.f32.mrf.mxu0
  %v4414 = vadd.f32 %v4383, %v4413
  %4415 = vmatmul.bf16.gmra.mxu0 %v4400
  %v4416 = vpop.f32.mrf.mxu0
  %v4417 = vadd.f32 %v4383, %v4416
  %v4418 = vpop.f32.mrf.mxu0
  %v4419 = vadd.f32 %v4383, %v4418
  %4420 = vdwg.mxu0
  %v4421 = vadd.f32 %v3196, %v4412
  %v4422 = vadd.f32 %v3197, %v4414
  %v4423 = vadd.f32 %v3198, %v4417
  %v4424 = vadd.f32 %v3199, %v4419
  %v4425 = vsel %vm439, %v4421, 0.0
  %4426 = vadd.xlane.f32.xlu0 %v4425
  %v4427 = vpop.xlane.xlu0 %4426
  %v4428 = vsel %vm439, %v4422, 0.0
  %4429 = vadd.xlane.f32.xlu0 %v4428
  %v4430 = vpop.xlane.xlu0 %4429
  %v4431 = vsel %vm439, %v4423, 0.0
  %4432 = vadd.xlane.f32.xlu0 %v4431
  %v4433 = vpop.xlane.xlu0 %4432
  %v4434 = vsel %vm439, %v4424, 0.0
  %4435 = vadd.xlane.f32.xlu0 %v4434
  %v4436 = vpop.xlane.xlu0 %4435
  %v4437 = vmul.f32 %v4427, %v1354
  %v4438 = vmul.f32 %v4430, %v1354
  %v4439 = vmul.f32 %v4433, %v1354
  %v4440 = vmul.f32 %v4436, %v1354
  %v4441 = vsub.f32 %v4421, %v4437
  %v4442 = vsub.f32 %v4422, %v4438
  %v4443 = vsub.f32 %v4423, %v4439
  %v4444 = vsub.f32 %v4424, %v4440
  %v4445 = vmul.f32 %v4441, %v4441
  %v4446 = vmul.f32 %v4442, %v4442
  %v4447 = vmul.f32 %v4443, %v4443
  %v4448 = vmul.f32 %v4444, %v4444
  %v4449 = vsel %vm439, %v4445, 0.0
  %4450 = vadd.xlane.f32.xlu0 %v4449
  %v4451 = vpop.xlane.xlu0 %4450
  %v4452 = vsel %vm439, %v4446, 0.0
  %4453 = vadd.xlane.f32.xlu0 %v4452
  %v4454 = vpop.xlane.xlu0 %4453
  %v4455 = vsel %vm439, %v4447, 0.0
  %4456 = vadd.xlane.f32.xlu0 %v4455
  %v4457 = vpop.xlane.xlu0 %4456
  %v4458 = vsel %vm439, %v4448, 0.0
  %4459 = vadd.xlane.f32.xlu0 %v4458
  %v4460 = vpop.xlane.xlu0 %4459
  %v4461 = vmul.f32 %v4451, %v1354
  %v4462 = vmul.f32 %v4454, %v1354
  %v4463 = vmul.f32 %v4457, %v1354
  %v4464 = vmul.f32 %v4460, %v1354
  %v4465 = vadd.f32 %v4461, 1e-05
  %v4466 = vadd.f32 %v4462, 1e-05
  %v4467 = vadd.f32 %v4463, 1e-05
  %v4468 = vadd.f32 %v4464, 1e-05
  %v4469 = vrsqrt.pop %v4465
  %v4470 = vmul.f32 %v4469, %v4465
  %v4471 = vmul.f32 %v4470, %v4469
  %v4472 = vmul.f32 0.5, %v4471
  %v4473 = vsub.f32 1.5, %v4472
  %v4474 = vmul.f32 %v4469, %v4473
  %vm4475 = vweird.f32 %v4465
  %vm4476 = vweird.f32 %v4469
  %vm4477 = vmor %vm4475, %vm4476
  %v4478 = vsel %vm4477, %v4469, %v4474
  %v4479 = vrsqrt.pop %v4466
  %v4480 = vmul.f32 %v4479, %v4466
  %v4481 = vmul.f32 %v4480, %v4479
  %v4482 = vmul.f32 0.5, %v4481
  %v4483 = vsub.f32 1.5, %v4482
  %v4484 = vmul.f32 %v4479, %v4483
  %vm4485 = vweird.f32 %v4466
  %vm4486 = vweird.f32 %v4479
  %vm4487 = vmor %vm4485, %vm4486
  %v4488 = vsel %vm4487, %v4479, %v4484
  %v4489 = vrsqrt.pop %v4467
  %v4490 = vmul.f32 %v4489, %v4467
  %v4491 = vmul.f32 %v4490, %v4489
  %v4492 = vmul.f32 0.5, %v4491
  %v4493 = vsub.f32 1.5, %v4492
  %v4494 = vmul.f32 %v4489, %v4493
  %vm4495 = vweird.f32 %v4467
  %vm4496 = vweird.f32 %v4489
  %vm4497 = vmor %vm4495, %vm4496
  %v4498 = vsel %vm4497, %v4489, %v4494
  %v4499 = vrsqrt.pop %v4468
  %v4500 = vmul.f32 %v4499, %v4468
  %v4501 = vmul.f32 %v4500, %v4499
  %v4502 = vmul.f32 0.5, %v4501
  %v4503 = vsub.f32 1.5, %v4502
  %v4504 = vmul.f32 %v4499, %v4503
  %vm4505 = vweird.f32 %v4468
  %vm4506 = vweird.f32 %v4499
  %vm4507 = vmor %vm4505, %vm4506
  %v4508 = vsel %vm4507, %v4499, %v4504
  %v4509 = vmul.f32 %v4441, %v4478
  %v4510 = vmul.f32 %v4442, %v4488
  %v4511 = vmul.f32 %v4443, %v4498
  %v4512 = vmul.f32 %v4444, %v4508
  %v4513 = vperm.slane %v3501, 2
  %v4514 = vmul.f32 %v4509, %v4513
  %v4515 = vmul.f32 %v4510, %v4513
  %v4516 = vmul.f32 %v4511, %v4513
  %v4517 = vmul.f32 %v4512, %v4513
  %v4518 = vperm.slane %v3501, 3
  %v4519 = vadd.f32 %v4514, %v4518
  %v4520 = vadd.f32 %v4515, %v4518
  %v4521 = vadd.f32 %v4516, %v4518
  %v4522 = vadd.f32 %v4517, %v4518
  %v4523 = vpack.c.bf16 %v4520, %v4519
  %v4524 = vpack.c.bf16 %v4522, %v4521
  %v4525 = vperm.slane %v3501, 4
  %v4526 = vperm.slane %v3502, 4
  %v4527 = vperm.slane %v3503, 4
  %v4528 = vperm.slane %v3504, 4
  %v4529 = vperm.slane %v3505, 4
  %v4530 = vperm.slane %v3506, 4
  %v4531 = vperm.slane %v3507, 4
  %v4532 = vperm.slane %v3508, 4
  %v4533 = vperm.slane %v3509, 4
  %v4534 = vperm.slane %v3510, 4
  %v4535 = vperm.slane %v3511, 4
  %v4536 = vperm.slane %v3512, 4
  %v4537 = vperm.slane %v3513, 4
  %v4538 = vperm.slane %v3514, 4
  %v4539 = vperm.slane %v3515, 4
  %v4540 = vperm.slane %v3516, 4
  %v4573 = vunpack.c.l.b16 %v3211
  %v4574 = vunpack.c.h.b16 %v3211
  %v4575 = vunpack.c.l.b16 %v3212
  %v4576 = vunpack.c.h.b16 %v3212
  %v4577 = vunpack.c.l.b16 %v3213
  %v4578 = vunpack.c.h.b16 %v3213
  %v4579 = vunpack.c.l.b16 %v3214
  %v4580 = vunpack.c.h.b16 %v3214
  %v4581 = vunpack.c.l.b16 %v3215
  %v4582 = vunpack.c.h.b16 %v3215
  %v4583 = vunpack.c.l.b16 %v3216
  %v4584 = vunpack.c.h.b16 %v3216
  %v4585 = vunpack.c.l.b16 %v3217
  %v4586 = vunpack.c.h.b16 %v3217
  %v4587 = vunpack.c.l.b16 %v3218
  %v4588 = vunpack.c.h.b16 %v3218
  %v4589 = vunpack.c.l.b16 %v3219
  %v4590 = vunpack.c.h.b16 %v3219
  %v4591 = vunpack.c.l.b16 %v3220
  %v4592 = vunpack.c.h.b16 %v3220
  %v4593 = vunpack.c.l.b16 %v3221
  %v4594 = vunpack.c.h.b16 %v3221
  %v4595 = vunpack.c.l.b16 %v3222
  %v4596 = vunpack.c.h.b16 %v3222
  %v4597 = vunpack.c.l.b16 %v3223
  %v4598 = vunpack.c.h.b16 %v3223
  %v4599 = vunpack.c.l.b16 %v3224
  %v4600 = vunpack.c.h.b16 %v3224
  %v4601 = vunpack.c.l.b16 %v3225
  %v4602 = vunpack.c.h.b16 %v3225
  %v4603 = vunpack.c.l.b16 %v3226
  %v4604 = vunpack.c.h.b16 %v3226
  %v4605 = vunpack.c.l.b16 %v3227
  %v4606 = vunpack.c.h.b16 %v3227
  %v4607 = vunpack.c.l.b16 %v3228
  %v4608 = vunpack.c.h.b16 %v3228
  %v4609 = vunpack.c.l.b16 %v3229
  %v4610 = vunpack.c.h.b16 %v3229
  %v4611 = vunpack.c.l.b16 %v3230
  %v4612 = vunpack.c.h.b16 %v3230
  %v4613 = vunpack.c.l.b16 %v3231
  %v4614 = vunpack.c.h.b16 %v3231
  %v4615 = vunpack.c.l.b16 %v3232
  %v4616 = vunpack.c.h.b16 %v3232
  %v4617 = vunpack.c.l.b16 %v3233
  %v4618 = vunpack.c.h.b16 %v3233
  %v4619 = vunpack.c.l.b16 %v3234
  %v4620 = vunpack.c.h.b16 %v3234
  %v4621 = vunpack.c.l.b16 %v3235
  %v4622 = vunpack.c.h.b16 %v3235
  %v4623 = vunpack.c.l.b16 %v3236
  %v4624 = vunpack.c.h.b16 %v3236
  %v4625 = vunpack.c.l.b16 %v3237
  %v4626 = vunpack.c.h.b16 %v3237
  %v4627 = vunpack.c.l.b16 %v3238
  %v4628 = vunpack.c.h.b16 %v3238
  %v4629 = vunpack.c.l.b16 %v3239
  %v4630 = vunpack.c.h.b16 %v3239
  %v4631 = vunpack.c.l.b16 %v3240
  %v4632 = vunpack.c.h.b16 %v3240
  %v4633 = vunpack.c.l.b16 %v3241
  %v4634 = vunpack.c.h.b16 %v3241
  %v4635 = vunpack.c.l.b16 %v3242
  %v4636 = vunpack.c.h.b16 %v3242
  %v4637 = vpack.c.b16 %v4589, %v4573
  %v4638 = vpack.c.b16 %v4590, %v4574
  %v4639 = vpack.c.b16 %v4591, %v4575
  %v4640 = vpack.c.b16 %v4592, %v4576
  %v4641 = vpack.c.b16 %v4593, %v4577
  %v4642 = vpack.c.b16 %v4594, %v4578
  %v4643 = vpack.c.b16 %v4595, %v4579
  %v4644 = vpack.c.b16 %v4596, %v4580
  %v4645 = vpack.c.b16 %v4597, %v4581
  %v4646 = vpack.c.b16 %v4598, %v4582
  %v4647 = vpack.c.b16 %v4599, %v4583
  %v4648 = vpack.c.b16 %v4600, %v4584
  %v4649 = vpack.c.b16 %v4601, %v4585
  %v4650 = vpack.c.b16 %v4602, %v4586
  %v4651 = vpack.c.b16 %v4603, %v4587
  %v4652 = vpack.c.b16 %v4604, %v4588
  %v4653 = vpack.c.b16 %v4621, %v4605
  %v4654 = vpack.c.b16 %v4622, %v4606
  %v4655 = vpack.c.b16 %v4623, %v4607
  %v4656 = vpack.c.b16 %v4624, %v4608
  %v4657 = vpack.c.b16 %v4625, %v4609
  %v4658 = vpack.c.b16 %v4626, %v4610
  %v4659 = vpack.c.b16 %v4627, %v4611
  %v4660 = vpack.c.b16 %v4628, %v4612
  %v4661 = vpack.c.b16 %v4629, %v4613
  %v4662 = vpack.c.b16 %v4630, %v4614
  %v4663 = vpack.c.b16 %v4631, %v4615
  %v4664 = vpack.c.b16 %v4632, %v4616
  %v4665 = vpack.c.b16 %v4633, %v4617
  %v4666 = vpack.c.b16 %v4634, %v4618
  %v4667 = vpack.c.b16 %v4635, %v4619
  %v4668 = vpack.c.b16 %v4636, %v4620
  %v4702 = vsel %vm439, %v4523, 0
  %v4705 = vsel %vm439, %v4524, 0
  %4707 = vmatpush.bf16.msra.mxu0 0
  %4708 = vmatpush.bf16.msra.mxu0 0
  %4709 = vmatpush.bf16.msra.mxu0 0
  %4710 = vmatpush.bf16.msra.mxu0 0
  %4711 = vmatpush.bf16.msra.mxu0 0
  %4712 = vmatpush.bf16.msra.mxu0 0
  %4713 = vmatpush.bf16.msra.mxu0 %v4653
  %4714 = vmatpush.bf16.msra.mxu0 %v4637
  %4715 = vmatmul.bf16.gmra.mxu0 %v4702
  %v4716 = vpop.f32.mrf.mxu0
  %v4717 = vadd.f32 %v4525, %v4716
  %v4718 = vpop.f32.mrf.mxu0
  %v4719 = vadd.f32 %v4525, %v4718
  %4720 = vmatmul.bf16.gmra.mxu0 %v4705
  %v4721 = vpop.f32.mrf.mxu0
  %v4722 = vadd.f32 %v4525, %v4721
  %v4723 = vpop.f32.mrf.mxu0
  %v4724 = vadd.f32 %v4525, %v4723
  %4725 = vdwg.mxu0
  %4726 = vmatpush.bf16.msra.mxu0 0
  %4727 = vmatpush.bf16.msra.mxu0 0
  %4728 = vmatpush.bf16.msra.mxu0 0
  %4729 = vmatpush.bf16.msra.mxu0 0
  %4730 = vmatpush.bf16.msra.mxu0 0
  %4731 = vmatpush.bf16.msra.mxu0 0
  %4732 = vmatpush.bf16.msra.mxu0 %v4654
  %4733 = vmatpush.bf16.msra.mxu0 %v4638
  %4734 = vmatmul.bf16.gmra.mxu0 %v4702
  %v4735 = vpop.f32.mrf.mxu0
  %v4736 = vadd.f32 %v4526, %v4735
  %v4737 = vpop.f32.mrf.mxu0
  %v4738 = vadd.f32 %v4526, %v4737
  %4739 = vmatmul.bf16.gmra.mxu0 %v4705
  %v4740 = vpop.f32.mrf.mxu0
  %v4741 = vadd.f32 %v4526, %v4740
  %v4742 = vpop.f32.mrf.mxu0
  %v4743 = vadd.f32 %v4526, %v4742
  %4744 = vdwg.mxu0
  %4745 = vmatpush.bf16.msra.mxu0 0
  %4746 = vmatpush.bf16.msra.mxu0 0
  %4747 = vmatpush.bf16.msra.mxu0 0
  %4748 = vmatpush.bf16.msra.mxu0 0
  %4749 = vmatpush.bf16.msra.mxu0 0
  %4750 = vmatpush.bf16.msra.mxu0 0
  %4751 = vmatpush.bf16.msra.mxu0 %v4655
  %4752 = vmatpush.bf16.msra.mxu0 %v4639
  %4753 = vmatmul.bf16.gmra.mxu0 %v4702
  %v4754 = vpop.f32.mrf.mxu0
  %v4755 = vadd.f32 %v4527, %v4754
  %v4756 = vpop.f32.mrf.mxu0
  %v4757 = vadd.f32 %v4527, %v4756
  %4758 = vmatmul.bf16.gmra.mxu0 %v4705
  %v4759 = vpop.f32.mrf.mxu0
  %v4760 = vadd.f32 %v4527, %v4759
  %v4761 = vpop.f32.mrf.mxu0
  %v4762 = vadd.f32 %v4527, %v4761
  %4763 = vdwg.mxu0
  %4764 = vmatpush.bf16.msra.mxu0 0
  %4765 = vmatpush.bf16.msra.mxu0 0
  %4766 = vmatpush.bf16.msra.mxu0 0
  %4767 = vmatpush.bf16.msra.mxu0 0
  %4768 = vmatpush.bf16.msra.mxu0 0
  %4769 = vmatpush.bf16.msra.mxu0 0
  %4770 = vmatpush.bf16.msra.mxu0 %v4656
  %4771 = vmatpush.bf16.msra.mxu0 %v4640
  %4772 = vmatmul.bf16.gmra.mxu0 %v4702
  %v4773 = vpop.f32.mrf.mxu0
  %v4774 = vadd.f32 %v4528, %v4773
  %v4775 = vpop.f32.mrf.mxu0
  %v4776 = vadd.f32 %v4528, %v4775
  %4777 = vmatmul.bf16.gmra.mxu0 %v4705
  %v4778 = vpop.f32.mrf.mxu0
  %v4779 = vadd.f32 %v4528, %v4778
  %v4780 = vpop.f32.mrf.mxu0
  %v4781 = vadd.f32 %v4528, %v4780
  %4782 = vdwg.mxu0
  %4783 = vmatpush.bf16.msra.mxu0 0
  %4784 = vmatpush.bf16.msra.mxu0 0
  %4785 = vmatpush.bf16.msra.mxu0 0
  %4786 = vmatpush.bf16.msra.mxu0 0
  %4787 = vmatpush.bf16.msra.mxu0 0
  %4788 = vmatpush.bf16.msra.mxu0 0
  %4789 = vmatpush.bf16.msra.mxu0 %v4657
  %4790 = vmatpush.bf16.msra.mxu0 %v4641
  %4791 = vmatmul.bf16.gmra.mxu0 %v4702
  %v4792 = vpop.f32.mrf.mxu0
  %v4793 = vadd.f32 %v4529, %v4792
  %v4794 = vpop.f32.mrf.mxu0
  %v4795 = vadd.f32 %v4529, %v4794
  %4796 = vmatmul.bf16.gmra.mxu0 %v4705
  %v4797 = vpop.f32.mrf.mxu0
  %v4798 = vadd.f32 %v4529, %v4797
  %v4799 = vpop.f32.mrf.mxu0
  %v4800 = vadd.f32 %v4529, %v4799
  %4801 = vdwg.mxu0
  %4802 = vmatpush.bf16.msra.mxu0 0
  %4803 = vmatpush.bf16.msra.mxu0 0
  %4804 = vmatpush.bf16.msra.mxu0 0
  %4805 = vmatpush.bf16.msra.mxu0 0
  %4806 = vmatpush.bf16.msra.mxu0 0
  %4807 = vmatpush.bf16.msra.mxu0 0
  %4808 = vmatpush.bf16.msra.mxu0 %v4658
  %4809 = vmatpush.bf16.msra.mxu0 %v4642
  %4810 = vmatmul.bf16.gmra.mxu0 %v4702
  %v4811 = vpop.f32.mrf.mxu0
  %v4812 = vadd.f32 %v4530, %v4811
  %v4813 = vpop.f32.mrf.mxu0
  %v4814 = vadd.f32 %v4530, %v4813
  %4815 = vmatmul.bf16.gmra.mxu0 %v4705
  %v4816 = vpop.f32.mrf.mxu0
  %v4817 = vadd.f32 %v4530, %v4816
  %v4818 = vpop.f32.mrf.mxu0
  %v4819 = vadd.f32 %v4530, %v4818
  %4820 = vdwg.mxu0
  %4821 = vmatpush.bf16.msra.mxu0 0
  %4822 = vmatpush.bf16.msra.mxu0 0
  %4823 = vmatpush.bf16.msra.mxu0 0
  %4824 = vmatpush.bf16.msra.mxu0 0
  %4825 = vmatpush.bf16.msra.mxu0 0
  %4826 = vmatpush.bf16.msra.mxu0 0
  %4827 = vmatpush.bf16.msra.mxu0 %v4659
  %4828 = vmatpush.bf16.msra.mxu0 %v4643
  %4829 = vmatmul.bf16.gmra.mxu0 %v4702
  %v4830 = vpop.f32.mrf.mxu0
  %v4831 = vadd.f32 %v4531, %v4830
  %v4832 = vpop.f32.mrf.mxu0
  %v4833 = vadd.f32 %v4531, %v4832
  %4834 = vmatmul.bf16.gmra.mxu0 %v4705
  %v4835 = vpop.f32.mrf.mxu0
  %v4836 = vadd.f32 %v4531, %v4835
  %v4837 = vpop.f32.mrf.mxu0
  %v4838 = vadd.f32 %v4531, %v4837
  %4839 = vdwg.mxu0
  %4840 = vmatpush.bf16.msra.mxu0 0
  %4841 = vmatpush.bf16.msra.mxu0 0
  %4842 = vmatpush.bf16.msra.mxu0 0
  %4843 = vmatpush.bf16.msra.mxu0 0
  %4844 = vmatpush.bf16.msra.mxu0 0
  %4845 = vmatpush.bf16.msra.mxu0 0
  %4846 = vmatpush.bf16.msra.mxu0 %v4660
  %4847 = vmatpush.bf16.msra.mxu0 %v4644
  %4848 = vmatmul.bf16.gmra.mxu0 %v4702
  %v4849 = vpop.f32.mrf.mxu0
  %v4850 = vadd.f32 %v4532, %v4849
  %v4851 = vpop.f32.mrf.mxu0
  %v4852 = vadd.f32 %v4532, %v4851
  %4853 = vmatmul.bf16.gmra.mxu0 %v4705
  %v4854 = vpop.f32.mrf.mxu0
  %v4855 = vadd.f32 %v4532, %v4854
  %v4856 = vpop.f32.mrf.mxu0
  %v4857 = vadd.f32 %v4532, %v4856
  %4858 = vdwg.mxu0
  %4859 = vmatpush.bf16.msra.mxu0 0
  %4860 = vmatpush.bf16.msra.mxu0 0
  %4861 = vmatpush.bf16.msra.mxu0 0
  %4862 = vmatpush.bf16.msra.mxu0 0
  %4863 = vmatpush.bf16.msra.mxu0 0
  %4864 = vmatpush.bf16.msra.mxu0 0
  %4865 = vmatpush.bf16.msra.mxu0 %v4661
  %4866 = vmatpush.bf16.msra.mxu0 %v4645
  %4867 = vmatmul.bf16.gmra.mxu0 %v4702
  %v4868 = vpop.f32.mrf.mxu0
  %v4869 = vadd.f32 %v4533, %v4868
  %v4870 = vpop.f32.mrf.mxu0
  %v4871 = vadd.f32 %v4533, %v4870
  %4872 = vmatmul.bf16.gmra.mxu0 %v4705
  %v4873 = vpop.f32.mrf.mxu0
  %v4874 = vadd.f32 %v4533, %v4873
  %v4875 = vpop.f32.mrf.mxu0
  %v4876 = vadd.f32 %v4533, %v4875
  %4877 = vdwg.mxu0
  %4878 = vmatpush.bf16.msra.mxu0 0
  %4879 = vmatpush.bf16.msra.mxu0 0
  %4880 = vmatpush.bf16.msra.mxu0 0
  %4881 = vmatpush.bf16.msra.mxu0 0
  %4882 = vmatpush.bf16.msra.mxu0 0
  %4883 = vmatpush.bf16.msra.mxu0 0
  %4884 = vmatpush.bf16.msra.mxu0 %v4662
  %4885 = vmatpush.bf16.msra.mxu0 %v4646
  %4886 = vmatmul.bf16.gmra.mxu0 %v4702
  %v4887 = vpop.f32.mrf.mxu0
  %v4888 = vadd.f32 %v4534, %v4887
  %v4889 = vpop.f32.mrf.mxu0
  %v4890 = vadd.f32 %v4534, %v4889
  %4891 = vmatmul.bf16.gmra.mxu0 %v4705
  %v4892 = vpop.f32.mrf.mxu0
  %v4893 = vadd.f32 %v4534, %v4892
  %v4894 = vpop.f32.mrf.mxu0
  %v4895 = vadd.f32 %v4534, %v4894
  %4896 = vdwg.mxu0
  %4897 = vmatpush.bf16.msra.mxu0 0
  %4898 = vmatpush.bf16.msra.mxu0 0
  %4899 = vmatpush.bf16.msra.mxu0 0
  %4900 = vmatpush.bf16.msra.mxu0 0
  %4901 = vmatpush.bf16.msra.mxu0 0
  %4902 = vmatpush.bf16.msra.mxu0 0
  %4903 = vmatpush.bf16.msra.mxu0 %v4663
  %4904 = vmatpush.bf16.msra.mxu0 %v4647
  %4905 = vmatmul.bf16.gmra.mxu0 %v4702
  %v4906 = vpop.f32.mrf.mxu0
  %v4907 = vadd.f32 %v4535, %v4906
  %v4908 = vpop.f32.mrf.mxu0
  %v4909 = vadd.f32 %v4535, %v4908
  %4910 = vmatmul.bf16.gmra.mxu0 %v4705
  %v4911 = vpop.f32.mrf.mxu0
  %v4912 = vadd.f32 %v4535, %v4911
  %v4913 = vpop.f32.mrf.mxu0
  %v4914 = vadd.f32 %v4535, %v4913
  %4915 = vdwg.mxu0
  %4916 = vmatpush.bf16.msra.mxu0 0
  %4917 = vmatpush.bf16.msra.mxu0 0
  %4918 = vmatpush.bf16.msra.mxu0 0
  %4919 = vmatpush.bf16.msra.mxu0 0
  %4920 = vmatpush.bf16.msra.mxu0 0
  %4921 = vmatpush.bf16.msra.mxu0 0
  %4922 = vmatpush.bf16.msra.mxu0 %v4664
  %4923 = vmatpush.bf16.msra.mxu0 %v4648
  %4924 = vmatmul.bf16.gmra.mxu0 %v4702
  %v4925 = vpop.f32.mrf.mxu0
  %v4926 = vadd.f32 %v4536, %v4925
  %v4927 = vpop.f32.mrf.mxu0
  %v4928 = vadd.f32 %v4536, %v4927
  %4929 = vmatmul.bf16.gmra.mxu0 %v4705
  %v4930 = vpop.f32.mrf.mxu0
  %v4931 = vadd.f32 %v4536, %v4930
  %v4932 = vpop.f32.mrf.mxu0
  %v4933 = vadd.f32 %v4536, %v4932
  %4934 = vdwg.mxu0
  %4935 = vmatpush.bf16.msra.mxu0 0
  %4936 = vmatpush.bf16.msra.mxu0 0
  %4937 = vmatpush.bf16.msra.mxu0 0
  %4938 = vmatpush.bf16.msra.mxu0 0
  %4939 = vmatpush.bf16.msra.mxu0 0
  %4940 = vmatpush.bf16.msra.mxu0 0
  %4941 = vmatpush.bf16.msra.mxu0 %v4665
  %4942 = vmatpush.bf16.msra.mxu0 %v4649
  %4943 = vmatmul.bf16.gmra.mxu0 %v4702
  %v4944 = vpop.f32.mrf.mxu0
  %v4945 = vadd.f32 %v4537, %v4944
  %v4946 = vpop.f32.mrf.mxu0
  %v4947 = vadd.f32 %v4537, %v4946
  %4948 = vmatmul.bf16.gmra.mxu0 %v4705
  %v4949 = vpop.f32.mrf.mxu0
  %v4950 = vadd.f32 %v4537, %v4949
  %v4951 = vpop.f32.mrf.mxu0
  %v4952 = vadd.f32 %v4537, %v4951
  %4953 = vdwg.mxu0
  %4954 = vmatpush.bf16.msra.mxu0 0
  %4955 = vmatpush.bf16.msra.mxu0 0
  %4956 = vmatpush.bf16.msra.mxu0 0
  %4957 = vmatpush.bf16.msra.mxu0 0
  %4958 = vmatpush.bf16.msra.mxu0 0
  %4959 = vmatpush.bf16.msra.mxu0 0
  %4960 = vmatpush.bf16.msra.mxu0 %v4666
  %4961 = vmatpush.bf16.msra.mxu0 %v4650
  %4962 = vmatmul.bf16.gmra.mxu0 %v4702
  %v4963 = vpop.f32.mrf.mxu0
  %v4964 = vadd.f32 %v4538, %v4963
  %v4965 = vpop.f32.mrf.mxu0
  %v4966 = vadd.f32 %v4538, %v4965
  %4967 = vmatmul.bf16.gmra.mxu0 %v4705
  %v4968 = vpop.f32.mrf.mxu0
  %v4969 = vadd.f32 %v4538, %v4968
  %v4970 = vpop.f32.mrf.mxu0
  %v4971 = vadd.f32 %v4538, %v4970
  %4972 = vdwg.mxu0
  %4973 = vmatpush.bf16.msra.mxu0 0
  %4974 = vmatpush.bf16.msra.mxu0 0
  %4975 = vmatpush.bf16.msra.mxu0 0
  %4976 = vmatpush.bf16.msra.mxu0 0
  %4977 = vmatpush.bf16.msra.mxu0 0
  %4978 = vmatpush.bf16.msra.mxu0 0
  %4979 = vmatpush.bf16.msra.mxu0 %v4667
  %4980 = vmatpush.bf16.msra.mxu0 %v4651
  %4981 = vmatmul.bf16.gmra.mxu0 %v4702
  %v4982 = vpop.f32.mrf.mxu0
  %v4983 = vadd.f32 %v4539, %v4982
  %v4984 = vpop.f32.mrf.mxu0
  %v4985 = vadd.f32 %v4539, %v4984
  %4986 = vmatmul.bf16.gmra.mxu0 %v4705
  %v4987 = vpop.f32.mrf.mxu0
  %v4988 = vadd.f32 %v4539, %v4987
  %v4989 = vpop.f32.mrf.mxu0
  %v4990 = vadd.f32 %v4539, %v4989
  %4991 = vdwg.mxu0
  %4992 = vmatpush.bf16.msra.mxu0 0
  %4993 = vmatpush.bf16.msra.mxu0 0
  %4994 = vmatpush.bf16.msra.mxu0 0
  %4995 = vmatpush.bf16.msra.mxu0 0
  %4996 = vmatpush.bf16.msra.mxu0 0
  %4997 = vmatpush.bf16.msra.mxu0 0
  %4998 = vmatpush.bf16.msra.mxu0 %v4668
  %4999 = vmatpush.bf16.msra.mxu0 %v4652
  %5000 = vmatmul.bf16.gmra.mxu0 %v4702
  %v5001 = vpop.f32.mrf.mxu0
  %v5002 = vadd.f32 %v4540, %v5001
  %v5003 = vpop.f32.mrf.mxu0
  %v5004 = vadd.f32 %v4540, %v5003
  %5005 = vmatmul.bf16.gmra.mxu0 %v4705
  %v5006 = vpop.f32.mrf.mxu0
  %v5007 = vadd.f32 %v4540, %v5006
  %v5008 = vpop.f32.mrf.mxu0
  %v5009 = vadd.f32 %v4540, %v5008
  %5010 = vdwg.mxu0
  %v5011 = vmax.f32 %v4717, 0.0
  %v5012 = vmax.f32 %v4736, 0.0
  %v5013 = vmax.f32 %v4755, 0.0
  %v5014 = vmax.f32 %v4774, 0.0
  %v5015 = vmax.f32 %v4793, 0.0
  %v5016 = vmax.f32 %v4812, 0.0
  %v5017 = vmax.f32 %v4831, 0.0
  %v5018 = vmax.f32 %v4850, 0.0
  %v5019 = vmax.f32 %v4869, 0.0
  %v5020 = vmax.f32 %v4888, 0.0
  %v5021 = vmax.f32 %v4907, 0.0
  %v5022 = vmax.f32 %v4926, 0.0
  %v5023 = vmax.f32 %v4945, 0.0
  %v5024 = vmax.f32 %v4964, 0.0
  %v5025 = vmax.f32 %v4983, 0.0
  %v5026 = vmax.f32 %v5002, 0.0
  %v5027 = vmax.f32 %v4719, 0.0
  %v5028 = vmax.f32 %v4738, 0.0
  %v5029 = vmax.f32 %v4757, 0.0
  %v5030 = vmax.f32 %v4776, 0.0
  %v5031 = vmax.f32 %v4795, 0.0
  %v5032 = vmax.f32 %v4814, 0.0
  %v5033 = vmax.f32 %v4833, 0.0
  %v5034 = vmax.f32 %v4852, 0.0
  %v5035 = vmax.f32 %v4871, 0.0
  %v5036 = vmax.f32 %v4890, 0.0
  %v5037 = vmax.f32 %v4909, 0.0
  %v5038 = vmax.f32 %v4928, 0.0
  %v5039 = vmax.f32 %v4947, 0.0
  %v5040 = vmax.f32 %v4966, 0.0
  %v5041 = vmax.f32 %v4985, 0.0
  %v5042 = vmax.f32 %v5004, 0.0
  %v5043 = vmax.f32 %v4722, 0.0
  %v5044 = vmax.f32 %v4741, 0.0
  %v5045 = vmax.f32 %v4760, 0.0
  %v5046 = vmax.f32 %v4779, 0.0
  %v5047 = vmax.f32 %v4798, 0.0
  %v5048 = vmax.f32 %v4817, 0.0
  %v5049 = vmax.f32 %v4836, 0.0
  %v5050 = vmax.f32 %v4855, 0.0
  %v5051 = vmax.f32 %v4874, 0.0
  %v5052 = vmax.f32 %v4893, 0.0
  %v5053 = vmax.f32 %v4912, 0.0
  %v5054 = vmax.f32 %v4931, 0.0
  %v5055 = vmax.f32 %v4950, 0.0
  %v5056 = vmax.f32 %v4969, 0.0
  %v5057 = vmax.f32 %v4988, 0.0
  %v5058 = vmax.f32 %v5007, 0.0
  %v5059 = vmax.f32 %v4724, 0.0
  %v5060 = vmax.f32 %v4743, 0.0
  %v5061 = vmax.f32 %v4762, 0.0
  %v5062 = vmax.f32 %v4781, 0.0
  %v5063 = vmax.f32 %v4800, 0.0
  %v5064 = vmax.f32 %v4819, 0.0
  %v5065 = vmax.f32 %v4838, 0.0
  %v5066 = vmax.f32 %v4857, 0.0
  %v5067 = vmax.f32 %v4876, 0.0
  %v5068 = vmax.f32 %v4895, 0.0
  %v5069 = vmax.f32 %v4914, 0.0
  %v5070 = vmax.f32 %v4933, 0.0
  %v5071 = vmax.f32 %v4952, 0.0
  %v5072 = vmax.f32 %v4971, 0.0
  %v5073 = vmax.f32 %v4990, 0.0
  %v5074 = vmax.f32 %v5009, 0.0
  %v5075 = vpack.c.bf16 %v5027, %v5011
  %v5076 = vpack.c.bf16 %v5028, %v5012
  %v5077 = vpack.c.bf16 %v5029, %v5013
  %v5078 = vpack.c.bf16 %v5030, %v5014
  %v5079 = vpack.c.bf16 %v5031, %v5015
  %v5080 = vpack.c.bf16 %v5032, %v5016
  %v5081 = vpack.c.bf16 %v5033, %v5017
  %v5082 = vpack.c.bf16 %v5034, %v5018
  %v5083 = vpack.c.bf16 %v5035, %v5019
  %v5084 = vpack.c.bf16 %v5036, %v5020
  %v5085 = vpack.c.bf16 %v5037, %v5021
  %v5086 = vpack.c.bf16 %v5038, %v5022
  %v5087 = vpack.c.bf16 %v5039, %v5023
  %v5088 = vpack.c.bf16 %v5040, %v5024
  %v5089 = vpack.c.bf16 %v5041, %v5025
  %v5090 = vpack.c.bf16 %v5042, %v5026
  %v5091 = vpack.c.bf16 %v5059, %v5043
  %v5092 = vpack.c.bf16 %v5060, %v5044
  %v5093 = vpack.c.bf16 %v5061, %v5045
  %v5094 = vpack.c.bf16 %v5062, %v5046
  %v5095 = vpack.c.bf16 %v5063, %v5047
  %v5096 = vpack.c.bf16 %v5064, %v5048
  %v5097 = vpack.c.bf16 %v5065, %v5049
  %v5098 = vpack.c.bf16 %v5066, %v5050
  %v5099 = vpack.c.bf16 %v5067, %v5051
  %v5100 = vpack.c.bf16 %v5068, %v5052
  %v5101 = vpack.c.bf16 %v5069, %v5053
  %v5102 = vpack.c.bf16 %v5070, %v5054
  %v5103 = vpack.c.bf16 %v5071, %v5055
  %v5104 = vpack.c.bf16 %v5072, %v5056
  %v5105 = vpack.c.bf16 %v5073, %v5057
  %v5106 = vpack.c.bf16 %v5074, %v5058
  %v5107 = vperm.slane %v3501, 5
  %v5364 = vunpack.c.l.b16 %v3244
  %v5365 = vunpack.c.l.b16 %v3245
  %v5366 = vunpack.c.l.b16 %v3246
  %v5367 = vunpack.c.l.b16 %v3247
  %v5368 = vunpack.c.l.b16 %v3248
  %v5369 = vunpack.c.l.b16 %v3249
  %v5370 = vunpack.c.l.b16 %v3250
  %v5371 = vunpack.c.l.b16 %v3251
  %v5372 = vunpack.c.l.b16 %v3252
  %v5373 = vunpack.c.l.b16 %v3253
  %v5374 = vunpack.c.l.b16 %v3254
  %v5375 = vunpack.c.l.b16 %v3255
  %v5376 = vunpack.c.l.b16 %v3256
  %v5377 = vunpack.c.l.b16 %v3257
  %v5378 = vunpack.c.l.b16 %v3258
  %v5379 = vunpack.c.l.b16 %v3259
  %v5380 = vunpack.c.l.b16 %v3260
  %v5381 = vunpack.c.l.b16 %v3261
  %v5382 = vunpack.c.l.b16 %v3262
  %v5383 = vunpack.c.l.b16 %v3263
  %v5384 = vunpack.c.l.b16 %v3264
  %v5385 = vunpack.c.l.b16 %v3265
  %v5386 = vunpack.c.l.b16 %v3266
  %v5387 = vunpack.c.l.b16 %v3267
  %v5388 = vunpack.c.l.b16 %v3268
  %v5389 = vunpack.c.l.b16 %v3269
  %v5390 = vunpack.c.l.b16 %v3270
  %v5391 = vunpack.c.l.b16 %v3271
  %v5392 = vunpack.c.l.b16 %v3272
  %v5393 = vunpack.c.l.b16 %v3273
  %v5394 = vunpack.c.l.b16 %v3274
  %v5395 = vunpack.c.l.b16 %v3275
  %v5396 = vunpack.c.l.b16 %v3276
  %v5397 = vunpack.c.l.b16 %v3277
  %v5398 = vunpack.c.l.b16 %v3278
  %v5399 = vunpack.c.l.b16 %v3279
  %v5400 = vunpack.c.l.b16 %v3280
  %v5401 = vunpack.c.l.b16 %v3281
  %v5402 = vunpack.c.l.b16 %v3282
  %v5403 = vunpack.c.l.b16 %v3283
  %v5404 = vunpack.c.l.b16 %v3284
  %v5405 = vunpack.c.l.b16 %v3285
  %v5406 = vunpack.c.l.b16 %v3286
  %v5407 = vunpack.c.l.b16 %v3287
  %v5408 = vunpack.c.l.b16 %v3288
  %v5409 = vunpack.c.l.b16 %v3289
  %v5410 = vunpack.c.l.b16 %v3290
  %v5411 = vunpack.c.l.b16 %v3291
  %v5412 = vunpack.c.l.b16 %v3292
  %v5413 = vunpack.c.l.b16 %v3293
  %v5414 = vunpack.c.l.b16 %v3294
  %v5415 = vunpack.c.l.b16 %v3295
  %v5416 = vunpack.c.l.b16 %v3296
  %v5417 = vunpack.c.l.b16 %v3297
  %v5418 = vunpack.c.l.b16 %v3298
  %v5419 = vunpack.c.l.b16 %v3299
  %v5420 = vunpack.c.l.b16 %v3300
  %v5421 = vunpack.c.l.b16 %v3301
  %v5422 = vunpack.c.l.b16 %v3302
  %v5423 = vunpack.c.l.b16 %v3303
  %v5424 = vunpack.c.l.b16 %v3304
  %v5425 = vunpack.c.l.b16 %v3305
  %v5426 = vunpack.c.l.b16 %v3306
  %v5427 = vunpack.c.l.b16 %v3307
  %v5428 = vunpack.c.l.b16 %v3308
  %v5429 = vunpack.c.l.b16 %v3309
  %v5430 = vunpack.c.l.b16 %v3310
  %v5431 = vunpack.c.l.b16 %v3311
  %v5432 = vunpack.c.l.b16 %v3312
  %v5433 = vunpack.c.l.b16 %v3313
  %v5434 = vunpack.c.l.b16 %v3314
  %v5435 = vunpack.c.l.b16 %v3315
  %v5436 = vunpack.c.l.b16 %v3316
  %v5437 = vunpack.c.l.b16 %v3317
  %v5438 = vunpack.c.l.b16 %v3318
  %v5439 = vunpack.c.l.b16 %v3319
  %v5440 = vunpack.c.l.b16 %v3320
  %v5441 = vunpack.c.l.b16 %v3321
  %v5442 = vunpack.c.l.b16 %v3322
  %v5443 = vunpack.c.l.b16 %v3323
  %v5444 = vunpack.c.l.b16 %v3324
  %v5445 = vunpack.c.l.b16 %v3325
  %v5446 = vunpack.c.l.b16 %v3326
  %v5447 = vunpack.c.l.b16 %v3327
  %v5448 = vunpack.c.l.b16 %v3328
  %v5449 = vunpack.c.l.b16 %v3329
  %v5450 = vunpack.c.l.b16 %v3330
  %v5451 = vunpack.c.l.b16 %v3331
  %v5452 = vunpack.c.l.b16 %v3332
  %v5453 = vunpack.c.l.b16 %v3333
  %v5454 = vunpack.c.l.b16 %v3334
  %v5455 = vunpack.c.l.b16 %v3335
  %v5456 = vunpack.c.l.b16 %v3336
  %v5457 = vunpack.c.l.b16 %v3337
  %v5458 = vunpack.c.l.b16 %v3338
  %v5459 = vunpack.c.l.b16 %v3339
  %v5460 = vunpack.c.l.b16 %v3340
  %v5461 = vunpack.c.l.b16 %v3341
  %v5462 = vunpack.c.l.b16 %v3342
  %v5463 = vunpack.c.l.b16 %v3343
  %v5464 = vunpack.c.l.b16 %v3344
  %v5465 = vunpack.c.l.b16 %v3345
  %v5466 = vunpack.c.l.b16 %v3346
  %v5467 = vunpack.c.l.b16 %v3347
  %v5468 = vunpack.c.l.b16 %v3348
  %v5469 = vunpack.c.l.b16 %v3349
  %v5470 = vunpack.c.l.b16 %v3350
  %v5471 = vunpack.c.l.b16 %v3351
  %v5472 = vunpack.c.l.b16 %v3352
  %v5473 = vunpack.c.l.b16 %v3353
  %v5474 = vunpack.c.l.b16 %v3354
  %v5475 = vunpack.c.l.b16 %v3355
  %v5476 = vunpack.c.l.b16 %v3356
  %v5477 = vunpack.c.l.b16 %v3357
  %v5478 = vunpack.c.l.b16 %v3358
  %v5479 = vunpack.c.l.b16 %v3359
  %v5480 = vunpack.c.l.b16 %v3360
  %v5481 = vunpack.c.l.b16 %v3361
  %v5482 = vunpack.c.l.b16 %v3362
  %v5483 = vunpack.c.l.b16 %v3363
  %v5484 = vunpack.c.l.b16 %v3364
  %v5485 = vunpack.c.l.b16 %v3365
  %v5486 = vunpack.c.l.b16 %v3366
  %v5487 = vunpack.c.l.b16 %v3367
  %v5488 = vunpack.c.l.b16 %v3368
  %v5489 = vunpack.c.l.b16 %v3369
  %v5490 = vunpack.c.l.b16 %v3370
  %v5491 = vunpack.c.l.b16 %v3371
  %v5492 = vunpack.c.l.b16 %v3372
  %v5493 = vunpack.c.l.b16 %v3373
  %v5494 = vunpack.c.l.b16 %v3374
  %v5495 = vunpack.c.l.b16 %v3375
  %v5496 = vunpack.c.l.b16 %v3376
  %v5497 = vunpack.c.l.b16 %v3377
  %v5498 = vunpack.c.l.b16 %v3378
  %v5499 = vunpack.c.l.b16 %v3379
  %v5500 = vunpack.c.l.b16 %v3380
  %v5501 = vunpack.c.l.b16 %v3381
  %v5502 = vunpack.c.l.b16 %v3382
  %v5503 = vunpack.c.l.b16 %v3383
  %v5504 = vunpack.c.l.b16 %v3384
  %v5505 = vunpack.c.l.b16 %v3385
  %v5506 = vunpack.c.l.b16 %v3386
  %v5507 = vunpack.c.l.b16 %v3387
  %v5508 = vunpack.c.l.b16 %v3388
  %v5509 = vunpack.c.l.b16 %v3389
  %v5510 = vunpack.c.l.b16 %v3390
  %v5511 = vunpack.c.l.b16 %v3391
  %v5512 = vunpack.c.l.b16 %v3392
  %v5513 = vunpack.c.l.b16 %v3393
  %v5514 = vunpack.c.l.b16 %v3394
  %v5515 = vunpack.c.l.b16 %v3395
  %v5516 = vunpack.c.l.b16 %v3396
  %v5517 = vunpack.c.l.b16 %v3397
  %v5518 = vunpack.c.l.b16 %v3398
  %v5519 = vunpack.c.l.b16 %v3399
  %v5520 = vunpack.c.l.b16 %v3400
  %v5521 = vunpack.c.l.b16 %v3401
  %v5522 = vunpack.c.l.b16 %v3402
  %v5523 = vunpack.c.l.b16 %v3403
  %v5524 = vunpack.c.l.b16 %v3404
  %v5525 = vunpack.c.l.b16 %v3405
  %v5526 = vunpack.c.l.b16 %v3406
  %v5527 = vunpack.c.l.b16 %v3407
  %v5528 = vunpack.c.l.b16 %v3408
  %v5529 = vunpack.c.l.b16 %v3409
  %v5530 = vunpack.c.l.b16 %v3410
  %v5531 = vunpack.c.l.b16 %v3411
  %v5532 = vunpack.c.l.b16 %v3412
  %v5533 = vunpack.c.l.b16 %v3413
  %v5534 = vunpack.c.l.b16 %v3414
  %v5535 = vunpack.c.l.b16 %v3415
  %v5536 = vunpack.c.l.b16 %v3416
  %v5537 = vunpack.c.l.b16 %v3417
  %v5538 = vunpack.c.l.b16 %v3418
  %v5539 = vunpack.c.l.b16 %v3419
  %v5540 = vunpack.c.l.b16 %v3420
  %v5541 = vunpack.c.l.b16 %v3421
  %v5542 = vunpack.c.l.b16 %v3422
  %v5543 = vunpack.c.l.b16 %v3423
  %v5544 = vunpack.c.l.b16 %v3424
  %v5545 = vunpack.c.l.b16 %v3425
  %v5546 = vunpack.c.l.b16 %v3426
  %v5547 = vunpack.c.l.b16 %v3427
  %v5548 = vunpack.c.l.b16 %v3428
  %v5549 = vunpack.c.l.b16 %v3429
  %v5550 = vunpack.c.l.b16 %v3430
  %v5551 = vunpack.c.l.b16 %v3431
  %v5552 = vunpack.c.l.b16 %v3432
  %v5553 = vunpack.c.l.b16 %v3433
  %v5554 = vunpack.c.l.b16 %v3434
  %v5555 = vunpack.c.l.b16 %v3435
  %v5556 = vunpack.c.l.b16 %v3436
  %v5557 = vunpack.c.l.b16 %v3437
  %v5558 = vunpack.c.l.b16 %v3438
  %v5559 = vunpack.c.l.b16 %v3439
  %v5560 = vunpack.c.l.b16 %v3440
  %v5561 = vunpack.c.l.b16 %v3441
  %v5562 = vunpack.c.l.b16 %v3442
  %v5563 = vunpack.c.l.b16 %v3443
  %v5564 = vunpack.c.l.b16 %v3444
  %v5565 = vunpack.c.l.b16 %v3445
  %v5566 = vunpack.c.l.b16 %v3446
  %v5567 = vunpack.c.l.b16 %v3447
  %v5568 = vunpack.c.l.b16 %v3448
  %v5569 = vunpack.c.l.b16 %v3449
  %v5570 = vunpack.c.l.b16 %v3450
  %v5571 = vunpack.c.l.b16 %v3451
  %v5572 = vunpack.c.l.b16 %v3452
  %v5573 = vunpack.c.l.b16 %v3453
  %v5574 = vunpack.c.l.b16 %v3454
  %v5575 = vunpack.c.l.b16 %v3455
  %v5576 = vunpack.c.l.b16 %v3456
  %v5577 = vunpack.c.l.b16 %v3457
  %v5578 = vunpack.c.l.b16 %v3458
  %v5579 = vunpack.c.l.b16 %v3459
  %v5580 = vunpack.c.l.b16 %v3460
  %v5581 = vunpack.c.l.b16 %v3461
  %v5582 = vunpack.c.l.b16 %v3462
  %v5583 = vunpack.c.l.b16 %v3463
  %v5584 = vunpack.c.l.b16 %v3464
  %v5585 = vunpack.c.l.b16 %v3465
  %v5586 = vunpack.c.l.b16 %v3466
  %v5587 = vunpack.c.l.b16 %v3467
  %v5588 = vunpack.c.l.b16 %v3468
  %v5589 = vunpack.c.l.b16 %v3469
  %v5590 = vunpack.c.l.b16 %v3470
  %v5591 = vunpack.c.l.b16 %v3471
  %v5592 = vunpack.c.l.b16 %v3472
  %v5593 = vunpack.c.l.b16 %v3473
  %v5594 = vunpack.c.l.b16 %v3474
  %v5595 = vunpack.c.l.b16 %v3475
  %v5596 = vunpack.c.l.b16 %v3476
  %v5597 = vunpack.c.l.b16 %v3477
  %v5598 = vunpack.c.l.b16 %v3478
  %v5599 = vunpack.c.l.b16 %v3479
  %v5600 = vunpack.c.l.b16 %v3480
  %v5601 = vunpack.c.l.b16 %v3481
  %v5602 = vunpack.c.l.b16 %v3482
  %v5603 = vunpack.c.l.b16 %v3483
  %v5604 = vunpack.c.l.b16 %v3484
  %v5605 = vunpack.c.l.b16 %v3485
  %v5606 = vunpack.c.l.b16 %v3486
  %v5607 = vunpack.c.l.b16 %v3487
  %v5608 = vunpack.c.l.b16 %v3488
  %v5609 = vunpack.c.l.b16 %v3489
  %v5610 = vunpack.c.l.b16 %v3490
  %v5611 = vunpack.c.l.b16 %v3491
  %v5612 = vunpack.c.l.b16 %v3492
  %v5613 = vunpack.c.l.b16 %v3493
  %v5614 = vunpack.c.l.b16 %v3494
  %v5615 = vunpack.c.l.b16 %v3495
  %v5616 = vunpack.c.l.b16 %v3496
  %v5617 = vunpack.c.l.b16 %v3497
  %v5618 = vunpack.c.l.b16 %v3498
  %v5619 = vunpack.c.l.b16 %v3499
  %v5620 = vpack.c.b16 %v5365, %v5364
  %v5621 = vpack.c.b16 %v5367, %v5366
  %v5622 = vpack.c.b16 %v5369, %v5368
  %v5623 = vpack.c.b16 %v5371, %v5370
  %v5624 = vpack.c.b16 %v5373, %v5372
  %v5625 = vpack.c.b16 %v5375, %v5374
  %v5626 = vpack.c.b16 %v5377, %v5376
  %v5627 = vpack.c.b16 %v5379, %v5378
  %v5628 = vpack.c.b16 %v5381, %v5380
  %v5629 = vpack.c.b16 %v5383, %v5382
  %v5630 = vpack.c.b16 %v5385, %v5384
  %v5631 = vpack.c.b16 %v5387, %v5386
  %v5632 = vpack.c.b16 %v5389, %v5388
  %v5633 = vpack.c.b16 %v5391, %v5390
  %v5634 = vpack.c.b16 %v5393, %v5392
  %v5635 = vpack.c.b16 %v5395, %v5394
  %v5636 = vpack.c.b16 %v5397, %v5396
  %v5637 = vpack.c.b16 %v5399, %v5398
  %v5638 = vpack.c.b16 %v5401, %v5400
  %v5639 = vpack.c.b16 %v5403, %v5402
  %v5640 = vpack.c.b16 %v5405, %v5404
  %v5641 = vpack.c.b16 %v5407, %v5406
  %v5642 = vpack.c.b16 %v5409, %v5408
  %v5643 = vpack.c.b16 %v5411, %v5410
  %v5644 = vpack.c.b16 %v5413, %v5412
  %v5645 = vpack.c.b16 %v5415, %v5414
  %v5646 = vpack.c.b16 %v5417, %v5416
  %v5647 = vpack.c.b16 %v5419, %v5418
  %v5648 = vpack.c.b16 %v5421, %v5420
  %v5649 = vpack.c.b16 %v5423, %v5422
  %v5650 = vpack.c.b16 %v5425, %v5424
  %v5651 = vpack.c.b16 %v5427, %v5426
  %v5652 = vpack.c.b16 %v5429, %v5428
  %v5653 = vpack.c.b16 %v5431, %v5430
  %v5654 = vpack.c.b16 %v5433, %v5432
  %v5655 = vpack.c.b16 %v5435, %v5434
  %v5656 = vpack.c.b16 %v5437, %v5436
  %v5657 = vpack.c.b16 %v5439, %v5438
  %v5658 = vpack.c.b16 %v5441, %v5440
  %v5659 = vpack.c.b16 %v5443, %v5442
  %v5660 = vpack.c.b16 %v5445, %v5444
  %v5661 = vpack.c.b16 %v5447, %v5446
  %v5662 = vpack.c.b16 %v5449, %v5448
  %v5663 = vpack.c.b16 %v5451, %v5450
  %v5664 = vpack.c.b16 %v5453, %v5452
  %v5665 = vpack.c.b16 %v5455, %v5454
  %v5666 = vpack.c.b16 %v5457, %v5456
  %v5667 = vpack.c.b16 %v5459, %v5458
  %v5668 = vpack.c.b16 %v5461, %v5460
  %v5669 = vpack.c.b16 %v5463, %v5462
  %v5670 = vpack.c.b16 %v5465, %v5464
  %v5671 = vpack.c.b16 %v5467, %v5466
  %v5672 = vpack.c.b16 %v5469, %v5468
  %v5673 = vpack.c.b16 %v5471, %v5470
  %v5674 = vpack.c.b16 %v5473, %v5472
  %v5675 = vpack.c.b16 %v5475, %v5474
  %v5676 = vpack.c.b16 %v5477, %v5476
  %v5677 = vpack.c.b16 %v5479, %v5478
  %v5678 = vpack.c.b16 %v5481, %v5480
  %v5679 = vpack.c.b16 %v5483, %v5482
  %v5680 = vpack.c.b16 %v5485, %v5484
  %v5681 = vpack.c.b16 %v5487, %v5486
  %v5682 = vpack.c.b16 %v5489, %v5488
  %v5683 = vpack.c.b16 %v5491, %v5490
  %v5684 = vpack.c.b16 %v5493, %v5492
  %v5685 = vpack.c.b16 %v5495, %v5494
  %v5686 = vpack.c.b16 %v5497, %v5496
  %v5687 = vpack.c.b16 %v5499, %v5498
  %v5688 = vpack.c.b16 %v5501, %v5500
  %v5689 = vpack.c.b16 %v5503, %v5502
  %v5690 = vpack.c.b16 %v5505, %v5504
  %v5691 = vpack.c.b16 %v5507, %v5506
  %v5692 = vpack.c.b16 %v5509, %v5508
  %v5693 = vpack.c.b16 %v5511, %v5510
  %v5694 = vpack.c.b16 %v5513, %v5512
  %v5695 = vpack.c.b16 %v5515, %v5514
  %v5696 = vpack.c.b16 %v5517, %v5516
  %v5697 = vpack.c.b16 %v5519, %v5518
  %v5698 = vpack.c.b16 %v5521, %v5520
  %v5699 = vpack.c.b16 %v5523, %v5522
  %v5700 = vpack.c.b16 %v5525, %v5524
  %v5701 = vpack.c.b16 %v5527, %v5526
  %v5702 = vpack.c.b16 %v5529, %v5528
  %v5703 = vpack.c.b16 %v5531, %v5530
  %v5704 = vpack.c.b16 %v5533, %v5532
  %v5705 = vpack.c.b16 %v5535, %v5534
  %v5706 = vpack.c.b16 %v5537, %v5536
  %v5707 = vpack.c.b16 %v5539, %v5538
  %v5708 = vpack.c.b16 %v5541, %v5540
  %v5709 = vpack.c.b16 %v5543, %v5542
  %v5710 = vpack.c.b16 %v5545, %v5544
  %v5711 = vpack.c.b16 %v5547, %v5546
  %v5712 = vpack.c.b16 %v5549, %v5548
  %v5713 = vpack.c.b16 %v5551, %v5550
  %v5714 = vpack.c.b16 %v5553, %v5552
  %v5715 = vpack.c.b16 %v5555, %v5554
  %v5716 = vpack.c.b16 %v5557, %v5556
  %v5717 = vpack.c.b16 %v5559, %v5558
  %v5718 = vpack.c.b16 %v5561, %v5560
  %v5719 = vpack.c.b16 %v5563, %v5562
  %v5720 = vpack.c.b16 %v5565, %v5564
  %v5721 = vpack.c.b16 %v5567, %v5566
  %v5722 = vpack.c.b16 %v5569, %v5568
  %v5723 = vpack.c.b16 %v5571, %v5570
  %v5724 = vpack.c.b16 %v5573, %v5572
  %v5725 = vpack.c.b16 %v5575, %v5574
  %v5726 = vpack.c.b16 %v5577, %v5576
  %v5727 = vpack.c.b16 %v5579, %v5578
  %v5728 = vpack.c.b16 %v5581, %v5580
  %v5729 = vpack.c.b16 %v5583, %v5582
  %v5730 = vpack.c.b16 %v5585, %v5584
  %v5731 = vpack.c.b16 %v5587, %v5586
  %v5732 = vpack.c.b16 %v5589, %v5588
  %v5733 = vpack.c.b16 %v5591, %v5590
  %v5734 = vpack.c.b16 %v5593, %v5592
  %v5735 = vpack.c.b16 %v5595, %v5594
  %v5736 = vpack.c.b16 %v5597, %v5596
  %v5737 = vpack.c.b16 %v5599, %v5598
  %v5738 = vpack.c.b16 %v5601, %v5600
  %v5739 = vpack.c.b16 %v5603, %v5602
  %v5740 = vpack.c.b16 %v5605, %v5604
  %v5741 = vpack.c.b16 %v5607, %v5606
  %v5742 = vpack.c.b16 %v5609, %v5608
  %v5743 = vpack.c.b16 %v5611, %v5610
  %v5744 = vpack.c.b16 %v5613, %v5612
  %v5745 = vpack.c.b16 %v5615, %v5614
  %v5746 = vpack.c.b16 %v5617, %v5616
  %v5747 = vpack.c.b16 %v5619, %v5618
  %5876 = vmatpush.bf16.msra.mxu0 %v5627
  %5877 = vmatpush.bf16.msra.mxu0 %v5626
  %5878 = vmatpush.bf16.msra.mxu0 %v5625
  %5879 = vmatpush.bf16.msra.mxu0 %v5624
  %5880 = vmatpush.bf16.msra.mxu0 %v5623
  %5881 = vmatpush.bf16.msra.mxu0 %v5622
  %5882 = vmatpush.bf16.msra.mxu0 %v5621
  %5883 = vmatpush.bf16.msra.mxu0 %v5620
  %5884 = vmatmul.bf16.gmra.mxu0 %v5075
  %v5885 = vpop.f32.mrf.mxu0
  %v5886 = vadd.f32 %v5107, %v5885
  %v5887 = vpop.f32.mrf.mxu0
  %v5888 = vadd.f32 %v5107, %v5887
  %5889 = vmatmul.bf16.gmra.mxu0 %v5091
  %v5890 = vpop.f32.mrf.mxu0
  %v5891 = vadd.f32 %v5107, %v5890
  %v5892 = vpop.f32.mrf.mxu0
  %v5893 = vadd.f32 %v5107, %v5892
  %5894 = vdwg.mxu0
  %5895 = vmatpush.bf16.msra.mxu0 %v5635
  %5896 = vmatpush.bf16.msra.mxu0 %v5634
  %5897 = vmatpush.bf16.msra.mxu0 %v5633
  %5898 = vmatpush.bf16.msra.mxu0 %v5632
  %5899 = vmatpush.bf16.msra.mxu0 %v5631
  %5900 = vmatpush.bf16.msra.mxu0 %v5630
  %5901 = vmatpush.bf16.msra.mxu0 %v5629
  %5902 = vmatpush.bf16.msra.mxu0 %v5628
  %5903 = vmatmul.bf16.gmra.mxu0 %v5076
  %v5904 = vpop.f32.mrf.mxu0
  %v5905 = vadd.f32 %v5886, %v5904
  %v5906 = vpop.f32.mrf.mxu0
  %v5907 = vadd.f32 %v5888, %v5906
  %5908 = vmatmul.bf16.gmra.mxu0 %v5092
  %v5909 = vpop.f32.mrf.mxu0
  %v5910 = vadd.f32 %v5891, %v5909
  %v5911 = vpop.f32.mrf.mxu0
  %v5912 = vadd.f32 %v5893, %v5911
  %5913 = vdwg.mxu0
  %5914 = vmatpush.bf16.msra.mxu0 %v5643
  %5915 = vmatpush.bf16.msra.mxu0 %v5642
  %5916 = vmatpush.bf16.msra.mxu0 %v5641
  %5917 = vmatpush.bf16.msra.mxu0 %v5640
  %5918 = vmatpush.bf16.msra.mxu0 %v5639
  %5919 = vmatpush.bf16.msra.mxu0 %v5638
  %5920 = vmatpush.bf16.msra.mxu0 %v5637
  %5921 = vmatpush.bf16.msra.mxu0 %v5636
  %5922 = vmatmul.bf16.gmra.mxu0 %v5077
  %v5923 = vpop.f32.mrf.mxu0
  %v5924 = vadd.f32 %v5905, %v5923
  %v5925 = vpop.f32.mrf.mxu0
  %v5926 = vadd.f32 %v5907, %v5925
  %5927 = vmatmul.bf16.gmra.mxu0 %v5093
  %v5928 = vpop.f32.mrf.mxu0
  %v5929 = vadd.f32 %v5910, %v5928
  %v5930 = vpop.f32.mrf.mxu0
  %v5931 = vadd.f32 %v5912, %v5930
  %5932 = vdwg.mxu0
  %5933 = vmatpush.bf16.msra.mxu0 %v5651
  %5934 = vmatpush.bf16.msra.mxu0 %v5650
  %5935 = vmatpush.bf16.msra.mxu0 %v5649
  %5936 = vmatpush.bf16.msra.mxu0 %v5648
  %5937 = vmatpush.bf16.msra.mxu0 %v5647
  %5938 = vmatpush.bf16.msra.mxu0 %v5646
  %5939 = vmatpush.bf16.msra.mxu0 %v5645
  %5940 = vmatpush.bf16.msra.mxu0 %v5644
  %5941 = vmatmul.bf16.gmra.mxu0 %v5078
  %v5942 = vpop.f32.mrf.mxu0
  %v5943 = vadd.f32 %v5924, %v5942
  %v5944 = vpop.f32.mrf.mxu0
  %v5945 = vadd.f32 %v5926, %v5944
  %5946 = vmatmul.bf16.gmra.mxu0 %v5094
  %v5947 = vpop.f32.mrf.mxu0
  %v5948 = vadd.f32 %v5929, %v5947
  %v5949 = vpop.f32.mrf.mxu0
  %v5950 = vadd.f32 %v5931, %v5949
  %5951 = vdwg.mxu0
  %5952 = vmatpush.bf16.msra.mxu0 %v5659
  %5953 = vmatpush.bf16.msra.mxu0 %v5658
  %5954 = vmatpush.bf16.msra.mxu0 %v5657
  %5955 = vmatpush.bf16.msra.mxu0 %v5656
  %5956 = vmatpush.bf16.msra.mxu0 %v5655
  %5957 = vmatpush.bf16.msra.mxu0 %v5654
  %5958 = vmatpush.bf16.msra.mxu0 %v5653
  %5959 = vmatpush.bf16.msra.mxu0 %v5652
  %5960 = vmatmul.bf16.gmra.mxu0 %v5079
  %v5961 = vpop.f32.mrf.mxu0
  %v5962 = vadd.f32 %v5943, %v5961
  %v5963 = vpop.f32.mrf.mxu0
  %v5964 = vadd.f32 %v5945, %v5963
  %5965 = vmatmul.bf16.gmra.mxu0 %v5095
  %v5966 = vpop.f32.mrf.mxu0
  %v5967 = vadd.f32 %v5948, %v5966
  %v5968 = vpop.f32.mrf.mxu0
  %v5969 = vadd.f32 %v5950, %v5968
  %5970 = vdwg.mxu0
  %5971 = vmatpush.bf16.msra.mxu0 %v5667
  %5972 = vmatpush.bf16.msra.mxu0 %v5666
  %5973 = vmatpush.bf16.msra.mxu0 %v5665
  %5974 = vmatpush.bf16.msra.mxu0 %v5664
  %5975 = vmatpush.bf16.msra.mxu0 %v5663
  %5976 = vmatpush.bf16.msra.mxu0 %v5662
  %5977 = vmatpush.bf16.msra.mxu0 %v5661
  %5978 = vmatpush.bf16.msra.mxu0 %v5660
  %5979 = vmatmul.bf16.gmra.mxu0 %v5080
  %v5980 = vpop.f32.mrf.mxu0
  %v5981 = vadd.f32 %v5962, %v5980
  %v5982 = vpop.f32.mrf.mxu0
  %v5983 = vadd.f32 %v5964, %v5982
  %5984 = vmatmul.bf16.gmra.mxu0 %v5096
  %v5985 = vpop.f32.mrf.mxu0
  %v5986 = vadd.f32 %v5967, %v5985
  %v5987 = vpop.f32.mrf.mxu0
  %v5988 = vadd.f32 %v5969, %v5987
  %5989 = vdwg.mxu0
  %5990 = vmatpush.bf16.msra.mxu0 %v5675
  %5991 = vmatpush.bf16.msra.mxu0 %v5674
  %5992 = vmatpush.bf16.msra.mxu0 %v5673
  %5993 = vmatpush.bf16.msra.mxu0 %v5672
  %5994 = vmatpush.bf16.msra.mxu0 %v5671
  %5995 = vmatpush.bf16.msra.mxu0 %v5670
  %5996 = vmatpush.bf16.msra.mxu0 %v5669
  %5997 = vmatpush.bf16.msra.mxu0 %v5668
  %5998 = vmatmul.bf16.gmra.mxu0 %v5081
  %v5999 = vpop.f32.mrf.mxu0
  %v6000 = vadd.f32 %v5981, %v5999
  %v6001 = vpop.f32.mrf.mxu0
  %v6002 = vadd.f32 %v5983, %v6001
  %6003 = vmatmul.bf16.gmra.mxu0 %v5097
  %v6004 = vpop.f32.mrf.mxu0
  %v6005 = vadd.f32 %v5986, %v6004
  %v6006 = vpop.f32.mrf.mxu0
  %v6007 = vadd.f32 %v5988, %v6006
  %6008 = vdwg.mxu0
  %6009 = vmatpush.bf16.msra.mxu0 %v5683
  %6010 = vmatpush.bf16.msra.mxu0 %v5682
  %6011 = vmatpush.bf16.msra.mxu0 %v5681
  %6012 = vmatpush.bf16.msra.mxu0 %v5680
  %6013 = vmatpush.bf16.msra.mxu0 %v5679
  %6014 = vmatpush.bf16.msra.mxu0 %v5678
  %6015 = vmatpush.bf16.msra.mxu0 %v5677
  %6016 = vmatpush.bf16.msra.mxu0 %v5676
  %6017 = vmatmul.bf16.gmra.mxu0 %v5082
  %v6018 = vpop.f32.mrf.mxu0
  %v6019 = vadd.f32 %v6000, %v6018
  %v6020 = vpop.f32.mrf.mxu0
  %v6021 = vadd.f32 %v6002, %v6020
  %6022 = vmatmul.bf16.gmra.mxu0 %v5098
  %v6023 = vpop.f32.mrf.mxu0
  %v6024 = vadd.f32 %v6005, %v6023
  %v6025 = vpop.f32.mrf.mxu0
  %v6026 = vadd.f32 %v6007, %v6025
  %6027 = vdwg.mxu0
  %6028 = vmatpush.bf16.msra.mxu0 %v5691
  %6029 = vmatpush.bf16.msra.mxu0 %v5690
  %6030 = vmatpush.bf16.msra.mxu0 %v5689
  %6031 = vmatpush.bf16.msra.mxu0 %v5688
  %6032 = vmatpush.bf16.msra.mxu0 %v5687
  %6033 = vmatpush.bf16.msra.mxu0 %v5686
  %6034 = vmatpush.bf16.msra.mxu0 %v5685
  %6035 = vmatpush.bf16.msra.mxu0 %v5684
  %6036 = vmatmul.bf16.gmra.mxu0 %v5083
  %v6037 = vpop.f32.mrf.mxu0
  %v6038 = vadd.f32 %v6019, %v6037
  %v6039 = vpop.f32.mrf.mxu0
  %v6040 = vadd.f32 %v6021, %v6039
  %6041 = vmatmul.bf16.gmra.mxu0 %v5099
  %v6042 = vpop.f32.mrf.mxu0
  %v6043 = vadd.f32 %v6024, %v6042
  %v6044 = vpop.f32.mrf.mxu0
  %v6045 = vadd.f32 %v6026, %v6044
  %6046 = vdwg.mxu0
  %6047 = vmatpush.bf16.msra.mxu0 %v5699
  %6048 = vmatpush.bf16.msra.mxu0 %v5698
  %6049 = vmatpush.bf16.msra.mxu0 %v5697
  %6050 = vmatpush.bf16.msra.mxu0 %v5696
  %6051 = vmatpush.bf16.msra.mxu0 %v5695
  %6052 = vmatpush.bf16.msra.mxu0 %v5694
  %6053 = vmatpush.bf16.msra.mxu0 %v5693
  %6054 = vmatpush.bf16.msra.mxu0 %v5692
  %6055 = vmatmul.bf16.gmra.mxu0 %v5084
  %v6056 = vpop.f32.mrf.mxu0
  %v6057 = vadd.f32 %v6038, %v6056
  %v6058 = vpop.f32.mrf.mxu0
  %v6059 = vadd.f32 %v6040, %v6058
  %6060 = vmatmul.bf16.gmra.mxu0 %v5100
  %v6061 = vpop.f32.mrf.mxu0
  %v6062 = vadd.f32 %v6043, %v6061
  %v6063 = vpop.f32.mrf.mxu0
  %v6064 = vadd.f32 %v6045, %v6063
  %6065 = vdwg.mxu0
  %6066 = vmatpush.bf16.msra.mxu0 %v5707
  %6067 = vmatpush.bf16.msra.mxu0 %v5706
  %6068 = vmatpush.bf16.msra.mxu0 %v5705
  %6069 = vmatpush.bf16.msra.mxu0 %v5704
  %6070 = vmatpush.bf16.msra.mxu0 %v5703
  %6071 = vmatpush.bf16.msra.mxu0 %v5702
  %6072 = vmatpush.bf16.msra.mxu0 %v5701
  %6073 = vmatpush.bf16.msra.mxu0 %v5700
  %6074 = vmatmul.bf16.gmra.mxu0 %v5085
  %v6075 = vpop.f32.mrf.mxu0
  %v6076 = vadd.f32 %v6057, %v6075
  %v6077 = vpop.f32.mrf.mxu0
  %v6078 = vadd.f32 %v6059, %v6077
  %6079 = vmatmul.bf16.gmra.mxu0 %v5101
  %v6080 = vpop.f32.mrf.mxu0
  %v6081 = vadd.f32 %v6062, %v6080
  %v6082 = vpop.f32.mrf.mxu0
  %v6083 = vadd.f32 %v6064, %v6082
  %6084 = vdwg.mxu0
  %6085 = vmatpush.bf16.msra.mxu0 %v5715
  %6086 = vmatpush.bf16.msra.mxu0 %v5714
  %6087 = vmatpush.bf16.msra.mxu0 %v5713
  %6088 = vmatpush.bf16.msra.mxu0 %v5712
  %6089 = vmatpush.bf16.msra.mxu0 %v5711
  %6090 = vmatpush.bf16.msra.mxu0 %v5710
  %6091 = vmatpush.bf16.msra.mxu0 %v5709
  %6092 = vmatpush.bf16.msra.mxu0 %v5708
  %6093 = vmatmul.bf16.gmra.mxu0 %v5086
  %v6094 = vpop.f32.mrf.mxu0
  %v6095 = vadd.f32 %v6076, %v6094
  %v6096 = vpop.f32.mrf.mxu0
  %v6097 = vadd.f32 %v6078, %v6096
  %6098 = vmatmul.bf16.gmra.mxu0 %v5102
  %v6099 = vpop.f32.mrf.mxu0
  %v6100 = vadd.f32 %v6081, %v6099
  %v6101 = vpop.f32.mrf.mxu0
  %v6102 = vadd.f32 %v6083, %v6101
  %6103 = vdwg.mxu0
  %6104 = vmatpush.bf16.msra.mxu0 %v5723
  %6105 = vmatpush.bf16.msra.mxu0 %v5722
  %6106 = vmatpush.bf16.msra.mxu0 %v5721
  %6107 = vmatpush.bf16.msra.mxu0 %v5720
  %6108 = vmatpush.bf16.msra.mxu0 %v5719
  %6109 = vmatpush.bf16.msra.mxu0 %v5718
  %6110 = vmatpush.bf16.msra.mxu0 %v5717
  %6111 = vmatpush.bf16.msra.mxu0 %v5716
  %6112 = vmatmul.bf16.gmra.mxu0 %v5087
  %v6113 = vpop.f32.mrf.mxu0
  %v6114 = vadd.f32 %v6095, %v6113
  %v6115 = vpop.f32.mrf.mxu0
  %v6116 = vadd.f32 %v6097, %v6115
  %6117 = vmatmul.bf16.gmra.mxu0 %v5103
  %v6118 = vpop.f32.mrf.mxu0
  %v6119 = vadd.f32 %v6100, %v6118
  %v6120 = vpop.f32.mrf.mxu0
  %v6121 = vadd.f32 %v6102, %v6120
  %6122 = vdwg.mxu0
  %6123 = vmatpush.bf16.msra.mxu0 %v5731
  %6124 = vmatpush.bf16.msra.mxu0 %v5730
  %6125 = vmatpush.bf16.msra.mxu0 %v5729
  %6126 = vmatpush.bf16.msra.mxu0 %v5728
  %6127 = vmatpush.bf16.msra.mxu0 %v5727
  %6128 = vmatpush.bf16.msra.mxu0 %v5726
  %6129 = vmatpush.bf16.msra.mxu0 %v5725
  %6130 = vmatpush.bf16.msra.mxu0 %v5724
  %6131 = vmatmul.bf16.gmra.mxu0 %v5088
  %v6132 = vpop.f32.mrf.mxu0
  %v6133 = vadd.f32 %v6114, %v6132
  %v6134 = vpop.f32.mrf.mxu0
  %v6135 = vadd.f32 %v6116, %v6134
  %6136 = vmatmul.bf16.gmra.mxu0 %v5104
  %v6137 = vpop.f32.mrf.mxu0
  %v6138 = vadd.f32 %v6119, %v6137
  %v6139 = vpop.f32.mrf.mxu0
  %v6140 = vadd.f32 %v6121, %v6139
  %6141 = vdwg.mxu0
  %6142 = vmatpush.bf16.msra.mxu0 %v5739
  %6143 = vmatpush.bf16.msra.mxu0 %v5738
  %6144 = vmatpush.bf16.msra.mxu0 %v5737
  %6145 = vmatpush.bf16.msra.mxu0 %v5736
  %6146 = vmatpush.bf16.msra.mxu0 %v5735
  %6147 = vmatpush.bf16.msra.mxu0 %v5734
  %6148 = vmatpush.bf16.msra.mxu0 %v5733
  %6149 = vmatpush.bf16.msra.mxu0 %v5732
  %6150 = vmatmul.bf16.gmra.mxu0 %v5089
  %v6151 = vpop.f32.mrf.mxu0
  %v6152 = vadd.f32 %v6133, %v6151
  %v6153 = vpop.f32.mrf.mxu0
  %v6154 = vadd.f32 %v6135, %v6153
  %6155 = vmatmul.bf16.gmra.mxu0 %v5105
  %v6156 = vpop.f32.mrf.mxu0
  %v6157 = vadd.f32 %v6138, %v6156
  %v6158 = vpop.f32.mrf.mxu0
  %v6159 = vadd.f32 %v6140, %v6158
  %6160 = vdwg.mxu0
  %6161 = vmatpush.bf16.msra.mxu0 %v5747
  %6162 = vmatpush.bf16.msra.mxu0 %v5746
  %6163 = vmatpush.bf16.msra.mxu0 %v5745
  %6164 = vmatpush.bf16.msra.mxu0 %v5744
  %6165 = vmatpush.bf16.msra.mxu0 %v5743
  %6166 = vmatpush.bf16.msra.mxu0 %v5742
  %6167 = vmatpush.bf16.msra.mxu0 %v5741
  %6168 = vmatpush.bf16.msra.mxu0 %v5740
  %6169 = vmatmul.bf16.gmra.mxu0 %v5090
  %v6170 = vpop.f32.mrf.mxu0
  %v6171 = vadd.f32 %v6152, %v6170
  %v6172 = vpop.f32.mrf.mxu0
  %v6173 = vadd.f32 %v6154, %v6172
  %6174 = vmatmul.bf16.gmra.mxu0 %v5106
  %v6175 = vpop.f32.mrf.mxu0
  %v6176 = vadd.f32 %v6157, %v6175
  %v6177 = vpop.f32.mrf.mxu0
  %v6178 = vadd.f32 %v6159, %v6177
  %6179 = vdwg.mxu0
  %v6180 = vadd.f32 %v4519, %v6171
  %v6181 = vadd.f32 %v4520, %v6173
  %v6182 = vadd.f32 %v4521, %v6176
  %v6183 = vadd.f32 %v4522, %v6178
  %v6184 = vsel %vm439, %v6180, 0.0
  %6185 = vadd.xlane.f32.xlu0 %v6184
  %v6186 = vpop.xlane.xlu0 %6185
  %v6187 = vsel %vm439, %v6181, 0.0
  %6188 = vadd.xlane.f32.xlu0 %v6187
  %v6189 = vpop.xlane.xlu0 %6188
  %v6190 = vsel %vm439, %v6182, 0.0
  %6191 = vadd.xlane.f32.xlu0 %v6190
  %v6192 = vpop.xlane.xlu0 %6191
  %v6193 = vsel %vm439, %v6183, 0.0
  %6194 = vadd.xlane.f32.xlu0 %v6193
  %v6195 = vpop.xlane.xlu0 %6194
  %v6196 = vmul.f32 %v6186, %v1354
  %v6197 = vmul.f32 %v6189, %v1354
  %v6198 = vmul.f32 %v6192, %v1354
  %v6199 = vmul.f32 %v6195, %v1354
  %v6200 = vsub.f32 %v6180, %v6196
  %v6201 = vsub.f32 %v6181, %v6197
  %v6202 = vsub.f32 %v6182, %v6198
  %v6203 = vsub.f32 %v6183, %v6199
  %v6204 = vmul.f32 %v6200, %v6200
  %v6205 = vmul.f32 %v6201, %v6201
  %v6206 = vmul.f32 %v6202, %v6202
  %v6207 = vmul.f32 %v6203, %v6203
  %v6208 = vsel %vm439, %v6204, 0.0
  %6209 = vadd.xlane.f32.xlu0 %v6208
  %v6210 = vpop.xlane.xlu0 %6209
  %v6211 = vsel %vm439, %v6205, 0.0
  %6212 = vadd.xlane.f32.xlu0 %v6211
  %v6213 = vpop.xlane.xlu0 %6212
  %v6214 = vsel %vm439, %v6206, 0.0
  %6215 = vadd.xlane.f32.xlu0 %v6214
  %v6216 = vpop.xlane.xlu0 %6215
  %v6217 = vsel %vm439, %v6207, 0.0
  %6218 = vadd.xlane.f32.xlu0 %v6217
  %v6219 = vpop.xlane.xlu0 %6218
  %v6220 = vmul.f32 %v6210, %v1354
  %v6221 = vmul.f32 %v6213, %v1354
  %v6222 = vmul.f32 %v6216, %v1354
  %v6223 = vmul.f32 %v6219, %v1354
  %v6224 = vadd.f32 %v6220, 1e-05
  %v6225 = vadd.f32 %v6221, 1e-05
  %v6226 = vadd.f32 %v6222, 1e-05
  %v6227 = vadd.f32 %v6223, 1e-05
  %v6228 = vrsqrt.pop %v6224
  %v6229 = vmul.f32 %v6228, %v6224
  %v6230 = vmul.f32 %v6229, %v6228
  %v6231 = vmul.f32 0.5, %v6230
  %v6232 = vsub.f32 1.5, %v6231
  %v6233 = vmul.f32 %v6228, %v6232
  %vm6234 = vweird.f32 %v6224
  %vm6235 = vweird.f32 %v6228
  %vm6236 = vmor %vm6234, %vm6235
  %v6237 = vsel %vm6236, %v6228, %v6233
  %v6238 = vrsqrt.pop %v6225
  %v6239 = vmul.f32 %v6238, %v6225
  %v6240 = vmul.f32 %v6239, %v6238
  %v6241 = vmul.f32 0.5, %v6240
  %v6242 = vsub.f32 1.5, %v6241
  %v6243 = vmul.f32 %v6238, %v6242
  %vm6244 = vweird.f32 %v6225
  %vm6245 = vweird.f32 %v6238
  %vm6246 = vmor %vm6244, %vm6245
  %v6247 = vsel %vm6246, %v6238, %v6243
  %v6248 = vrsqrt.pop %v6226
  %v6249 = vmul.f32 %v6248, %v6226
  %v6250 = vmul.f32 %v6249, %v6248
  %v6251 = vmul.f32 0.5, %v6250
  %v6252 = vsub.f32 1.5, %v6251
  %v6253 = vmul.f32 %v6248, %v6252
  %vm6254 = vweird.f32 %v6226
  %vm6255 = vweird.f32 %v6248
  %vm6256 = vmor %vm6254, %vm6255
  %v6257 = vsel %vm6256, %v6248, %v6253
  %v6258 = vrsqrt.pop %v6227
  %v6259 = vmul.f32 %v6258, %v6227
  %v6260 = vmul.f32 %v6259, %v6258
  %v6261 = vmul.f32 0.5, %v6260
  %v6262 = vsub.f32 1.5, %v6261
  %v6263 = vmul.f32 %v6258, %v6262
  %vm6264 = vweird.f32 %v6227
  %vm6265 = vweird.f32 %v6258
  %vm6266 = vmor %vm6264, %vm6265
  %v6267 = vsel %vm6266, %v6258, %v6263
  %v6268 = vmul.f32 %v6200, %v6237
  %v6269 = vmul.f32 %v6201, %v6247
  %v6270 = vmul.f32 %v6202, %v6257
  %v6271 = vmul.f32 %v6203, %v6267
  %v6272 = vperm.slane %v3501, 6
  %v6273 = vmul.f32 %v6268, %v6272
  %v6274 = vmul.f32 %v6269, %v6272
  %v6275 = vmul.f32 %v6270, %v6272
  %v6276 = vmul.f32 %v6271, %v6272
  %v6277 = vperm.slane %v3501, 7
  %v6278 = vadd.f32 %v6273, %v6277
  %v6279 = vadd.f32 %v6274, %v6277
  %v6280 = vadd.f32 %v6275, %v6277
  %v6281 = vadd.f32 %v6276, %v6277
  %v6282 = vld [vmem:[%s8] sm:$0xff]
  %v6283 = vld [vmem:[%s8 + $0x8] sm:$0xff]
  %v6284 = vld [vmem:[%s8 + $0x10] sm:$0xff]
  %v6285 = vld [vmem:[%s8 + $0x18] sm:$0xff]
  %v6286 = vld [vmem:[%s8 + $0x20] sm:$0xff]
  %v6287 = vperm.slane %v6286, 0
  %v6289 = vsel %vm439, %v6278, 0
  %v6292 = vsel %vm439, %v6279, 0
  %v6295 = vsel %vm439, %v6280, 0
  %v6298 = vsel %vm439, %v6281, 0
  %6300 = vmatpush.msra.mxu0 0.0
  %6301 = vmatpush.msra.mxu0 0.0
  %6302 = vmatpush.msra.mxu0 0.0
  %6303 = vmatpush.msra.mxu0 0.0
  %6304 = vmatpush.msra.mxu0 0.0
  %6305 = vmatpush.msra.mxu0 0.0
  %6306 = vmatpush.msra.mxu0 0.0
  %6307 = vmatpush.msra.mxu0 0.0
  %6308 = vmatpush.msra.mxu0 0.0
  %6309 = vmatpush.msra.mxu0 0.0
  %6310 = vmatpush.msra.mxu0 0.0
  %6311 = vmatpush.msra.mxu0 0.0
  %6312 = vmatpush.msra.mxu0 %v6285
  %6313 = vmatpush.msra.mxu0 %v6284
  %6314 = vmatpush.msra.mxu0 %v6283
  %6315 = vmatpush.msra.mxu0 %v6282
  %6316 = vmatmul.f32.gmra.mxu0 %v6289
  %v6317 = vpop.f32.mrf.mxu0
  %v6318 = vadd.f32 %v6287, %v6317
  %6319 = vmatmul.f32.gmra.mxu0 %v6292
  %v6320 = vpop.f32.mrf.mxu0
  %v6321 = vadd.f32 %v6287, %v6320
  %6322 = vmatmul.f32.gmra.mxu0 %v6295
  %v6323 = vpop.f32.mrf.mxu0
  %v6324 = vadd.f32 %v6287, %v6323
  %6325 = vmatmul.f32.gmra.mxu0 %v6298
  %v6326 = vpop.f32.mrf.mxu0
  %v6327 = vadd.f32 %v6287, %v6326
  %6328 = vdwg.mxu0
  %vm6329 = vcmask 31744
  %v6330 = vsel %vm6329, %v6318, 0.0
  %v6331 = vsel %vm6329, %v6321, 0.0
  %v6332 = vadd.f32 %v6330, %v6331
  %v6333 = vsel %vm6329, %v6324, 0.0
  %v6334 = vadd.f32 %v6332, %v6333
  %v6335 = vsel %vm6329, %v6327, 0.0
  %v6336 = vadd.f32 %v6334, %v6335
  %v6337 = vrot.slane %v6336, 4
  %v6338 = vadd.f32 %v6336, %v6337
  %v6339 = vrot.slane %v6338, 2
  %v6340 = vadd.f32 %v6338, %v6339
  %v6341 = vrot.slane %v6340, 1
  %v6342 = vadd.f32 %v6340, %v6341
  %v6343 = vmul.f32 %v6342, %v1354
  %v6344 = vsub.f32 %v6318, %v6343
  %v6345 = vsub.f32 %v6321, %v6343
  %v6346 = vsub.f32 %v6324, %v6343
  %v6347 = vsub.f32 %v6327, %v6343
  %v6348 = vmul.f32 %v6344, %v6344
  %v6349 = vmul.f32 %v6345, %v6345
  %v6350 = vmul.f32 %v6346, %v6346
  %v6351 = vmul.f32 %v6347, %v6347
  %v6352 = vsel %vm6329, %v6348, 0.0
  %v6353 = vsel %vm6329, %v6349, 0.0
  %v6354 = vadd.f32 %v6352, %v6353
  %v6355 = vsel %vm6329, %v6350, 0.0
  %v6356 = vadd.f32 %v6354, %v6355
  %v6357 = vsel %vm6329, %v6351, 0.0
  %v6358 = vadd.f32 %v6356, %v6357
  %v6359 = vrot.slane %v6358, 4
  %v6360 = vadd.f32 %v6358, %v6359
  %v6361 = vrot.slane %v6360, 2
  %v6362 = vadd.f32 %v6360, %v6361
  %v6363 = vrot.slane %v6362, 1
  %v6364 = vadd.f32 %v6362, %v6363
  %v6365 = vmul.f32 %v6364, %v1354
  %v6366 = vadd.f32 %v6365, 1e-05
  %v6367 = vrsqrt.pop %v6366
  %v6368 = vmul.f32 %v6367, %v6366
  %v6369 = vmul.f32 %v6368, %v6367
  %v6370 = vmul.f32 0.5, %v6369
  %v6371 = vsub.f32 1.5, %v6370
  %v6372 = vmul.f32 %v6367, %v6371
  %vm6373 = vweird.f32 %v6366
  %vm6374 = vweird.f32 %v6367
  %vm6375 = vmor %vm6373, %vm6374
  %v6376 = vsel %vm6375, %v6367, %v6372
  %v6377 = vmul.f32 %v6344, %v6376
  %v6378 = vmul.f32 %v6345, %v6376
  %v6379 = vmul.f32 %v6346, %v6376
  %v6380 = vmul.f32 %v6347, %v6376
  %v6381 = vperm.slane %v6286, 1
  %v6382 = vmul.f32 %v6377, %v6381
  %v6383 = vmul.f32 %v6378, %v6381
  %v6384 = vmul.f32 %v6379, %v6381
  %v6385 = vmul.f32 %v6380, %v6381
  %v6386 = vperm.slane %v6286, 2
  %v6387 = vadd.f32 %v6382, %v6386
  %v6388 = vadd.f32 %v6383, %v6386
  %v6389 = vadd.f32 %v6384, %v6386
  %v6390 = vadd.f32 %v6385, %v6386
  %v6391 = vmax.f32 %v6387, 0.0
  %v6392 = vmax.f32 %v6388, 0.0
  %v6393 = vmax.f32 %v6389, 0.0
  %v6394 = vmax.f32 %v6390, 0.0
  %v6395 = vperm.slane %v6286, 7
  %v6397 = vrot.slane %v6286, 3
  %v6399 = vsel %vm6329, %v6391, 0
  %v6402 = vsel %vm6329, %v6392, 0
  %v6405 = vsel %vm6329, %v6393, 0
  %v6408 = vsel %vm6329, %v6394, 0
  %vm6410 = vcmask 1043456
  %v6411 = vsel %vm6410, %v6397, 0
  %6413 = vmatpush.msra.mxu0 0.0
  %6414 = vmatpush.msra.mxu0 0.0
  %6415 = vmatpush.msra.mxu0 0.0
  %6416 = vmatpush.msra.mxu0 0.0
  %6417 = vmatpush.msra.mxu0 0.0
  %6418 = vmatpush.msra.mxu0 0.0
  %6419 = vmatpush.msra.mxu0 0.0
  %6420 = vmatpush.msra.mxu0 0.0
  %6421 = vmatpush.msra.mxu0 0.0
  %6422 = vmatpush.msra.mxu0 0.0
  %6423 = vmatpush.msra.mxu0 0.0
  %6424 = vmatpush.msra.mxu0 0.0
  %6425 = vmatpush.msra.mxu0 0.0
  %6426 = vmatpush.msra.mxu0 0.0
  %6427 = vmatpush.msra.mxu0 0.0
  %6428 = vmatpush.msra.mxu0 %v6411
  %6429 = vmatmul.f32.gmra.mxu0 %v6399
  %v6430 = vpop.f32.mrf.mxu0
  %v6431 = vadd.f32 %v6395, %v6430
  %6432 = vmatmul.f32.gmra.mxu0 %v6402
  %v6433 = vpop.f32.mrf.mxu0
  %v6434 = vadd.f32 %v6395, %v6433
  %6435 = vmatmul.f32.gmra.mxu0 %v6405
  %v6436 = vpop.f32.mrf.mxu0
  %v6437 = vadd.f32 %v6395, %v6436
  %6438 = vmatmul.f32.gmra.mxu0 %v6408
  %v6439 = vpop.f32.mrf.mxu0
  %v6440 = vadd.f32 %v6395, %v6439
  %6441 = vdwg.mxu0
  %6442 = vxpose.xlu0.b32.start [1/16] %v6431, 128
  %6443 = vxpose.xlu0.b32.cont [2/16] %v6434, 128
  %6444 = vxpose.xlu0.b32.cont [3/16] 0.0, 128
  %6445 = vxpose.xlu0.b32.cont [4/16] 0.0, 128
  %6446 = vxpose.xlu0.b32.cont [5/16] 0.0, 128
  %6447 = vxpose.xlu0.b32.cont [6/16] 0.0, 128
  %6448 = vxpose.xlu0.b32.cont [7/16] 0.0, 128
  %6449 = vxpose.xlu0.b32.cont [8/16] 0.0, 128
  %6450 = vxpose.xlu0.b32.cont [9/16] 0.0, 128
  %6451 = vxpose.xlu0.b32.cont [10/16] 0.0, 128
  %6452 = vxpose.xlu0.b32.cont [11/16] 0.0, 128
  %6453 = vxpose.xlu0.b32.cont [12/16] 0.0, 128
  %6454 = vxpose.xlu0.b32.cont [13/16] 0.0, 128
  %6455 = vxpose.xlu0.b32.cont [14/16] 0.0, 128
  %6456 = vxpose.xlu0.b32.cont [15/16] 0.0, 128
  %6457 = vxpose.xlu0.b32.end [16/16] 0.0, 128
  %v6458 = vpop.trf.xlu0
  %v6459 = vpop.trf.xlu0
  %v6460 = vpop.trf.xlu0
  %v6461 = vpop.trf.xlu0
  %v6462 = vpop.trf.xlu0
  %v6463 = vpop.trf.xlu0
  %v6464 = vpop.trf.xlu0
  %v6465 = vpop.trf.xlu0
  %v6466 = vpop.trf.xlu0
  %v6467 = vpop.trf.xlu0
  %v6468 = vpop.trf.xlu0
  %v6469 = vpop.trf.xlu0
  %v6470 = vpop.trf.xlu0
  %v6471 = vpop.trf.xlu0
  %v6472 = vpop.trf.xlu0
  %v6473 = vpop.trf.xlu0
  %6474 = vxpose.xlu0.b32.start [1/16] %v6437, 128
  %6475 = vxpose.xlu0.b32.cont [2/16] %v6440, 128
  %6476 = vxpose.xlu0.b32.cont [3/16] 0.0, 128
  %6477 = vxpose.xlu0.b32.cont [4/16] 0.0, 128
  %6478 = vxpose.xlu0.b32.cont [5/16] 0.0, 128
  %6479 = vxpose.xlu0.b32.cont [6/16] 0.0, 128
  %6480 = vxpose.xlu0.b32.cont [7/16] 0.0, 128
  %6481 = vxpose.xlu0.b32.cont [8/16] 0.0, 128
  %6482 = vxpose.xlu0.b32.cont [9/16] 0.0, 128
  %6483 = vxpose.xlu0.b32.cont [10/16] 0.0, 128
  %6484 = vxpose.xlu0.b32.cont [11/16] 0.0, 128
  %6485 = vxpose.xlu0.b32.cont [12/16] 0.0, 128
  %6486 = vxpose.xlu0.b32.cont [13/16] 0.0, 128
  %6487 = vxpose.xlu0.b32.cont [14/16] 0.0, 128
  %6488 = vxpose.xlu0.b32.cont [15/16] 0.0, 128
  %6489 = vxpose.xlu0.b32.end [16/16] 0.0, 128
  %v6490 = vpop.trf.xlu0
  %v6491 = vpop.trf.xlu0
  %v6492 = vpop.trf.xlu0
  %v6493 = vpop.trf.xlu0
  %v6494 = vpop.trf.xlu0
  %v6495 = vpop.trf.xlu0
  %v6496 = vpop.trf.xlu0
  %v6497 = vpop.trf.xlu0
  %v6498 = vpop.trf.xlu0
  %v6499 = vpop.trf.xlu0
  %v6500 = vpop.trf.xlu0
  %v6501 = vpop.trf.xlu0
  %v6502 = vpop.trf.xlu0
  %v6503 = vpop.trf.xlu0
  %v6504 = vpop.trf.xlu0
  %v6505 = vpop.trf.xlu0
  %v6507 = vrot.slane %v6490, 4
  %v6509 = vsel %vm6410, %v6458, %v6507
  %v6510 = vld [vmem:[%s9] sm:$0xff]
  %v6511 = vld [vmem:[%s9 + $0x8] sm:$0xff]
  %v6512 = vld [vmem:[%s9 + $0x10] sm:$0xff]
  %v6513 = vld [vmem:[%s9 + $0x18] sm:$0xff]
  %v6515 = vsel %vm540, %v6509, 0
  %6517 = vmatpush.msra.mxu0 0.0
  %6518 = vmatpush.msra.mxu0 0.0
  %6519 = vmatpush.msra.mxu0 0.0
  %6520 = vmatpush.msra.mxu0 0.0
  %6521 = vmatpush.msra.mxu0 0.0
  %6522 = vmatpush.msra.mxu0 0.0
  %6523 = vmatpush.msra.mxu0 0.0
  %6524 = vmatpush.msra.mxu0 0.0
  %6525 = vmatpush.msra.mxu0 0.0
  %6526 = vmatpush.msra.mxu0 0.0
  %6527 = vmatpush.msra.mxu0 0.0
  %6528 = vmatpush.msra.mxu0 0.0
  %6529 = vmatpush.msra.mxu0 0.0
  %6530 = vmatpush.msra.mxu0 0.0
  %6531 = vmatpush.msra.mxu0 %v6512
  %6532 = vmatpush.msra.mxu0 %v6510
  %6533 = vmatmul.f32.gmra.mxu0 %v6515
  %v6534 = vpop.f32.mrf.mxu0
  %v6535 = vadd.f32 0.0, %v6534
  %6536 = vdwg.mxu0
  %6537 = vmatpush.msra.mxu0 0.0
  %6538 = vmatpush.msra.mxu0 0.0
  %6539 = vmatpush.msra.mxu0 0.0
  %6540 = vmatpush.msra.mxu0 0.0
  %6541 = vmatpush.msra.mxu0 0.0
  %6542 = vmatpush.msra.mxu0 0.0
  %6543 = vmatpush.msra.mxu0 0.0
  %6544 = vmatpush.msra.mxu0 0.0
  %6545 = vmatpush.msra.mxu0 0.0
  %6546 = vmatpush.msra.mxu0 0.0
  %6547 = vmatpush.msra.mxu0 0.0
  %6548 = vmatpush.msra.mxu0 0.0
  %6549 = vmatpush.msra.mxu0 0.0
  %6550 = vmatpush.msra.mxu0 0.0
  %6551 = vmatpush.msra.mxu0 %v6513
  %6552 = vmatpush.msra.mxu0 %v6511
  %6553 = vmatmul.f32.gmra.mxu0 %v6515
  %v6554 = vpop.f32.mrf.mxu0
  %v6555 = vadd.f32 0.0, %v6554
  %6556 = vdwg.mxu0
  %6557 = vst [vmem:[%s10] sm:$0xff] %v6535
  %6558 = vst [vmem:[%s10 + $0x8] sm:$0xff] %v6555
  // Predicated region
  $region42: #{previt_forward.1} parent=0 // pred_check
    _
  $region43: #{previt_forward.1} parent=0 // pred_check_branch
    %6560 = sbr.rel (0) target = $region45
  $region44: #{previt_forward.1} parent=0 // pred_region
    _
  $region45: #{previt_forward.1} parent=0 // pred_fallthru
    _
  // Predicated region
  $region46: #{previt_forward.1} parent=0 // pred_check
    _
  $region47: #{previt_forward.1} parent=0 // pred_check_branch
    %6562 = sbr.rel (0) target = $region49
  $region48: #{previt_forward.1} parent=0 // pred_region
    _
  $region49: #{previt_forward.1} parent=0 // pred_fallthru
    _

</llo_original>
